<compile_context>
chip_gen: v7x
topology: tpu7x:2x2x1
jax: 0.10.0
libtpu: 0.0.40
codegen_flags: <defaults>
</compile_context>

<pallas_src>
import math

import jax
import jax.numpy as jnp
from jax import lax
from jax.experimental import pallas as pl
from jax.experimental.pallas import tpu as pltpu

# ---- problem sizes (from the module) ----------------------------------------
F = 3                                   # num_feature (fixed by BatchNorm1d(3))
IN_DIM = 32
HIDDEN_DIM = 16
MID_DIM = (IN_DIM + HIDDEN_DIM) // 2    # 24
NUM_HEAD = 4
HEAD_DIM = IN_DIM // NUM_HEAD           # 8
BATCH = 256                             # module's batch_size
EPS = 1e-5

_HP = jax.lax.Precision.HIGHEST         # reference path only

# ---- packed-parameter slab layout --------------------------------------------
_SLAB_LANES = 288
# weight slab row offsets (all multiples of 16 for clean bf16 sub-tile slices)
_R_QKV, _R_WO, _R_LIN, _R_L1, _R_PLN = 0, 96, 192, 288, 384
_R_L2, _R_L4, _R_L3, _R_M1, _R_M2 = 480, 560, 640, 688, 976
_SLAB_ROWS = 1024
# bias / vector slab rows
(_V_BQKV, _V_BO, _V_LN1G, _V_LN1B, _V_LINB, _V_LN2G, _V_LN2B,
 _V_L1B, _V_BN1S, _V_BN1O, _V_L2B, _V_L3B, _V_BN3S, _V_BN3O, _V_L4B) = range(15)
_VEC_ROWS = 16


# ---- in-kernel math helpers --------------------------------------------------
def _gelu(x):
    # tanh-form GELU: one EUP tanh + a few VPU ops (error ~1e-3 vs exact erf GELU).
    c = math.sqrt(2.0 / math.pi)
    return 0.5 * x * (1.0 + jnp.tanh(c * (x + 0.044715 * x * x * x)))


# ---- the kernel --------------------------------------------------------------
def _autoencoder_kernel(x_ref, w_ref, vec_ref, ae2_ref, ae4_ref):
    f32 = jnp.float32

    def mm(a, r0, k, n):
        """bf16 MXU dot against a static (k, n) slice of the weight slab (f32 accum)."""
        return jnp.dot(a.astype(jnp.bfloat16), w_ref[r0:r0 + k, 0:n],
                       preferred_element_type=f32)

    def vec(r, n):
        return vec_ref[r:r + 1, 0:n]                    # (1, n) f32, broadcasts over rows

    x96 = x_ref[...]                                    # (BB, 96) f32, lane = f*32 + c

    # --- fused per-feature Q/K/V projection (one dot) -------------------------
    # output lanes: [q f0|f1|f2 , k f0|f1|f2 , v f0|f1|f2]
    qkv = mm(x96, _R_QKV, 96, 288) + vec(_V_BQKV, 288)  # (BB, 288)
    q96 = qkv[:, 0:96]
    k96 = qkv[:, 96:192]
    v96 = qkv[:, 192:288]

    # --- lane-packed feature attention (2 dots) --------------------------------
    # replicated lane layout: lane = j*96 + i*32 + (h*8 + d)
    #   i = query feature, j = key feature, h = head, d = head dim
    def rep_each(a):                                    # (BB, 96) -> (BB, 288)
        g0, g1, g2 = a[:, 0:32], a[:, 32:64], a[:, 64:96]
        return jnp.concatenate([g0, g0, g0, g1, g1, g1, g2, g2, g2], axis=1)

    q_rep = jnp.concatenate([q96, q96, q96], axis=1)    # (BB, 288)
    prod = q_rep * rep_each(k96)
    # scores: columns = j*12 + i*4 + h   (1/sqrt(head_dim) folded into the mask)
    s = mm(prod, _R_M1, 288, 36)                        # (BB, 36)

    s0, s1, s2 = s[:, 0:12], s[:, 12:24], s[:, 24:36]
    m = jnp.maximum(jnp.maximum(s0, s1), s2)
    e0, e1, e2 = jnp.exp(s0 - m), jnp.exp(s1 - m), jnp.exp(s2 - m)
    inv = pl.reciprocal(e0 + e1 + e2, approx=True)      # softmax denom on the EUP
    p = jnp.concatenate([e0 * inv, e1 * inv, e2 * inv], axis=1)   # (BB, 36)

    pv = mm(p, _R_M2, 36, 288) * rep_each(v96)          # (BB, 288)
    att = pv[:, 0:96] + pv[:, 96:192] + pv[:, 192:288]  # sum over key feature j
    att = mm(att, _R_WO, 96, 96) + vec(_V_BO, 96)       # W_O

    # --- per-feature LayerNorm via block-averaging matmul ----------------------
    def layernorm(v, g_row, b_row):
        mu = mm(v, _R_PLN, 96, 96)                      # per-32-lane-group mean, broadcast
        c = v - mu
        var = mm(c * c, _R_PLN, 96, 96)
        return c * lax.rsqrt(var + EPS) * vec(g_row, 96) + vec(b_row, 96)

    y = layernorm(x96 + att, _V_LN1G, _V_LN1B)
    y = layernorm(y + mm(y, _R_LIN, 96, 96) + vec(_V_LINB, 96), _V_LN2G, _V_LN2B)

    # --- encoder: l1 -> gelu -> BatchNorm1d(3) eval affine -> dropout(id) -> l2 -
    h1 = _gelu(mm(y, _R_L1, 96, 72) + vec(_V_L1B, 72))
    h1 = h1 * vec(_V_BN1S, 72) + vec(_V_BN1O, 72)
    ae2 = mm(h1, _R_L2, 72, 48) + vec(_V_L2B, 48)       # (BB, 48)

    # --- decoder: l3 -> gelu -> BatchNorm1d(3) eval affine -> dropout(id) -> l4 -
    h3 = _gelu(mm(ae2, _R_L3, 48, 72) + vec(_V_L3B, 72))
    h3 = h3 * vec(_V_BN3S, 72) + vec(_V_BN3O, 72)
    ae4 = mm(h3, _R_L4, 72, 96) + vec(_V_L4B, 96)       # (BB, 96)

    ae2_ref[...] = ae2
    ae4_ref[...] = ae4


# ---- one-time parameter packing (runs once, outside the jitted forward) -------
def _bd3(w):
    """Block-diagonal expansion of a per-feature (in, out) weight to (3*in, 3*out)."""
    i, o = w.shape
    z = jnp.zeros((i, o), w.dtype)
    return jnp.concatenate([
        jnp.concatenate([w, z, z], axis=1),
        jnp.concatenate([z, w, z], axis=1),
        jnp.concatenate([z, z, w], axis=1),
    ], axis=0)


def _slab_block(a, rows):
    r, c = a.shape
    return jnp.pad(a, ((0, rows - r), (0, _SLAB_LANES - c)))


def pack_params(p):
    """Pack all module parameters into two DMA-friendly slabs."""
    # fused QKV block-diag weight: out lanes [q f0|f1|f2 , k ..., v ...]
    w_qkv_big = jnp.concatenate([_bd3(p["wq"]), _bd3(p["wk"]), _bd3(p["wv"])], axis=1)

    # per-feature LayerNorm block-averaging matrix (blockdiag of ones/32)
    d = jnp.arange(F * IN_DIM)
    p_ln = ((d[:, None] // IN_DIM) == (d[None, :] // IN_DIM)).astype(jnp.float32) / IN_DIM

    # attention score / broadcast masks on the replicated lane layout
    lane = jnp.arange(F * 96)
    col_of_lane = (lane // 96) * 12 + ((lane % 96) // 32) * 4 + ((lane % 32) // 8)
    ind = (col_of_lane[:, None] == jnp.arange(36)[None, :]).astype(jnp.float32)
    m1 = ind / math.sqrt(HEAD_DIM)                       # (288, 36), scale folded in
    m2 = ind.T                                           # (36, 288)

    wslab = jnp.concatenate([
        _slab_block(w_qkv_big, 96),                      # _R_QKV
        _slab_block(_bd3(p["wo"]), 96),                  # _R_WO
        _slab_block(_bd3(p["lin_w"]), 96),               # _R_LIN
        _slab_block(_bd3(p["l1_w"]), 96),                # _R_L1
        _slab_block(p_ln, 96),                           # _R_PLN
        _slab_block(_bd3(p["l2_w"]), 80),                # _R_L2
        _slab_block(_bd3(p["l4_w"]), 80),                # _R_L4
        _slab_block(_bd3(p["l3_w"]), 48),                # _R_L3
        _slab_block(m1, 288),                            # _R_M1
        _slab_block(m2, 48),                             # _R_M2
    ], axis=0).astype(jnp.bfloat16)
    assert wslab.shape == (_SLAB_ROWS, _SLAB_LANES)

    tile3 = lambda b: jnp.tile(jnp.asarray(b, jnp.float32).reshape(1, -1), (1, F))
    rep3 = lambda s, w: jnp.repeat(jnp.asarray(s, jnp.float32), w).reshape(1, -1)

    b_qkv = jnp.concatenate([tile3(p["bq"]), tile3(p["bk"]), tile3(p["bv"])], axis=1)
    vec_rows = [
        b_qkv,                                   # _V_BQKV  (1, 288)
        tile3(p["bo"]),                          # _V_BO    (1, 96)
        tile3(p["ln1_g"]), tile3(p["ln1_b"]),    # LN1 gamma/beta
        tile3(p["lin_b"]),
        tile3(p["ln2_g"]), tile3(p["ln2_b"]),
        tile3(p["l1_b"]),                        # (1, 72)
        rep3(p["bn1_scale"], MID_DIM), rep3(p["bn1_shift"], MID_DIM),
        tile3(p["l2_b"]),                        # (1, 48)
        tile3(p["l3_b"]),                        # (1, 72)
        rep3(p["bn3_scale"], MID_DIM), rep3(p["bn3_shift"], MID_DIM),
        tile3(p["l4_b"]),                        # (1, 96)
        jnp.zeros((1, _SLAB_LANES), jnp.float32),
    ]
    vecs = jnp.concatenate(
        [jnp.pad(r, ((0, 0), (0, _SLAB_LANES - r.shape[1]))) for r in vec_rows], axis=0)
    assert vecs.shape == (_VEC_ROWS, _SLAB_LANES)

    return {"wslab": wslab, "vecs": vecs}


# ---- wrapper -----------------------------------------------------------------
def _pick_block_rows(batch):
    try:
        kind = jax.devices()[0].device_kind.lower()
    except Exception:
        kind = ""
    # megacore chips (2 TensorCores per device): give each core one grid step
    two_tc = any(t in kind for t in ("v4", "v5p", "v7", "7x"))
    prefer = 128 if two_tc else 256
    for bb in (prefer, 256, 128, 64, 32, 16, 8):
        if bb <= batch and batch % bb == 0:
            return bb
    return batch


def autoencoder_forward(x, packed):
    """x: (B, 3, IN_DIM) f32 -> (AE_2: (B, 3, HIDDEN_DIM), AE_4: (B, 3, IN_DIM))."""
    B = x.shape[0]
    assert x.shape == (B, F, IN_DIM)
    bb = _pick_block_rows(B)

    x2 = x.astype(jnp.float32).reshape(B, F * IN_DIM)    # free bitcast, no transpose
    wslab, vecs = packed["wslab"], packed["vecs"]

    in_specs = [
        pl.BlockSpec((bb, F * IN_DIM), lambda b: (b, 0)),
        pl.BlockSpec(wslab.shape, lambda b: (0, 0)),     # constant block -> single DMA
        pl.BlockSpec(vecs.shape, lambda b: (0, 0)),
    ]
    out_specs = (
        pl.BlockSpec((bb, F * HIDDEN_DIM), lambda b: (b, 0)),
        pl.BlockSpec((bb, F * IN_DIM), lambda b: (b, 0)),
    )
    out_shape = (
        jax.ShapeDtypeStruct((B, F * HIDDEN_DIM), jnp.float32),
        jax.ShapeDtypeStruct((B, F * IN_DIM), jnp.float32),
    )

    ae2_flat, ae4_flat = pl.pallas_call(
        _autoencoder_kernel,
        grid=(B // bb,),
        in_specs=in_specs,
        out_specs=out_specs,
        out_shape=out_shape,
        compiler_params=pltpu.CompilerParams(dimension_semantics=("parallel",)),
    )(x2, wslab, vecs)

    # free contiguous reshapes back to the module's (B, 3, dim) layout
    return ae2_flat.reshape(B, F, HIDDEN_DIM), ae4_flat.reshape(B, F, IN_DIM)


# ---- deterministic parameter init (shapes from the module __init__) ----------
def init_params(key):
    ks = iter(jax.random.split(key, 32))

    def lin_p(in_d, out_d):
        bound = 1.0 / math.sqrt(in_d)
        w = jax.random.uniform(next(ks), (in_d, out_d), jnp.float32, -bound, bound)
        b = jax.random.uniform(next(ks), (1, out_d), jnp.float32, -bound, bound)
        return w, b

    p = {}
    p["wq"], p["bq"] = lin_p(IN_DIM, IN_DIM)
    p["wk"], p["bk"] = lin_p(IN_DIM, IN_DIM)
    p["wv"], p["bv"] = lin_p(IN_DIM, IN_DIM)
    p["wo"], p["bo"] = lin_p(IN_DIM, IN_DIM)
    p["lin_w"], p["lin_b"] = lin_p(IN_DIM, IN_DIM)
    p["l1_w"], p["l1_b"] = lin_p(IN_DIM, MID_DIM)
    p["l2_w"], p["l2_b"] = lin_p(MID_DIM, HIDDEN_DIM)
    p["l3_w"], p["l3_b"] = lin_p(HIDDEN_DIM, MID_DIM)
    p["l4_w"], p["l4_b"] = lin_p(MID_DIM, IN_DIM)

    for name in ("ln1", "ln2"):
        p[name + "_g"] = 1.0 + 0.1 * jax.random.normal(next(ks), (1, IN_DIM), jnp.float32)
        p[name + "_b"] = 0.1 * jax.random.normal(next(ks), (1, IN_DIM), jnp.float32)

    # BatchNorm1d(3) in eval mode, folded to per-channel scale/shift.
    for name in ("bn1", "bn3"):
        gamma = 1.0 + 0.1 * jax.random.normal(next(ks), (F,), jnp.float32)
        beta = 0.1 * jax.random.normal(next(ks), (F,), jnp.float32)
        rmean = 0.1 * jax.random.normal(next(ks), (F,), jnp.float32)
        rvar = 1.0 + 0.1 * jax.random.uniform(next(ks), (F,), jnp.float32)
        s = gamma * lax.rsqrt(rvar + EPS)
        p[name + "_scale"] = s
        p[name + "_shift"] = beta - rmean * s
    return p


# ---- pure-JAX reference (mirrors the PyTorch forward in eval mode) ------------
def reference_forward(x, p):
    B_, F_, D_ = x.shape
    hd = D_ // NUM_HEAD

    def lin(v, w, b):
        return jnp.einsum("bfi,io->bfo", v, w, precision=_HP) + b

    def layernorm(v, g, b):
        mu = v.mean(-1, keepdims=True)
        var = ((v - mu) ** 2).mean(-1, keepdims=True)
        return (v - mu) * lax.rsqrt(var + EPS) * g + b

    def gelu(v):
        return v * 0.5 * (1.0 + lax.erf(v / math.sqrt(2.0)))

    def bn_eval(v, scale, shift):
        return v * scale.reshape(1, -1, 1) + shift.reshape(1, -1, 1)

    Q = lin(x, p["wq"], p["bq"]).reshape(B_, F_, NUM_HEAD, hd).transpose(0, 2, 1, 3)
    K = lin(x, p["wk"], p["bk"]).reshape(B_, F_, NUM_HEAD, hd).transpose(0, 2, 1, 3)
    V = lin(x, p["wv"], p["bv"]).reshape(B_, F_, NUM_HEAD, hd).transpose(0, 2, 1, 3)
    s = jnp.einsum("bhqd,bhkd->bhqk", Q, K, precision=_HP) / math.sqrt(hd)
    a = jax.nn.softmax(s, axis=-1)
    o = jnp.einsum("bhqk,bhkd->bhqd", a, V, precision=_HP)
    o = o.transpose(0, 2, 1, 3).reshape(B_, F_, D_)
    o = lin(o, p["wo"], p["bo"])
    y = layernorm(x + o, p["ln1_g"], p["ln1_b"])
    y = layernorm(y + lin(y, p["lin_w"], p["lin_b"]), p["ln2_g"], p["ln2_b"])

    a1 = bn_eval(gelu(lin(y, p["l1_w"], p["l1_b"])), p["bn1_scale"], p["bn1_shift"])
    ae2 = lin(a1, p["l2_w"], p["l2_b"])
    a3 = bn_eval(gelu(lin(ae2, p["l3_w"], p["l3_b"])), p["bn3_scale"], p["bn3_shift"])
    ae4 = lin(a3, p["l4_w"], p["l4_b"])
    return ae2, ae4


if __name__ == "__main__":
    key = jax.random.PRNGKey(0)
    kx, kp = jax.random.split(key)
    x = jax.random.normal(kx, (BATCH, F, IN_DIM), jnp.float32)
    params = init_params(kp)
    packed = pack_params(params)                 # one-time packing, outside the jit

    fwd = jax.jit(autoencoder_forward)
    ae2, ae4 = fwd(x, packed)
    jax.block_until_ready((ae2, ae4))

    ref2, ref4 = reference_forward(x, params)
    assert ae2.shape == (BATCH, F, HIDDEN_DIM) and ae4.shape == (BATCH, F, IN_DIM)
    assert jnp.allclose(ae2, ref2, atol=2e-2, rtol=2e-2), "AE_2 mismatch vs reference"
    assert jnp.allclose(ae4, ref4, atol=2e-2, rtol=2e-2), "AE_4 mismatch vs reference"

    print("KERNEL_OK")
</pallas_src>

<mosaic_0001>
module attributes {stable_mosaic.version = 11 : i64} {
  func.func @_autoencoder_kernel(%arg0: i32, %arg1: memref<256x96xf32, #tpu.memory_space<vmem>>, %arg2: memref<1024x288xbf16, #tpu.memory_space<vmem>>, %arg3: memref<16x288xf32, #tpu.memory_space<vmem>>, %arg4: memref<256x48xf32, #tpu.memory_space<vmem>>, %arg5: memref<256x96xf32, #tpu.memory_space<vmem>>) attributes {dimension_semantics = [#tpu.dimension_semantics<parallel>], iteration_bounds = array<i64: 1>, scalar_prefetch = 0 : i64, scratch_operands = 0 : i64, tpu.core_type = #tpu.core_type<tc>, window_params = [{transform_indices = @transform_0, window_bounds = array<i64: 256, 96>}, {pipeline_mode = #tpu.pipeline_mode<synchronous>, transform_indices = @transform_1, window_bounds = array<i64: 1024, 288>}, {pipeline_mode = #tpu.pipeline_mode<synchronous>, transform_indices = @transform_2, window_bounds = array<i64: 16, 288>}, {transform_indices = @transform_3, window_bounds = array<i64: 256, 48>}, {transform_indices = @transform_4, window_bounds = array<i64: 256, 96>}]} {
    %c0 = arith.constant 0 : index
    %c0_0 = arith.constant 0 : index
    %0 = vector.load %arg1[%c0, %c0_0] : memref<256x96xf32, #tpu.memory_space<vmem>>, vector<256x96xf32>
    %1 = arith.truncf %0 : vector<256x96xf32> to vector<256x96xbf16>
    %c0_1 = arith.constant 0 : index
    %c0_2 = arith.constant 0 : index
    %2 = vector.load %arg2[%c0_1, %c0_2] : memref<1024x288xbf16, #tpu.memory_space<vmem>>, vector<96x288xbf16>
    %cst = arith.constant dense<0.000000e+00> : vector<256x288xf32>
    %3 = tpu.matmul %1, %2, %cst {dimension_numbers = #tpu.dot_dimension_numbers<[1], [0], [0], [1], [0, 0, 1, 1], [], []>} : vector<256x96xbf16>, vector<96x288xbf16>, vector<256x288xf32> -> vector<256x288xf32>
    %c0_3 = arith.constant 0 : index
    %c0_4 = arith.constant 0 : index
    %4 = vector.load %arg3[%c0_3, %c0_4] : memref<16x288xf32, #tpu.memory_space<vmem>>, vector<1x288xf32>
    %5 = vector.broadcast %4 : vector<1x288xf32> to vector<256x288xf32>
    %6 = arith.addf %3, %5 : vector<256x288xf32>
    %7 = vector.extract_strided_slice %6 {offsets = [0, 0], sizes = [256, 96], strides = [1, 1]} : vector<256x288xf32> to vector<256x96xf32>
    %8 = vector.extract_strided_slice %6 {offsets = [0, 96], sizes = [256, 96], strides = [1, 1]} : vector<256x288xf32> to vector<256x96xf32>
    %9 = vector.extract_strided_slice %6 {offsets = [0, 192], sizes = [256, 96], strides = [1, 1]} : vector<256x288xf32> to vector<256x96xf32>
    %10 = tpu.concatenate %7, %7, %7 in 1 : vector<256x96xf32>, vector<256x96xf32>, vector<256x96xf32> -> vector<256x288xf32>
    %11 = vector.extract_strided_slice %8 {offsets = [0, 0], sizes = [256, 32], strides = [1, 1]} : vector<256x96xf32> to vector<256x32xf32>
    %12 = vector.extract_strided_slice %8 {offsets = [0, 32], sizes = [256, 32], strides = [1, 1]} : vector<256x96xf32> to vector<256x32xf32>
    %13 = vector.extract_strided_slice %8 {offsets = [0, 64], sizes = [256, 32], strides = [1, 1]} : vector<256x96xf32> to vector<256x32xf32>
    %14 = tpu.concatenate %11, %11, %11, %12, %12, %12, %13, %13, %13 in 1 : vector<256x32xf32>, vector<256x32xf32>, vector<256x32xf32>, vector<256x32xf32>, vector<256x32xf32>, vector<256x32xf32>, vector<256x32xf32>, vector<256x32xf32>, vector<256x32xf32> -> vector<256x288xf32>
    %15 = arith.mulf %10, %14 : vector<256x288xf32>
    %16 = arith.truncf %15 : vector<256x288xf32> to vector<256x288xbf16>
    %c688 = arith.constant 688 : index
    %c0_5 = arith.constant 0 : index
    %17 = vector.load %arg2[%c688, %c0_5] : memref<1024x288xbf16, #tpu.memory_space<vmem>>, vector<288x36xbf16>
    %cst_6 = arith.constant dense<0.000000e+00> : vector<256x36xf32>
    %18 = tpu.matmul %16, %17, %cst_6 {dimension_numbers = #tpu.dot_dimension_numbers<[1], [0], [0], [1], [0, 0, 1, 1], [], []>} : vector<256x288xbf16>, vector<288x36xbf16>, vector<256x36xf32> -> vector<256x36xf32>
    %19 = vector.extract_strided_slice %18 {offsets = [0, 0], sizes = [256, 12], strides = [1, 1]} : vector<256x36xf32> to vector<256x12xf32>
    %20 = vector.extract_strided_slice %18 {offsets = [0, 12], sizes = [256, 12], strides = [1, 1]} : vector<256x36xf32> to vector<256x12xf32>
    %21 = vector.extract_strided_slice %18 {offsets = [0, 24], sizes = [256, 12], strides = [1, 1]} : vector<256x36xf32> to vector<256x12xf32>
    %22 = arith.maximumf %19, %20 : vector<256x12xf32>
    %23 = arith.maximumf %22, %21 : vector<256x12xf32>
    %24 = arith.subf %19, %23 : vector<256x12xf32>
    %25 = math.exp %24 : vector<256x12xf32>
    %26 = arith.subf %20, %23 : vector<256x12xf32>
    %27 = math.exp %26 : vector<256x12xf32>
    %28 = arith.subf %21, %23 : vector<256x12xf32>
    %29 = math.exp %28 : vector<256x12xf32>
    %30 = arith.addf %25, %27 : vector<256x12xf32>
    %31 = arith.addf %30, %29 : vector<256x12xf32>
    %32 = tpu.reciprocal %31 {approx = true} : vector<256x12xf32> -> vector<256x12xf32>
    %33 = arith.mulf %25, %32 : vector<256x12xf32>
    %34 = arith.mulf %27, %32 : vector<256x12xf32>
    %35 = arith.mulf %29, %32 : vector<256x12xf32>
    %36 = tpu.concatenate %33, %34, %35 in 1 : vector<256x12xf32>, vector<256x12xf32>, vector<256x12xf32> -> vector<256x36xf32>
    %37 = arith.truncf %36 : vector<256x36xf32> to vector<256x36xbf16>
    %c976 = arith.constant 976 : index
    %c0_7 = arith.constant 0 : index
    %38 = vector.load %arg2[%c976, %c0_7] : memref<1024x288xbf16, #tpu.memory_space<vmem>>, vector<36x288xbf16>
    %cst_8 = arith.constant dense<0.000000e+00> : vector<256x288xf32>
    %39 = tpu.matmul %37, %38, %cst_8 {dimension_numbers = #tpu.dot_dimension_numbers<[1], [0], [0], [1], [0, 0, 1, 1], [], []>} : vector<256x36xbf16>, vector<36x288xbf16>, vector<256x288xf32> -> vector<256x288xf32>
    %40 = vector.extract_strided_slice %9 {offsets = [0, 0], sizes = [256, 32], strides = [1, 1]} : vector<256x96xf32> to vector<256x32xf32>
    %41 = vector.extract_strided_slice %9 {offsets = [0, 32], sizes = [256, 32], strides = [1, 1]} : vector<256x96xf32> to vector<256x32xf32>
    %42 = vector.extract_strided_slice %9 {offsets = [0, 64], sizes = [256, 32], strides = [1, 1]} : vector<256x96xf32> to vector<256x32xf32>
    %43 = tpu.concatenate %40, %40, %40, %41, %41, %41, %42, %42, %42 in 1 : vector<256x32xf32>, vector<256x32xf32>, vector<256x32xf32>, vector<256x32xf32>, vector<256x32xf32>, vector<256x32xf32>, vector<256x32xf32>, vector<256x32xf32>, vector<256x32xf32> -> vector<256x288xf32>
    %44 = arith.mulf %39, %43 : vector<256x288xf32>
    %45 = vector.extract_strided_slice %44 {offsets = [0, 0], sizes = [256, 96], strides = [1, 1]} : vector<256x288xf32> to vector<256x96xf32>
    %46 = vector.extract_strided_slice %44 {offsets = [0, 96], sizes = [256, 96], strides = [1, 1]} : vector<256x288xf32> to vector<256x96xf32>
    %47 = arith.addf %45, %46 : vector<256x96xf32>
    %48 = vector.extract_strided_slice %44 {offsets = [0, 192], sizes = [256, 96], strides = [1, 1]} : vector<256x288xf32> to vector<256x96xf32>
    %49 = arith.addf %47, %48 : vector<256x96xf32>
    %50 = arith.truncf %49 : vector<256x96xf32> to vector<256x96xbf16>
    %c96 = arith.constant 96 : index
    %c0_9 = arith.constant 0 : index
    %51 = vector.load %arg2[%c96, %c0_9] : memref<1024x288xbf16, #tpu.memory_space<vmem>>, vector<96x96xbf16>
    %cst_10 = arith.constant dense<0.000000e+00> : vector<256x96xf32>
    %52 = tpu.matmul %50, %51, %cst_10 {dimension_numbers = #tpu.dot_dimension_numbers<[1], [0], [0], [1], [0, 0, 1, 1], [], []>} : vector<256x96xbf16>, vector<96x96xbf16>, vector<256x96xf32> -> vector<256x96xf32>
    %c1 = arith.constant 1 : index
    %c0_11 = arith.constant 0 : index
    %53 = vector.load %arg3[%c1, %c0_11] : memref<16x288xf32, #tpu.memory_space<vmem>>, vector<1x96xf32>
    %54 = vector.broadcast %53 : vector<1x96xf32> to vector<256x96xf32>
    %55 = arith.addf %52, %54 : vector<256x96xf32>
    %56 = arith.addf %0, %55 : vector<256x96xf32>
    %57 = arith.truncf %56 : vector<256x96xf32> to vector<256x96xbf16>
    %c384 = arith.constant 384 : index
    %c0_12 = arith.constant 0 : index
    %58 = vector.load %arg2[%c384, %c0_12] : memref<1024x288xbf16, #tpu.memory_space<vmem>>, vector<96x96xbf16>
    %cst_13 = arith.constant dense<0.000000e+00> : vector<256x96xf32>
    %59 = tpu.matmul %57, %58, %cst_13 {dimension_numbers = #tpu.dot_dimension_numbers<[1], [0], [0], [1], [0, 0, 1, 1], [], []>} : vector<256x96xbf16>, vector<96x96xbf16>, vector<256x96xf32> -> vector<256x96xf32>
    %60 = arith.subf %56, %59 : vector<256x96xf32>
    %61 = arith.mulf %60, %60 : vector<256x96xf32>
    %62 = arith.truncf %61 : vector<256x96xf32> to vector<256x96xbf16>
    %c384_14 = arith.constant 384 : index
    %c0_15 = arith.constant 0 : index
    %63 = vector.load %arg2[%c384_14, %c0_15] : memref<1024x288xbf16, #tpu.memory_space<vmem>>, vector<96x96xbf16>
    %cst_16 = arith.constant dense<0.000000e+00> : vector<256x96xf32>
    %64 = tpu.matmul %62, %63, %cst_16 {dimension_numbers = #tpu.dot_dimension_numbers<[1], [0], [0], [1], [0, 0, 1, 1], [], []>} : vector<256x96xbf16>, vector<96x96xbf16>, vector<256x96xf32> -> vector<256x96xf32>
    %cst_17 = arith.constant 9.99999974E-6 : f32
    %65 = vector.broadcast %cst_17 : f32 to vector<256x96xf32>
    %66 = arith.addf %64, %65 : vector<256x96xf32>
    %67 = math.rsqrt %66 : vector<256x96xf32>
    %68 = arith.mulf %60, %67 : vector<256x96xf32>
    %c2 = arith.constant 2 : index
    %c0_18 = arith.constant 0 : index
    %69 = vector.load %arg3[%c2, %c0_18] : memref<16x288xf32, #tpu.memory_space<vmem>>, vector<1x96xf32>
    %70 = vector.broadcast %69 : vector<1x96xf32> to vector<256x96xf32>
    %71 = arith.mulf %68, %70 : vector<256x96xf32>
    %c3 = arith.constant 3 : index
    %c0_19 = arith.constant 0 : index
    %72 = vector.load %arg3[%c3, %c0_19] : memref<16x288xf32, #tpu.memory_space<vmem>>, vector<1x96xf32>
    %73 = vector.broadcast %72 : vector<1x96xf32> to vector<256x96xf32>
    %74 = arith.addf %71, %73 : vector<256x96xf32>
    %75 = arith.truncf %74 : vector<256x96xf32> to vector<256x96xbf16>
    %c192 = arith.constant 192 : index
    %c0_20 = arith.constant 0 : index
    %76 = vector.load %arg2[%c192, %c0_20] : memref<1024x288xbf16, #tpu.memory_space<vmem>>, vector<96x96xbf16>
    %cst_21 = arith.constant dense<0.000000e+00> : vector<256x96xf32>
    %77 = tpu.matmul %75, %76, %cst_21 {dimension_numbers = #tpu.dot_dimension_numbers<[1], [0], [0], [1], [0, 0, 1, 1], [], []>} : vector<256x96xbf16>, vector<96x96xbf16>, vector<256x96xf32> -> vector<256x96xf32>
    %78 = arith.addf %74, %77 : vector<256x96xf32>
    %c4 = arith.constant 4 : index
    %c0_22 = arith.constant 0 : index
    %79 = vector.load %arg3[%c4, %c0_22] : memref<16x288xf32, #tpu.memory_space<vmem>>, vector<1x96xf32>
    %80 = vector.broadcast %79 : vector<1x96xf32> to vector<256x96xf32>
    %81 = arith.addf %78, %80 : vector<256x96xf32>
    %82 = arith.truncf %81 : vector<256x96xf32> to vector<256x96xbf16>
    %c384_23 = arith.constant 384 : index
    %c0_24 = arith.constant 0 : index
    %83 = vector.load %arg2[%c384_23, %c0_24] : memref<1024x288xbf16, #tpu.memory_space<vmem>>, vector<96x96xbf16>
    %cst_25 = arith.constant dense<0.000000e+00> : vector<256x96xf32>
    %84 = tpu.matmul %82, %83, %cst_25 {dimension_numbers = #tpu.dot_dimension_numbers<[1], [0], [0], [1], [0, 0, 1, 1], [], []>} : vector<256x96xbf16>, vector<96x96xbf16>, vector<256x96xf32> -> vector<256x96xf32>
    %85 = arith.subf %81, %84 : vector<256x96xf32>
    %86 = arith.mulf %85, %85 : vector<256x96xf32>
    %87 = arith.truncf %86 : vector<256x96xf32> to vector<256x96xbf16>
    %c384_26 = arith.constant 384 : index
    %c0_27 = arith.constant 0 : index
    %88 = vector.load %arg2[%c384_26, %c0_27] : memref<1024x288xbf16, #tpu.memory_space<vmem>>, vector<96x96xbf16>
    %cst_28 = arith.constant dense<0.000000e+00> : vector<256x96xf32>
    %89 = tpu.matmul %87, %88, %cst_28 {dimension_numbers = #tpu.dot_dimension_numbers<[1], [0], [0], [1], [0, 0, 1, 1], [], []>} : vector<256x96xbf16>, vector<96x96xbf16>, vector<256x96xf32> -> vector<256x96xf32>
    %cst_29 = arith.constant 9.99999974E-6 : f32
    %90 = vector.broadcast %cst_29 : f32 to vector<256x96xf32>
    %91 = arith.addf %89, %90 : vector<256x96xf32>
    %92 = math.rsqrt %91 : vector<256x96xf32>
    %93 = arith.mulf %85, %92 : vector<256x96xf32>
    %c5 = arith.constant 5 : index
    %c0_30 = arith.constant 0 : index
    %94 = vector.load %arg3[%c5, %c0_30] : memref<16x288xf32, #tpu.memory_space<vmem>>, vector<1x96xf32>
    %95 = vector.broadcast %94 : vector<1x96xf32> to vector<256x96xf32>
    %96 = arith.mulf %93, %95 : vector<256x96xf32>
    %c6 = arith.constant 6 : index
    %c0_31 = arith.constant 0 : index
    %97 = vector.load %arg3[%c6, %c0_31] : memref<16x288xf32, #tpu.memory_space<vmem>>, vector<1x96xf32>
    %98 = vector.broadcast %97 : vector<1x96xf32> to vector<256x96xf32>
    %99 = arith.addf %96, %98 : vector<256x96xf32>
    %100 = arith.truncf %99 : vector<256x96xf32> to vector<256x96xbf16>
    %c288 = arith.constant 288 : index
    %c0_32 = arith.constant 0 : index
    %101 = vector.load %arg2[%c288, %c0_32] : memref<1024x288xbf16, #tpu.memory_space<vmem>>, vector<96x72xbf16>
    %cst_33 = arith.constant dense<0.000000e+00> : vector<256x72xf32>
    %102 = tpu.matmul %100, %101, %cst_33 {dimension_numbers = #tpu.dot_dimension_numbers<[1], [0], [0], [1], [0, 0, 1, 1], [], []>} : vector<256x96xbf16>, vector<96x72xbf16>, vector<256x72xf32> -> vector<256x72xf32>
    %c7 = arith.constant 7 : index
    %c0_34 = arith.constant 0 : index
    %103 = vector.load %arg3[%c7, %c0_34] : memref<16x288xf32, #tpu.memory_space<vmem>>, vector<1x72xf32>
    %104 = vector.broadcast %103 : vector<1x72xf32> to vector<256x72xf32>
    %105 = arith.addf %102, %104 : vector<256x72xf32>
    %cst_35 = arith.constant 5.000000e-01 : f32
    %106 = vector.broadcast %cst_35 : f32 to vector<256x72xf32>
    %107 = arith.mulf %106, %105 : vector<256x72xf32>
    %cst_36 = arith.constant 4.471500e-02 : f32
    %108 = vector.broadcast %cst_36 : f32 to vector<256x72xf32>
    %109 = arith.mulf %108, %105 : vector<256x72xf32>
    %110 = arith.mulf %109, %105 : vector<256x72xf32>
    %111 = arith.mulf %110, %105 : vector<256x72xf32>
    %112 = arith.addf %105, %111 : vector<256x72xf32>
    %cst_37 = arith.constant 0.797884583 : f32
    %113 = vector.broadcast %cst_37 : f32 to vector<256x72xf32>
    %114 = arith.mulf %113, %112 : vector<256x72xf32>
    %115 = math.tanh %114 : vector<256x72xf32>
    %cst_38 = arith.constant 1.000000e+00 : f32
    %116 = vector.broadcast %cst_38 : f32 to vector<256x72xf32>
    %117 = arith.addf %116, %115 : vector<256x72xf32>
    %118 = arith.mulf %107, %117 : vector<256x72xf32>
    %c8 = arith.constant 8 : index
    %c0_39 = arith.constant 0 : index
    %119 = vector.load %arg3[%c8, %c0_39] : memref<16x288xf32, #tpu.memory_space<vmem>>, vector<1x72xf32>
    %120 = vector.broadcast %119 : vector<1x72xf32> to vector<256x72xf32>
    %121 = arith.mulf %118, %120 : vector<256x72xf32>
    %c9 = arith.constant 9 : index
    %c0_40 = arith.constant 0 : index
    %122 = vector.load %arg3[%c9, %c0_40] : memref<16x288xf32, #tpu.memory_space<vmem>>, vector<1x72xf32>
    %123 = vector.broadcast %122 : vector<1x72xf32> to vector<256x72xf32>
    %124 = arith.addf %121, %123 : vector<256x72xf32>
    %125 = arith.truncf %124 : vector<256x72xf32> to vector<256x72xbf16>
    %c480 = arith.constant 480 : index
    %c0_41 = arith.constant 0 : index
    %126 = vector.load %arg2[%c480, %c0_41] : memref<1024x288xbf16, #tpu.memory_space<vmem>>, vector<72x48xbf16>
    %cst_42 = arith.constant dense<0.000000e+00> : vector<256x48xf32>
    %127 = tpu.matmul %125, %126, %cst_42 {dimension_numbers = #tpu.dot_dimension_numbers<[1], [0], [0], [1], [0, 0, 1, 1], [], []>} : vector<256x72xbf16>, vector<72x48xbf16>, vector<256x48xf32> -> vector<256x48xf32>
    %c10 = arith.constant 10 : index
    %c0_43 = arith.constant 0 : index
    %128 = vector.load %arg3[%c10, %c0_43] : memref<16x288xf32, #tpu.memory_space<vmem>>, vector<1x48xf32>
    %129 = vector.broadcast %128 : vector<1x48xf32> to vector<256x48xf32>
    %130 = arith.addf %127, %129 : vector<256x48xf32>
    %131 = arith.truncf %130 : vector<256x48xf32> to vector<256x48xbf16>
    %c640 = arith.constant 640 : index
    %c0_44 = arith.constant 0 : index
    %132 = vector.load %arg2[%c640, %c0_44] : memref<1024x288xbf16, #tpu.memory_space<vmem>>, vector<48x72xbf16>
    %cst_45 = arith.constant dense<0.000000e+00> : vector<256x72xf32>
    %133 = tpu.matmul %131, %132, %cst_45 {dimension_numbers = #tpu.dot_dimension_numbers<[1], [0], [0], [1], [0, 0, 1, 1], [], []>} : vector<256x48xbf16>, vector<48x72xbf16>, vector<256x72xf32> -> vector<256x72xf32>
    %c11 = arith.constant 11 : index
    %c0_46 = arith.constant 0 : index
    %134 = vector.load %arg3[%c11, %c0_46] : memref<16x288xf32, #tpu.memory_space<vmem>>, vector<1x72xf32>
    %135 = vector.broadcast %134 : vector<1x72xf32> to vector<256x72xf32>
    %136 = arith.addf %133, %135 : vector<256x72xf32>
    %cst_47 = arith.constant 5.000000e-01 : f32
    %137 = vector.broadcast %cst_47 : f32 to vector<256x72xf32>
    %138 = arith.mulf %137, %136 : vector<256x72xf32>
    %cst_48 = arith.constant 4.471500e-02 : f32
    %139 = vector.broadcast %cst_48 : f32 to vector<256x72xf32>
    %140 = arith.mulf %139, %136 : vector<256x72xf32>
    %141 = arith.mulf %140, %136 : vector<256x72xf32>
    %142 = arith.mulf %141, %136 : vector<256x72xf32>
    %143 = arith.addf %136, %142 : vector<256x72xf32>
    %cst_49 = arith.constant 0.797884583 : f32
    %144 = vector.broadcast %cst_49 : f32 to vector<256x72xf32>
    %145 = arith.mulf %144, %143 : vector<256x72xf32>
    %146 = math.tanh %145 : vector<256x72xf32>
    %cst_50 = arith.constant 1.000000e+00 : f32
    %147 = vector.broadcast %cst_50 : f32 to vector<256x72xf32>
    %148 = arith.addf %147, %146 : vector<256x72xf32>
    %149 = arith.mulf %138, %148 : vector<256x72xf32>
    %c12 = arith.constant 12 : index
    %c0_51 = arith.constant 0 : index
    %150 = vector.load %arg3[%c12, %c0_51] : memref<16x288xf32, #tpu.memory_space<vmem>>, vector<1x72xf32>
    %151 = vector.broadcast %150 : vector<1x72xf32> to vector<256x72xf32>
    %152 = arith.mulf %149, %151 : vector<256x72xf32>
    %c13 = arith.constant 13 : index
    %c0_52 = arith.constant 0 : index
    %153 = vector.load %arg3[%c13, %c0_52] : memref<16x288xf32, #tpu.memory_space<vmem>>, vector<1x72xf32>
    %154 = vector.broadcast %153 : vector<1x72xf32> to vector<256x72xf32>
    %155 = arith.addf %152, %154 : vector<256x72xf32>
    %156 = arith.truncf %155 : vector<256x72xf32> to vector<256x72xbf16>
    %c560 = arith.constant 560 : index
    %c0_53 = arith.constant 0 : index
    %157 = vector.load %arg2[%c560, %c0_53] : memref<1024x288xbf16, #tpu.memory_space<vmem>>, vector<72x96xbf16>
    %cst_54 = arith.constant dense<0.000000e+00> : vector<256x96xf32>
    %158 = tpu.matmul %156, %157, %cst_54 {dimension_numbers = #tpu.dot_dimension_numbers<[1], [0], [0], [1], [0, 0, 1, 1], [], []>} : vector<256x72xbf16>, vector<72x96xbf16>, vector<256x96xf32> -> vector<256x96xf32>
    %c14 = arith.constant 14 : index
    %c0_55 = arith.constant 0 : index
    %159 = vector.load %arg3[%c14, %c0_55] : memref<16x288xf32, #tpu.memory_space<vmem>>, vector<1x96xf32>
    %160 = vector.broadcast %159 : vector<1x96xf32> to vector<256x96xf32>
    %161 = arith.addf %158, %160 : vector<256x96xf32>
    %c0_56 = arith.constant 0 : index
    %c0_57 = arith.constant 0 : index
    %162 = vector.load %arg4[%c0_56, %c0_57] : memref<256x48xf32, #tpu.memory_space<vmem>>, vector<256x48xf32>
    tpu.vector_store %arg4[%c0_56, %c0_57], %130 {strides = array<i32>} : memref<256x48xf32, #tpu.memory_space<vmem>>, vector<256x48xf32>,
    %c0_58 = arith.constant 0 : index
    %c0_59 = arith.constant 0 : index
    %163 = vector.load %arg5[%c0_58, %c0_59] : memref<256x96xf32, #tpu.memory_space<vmem>>, vector<256x96xf32>
    tpu.vector_store %arg5[%c0_58, %c0_59], %161 {strides = array<i32>} : memref<256x96xf32, #tpu.memory_space<vmem>>, vector<256x96xf32>,
    return
  }
  func.func @transform_0(%arg0: i32) -> (i32, i32) {
    %c0_i32 = arith.constant 0 : i32
    %c0_i32_0 = arith.constant 0 : i32
    return %arg0, %c0_i32 : i32, i32
  }
  func.func @transform_1(%arg0: i32) -> (i32, i32) {
    %c0_i32 = arith.constant 0 : i32
    %c0_i32_0 = arith.constant 0 : i32
    %c0_i32_1 = arith.constant 0 : i32
    return %c0_i32, %c0_i32_0 : i32, i32
  }
  func.func @transform_2(%arg0: i32) -> (i32, i32) {
    %c0_i32 = arith.constant 0 : i32
    %c0_i32_0 = arith.constant 0 : i32
    %c0_i32_1 = arith.constant 0 : i32
    return %c0_i32, %c0_i32_0 : i32, i32
  }
  func.func @transform_3(%arg0: i32) -> (i32, i32) {
    %c0_i32 = arith.constant 0 : i32
    %c0_i32_0 = arith.constant 0 : i32
    return %arg0, %c0_i32 : i32, i32
  }
  func.func @transform_4(%arg0: i32) -> (i32, i32) {
    %c0_i32 = arith.constant 0 : i32
    %c0_i32_0 = arith.constant 0 : i32
    return %arg0, %c0_i32 : i32, i32
  }
}

</mosaic_0001>

<llo_original>
// kernel: autoencoder_forward.1
$region0: #{autoencoder_forward.1}
  #allocation0 [shape = 'u32[]', space=smem, size = 0x4, offset = 0x4, fixed_abs, tag = 'smem constant byte address 0x4 - core index']
  #allocation1 [shape = 'u32[144,128]{1,0:T(1,128)}', space=vmem, size = 0x12000, scoped, tag = 'internal scratch']
  %s0 = inlined_call_operand.vmem [shape: f32[256,96], index: 0, kind: input, shape index: {}]
  %s1 = inlined_call_operand.vmem [shape: bf16[1024,288], index: 1, kind: input, shape index: {}]
  %s2 = inlined_call_operand.vmem [shape: f32[16,288], index: 2, kind: input, shape index: {}]
  %s3 = inlined_call_operand.vmem [shape: f32[256,48], index: 3, kind: output, shape index: {0}]
  %s4 = inlined_call_operand.vmem [shape: f32[256,96], index: 4, kind: output, shape index: {1}]
  %5 = xla_tuple %s3, %s4
  %s6 = sld [smem:[#allocation0]]
  $region30: #{autoencoder_forward.1} parent=0
    _
  %s8 = ssub.s32 1, %s6
  %s9 = scalar_select 0, %s8, %s6
  // Predicated region
  $region2: #{autoencoder_forward.1} parent=0 // pred_check
    _
  $region3: #{autoencoder_forward.1} parent=0 // pred_check_branch
    %11 = sbr.rel (0) target = $region5
  $region4: #{autoencoder_forward.1} parent=0 // pred_region
    _
  $region5: #{autoencoder_forward.1} parent=0 // pred_fallthru
    _
  // Predicated region
  $region6: #{autoencoder_forward.1} parent=0 // pred_check
    _
  $region7: #{autoencoder_forward.1} parent=0 // pred_check_branch
    %13 = sbr.rel (0) target = $region9
  $region8: #{autoencoder_forward.1} parent=0 // pred_region
    _
  $region9: #{autoencoder_forward.1} parent=0 // pred_fallthru
    _
  // Predicated region
  $region10: #{autoencoder_forward.1} parent=0 // pred_check
    _
  $region11: #{autoencoder_forward.1} parent=0 // pred_check_branch
    %15 = sbr.rel (0) target = $region13
  $region12: #{autoencoder_forward.1} parent=0 // pred_region
    _
  $region13: #{autoencoder_forward.1} parent=0 // pred_fallthru
    _
  %v17 = vld [vmem:[%s0] sm:$0xff]
  %v18 = vld [vmem:[%s0 + $0x8] sm:$0xff]
  %v19 = vld [vmem:[%s0 + $0x10] sm:$0xff]
  %v20 = vld [vmem:[%s0 + $0x18] sm:$0xff]
  %v21 = vld [vmem:[%s0 + $0x20] sm:$0xff]
  %v22 = vld [vmem:[%s0 + $0x28] sm:$0xff]
  %v23 = vld [vmem:[%s0 + $0x30] sm:$0xff]
  %v24 = vld [vmem:[%s0 + $0x38] sm:$0xff]
  %v25 = vld [vmem:[%s0 + $0x40] sm:$0xff]
  %v26 = vld [vmem:[%s0 + $0x48] sm:$0xff]
  %v27 = vld [vmem:[%s0 + $0x50] sm:$0xff]
  %v28 = vld [vmem:[%s0 + $0x58] sm:$0xff]
  %v29 = vld [vmem:[%s0 + $0x60] sm:$0xff]
  %v30 = vld [vmem:[%s0 + $0x68] sm:$0xff]
  %v31 = vld [vmem:[%s0 + $0x70] sm:$0xff]
  %v32 = vld [vmem:[%s0 + $0x78] sm:$0xff]
  %v33 = vld [vmem:[%s0 + $0x80] sm:$0xff]
  %v34 = vld [vmem:[%s0 + $0x88] sm:$0xff]
  %v35 = vld [vmem:[%s0 + $0x90] sm:$0xff]
  %v36 = vld [vmem:[%s0 + $0x98] sm:$0xff]
  %v37 = vld [vmem:[%s0 + $0xa0] sm:$0xff]
  %v38 = vld [vmem:[%s0 + $0xa8] sm:$0xff]
  %v39 = vld [vmem:[%s0 + $0xb0] sm:$0xff]
  %v40 = vld [vmem:[%s0 + $0xb8] sm:$0xff]
  %v41 = vld [vmem:[%s0 + $0xc0] sm:$0xff]
  %v42 = vld [vmem:[%s0 + $0xc8] sm:$0xff]
  %v43 = vld [vmem:[%s0 + $0xd0] sm:$0xff]
  %v44 = vld [vmem:[%s0 + $0xd8] sm:$0xff]
  %v45 = vld [vmem:[%s0 + $0xe0] sm:$0xff]
  %v46 = vld [vmem:[%s0 + $0xe8] sm:$0xff]
  %v47 = vld [vmem:[%s0 + $0xf0] sm:$0xff]
  %v48 = vld [vmem:[%s0 + $0xf8] sm:$0xff]
  %v49 = vpack.c.bf16 %v18, %v17
  %v50 = vpack.c.bf16 %v20, %v19
  %v51 = vpack.c.bf16 %v22, %v21
  %v52 = vpack.c.bf16 %v24, %v23
  %v53 = vpack.c.bf16 %v26, %v25
  %v54 = vpack.c.bf16 %v28, %v27
  %v55 = vpack.c.bf16 %v30, %v29
  %v56 = vpack.c.bf16 %v32, %v31
  %v57 = vpack.c.bf16 %v34, %v33
  %v58 = vpack.c.bf16 %v36, %v35
  %v59 = vpack.c.bf16 %v38, %v37
  %v60 = vpack.c.bf16 %v40, %v39
  %v61 = vpack.c.bf16 %v42, %v41
  %v62 = vpack.c.bf16 %v44, %v43
  %v63 = vpack.c.bf16 %v46, %v45
  %v64 = vpack.c.bf16 %v48, %v47
  %v65 = vld [vmem:[%s1] sm:$0xff]
  %v66 = vld [vmem:[%s1 + $0x8] sm:$0xf]
  %v67 = vld [vmem:[%s1 + $0xc] sm:$0xff]
  %v68 = vld [vmem:[%s1 + $0x14] sm:$0xf]
  %v69 = vld [vmem:[%s1 + $0x18] sm:$0xff]
  %v70 = vld [vmem:[%s1 + $0x20] sm:$0xf]
  %v71 = vld [vmem:[%s1 + $0x24] sm:$0xff]
  %v72 = vld [vmem:[%s1 + $0x2c] sm:$0xf]
  %v73 = vld [vmem:[%s1 + $0x30] sm:$0xff]
  %v74 = vld [vmem:[%s1 + $0x38] sm:$0xf]
  %v75 = vld [vmem:[%s1 + $0x3c] sm:$0xff]
  %v76 = vld [vmem:[%s1 + $0x44] sm:$0xf]
  %v77 = vld [vmem:[%s1 + $0x48] sm:$0xff]
  %v78 = vld [vmem:[%s1 + $0x50] sm:$0xf]
  %v79 = vld [vmem:[%s1 + $0x54] sm:$0xff]
  %v80 = vld [vmem:[%s1 + $0x5c] sm:$0xf]
  %v81 = vld [vmem:[%s1 + $0x60] sm:$0xff]
  %v82 = vld [vmem:[%s1 + $0x68] sm:$0xf]
  %v83 = vld [vmem:[%s1 + $0x6c] sm:$0xff]
  %v84 = vld [vmem:[%s1 + $0x74] sm:$0xf]
  %v85 = vld [vmem:[%s1 + $0x78] sm:$0xff]
  %v86 = vld [vmem:[%s1 + $0x80] sm:$0xf]
  %v87 = vld [vmem:[%s1 + $0x84] sm:$0xff]
  %v88 = vld [vmem:[%s1 + $0x8c] sm:$0xf]
  %v89 = vld [vmem:[%s2] ss:$8 sm:$0x7]
  %v91 = vlaneseq
  %v92 = vshrl.u32 %v91, 7
  %v93 = vsub.s32 0, %v92
  %v94 = vrot.slane %v89, %v93
  %v95 = vlaneseq
  %v96 = vshrl.u32 %v95, 7
  %v97 = vsub.s32 1, %v96
  %v98 = vrot.slane %v89, %v97
  %v99 = vlaneseq
  %v100 = vshrl.u32 %v99, 7
  %v101 = vsub.s32 2, %v100
  %v102 = vrot.slane %v89, %v101
  %v130 = vunpack.c.l.b16 %v65
  %v131 = vunpack.c.h.b16 %v65
  %v132 = vunpack.c.l.b16 %v66
  %v133 = vunpack.c.l.b16 %v67
  %v134 = vunpack.c.h.b16 %v67
  %v135 = vunpack.c.l.b16 %v68
  %v136 = vunpack.c.l.b16 %v69
  %v137 = vunpack.c.h.b16 %v69
  %v138 = vunpack.c.l.b16 %v70
  %v139 = vunpack.c.l.b16 %v71
  %v140 = vunpack.c.h.b16 %v71
  %v141 = vunpack.c.l.b16 %v72
  %v142 = vunpack.c.l.b16 %v73
  %v143 = vunpack.c.h.b16 %v73
  %v144 = vunpack.c.l.b16 %v74
  %v145 = vunpack.c.l.b16 %v75
  %v146 = vunpack.c.h.b16 %v75
  %v147 = vunpack.c.l.b16 %v76
  %v148 = vunpack.c.l.b16 %v77
  %v149 = vunpack.c.h.b16 %v77
  %v150 = vunpack.c.l.b16 %v78
  %v151 = vunpack.c.l.b16 %v79
  %v152 = vunpack.c.h.b16 %v79
  %v153 = vunpack.c.l.b16 %v80
  %v154 = vunpack.c.l.b16 %v81
  %v155 = vunpack.c.h.b16 %v81
  %v156 = vunpack.c.l.b16 %v82
  %v157 = vunpack.c.l.b16 %v83
  %v158 = vunpack.c.h.b16 %v83
  %v159 = vunpack.c.l.b16 %v84
  %v160 = vunpack.c.l.b16 %v85
  %v161 = vunpack.c.h.b16 %v85
  %v162 = vunpack.c.l.b16 %v86
  %v163 = vunpack.c.l.b16 %v87
  %v164 = vunpack.c.h.b16 %v87
  %v165 = vunpack.c.l.b16 %v88
  %v166 = vpack.c.b16 %v133, %v130
  %v167 = vpack.c.b16 %v134, %v131
  %v168 = vpack.c.b16 %v135, %v132
  %v169 = vpack.c.b16 %v139, %v136
  %v170 = vpack.c.b16 %v140, %v137
  %v171 = vpack.c.b16 %v141, %v138
  %v172 = vpack.c.b16 %v145, %v142
  %v173 = vpack.c.b16 %v146, %v143
  %v174 = vpack.c.b16 %v147, %v144
  %v175 = vpack.c.b16 %v151, %v148
  %v176 = vpack.c.b16 %v152, %v149
  %v177 = vpack.c.b16 %v153, %v150
  %v178 = vpack.c.b16 %v157, %v154
  %v179 = vpack.c.b16 %v158, %v155
  %v180 = vpack.c.b16 %v159, %v156
  %v181 = vpack.c.b16 %v163, %v160
  %v182 = vpack.c.b16 %v164, %v161
  %v183 = vpack.c.b16 %v165, %v162
  %vm202 = vcmask 785408
  %v204 = vsel %vm202, %v49, 0
  %v207 = vsel %vm202, %v50, 0
  %v210 = vsel %vm202, %v51, 0
  %v213 = vsel %vm202, %v52, 0
  %v216 = vsel %vm202, %v53, 0
  %v219 = vsel %vm202, %v54, 0
  %v222 = vsel %vm202, %v55, 0
  %v225 = vsel %vm202, %v56, 0
  %v228 = vsel %vm202, %v57, 0
  %v231 = vsel %vm202, %v58, 0
  %v234 = vsel %vm202, %v59, 0
  %v237 = vsel %vm202, %v60, 0
  %v240 = vsel %vm202, %v61, 0
  %v243 = vsel %vm202, %v62, 0
  %v246 = vsel %vm202, %v63, 0
  %v249 = vsel %vm202, %v64, 0
  %251 = vmatprep.subr.bf16.mxu0 %v167
  %252 = vmatpush1.bf16.msra.mxu0 %v166
  %253 = vmatprep.subr.bf16.mxu0 %v170
  %254 = vmatpush1.bf16.msra.mxu0 %v169
  %255 = vmatprep.subr.bf16.mxu0 %v173
  %256 = vmatpush1.bf16.msra.mxu0 %v172
  %257 = vmatprep.subr.bf16.mxu0 %v176
  %258 = vmatpush1.bf16.msra.mxu0 %v175
  %259 = vmatprep.subr.bf16.mxu0 %v179
  %260 = vmatpush1.bf16.msra.mxu0 %v178
  %261 = vmatprep.subr.bf16.mxu0 %v182
  %262 = vmatpush1.bf16.msra.mxu0 %v181
  %263 = vmatprep.subr.bf16.mxu0 0
  %264 = vmatpush1.bf16.msra.mxu0 0
  %265 = vmatprep.subr.bf16.mxu0 0
  %266 = vmatpush1.bf16.msra.mxu0 0
  %267 = vmatprep.subr.bf16.mxu0 0
  %268 = vmatpush1.bf16.msra.mxu0 0
  %269 = vmatprep.subr.bf16.mxu0 0
  %270 = vmatpush1.bf16.msra.mxu0 0
  %271 = vmatprep.subr.bf16.mxu0 0
  %272 = vmatpush1.bf16.msra.mxu0 0
  %273 = vmatprep.subr.bf16.mxu0 0
  %274 = vmatpush1.bf16.msra.mxu0 0
  %275 = vmatprep.subr.bf16.mxu0 0
  %276 = vmatpush1.bf16.msra.mxu0 0
  %277 = vmatprep.subr.bf16.mxu0 0
  %278 = vmatpush1.bf16.msra.mxu0 0
  %279 = vmatprep.subr.bf16.mxu0 0
  %280 = vmatpush1.bf16.msra.mxu0 0
  %281 = vmatprep.subr.bf16.mxu0 0
  %282 = vmatpush1.bf16.msra.mxu0 0
  %283 = vmatprep.mubr.bf16.mxu0 0
  %284 = vmatmul.mubr.bf16.gmra.mrb[0].mxu0 %v204
  %v285 = vpop.f32.mrb[0].mxu0
  %v286 = vadd.f32 %v94, %v285
  %v287 = vpop.f32.mrb[0].mxu0
  %v288 = vadd.f32 %v98, %v287
  %v289 = vpop.f32.mrb[0].mxu0
  %v290 = vadd.f32 %v94, %v289
  %v291 = vpop.f32.mrb[0].mxu0
  %v292 = vadd.f32 %v98, %v291
  %293 = vmatprep.mubr.bf16.mxu0 0
  %294 = vmatmul.mubr.bf16.gmra.mrb[0].mxu0 %v207
  %v295 = vpop.f32.mrb[0].mxu0
  %v296 = vadd.f32 %v94, %v295
  %v297 = vpop.f32.mrb[0].mxu0
  %v298 = vadd.f32 %v98, %v297
  %v299 = vpop.f32.mrb[0].mxu0
  %v300 = vadd.f32 %v94, %v299
  %v301 = vpop.f32.mrb[0].mxu0
  %v302 = vadd.f32 %v98, %v301
  %303 = vmatprep.mubr.bf16.mxu0 0
  %304 = vmatmul.mubr.bf16.gmra.mrb[0].mxu0 %v210
  %v305 = vpop.f32.mrb[0].mxu0
  %v306 = vadd.f32 %v94, %v305
  %v307 = vpop.f32.mrb[0].mxu0
  %v308 = vadd.f32 %v98, %v307
  %v309 = vpop.f32.mrb[0].mxu0
  %v310 = vadd.f32 %v94, %v309
  %v311 = vpop.f32.mrb[0].mxu0
  %v312 = vadd.f32 %v98, %v311
  %313 = vmatprep.mubr.bf16.mxu0 0
  %314 = vmatmul.mubr.bf16.gmra.mrb[0].mxu0 %v213
  %v315 = vpop.f32.mrb[0].mxu0
  %v316 = vadd.f32 %v94, %v315
  %v317 = vpop.f32.mrb[0].mxu0
  %v318 = vadd.f32 %v98, %v317
  %v319 = vpop.f32.mrb[0].mxu0
  %v320 = vadd.f32 %v94, %v319
  %v321 = vpop.f32.mrb[0].mxu0
  %v322 = vadd.f32 %v98, %v321
  %323 = vmatprep.mubr.bf16.mxu0 0
  %324 = vmatmul.mubr.bf16.gmra.mrb[0].mxu0 %v216
  %v325 = vpop.f32.mrb[0].mxu0
  %v326 = vadd.f32 %v94, %v325
  %v327 = vpop.f32.mrb[0].mxu0
  %v328 = vadd.f32 %v98, %v327
  %v329 = vpop.f32.mrb[0].mxu0
  %v330 = vadd.f32 %v94, %v329
  %v331 = vpop.f32.mrb[0].mxu0
  %v332 = vadd.f32 %v98, %v331
  %333 = vmatprep.mubr.bf16.mxu0 0
  %334 = vmatmul.mubr.bf16.gmra.mrb[0].mxu0 %v219
  %v335 = vpop.f32.mrb[0].mxu0
  %v336 = vadd.f32 %v94, %v335
  %v337 = vpop.f32.mrb[0].mxu0
  %v338 = vadd.f32 %v98, %v337
  %v339 = vpop.f32.mrb[0].mxu0
  %v340 = vadd.f32 %v94, %v339
  %v341 = vpop.f32.mrb[0].mxu0
  %v342 = vadd.f32 %v98, %v341
  %343 = vmatprep.mubr.bf16.mxu0 0
  %344 = vmatmul.mubr.bf16.gmra.mrb[0].mxu0 %v222
  %v345 = vpop.f32.mrb[0].mxu0
  %v346 = vadd.f32 %v94, %v345
  %v347 = vpop.f32.mrb[0].mxu0
  %v348 = vadd.f32 %v98, %v347
  %v349 = vpop.f32.mrb[0].mxu0
  %v350 = vadd.f32 %v94, %v349
  %v351 = vpop.f32.mrb[0].mxu0
  %v352 = vadd.f32 %v98, %v351
  %353 = vmatprep.mubr.bf16.mxu0 0
  %354 = vmatmul.mubr.bf16.gmra.mrb[0].mxu0 %v225
  %v355 = vpop.f32.mrb[0].mxu0
  %v356 = vadd.f32 %v94, %v355
  %v357 = vpop.f32.mrb[0].mxu0
  %v358 = vadd.f32 %v98, %v357
  %v359 = vpop.f32.mrb[0].mxu0
  %v360 = vadd.f32 %v94, %v359
  %v361 = vpop.f32.mrb[0].mxu0
  %v362 = vadd.f32 %v98, %v361
  %363 = vmatprep.mubr.bf16.mxu0 0
  %364 = vmatmul.mubr.bf16.gmra.mrb[0].mxu0 %v228
  %v365 = vpop.f32.mrb[0].mxu0
  %v366 = vadd.f32 %v94, %v365
  %v367 = vpop.f32.mrb[0].mxu0
  %v368 = vadd.f32 %v98, %v367
  %v369 = vpop.f32.mrb[0].mxu0
  %v370 = vadd.f32 %v94, %v369
  %v371 = vpop.f32.mrb[0].mxu0
  %v372 = vadd.f32 %v98, %v371
  %373 = vmatprep.mubr.bf16.mxu0 0
  %374 = vmatmul.mubr.bf16.gmra.mrb[0].mxu0 %v231
  %v375 = vpop.f32.mrb[0].mxu0
  %v376 = vadd.f32 %v94, %v375
  %v377 = vpop.f32.mrb[0].mxu0
  %v378 = vadd.f32 %v98, %v377
  %v379 = vpop.f32.mrb[0].mxu0
  %v380 = vadd.f32 %v94, %v379
  %v381 = vpop.f32.mrb[0].mxu0
  %v382 = vadd.f32 %v98, %v381
  %383 = vmatprep.mubr.bf16.mxu0 0
  %384 = vmatmul.mubr.bf16.gmra.mrb[0].mxu0 %v234
  %v385 = vpop.f32.mrb[0].mxu0
  %v386 = vadd.f32 %v94, %v385
  %v387 = vpop.f32.mrb[0].mxu0
  %v388 = vadd.f32 %v98, %v387
  %v389 = vpop.f32.mrb[0].mxu0
  %v390 = vadd.f32 %v94, %v389
  %v391 = vpop.f32.mrb[0].mxu0
  %v392 = vadd.f32 %v98, %v391
  %393 = vmatprep.mubr.bf16.mxu0 0
  %394 = vmatmul.mubr.bf16.gmra.mrb[0].mxu0 %v237
  %v395 = vpop.f32.mrb[0].mxu0
  %v396 = vadd.f32 %v94, %v395
  %v397 = vpop.f32.mrb[0].mxu0
  %v398 = vadd.f32 %v98, %v397
  %v399 = vpop.f32.mrb[0].mxu0
  %v400 = vadd.f32 %v94, %v399
  %v401 = vpop.f32.mrb[0].mxu0
  %v402 = vadd.f32 %v98, %v401
  %403 = vmatprep.mubr.bf16.mxu0 0
  %404 = vmatmul.mubr.bf16.gmra.mrb[0].mxu0 %v240
  %v405 = vpop.f32.mrb[0].mxu0
  %v406 = vadd.f32 %v94, %v405
  %v407 = vpop.f32.mrb[0].mxu0
  %v408 = vadd.f32 %v98, %v407
  %v409 = vpop.f32.mrb[0].mxu0
  %v410 = vadd.f32 %v94, %v409
  %v411 = vpop.f32.mrb[0].mxu0
  %v412 = vadd.f32 %v98, %v411
  %413 = vmatprep.mubr.bf16.mxu0 0
  %414 = vmatmul.mubr.bf16.gmra.mrb[0].mxu0 %v243
  %v415 = vpop.f32.mrb[0].mxu0
  %v416 = vadd.f32 %v94, %v415
  %v417 = vpop.f32.mrb[0].mxu0
  %v418 = vadd.f32 %v98, %v417
  %v419 = vpop.f32.mrb[0].mxu0
  %v420 = vadd.f32 %v94, %v419
  %v421 = vpop.f32.mrb[0].mxu0
  %v422 = vadd.f32 %v98, %v421
  %423 = vmatprep.mubr.bf16.mxu0 0
  %424 = vmatmul.mubr.bf16.gmra.mrb[0].mxu0 %v246
  %v425 = vpop.f32.mrb[0].mxu0
  %v426 = vadd.f32 %v94, %v425
  %v427 = vpop.f32.mrb[0].mxu0
  %v428 = vadd.f32 %v98, %v427
  %v429 = vpop.f32.mrb[0].mxu0
  %v430 = vadd.f32 %v94, %v429
  %v431 = vpop.f32.mrb[0].mxu0
  %v432 = vadd.f32 %v98, %v431
  %433 = vmatprep.mubr.bf16.mxu0 0
  %434 = vmatmul.mubr.bf16.gmra.mrb[0].mxu0 %v249
  %v435 = vpop.f32.mrb[0].mxu0
  %v436 = vadd.f32 %v94, %v435
  %v437 = vpop.f32.mrb[0].mxu0
  %v438 = vadd.f32 %v98, %v437
  %v439 = vpop.f32.mrb[0].mxu0
  %v440 = vadd.f32 %v94, %v439
  %v441 = vpop.f32.mrb[0].mxu0
  %v442 = vadd.f32 %v98, %v441
  %443 = vdwg.mxu0
  %444 = vmatprep.subr.bf16.mxu0 0
  %445 = vmatpush1.bf16.msra.mxu0 %v168
  %446 = vmatprep.subr.bf16.mxu0 0
  %447 = vmatpush1.bf16.msra.mxu0 %v171
  %448 = vmatprep.subr.bf16.mxu0 0
  %449 = vmatpush1.bf16.msra.mxu0 %v174
  %450 = vmatprep.subr.bf16.mxu0 0
  %451 = vmatpush1.bf16.msra.mxu0 %v177
  %452 = vmatprep.subr.bf16.mxu0 0
  %453 = vmatpush1.bf16.msra.mxu0 %v180
  %454 = vmatprep.subr.bf16.mxu0 0
  %455 = vmatpush1.bf16.msra.mxu0 %v183
  %456 = vmatprep.subr.bf16.mxu0 0
  %457 = vmatpush1.bf16.msra.mxu0 0
  %458 = vmatprep.subr.bf16.mxu0 0
  %459 = vmatpush1.bf16.msra.mxu0 0
  %460 = vmatprep.subr.bf16.mxu0 0
  %461 = vmatpush1.bf16.msra.mxu0 0
  %462 = vmatprep.subr.bf16.mxu0 0
  %463 = vmatpush1.bf16.msra.mxu0 0
  %464 = vmatprep.subr.bf16.mxu0 0
  %465 = vmatpush1.bf16.msra.mxu0 0
  %466 = vmatprep.subr.bf16.mxu0 0
  %467 = vmatpush1.bf16.msra.mxu0 0
  %468 = vmatprep.subr.bf16.mxu0 0
  %469 = vmatpush1.bf16.msra.mxu0 0
  %470 = vmatprep.subr.bf16.mxu0 0
  %471 = vmatpush1.bf16.msra.mxu0 0
  %472 = vmatprep.subr.bf16.mxu0 0
  %473 = vmatpush1.bf16.msra.mxu0 0
  %474 = vmatprep.subr.bf16.mxu0 0
  %475 = vmatpush1.bf16.msra.mxu0 0
  %476 = vmatprep.mubr.bf16.mxu0 0
  %477 = vmatmul.mubr.bf16.gmra.mrb[0].mxu0 %v204
  %v478 = vpop.f32.mrb[0].mxu0
  %v479 = vadd.f32 %v102, %v478
  %v480 = vpop.f32.mrb[0].mxu0
  %v481 = vpop.f32.mrb[0].mxu0
  %v482 = vadd.f32 %v102, %v481
  %v483 = vpop.f32.mrb[0].mxu0
  %484 = vmatprep.mubr.bf16.mxu0 0
  %485 = vmatmul.mubr.bf16.gmra.mrb[0].mxu0 %v207
  %v486 = vpop.f32.mrb[0].mxu0
  %v487 = vadd.f32 %v102, %v486
  %v488 = vpop.f32.mrb[0].mxu0
  %v489 = vpop.f32.mrb[0].mxu0
  %v490 = vadd.f32 %v102, %v489
  %v491 = vpop.f32.mrb[0].mxu0
  %492 = vmatprep.mubr.bf16.mxu0 0
  %493 = vmatmul.mubr.bf16.gmra.mrb[0].mxu0 %v210
  %v494 = vpop.f32.mrb[0].mxu0
  %v495 = vadd.f32 %v102, %v494
  %v496 = vpop.f32.mrb[0].mxu0
  %v497 = vpop.f32.mrb[0].mxu0
  %v498 = vadd.f32 %v102, %v497
  %v499 = vpop.f32.mrb[0].mxu0
  %500 = vmatprep.mubr.bf16.mxu0 0
  %501 = vmatmul.mubr.bf16.gmra.mrb[0].mxu0 %v213
  %v502 = vpop.f32.mrb[0].mxu0
  %v503 = vadd.f32 %v102, %v502
  %v504 = vpop.f32.mrb[0].mxu0
  %v505 = vpop.f32.mrb[0].mxu0
  %v506 = vadd.f32 %v102, %v505
  %v507 = vpop.f32.mrb[0].mxu0
  %508 = vmatprep.mubr.bf16.mxu0 0
  %509 = vmatmul.mubr.bf16.gmra.mrb[0].mxu0 %v216
  %v510 = vpop.f32.mrb[0].mxu0
  %v511 = vadd.f32 %v102, %v510
  %v512 = vpop.f32.mrb[0].mxu0
  %v513 = vpop.f32.mrb[0].mxu0
  %v514 = vadd.f32 %v102, %v513
  %v515 = vpop.f32.mrb[0].mxu0
  %516 = vmatprep.mubr.bf16.mxu0 0
  %517 = vmatmul.mubr.bf16.gmra.mrb[0].mxu0 %v219
  %v518 = vpop.f32.mrb[0].mxu0
  %v519 = vadd.f32 %v102, %v518
  %v520 = vpop.f32.mrb[0].mxu0
  %v521 = vpop.f32.mrb[0].mxu0
  %v522 = vadd.f32 %v102, %v521
  %v523 = vpop.f32.mrb[0].mxu0
  %524 = vmatprep.mubr.bf16.mxu0 0
  %525 = vmatmul.mubr.bf16.gmra.mrb[0].mxu0 %v222
  %v526 = vpop.f32.mrb[0].mxu0
  %v527 = vadd.f32 %v102, %v526
  %v528 = vpop.f32.mrb[0].mxu0
  %v529 = vpop.f32.mrb[0].mxu0
  %v530 = vadd.f32 %v102, %v529
  %v531 = vpop.f32.mrb[0].mxu0
  %532 = vmatprep.mubr.bf16.mxu0 0
  %533 = vmatmul.mubr.bf16.gmra.mrb[0].mxu0 %v225
  %v534 = vpop.f32.mrb[0].mxu0
  %v535 = vadd.f32 %v102, %v534
  %v536 = vpop.f32.mrb[0].mxu0
  %v537 = vpop.f32.mrb[0].mxu0
  %v538 = vadd.f32 %v102, %v537
  %v539 = vpop.f32.mrb[0].mxu0
  %540 = vmatprep.mubr.bf16.mxu0 0
  %541 = vmatmul.mubr.bf16.gmra.mrb[0].mxu0 %v228
  %v542 = vpop.f32.mrb[0].mxu0
  %v543 = vadd.f32 %v102, %v542
  %v544 = vpop.f32.mrb[0].mxu0
  %v545 = vpop.f32.mrb[0].mxu0
  %v546 = vadd.f32 %v102, %v545
  %v547 = vpop.f32.mrb[0].mxu0
  %548 = vmatprep.mubr.bf16.mxu0 0
  %549 = vmatmul.mubr.bf16.gmra.mrb[0].mxu0 %v231
  %v550 = vpop.f32.mrb[0].mxu0
  %v551 = vadd.f32 %v102, %v550
  %v552 = vpop.f32.mrb[0].mxu0
  %v553 = vpop.f32.mrb[0].mxu0
  %v554 = vadd.f32 %v102, %v553
  %v555 = vpop.f32.mrb[0].mxu0
  %556 = vmatprep.mubr.bf16.mxu0 0
  %557 = vmatmul.mubr.bf16.gmra.mrb[0].mxu0 %v234
  %v558 = vpop.f32.mrb[0].mxu0
  %v559 = vadd.f32 %v102, %v558
  %v560 = vpop.f32.mrb[0].mxu0
  %v561 = vpop.f32.mrb[0].mxu0
  %v562 = vadd.f32 %v102, %v561
  %v563 = vpop.f32.mrb[0].mxu0
  %564 = vmatprep.mubr.bf16.mxu0 0
  %565 = vmatmul.mubr.bf16.gmra.mrb[0].mxu0 %v237
  %v566 = vpop.f32.mrb[0].mxu0
  %v567 = vadd.f32 %v102, %v566
  %v568 = vpop.f32.mrb[0].mxu0
  %v569 = vpop.f32.mrb[0].mxu0
  %v570 = vadd.f32 %v102, %v569
  %v571 = vpop.f32.mrb[0].mxu0
  %572 = vmatprep.mubr.bf16.mxu0 0
  %573 = vmatmul.mubr.bf16.gmra.mrb[0].mxu0 %v240
  %v574 = vpop.f32.mrb[0].mxu0
  %v575 = vadd.f32 %v102, %v574
  %v576 = vpop.f32.mrb[0].mxu0
  %v577 = vpop.f32.mrb[0].mxu0
  %v578 = vadd.f32 %v102, %v577
  %v579 = vpop.f32.mrb[0].mxu0
  %580 = vmatprep.mubr.bf16.mxu0 0
  %581 = vmatmul.mubr.bf16.gmra.mrb[0].mxu0 %v243
  %v582 = vpop.f32.mrb[0].mxu0
  %v583 = vadd.f32 %v102, %v582
  %v584 = vpop.f32.mrb[0].mxu0
  %v585 = vpop.f32.mrb[0].mxu0
  %v586 = vadd.f32 %v102, %v585
  %v587 = vpop.f32.mrb[0].mxu0
  %588 = vmatprep.mubr.bf16.mxu0 0
  %589 = vmatmul.mubr.bf16.gmra.mrb[0].mxu0 %v246
  %v590 = vpop.f32.mrb[0].mxu0
  %v591 = vadd.f32 %v102, %v590
  %v592 = vpop.f32.mrb[0].mxu0
  %v593 = vpop.f32.mrb[0].mxu0
  %v594 = vadd.f32 %v102, %v593
  %v595 = vpop.f32.mrb[0].mxu0
  %596 = vmatprep.mubr.bf16.mxu0 0
  %597 = vmatmul.mubr.bf16.gmra.mrb[0].mxu0 %v249
  %v598 = vpop.f32.mrb[0].mxu0
  %v599 = vadd.f32 %v102, %v598
  %v600 = vpop.f32.mrb[0].mxu0
  %v601 = vpop.f32.mrb[0].mxu0
  %v602 = vadd.f32 %v102, %v601
  %v603 = vpop.f32.mrb[0].mxu0
  %604 = vdwg.mxu0
  %637 = vrot.lane.b32.xlu0 %v286, 96
  %v638 = vpop.permute.xlu0 %637
  %639 = vrot.lane.b32.xlu0 %v290, 96
  %v640 = vpop.permute.xlu0 %639
  %641 = vrot.lane.b32.xlu0 %v296, 96
  %v642 = vpop.permute.xlu0 %641
  %643 = vrot.lane.b32.xlu0 %v300, 96
  %v644 = vpop.permute.xlu0 %643
  %645 = vrot.lane.b32.xlu0 %v306, 96
  %v646 = vpop.permute.xlu0 %645
  %647 = vrot.lane.b32.xlu0 %v310, 96
  %v648 = vpop.permute.xlu0 %647
  %649 = vrot.lane.b32.xlu0 %v316, 96
  %v650 = vpop.permute.xlu0 %649
  %651 = vrot.lane.b32.xlu0 %v320, 96
  %v652 = vpop.permute.xlu0 %651
  %653 = vrot.lane.b32.xlu0 %v326, 96
  %v654 = vpop.permute.xlu0 %653
  %655 = vrot.lane.b32.xlu0 %v330, 96
  %v656 = vpop.permute.xlu0 %655
  %657 = vrot.lane.b32.xlu0 %v336, 96
  %v658 = vpop.permute.xlu0 %657
  %659 = vrot.lane.b32.xlu0 %v340, 96
  %v660 = vpop.permute.xlu0 %659
  %661 = vrot.lane.b32.xlu0 %v346, 96
  %v662 = vpop.permute.xlu0 %661
  %663 = vrot.lane.b32.xlu0 %v350, 96
  %v664 = vpop.permute.xlu0 %663
  %665 = vrot.lane.b32.xlu0 %v356, 96
  %v666 = vpop.permute.xlu0 %665
  %667 = vrot.lane.b32.xlu0 %v360, 96
  %v668 = vpop.permute.xlu0 %667
  %669 = vrot.lane.b32.xlu0 %v366, 96
  %v670 = vpop.permute.xlu0 %669
  %671 = vrot.lane.b32.xlu0 %v370, 96
  %v672 = vpop.permute.xlu0 %671
  %673 = vrot.lane.b32.xlu0 %v376, 96
  %v674 = vpop.permute.xlu0 %673
  %675 = vrot.lane.b32.xlu0 %v380, 96
  %v676 = vpop.permute.xlu0 %675
  %677 = vrot.lane.b32.xlu0 %v386, 96
  %v678 = vpop.permute.xlu0 %677
  %679 = vrot.lane.b32.xlu0 %v390, 96
  %v680 = vpop.permute.xlu0 %679
  %681 = vrot.lane.b32.xlu0 %v396, 96
  %v682 = vpop.permute.xlu0 %681
  %683 = vrot.lane.b32.xlu0 %v400, 96
  %v684 = vpop.permute.xlu0 %683
  %685 = vrot.lane.b32.xlu0 %v406, 96
  %v686 = vpop.permute.xlu0 %685
  %687 = vrot.lane.b32.xlu0 %v410, 96
  %v688 = vpop.permute.xlu0 %687
  %689 = vrot.lane.b32.xlu0 %v416, 96
  %v690 = vpop.permute.xlu0 %689
  %691 = vrot.lane.b32.xlu0 %v420, 96
  %v692 = vpop.permute.xlu0 %691
  %693 = vrot.lane.b32.xlu0 %v426, 96
  %v694 = vpop.permute.xlu0 %693
  %695 = vrot.lane.b32.xlu0 %v430, 96
  %v696 = vpop.permute.xlu0 %695
  %697 = vrot.lane.b32.xlu0 %v436, 96
  %v698 = vpop.permute.xlu0 %697
  %699 = vrot.lane.b32.xlu0 %v440, 96
  %v700 = vpop.permute.xlu0 %699
  %733 = vrot.lane.b32.xlu0 %v286, 64
  %v734 = vpop.permute.xlu0 %733
  %735 = vrot.lane.b32.xlu0 %v290, 64
  %v736 = vpop.permute.xlu0 %735
  %737 = vrot.lane.b32.xlu0 %v296, 64
  %v738 = vpop.permute.xlu0 %737
  %739 = vrot.lane.b32.xlu0 %v300, 64
  %v740 = vpop.permute.xlu0 %739
  %741 = vrot.lane.b32.xlu0 %v306, 64
  %v742 = vpop.permute.xlu0 %741
  %743 = vrot.lane.b32.xlu0 %v310, 64
  %v744 = vpop.permute.xlu0 %743
  %745 = vrot.lane.b32.xlu0 %v316, 64
  %v746 = vpop.permute.xlu0 %745
  %747 = vrot.lane.b32.xlu0 %v320, 64
  %v748 = vpop.permute.xlu0 %747
  %749 = vrot.lane.b32.xlu0 %v326, 64
  %v750 = vpop.permute.xlu0 %749
  %751 = vrot.lane.b32.xlu0 %v330, 64
  %v752 = vpop.permute.xlu0 %751
  %753 = vrot.lane.b32.xlu0 %v336, 64
  %v754 = vpop.permute.xlu0 %753
  %755 = vrot.lane.b32.xlu0 %v340, 64
  %v756 = vpop.permute.xlu0 %755
  %757 = vrot.lane.b32.xlu0 %v346, 64
  %v758 = vpop.permute.xlu0 %757
  %759 = vrot.lane.b32.xlu0 %v350, 64
  %v760 = vpop.permute.xlu0 %759
  %761 = vrot.lane.b32.xlu0 %v356, 64
  %v762 = vpop.permute.xlu0 %761
  %763 = vrot.lane.b32.xlu0 %v360, 64
  %v764 = vpop.permute.xlu0 %763
  %765 = vrot.lane.b32.xlu0 %v366, 64
  %v766 = vpop.permute.xlu0 %765
  %767 = vrot.lane.b32.xlu0 %v370, 64
  %v768 = vpop.permute.xlu0 %767
  %769 = vrot.lane.b32.xlu0 %v376, 64
  %v770 = vpop.permute.xlu0 %769
  %771 = vrot.lane.b32.xlu0 %v380, 64
  %v772 = vpop.permute.xlu0 %771
  %773 = vrot.lane.b32.xlu0 %v386, 64
  %v774 = vpop.permute.xlu0 %773
  %775 = vrot.lane.b32.xlu0 %v390, 64
  %v776 = vpop.permute.xlu0 %775
  %777 = vrot.lane.b32.xlu0 %v396, 64
  %v778 = vpop.permute.xlu0 %777
  %779 = vrot.lane.b32.xlu0 %v400, 64
  %v780 = vpop.permute.xlu0 %779
  %781 = vrot.lane.b32.xlu0 %v406, 64
  %v782 = vpop.permute.xlu0 %781
  %783 = vrot.lane.b32.xlu0 %v410, 64
  %v784 = vpop.permute.xlu0 %783
  %785 = vrot.lane.b32.xlu0 %v416, 64
  %v786 = vpop.permute.xlu0 %785
  %787 = vrot.lane.b32.xlu0 %v420, 64
  %v788 = vpop.permute.xlu0 %787
  %789 = vrot.lane.b32.xlu0 %v426, 64
  %v790 = vpop.permute.xlu0 %789
  %791 = vrot.lane.b32.xlu0 %v430, 64
  %v792 = vpop.permute.xlu0 %791
  %793 = vrot.lane.b32.xlu0 %v436, 64
  %v794 = vpop.permute.xlu0 %793
  %795 = vrot.lane.b32.xlu0 %v440, 64
  %v796 = vpop.permute.xlu0 %795
  %v829 = vsel %vm202, %v286, %v638
  %v830 = vsel %vm202, %v290, %v640
  %v831 = vsel %vm202, %v296, %v642
  %v832 = vsel %vm202, %v300, %v644
  %v833 = vsel %vm202, %v306, %v646
  %v834 = vsel %vm202, %v310, %v648
  %v835 = vsel %vm202, %v316, %v650
  %v836 = vsel %vm202, %v320, %v652
  %v837 = vsel %vm202, %v326, %v654
  %v838 = vsel %vm202, %v330, %v656
  %v839 = vsel %vm202, %v336, %v658
  %v840 = vsel %vm202, %v340, %v660
  %v841 = vsel %vm202, %v346, %v662
  %v842 = vsel %vm202, %v350, %v664
  %v843 = vsel %vm202, %v356, %v666
  %v844 = vsel %vm202, %v360, %v668
  %v845 = vsel %vm202, %v366, %v670
  %v846 = vsel %vm202, %v370, %v672
  %v847 = vsel %vm202, %v376, %v674
  %v848 = vsel %vm202, %v380, %v676
  %v849 = vsel %vm202, %v386, %v678
  %v850 = vsel %vm202, %v390, %v680
  %v851 = vsel %vm202, %v396, %v682
  %v852 = vsel %vm202, %v400, %v684
  %v853 = vsel %vm202, %v406, %v686
  %v854 = vsel %vm202, %v410, %v688
  %v855 = vsel %vm202, %v416, %v690
  %v856 = vsel %vm202, %v420, %v692
  %v857 = vsel %vm202, %v426, %v694
  %v858 = vsel %vm202, %v430, %v696
  %v859 = vsel %vm202, %v436, %v698
  %v860 = vsel %vm202, %v440, %v700
  %vm861 = vcmask 523264
  %v862 = vsel %vm861, %v638, %v734
  %v863 = vsel %vm861, %v640, %v736
  %v864 = vsel %vm861, %v642, %v738
  %v865 = vsel %vm861, %v644, %v740
  %v866 = vsel %vm861, %v646, %v742
  %v867 = vsel %vm861, %v648, %v744
  %v868 = vsel %vm861, %v650, %v746
  %v869 = vsel %vm861, %v652, %v748
  %v870 = vsel %vm861, %v654, %v750
  %v871 = vsel %vm861, %v656, %v752
  %v872 = vsel %vm861, %v658, %v754
  %v873 = vsel %vm861, %v660, %v756
  %v874 = vsel %vm861, %v662, %v758
  %v875 = vsel %vm861, %v664, %v760
  %v876 = vsel %vm861, %v666, %v762
  %v877 = vsel %vm861, %v668, %v764
  %v878 = vsel %vm861, %v670, %v766
  %v879 = vsel %vm861, %v672, %v768
  %v880 = vsel %vm861, %v674, %v770
  %v881 = vsel %vm861, %v676, %v772
  %v882 = vsel %vm861, %v678, %v774
  %v883 = vsel %vm861, %v680, %v776
  %v884 = vsel %vm861, %v682, %v778
  %v885 = vsel %vm861, %v684, %v780
  %v886 = vsel %vm861, %v686, %v782
  %v887 = vsel %vm861, %v688, %v784
  %v888 = vsel %vm861, %v690, %v786
  %v889 = vsel %vm861, %v692, %v788
  %v890 = vsel %vm861, %v694, %v790
  %v891 = vsel %vm861, %v696, %v792
  %v892 = vsel %vm861, %v698, %v794
  %v893 = vsel %vm861, %v700, %v796
  %894 = vrot.lane.b32.xlu0 %v286, 32
  %v895 = vpop.permute.xlu0 %894
  %896 = vrot.lane.b32.xlu0 %v290, 32
  %v897 = vpop.permute.xlu0 %896
  %898 = vrot.lane.b32.xlu0 %v296, 32
  %v899 = vpop.permute.xlu0 %898
  %900 = vrot.lane.b32.xlu0 %v300, 32
  %v901 = vpop.permute.xlu0 %900
  %902 = vrot.lane.b32.xlu0 %v306, 32
  %v903 = vpop.permute.xlu0 %902
  %904 = vrot.lane.b32.xlu0 %v310, 32
  %v905 = vpop.permute.xlu0 %904
  %906 = vrot.lane.b32.xlu0 %v316, 32
  %v907 = vpop.permute.xlu0 %906
  %908 = vrot.lane.b32.xlu0 %v320, 32
  %v909 = vpop.permute.xlu0 %908
  %910 = vrot.lane.b32.xlu0 %v326, 32
  %v911 = vpop.permute.xlu0 %910
  %912 = vrot.lane.b32.xlu0 %v330, 32
  %v913 = vpop.permute.xlu0 %912
  %914 = vrot.lane.b32.xlu0 %v336, 32
  %v915 = vpop.permute.xlu0 %914
  %916 = vrot.lane.b32.xlu0 %v340, 32
  %v917 = vpop.permute.xlu0 %916
  %918 = vrot.lane.b32.xlu0 %v346, 32
  %v919 = vpop.permute.xlu0 %918
  %920 = vrot.lane.b32.xlu0 %v350, 32
  %v921 = vpop.permute.xlu0 %920
  %922 = vrot.lane.b32.xlu0 %v356, 32
  %v923 = vpop.permute.xlu0 %922
  %924 = vrot.lane.b32.xlu0 %v360, 32
  %v925 = vpop.permute.xlu0 %924
  %926 = vrot.lane.b32.xlu0 %v366, 32
  %v927 = vpop.permute.xlu0 %926
  %928 = vrot.lane.b32.xlu0 %v370, 32
  %v929 = vpop.permute.xlu0 %928
  %930 = vrot.lane.b32.xlu0 %v376, 32
  %v931 = vpop.permute.xlu0 %930
  %932 = vrot.lane.b32.xlu0 %v380, 32
  %v933 = vpop.permute.xlu0 %932
  %934 = vrot.lane.b32.xlu0 %v386, 32
  %v935 = vpop.permute.xlu0 %934
  %936 = vrot.lane.b32.xlu0 %v390, 32
  %v937 = vpop.permute.xlu0 %936
  %938 = vrot.lane.b32.xlu0 %v396, 32
  %v939 = vpop.permute.xlu0 %938
  %940 = vrot.lane.b32.xlu0 %v400, 32
  %v941 = vpop.permute.xlu0 %940
  %942 = vrot.lane.b32.xlu0 %v406, 32
  %v943 = vpop.permute.xlu0 %942
  %944 = vrot.lane.b32.xlu0 %v410, 32
  %v945 = vpop.permute.xlu0 %944
  %946 = vrot.lane.b32.xlu0 %v416, 32
  %v947 = vpop.permute.xlu0 %946
  %948 = vrot.lane.b32.xlu0 %v420, 32
  %v949 = vpop.permute.xlu0 %948
  %950 = vrot.lane.b32.xlu0 %v426, 32
  %v951 = vpop.permute.xlu0 %950
  %952 = vrot.lane.b32.xlu0 %v430, 32
  %v953 = vpop.permute.xlu0 %952
  %954 = vrot.lane.b32.xlu0 %v436, 32
  %v955 = vpop.permute.xlu0 %954
  %956 = vrot.lane.b32.xlu0 %v440, 32
  %v957 = vpop.permute.xlu0 %956
  %1022 = vrot.lane.b32.xlu0 %v288, 96
  %v1023 = vpop.permute.xlu0 %1022
  %1024 = vrot.lane.b32.xlu0 %v292, 96
  %v1025 = vpop.permute.xlu0 %1024
  %1026 = vrot.lane.b32.xlu0 %v298, 96
  %v1027 = vpop.permute.xlu0 %1026
  %1028 = vrot.lane.b32.xlu0 %v302, 96
  %v1029 = vpop.permute.xlu0 %1028
  %1030 = vrot.lane.b32.xlu0 %v308, 96
  %v1031 = vpop.permute.xlu0 %1030
  %1032 = vrot.lane.b32.xlu0 %v312, 96
  %v1033 = vpop.permute.xlu0 %1032
  %1034 = vrot.lane.b32.xlu0 %v318, 96
  %v1035 = vpop.permute.xlu0 %1034
  %1036 = vrot.lane.b32.xlu0 %v322, 96
  %v1037 = vpop.permute.xlu0 %1036
  %1038 = vrot.lane.b32.xlu0 %v328, 96
  %v1039 = vpop.permute.xlu0 %1038
  %1040 = vrot.lane.b32.xlu0 %v332, 96
  %v1041 = vpop.permute.xlu0 %1040
  %1042 = vrot.lane.b32.xlu0 %v338, 96
  %v1043 = vpop.permute.xlu0 %1042
  %1044 = vrot.lane.b32.xlu0 %v342, 96
  %v1045 = vpop.permute.xlu0 %1044
  %1046 = vrot.lane.b32.xlu0 %v348, 96
  %v1047 = vpop.permute.xlu0 %1046
  %1048 = vrot.lane.b32.xlu0 %v352, 96
  %v1049 = vpop.permute.xlu0 %1048
  %1050 = vrot.lane.b32.xlu0 %v358, 96
  %v1051 = vpop.permute.xlu0 %1050
  %1052 = vrot.lane.b32.xlu0 %v362, 96
  %v1053 = vpop.permute.xlu0 %1052
  %1054 = vrot.lane.b32.xlu0 %v368, 96
  %v1055 = vpop.permute.xlu0 %1054
  %1056 = vrot.lane.b32.xlu0 %v372, 96
  %v1057 = vpop.permute.xlu0 %1056
  %1058 = vrot.lane.b32.xlu0 %v378, 96
  %v1059 = vpop.permute.xlu0 %1058
  %1060 = vrot.lane.b32.xlu0 %v382, 96
  %v1061 = vpop.permute.xlu0 %1060
  %1062 = vrot.lane.b32.xlu0 %v388, 96
  %v1063 = vpop.permute.xlu0 %1062
  %1064 = vrot.lane.b32.xlu0 %v392, 96
  %v1065 = vpop.permute.xlu0 %1064
  %1066 = vrot.lane.b32.xlu0 %v398, 96
  %v1067 = vpop.permute.xlu0 %1066
  %1068 = vrot.lane.b32.xlu0 %v402, 96
  %v1069 = vpop.permute.xlu0 %1068
  %1070 = vrot.lane.b32.xlu0 %v408, 96
  %v1071 = vpop.permute.xlu0 %1070
  %1072 = vrot.lane.b32.xlu0 %v412, 96
  %v1073 = vpop.permute.xlu0 %1072
  %1074 = vrot.lane.b32.xlu0 %v418, 96
  %v1075 = vpop.permute.xlu0 %1074
  %1076 = vrot.lane.b32.xlu0 %v422, 96
  %v1077 = vpop.permute.xlu0 %1076
  %1078 = vrot.lane.b32.xlu0 %v428, 96
  %v1079 = vpop.permute.xlu0 %1078
  %1080 = vrot.lane.b32.xlu0 %v432, 96
  %v1081 = vpop.permute.xlu0 %1080
  %1082 = vrot.lane.b32.xlu0 %v438, 96
  %v1083 = vpop.permute.xlu0 %1082
  %1084 = vrot.lane.b32.xlu0 %v442, 96
  %v1085 = vpop.permute.xlu0 %1084
  %1118 = vrot.lane.b32.xlu0 %v288, 32
  %v1119 = vpop.permute.xlu0 %1118
  %1120 = vrot.lane.b32.xlu0 %v292, 32
  %v1121 = vpop.permute.xlu0 %1120
  %1122 = vrot.lane.b32.xlu0 %v298, 32
  %v1123 = vpop.permute.xlu0 %1122
  %1124 = vrot.lane.b32.xlu0 %v302, 32
  %v1125 = vpop.permute.xlu0 %1124
  %1126 = vrot.lane.b32.xlu0 %v308, 32
  %v1127 = vpop.permute.xlu0 %1126
  %1128 = vrot.lane.b32.xlu0 %v312, 32
  %v1129 = vpop.permute.xlu0 %1128
  %1130 = vrot.lane.b32.xlu0 %v318, 32
  %v1131 = vpop.permute.xlu0 %1130
  %1132 = vrot.lane.b32.xlu0 %v322, 32
  %v1133 = vpop.permute.xlu0 %1132
  %1134 = vrot.lane.b32.xlu0 %v328, 32
  %v1135 = vpop.permute.xlu0 %1134
  %1136 = vrot.lane.b32.xlu0 %v332, 32
  %v1137 = vpop.permute.xlu0 %1136
  %1138 = vrot.lane.b32.xlu0 %v338, 32
  %v1139 = vpop.permute.xlu0 %1138
  %1140 = vrot.lane.b32.xlu0 %v342, 32
  %v1141 = vpop.permute.xlu0 %1140
  %1142 = vrot.lane.b32.xlu0 %v348, 32
  %v1143 = vpop.permute.xlu0 %1142
  %1144 = vrot.lane.b32.xlu0 %v352, 32
  %v1145 = vpop.permute.xlu0 %1144
  %1146 = vrot.lane.b32.xlu0 %v358, 32
  %v1147 = vpop.permute.xlu0 %1146
  %1148 = vrot.lane.b32.xlu0 %v362, 32
  %v1149 = vpop.permute.xlu0 %1148
  %1150 = vrot.lane.b32.xlu0 %v368, 32
  %v1151 = vpop.permute.xlu0 %1150
  %1152 = vrot.lane.b32.xlu0 %v372, 32
  %v1153 = vpop.permute.xlu0 %1152
  %1154 = vrot.lane.b32.xlu0 %v378, 32
  %v1155 = vpop.permute.xlu0 %1154
  %1156 = vrot.lane.b32.xlu0 %v382, 32
  %v1157 = vpop.permute.xlu0 %1156
  %1158 = vrot.lane.b32.xlu0 %v388, 32
  %v1159 = vpop.permute.xlu0 %1158
  %1160 = vrot.lane.b32.xlu0 %v392, 32
  %v1161 = vpop.permute.xlu0 %1160
  %1162 = vrot.lane.b32.xlu0 %v398, 32
  %v1163 = vpop.permute.xlu0 %1162
  %1164 = vrot.lane.b32.xlu0 %v402, 32
  %v1165 = vpop.permute.xlu0 %1164
  %1166 = vrot.lane.b32.xlu0 %v408, 32
  %v1167 = vpop.permute.xlu0 %1166
  %1168 = vrot.lane.b32.xlu0 %v412, 32
  %v1169 = vpop.permute.xlu0 %1168
  %1170 = vrot.lane.b32.xlu0 %v418, 32
  %v1171 = vpop.permute.xlu0 %1170
  %1172 = vrot.lane.b32.xlu0 %v422, 32
  %v1173 = vpop.permute.xlu0 %1172
  %1174 = vrot.lane.b32.xlu0 %v428, 32
  %v1175 = vpop.permute.xlu0 %1174
  %1176 = vrot.lane.b32.xlu0 %v432, 32
  %v1177 = vpop.permute.xlu0 %1176
  %1178 = vrot.lane.b32.xlu0 %v438, 32
  %v1179 = vpop.permute.xlu0 %1178
  %1180 = vrot.lane.b32.xlu0 %v442, 32
  %v1181 = vpop.permute.xlu0 %1180
  %1214 = vrot.lane.b32.xlu0 %v288, 64
  %v1215 = vpop.permute.xlu0 %1214
  %1216 = vrot.lane.b32.xlu0 %v292, 64
  %v1217 = vpop.permute.xlu0 %1216
  %1218 = vrot.lane.b32.xlu0 %v298, 64
  %v1219 = vpop.permute.xlu0 %1218
  %1220 = vrot.lane.b32.xlu0 %v302, 64
  %v1221 = vpop.permute.xlu0 %1220
  %1222 = vrot.lane.b32.xlu0 %v308, 64
  %v1223 = vpop.permute.xlu0 %1222
  %1224 = vrot.lane.b32.xlu0 %v312, 64
  %v1225 = vpop.permute.xlu0 %1224
  %1226 = vrot.lane.b32.xlu0 %v318, 64
  %v1227 = vpop.permute.xlu0 %1226
  %1228 = vrot.lane.b32.xlu0 %v322, 64
  %v1229 = vpop.permute.xlu0 %1228
  %1230 = vrot.lane.b32.xlu0 %v328, 64
  %v1231 = vpop.permute.xlu0 %1230
  %1232 = vrot.lane.b32.xlu0 %v332, 64
  %v1233 = vpop.permute.xlu0 %1232
  %1234 = vrot.lane.b32.xlu0 %v338, 64
  %v1235 = vpop.permute.xlu0 %1234
  %1236 = vrot.lane.b32.xlu0 %v342, 64
  %v1237 = vpop.permute.xlu0 %1236
  %1238 = vrot.lane.b32.xlu0 %v348, 64
  %v1239 = vpop.permute.xlu0 %1238
  %1240 = vrot.lane.b32.xlu0 %v352, 64
  %v1241 = vpop.permute.xlu0 %1240
  %1242 = vrot.lane.b32.xlu0 %v358, 64
  %v1243 = vpop.permute.xlu0 %1242
  %1244 = vrot.lane.b32.xlu0 %v362, 64
  %v1245 = vpop.permute.xlu0 %1244
  %1246 = vrot.lane.b32.xlu0 %v368, 64
  %v1247 = vpop.permute.xlu0 %1246
  %1248 = vrot.lane.b32.xlu0 %v372, 64
  %v1249 = vpop.permute.xlu0 %1248
  %1250 = vrot.lane.b32.xlu0 %v378, 64
  %v1251 = vpop.permute.xlu0 %1250
  %1252 = vrot.lane.b32.xlu0 %v382, 64
  %v1253 = vpop.permute.xlu0 %1252
  %1254 = vrot.lane.b32.xlu0 %v388, 64
  %v1255 = vpop.permute.xlu0 %1254
  %1256 = vrot.lane.b32.xlu0 %v392, 64
  %v1257 = vpop.permute.xlu0 %1256
  %1258 = vrot.lane.b32.xlu0 %v398, 64
  %v1259 = vpop.permute.xlu0 %1258
  %1260 = vrot.lane.b32.xlu0 %v402, 64
  %v1261 = vpop.permute.xlu0 %1260
  %1262 = vrot.lane.b32.xlu0 %v408, 64
  %v1263 = vpop.permute.xlu0 %1262
  %1264 = vrot.lane.b32.xlu0 %v412, 64
  %v1265 = vpop.permute.xlu0 %1264
  %1266 = vrot.lane.b32.xlu0 %v418, 64
  %v1267 = vpop.permute.xlu0 %1266
  %1268 = vrot.lane.b32.xlu0 %v422, 64
  %v1269 = vpop.permute.xlu0 %1268
  %1270 = vrot.lane.b32.xlu0 %v428, 64
  %v1271 = vpop.permute.xlu0 %1270
  %1272 = vrot.lane.b32.xlu0 %v432, 64
  %v1273 = vpop.permute.xlu0 %1272
  %1274 = vrot.lane.b32.xlu0 %v438, 64
  %v1275 = vpop.permute.xlu0 %1274
  %1276 = vrot.lane.b32.xlu0 %v442, 64
  %v1277 = vpop.permute.xlu0 %1276
  %vm1310 = vcmask 261120
  %v1311 = vsel %vm1310, %v895, %v734
  %v1312 = vsel %vm1310, %v897, %v736
  %v1313 = vsel %vm1310, %v899, %v738
  %v1314 = vsel %vm1310, %v901, %v740
  %v1315 = vsel %vm1310, %v903, %v742
  %v1316 = vsel %vm1310, %v905, %v744
  %v1317 = vsel %vm1310, %v907, %v746
  %v1318 = vsel %vm1310, %v909, %v748
  %v1319 = vsel %vm1310, %v911, %v750
  %v1320 = vsel %vm1310, %v913, %v752
  %v1321 = vsel %vm1310, %v915, %v754
  %v1322 = vsel %vm1310, %v917, %v756
  %v1323 = vsel %vm1310, %v919, %v758
  %v1324 = vsel %vm1310, %v921, %v760
  %v1325 = vsel %vm1310, %v923, %v762
  %v1326 = vsel %vm1310, %v925, %v764
  %v1327 = vsel %vm1310, %v927, %v766
  %v1328 = vsel %vm1310, %v929, %v768
  %v1329 = vsel %vm1310, %v931, %v770
  %v1330 = vsel %vm1310, %v933, %v772
  %v1331 = vsel %vm1310, %v935, %v774
  %v1332 = vsel %vm1310, %v937, %v776
  %v1333 = vsel %vm1310, %v939, %v778
  %v1334 = vsel %vm1310, %v941, %v780
  %v1335 = vsel %vm1310, %v943, %v782
  %v1336 = vsel %vm1310, %v945, %v784
  %v1337 = vsel %vm1310, %v947, %v786
  %v1338 = vsel %vm1310, %v949, %v788
  %v1339 = vsel %vm1310, %v951, %v790
  %v1340 = vsel %vm1310, %v953, %v792
  %v1341 = vsel %vm1310, %v955, %v794
  %v1342 = vsel %vm1310, %v957, %v796
  %v1343 = vsel %vm861, %v1311, %v638
  %v1344 = vsel %vm861, %v1312, %v640
  %v1345 = vsel %vm861, %v1313, %v642
  %v1346 = vsel %vm861, %v1314, %v644
  %v1347 = vsel %vm861, %v1315, %v646
  %v1348 = vsel %vm861, %v1316, %v648
  %v1349 = vsel %vm861, %v1317, %v650
  %v1350 = vsel %vm861, %v1318, %v652
  %v1351 = vsel %vm861, %v1319, %v654
  %v1352 = vsel %vm861, %v1320, %v656
  %v1353 = vsel %vm861, %v1321, %v658
  %v1354 = vsel %vm861, %v1322, %v660
  %v1355 = vsel %vm861, %v1323, %v662
  %v1356 = vsel %vm861, %v1324, %v664
  %v1357 = vsel %vm861, %v1325, %v666
  %v1358 = vsel %vm861, %v1326, %v668
  %v1359 = vsel %vm861, %v1327, %v670
  %v1360 = vsel %vm861, %v1328, %v672
  %v1361 = vsel %vm861, %v1329, %v674
  %v1362 = vsel %vm861, %v1330, %v676
  %v1363 = vsel %vm861, %v1331, %v678
  %v1364 = vsel %vm861, %v1332, %v680
  %v1365 = vsel %vm861, %v1333, %v682
  %v1366 = vsel %vm861, %v1334, %v684
  %v1367 = vsel %vm861, %v1335, %v686
  %v1368 = vsel %vm861, %v1336, %v688
  %v1369 = vsel %vm861, %v1337, %v690
  %v1370 = vsel %vm861, %v1338, %v692
  %v1371 = vsel %vm861, %v1339, %v694
  %v1372 = vsel %vm861, %v1340, %v696
  %v1373 = vsel %vm861, %v1341, %v698
  %v1374 = vsel %vm861, %v1342, %v700
  %v1375 = vsel %vm202, %v1343, %v1023
  %v1376 = vsel %vm202, %v1344, %v1025
  %v1377 = vsel %vm202, %v1345, %v1027
  %v1378 = vsel %vm202, %v1346, %v1029
  %v1379 = vsel %vm202, %v1347, %v1031
  %v1380 = vsel %vm202, %v1348, %v1033
  %v1381 = vsel %vm202, %v1349, %v1035
  %v1382 = vsel %vm202, %v1350, %v1037
  %v1383 = vsel %vm202, %v1351, %v1039
  %v1384 = vsel %vm202, %v1352, %v1041
  %v1385 = vsel %vm202, %v1353, %v1043
  %v1386 = vsel %vm202, %v1354, %v1045
  %v1387 = vsel %vm202, %v1355, %v1047
  %v1388 = vsel %vm202, %v1356, %v1049
  %v1389 = vsel %vm202, %v1357, %v1051
  %v1390 = vsel %vm202, %v1358, %v1053
  %v1391 = vsel %vm202, %v1359, %v1055
  %v1392 = vsel %vm202, %v1360, %v1057
  %v1393 = vsel %vm202, %v1361, %v1059
  %v1394 = vsel %vm202, %v1362, %v1061
  %v1395 = vsel %vm202, %v1363, %v1063
  %v1396 = vsel %vm202, %v1364, %v1065
  %v1397 = vsel %vm202, %v1365, %v1067
  %v1398 = vsel %vm202, %v1366, %v1069
  %v1399 = vsel %vm202, %v1367, %v1071
  %v1400 = vsel %vm202, %v1368, %v1073
  %v1401 = vsel %vm202, %v1369, %v1075
  %v1402 = vsel %vm202, %v1370, %v1077
  %v1403 = vsel %vm202, %v1371, %v1079
  %v1404 = vsel %vm202, %v1372, %v1081
  %v1405 = vsel %vm202, %v1373, %v1083
  %v1406 = vsel %vm202, %v1374, %v1085
  %v1407 = vsel %vm1310, %v288, %v1119
  %v1408 = vsel %vm1310, %v292, %v1121
  %v1409 = vsel %vm1310, %v298, %v1123
  %v1410 = vsel %vm1310, %v302, %v1125
  %v1411 = vsel %vm1310, %v308, %v1127
  %v1412 = vsel %vm1310, %v312, %v1129
  %v1413 = vsel %vm1310, %v318, %v1131
  %v1414 = vsel %vm1310, %v322, %v1133
  %v1415 = vsel %vm1310, %v328, %v1135
  %v1416 = vsel %vm1310, %v332, %v1137
  %v1417 = vsel %vm1310, %v338, %v1139
  %v1418 = vsel %vm1310, %v342, %v1141
  %v1419 = vsel %vm1310, %v348, %v1143
  %v1420 = vsel %vm1310, %v352, %v1145
  %v1421 = vsel %vm1310, %v358, %v1147
  %v1422 = vsel %vm1310, %v362, %v1149
  %v1423 = vsel %vm1310, %v368, %v1151
  %v1424 = vsel %vm1310, %v372, %v1153
  %v1425 = vsel %vm1310, %v378, %v1155
  %v1426 = vsel %vm1310, %v382, %v1157
  %v1427 = vsel %vm1310, %v388, %v1159
  %v1428 = vsel %vm1310, %v392, %v1161
  %v1429 = vsel %vm1310, %v398, %v1163
  %v1430 = vsel %vm1310, %v402, %v1165
  %v1431 = vsel %vm1310, %v408, %v1167
  %v1432 = vsel %vm1310, %v412, %v1169
  %v1433 = vsel %vm1310, %v418, %v1171
  %v1434 = vsel %vm1310, %v422, %v1173
  %v1435 = vsel %vm1310, %v428, %v1175
  %v1436 = vsel %vm1310, %v432, %v1177
  %v1437 = vsel %vm1310, %v438, %v1179
  %v1438 = vsel %vm1310, %v442, %v1181
  %v1439 = vsel %vm861, %v1407, %v1119
  %v1440 = vsel %vm861, %v1408, %v1121
  %v1441 = vsel %vm861, %v1409, %v1123
  %v1442 = vsel %vm861, %v1410, %v1125
  %v1443 = vsel %vm861, %v1411, %v1127
  %v1444 = vsel %vm861, %v1412, %v1129
  %v1445 = vsel %vm861, %v1413, %v1131
  %v1446 = vsel %vm861, %v1414, %v1133
  %v1447 = vsel %vm861, %v1415, %v1135
  %v1448 = vsel %vm861, %v1416, %v1137
  %v1449 = vsel %vm861, %v1417, %v1139
  %v1450 = vsel %vm861, %v1418, %v1141
  %v1451 = vsel %vm861, %v1419, %v1143
  %v1452 = vsel %vm861, %v1420, %v1145
  %v1453 = vsel %vm861, %v1421, %v1147
  %v1454 = vsel %vm861, %v1422, %v1149
  %v1455 = vsel %vm861, %v1423, %v1151
  %v1456 = vsel %vm861, %v1424, %v1153
  %v1457 = vsel %vm861, %v1425, %v1155
  %v1458 = vsel %vm861, %v1426, %v1157
  %v1459 = vsel %vm861, %v1427, %v1159
  %v1460 = vsel %vm861, %v1428, %v1161
  %v1461 = vsel %vm861, %v1429, %v1163
  %v1462 = vsel %vm861, %v1430, %v1165
  %v1463 = vsel %vm861, %v1431, %v1167
  %v1464 = vsel %vm861, %v1432, %v1169
  %v1465 = vsel %vm861, %v1433, %v1171
  %v1466 = vsel %vm861, %v1434, %v1173
  %v1467 = vsel %vm861, %v1435, %v1175
  %v1468 = vsel %vm861, %v1436, %v1177
  %v1469 = vsel %vm861, %v1437, %v1179
  %v1470 = vsel %vm861, %v1438, %v1181
  %v1471 = vsel %vm202, %v1439, %v1215
  %v1472 = vsel %vm202, %v1440, %v1217
  %v1473 = vsel %vm202, %v1441, %v1219
  %v1474 = vsel %vm202, %v1442, %v1221
  %v1475 = vsel %vm202, %v1443, %v1223
  %v1476 = vsel %vm202, %v1444, %v1225
  %v1477 = vsel %vm202, %v1445, %v1227
  %v1478 = vsel %vm202, %v1446, %v1229
  %v1479 = vsel %vm202, %v1447, %v1231
  %v1480 = vsel %vm202, %v1448, %v1233
  %v1481 = vsel %vm202, %v1449, %v1235
  %v1482 = vsel %vm202, %v1450, %v1237
  %v1483 = vsel %vm202, %v1451, %v1239
  %v1484 = vsel %vm202, %v1452, %v1241
  %v1485 = vsel %vm202, %v1453, %v1243
  %v1486 = vsel %vm202, %v1454, %v1245
  %v1487 = vsel %vm202, %v1455, %v1247
  %v1488 = vsel %vm202, %v1456, %v1249
  %v1489 = vsel %vm202, %v1457, %v1251
  %v1490 = vsel %vm202, %v1458, %v1253
  %v1491 = vsel %vm202, %v1459, %v1255
  %v1492 = vsel %vm202, %v1460, %v1257
  %v1493 = vsel %vm202, %v1461, %v1259
  %v1494 = vsel %vm202, %v1462, %v1261
  %v1495 = vsel %vm202, %v1463, %v1263
  %v1496 = vsel %vm202, %v1464, %v1265
  %v1497 = vsel %vm202, %v1465, %v1267
  %v1498 = vsel %vm202, %v1466, %v1269
  %v1499 = vsel %vm202, %v1467, %v1271
  %v1500 = vsel %vm202, %v1468, %v1273
  %v1501 = vsel %vm202, %v1469, %v1275
  %v1502 = vsel %vm202, %v1470, %v1277
  %v1503 = vmul.f32 %v829, %v1375
  %v1504 = vmul.f32 %v862, %v1471
  %v1505 = vmul.f32 %v734, %v1023
  %v1506 = vmul.f32 %v830, %v1376
  %v1507 = vmul.f32 %v863, %v1472
  %v1508 = vmul.f32 %v736, %v1025
  %v1509 = vmul.f32 %v831, %v1377
  %v1510 = vmul.f32 %v864, %v1473
  %v1511 = vmul.f32 %v738, %v1027
  %v1512 = vmul.f32 %v832, %v1378
  %v1513 = vmul.f32 %v865, %v1474
  %v1514 = vmul.f32 %v740, %v1029
  %v1515 = vmul.f32 %v833, %v1379
  %v1516 = vmul.f32 %v866, %v1475
  %v1517 = vmul.f32 %v742, %v1031
  %v1518 = vmul.f32 %v834, %v1380
  %v1519 = vmul.f32 %v867, %v1476
  %v1520 = vmul.f32 %v744, %v1033
  %v1521 = vmul.f32 %v835, %v1381
  %v1522 = vmul.f32 %v868, %v1477
  %v1523 = vmul.f32 %v746, %v1035
  %v1524 = vmul.f32 %v836, %v1382
  %v1525 = vmul.f32 %v869, %v1478
  %v1526 = vmul.f32 %v748, %v1037
  %v1527 = vmul.f32 %v837, %v1383
  %v1528 = vmul.f32 %v870, %v1479
  %v1529 = vmul.f32 %v750, %v1039
  %v1530 = vmul.f32 %v838, %v1384
  %v1531 = vmul.f32 %v871, %v1480
  %v1532 = vmul.f32 %v752, %v1041
  %v1533 = vmul.f32 %v839, %v1385
  %v1534 = vmul.f32 %v872, %v1481
  %v1535 = vmul.f32 %v754, %v1043
  %v1536 = vmul.f32 %v840, %v1386
  %v1537 = vmul.f32 %v873, %v1482
  %v1538 = vmul.f32 %v756, %v1045
  %v1539 = vmul.f32 %v841, %v1387
  %v1540 = vmul.f32 %v874, %v1483
  %v1541 = vmul.f32 %v758, %v1047
  %v1542 = vmul.f32 %v842, %v1388
  %v1543 = vmul.f32 %v875, %v1484
  %v1544 = vmul.f32 %v760, %v1049
  %v1545 = vmul.f32 %v843, %v1389
  %v1546 = vmul.f32 %v876, %v1485
  %v1547 = vmul.f32 %v762, %v1051
  %v1548 = vmul.f32 %v844, %v1390
  %v1549 = vmul.f32 %v877, %v1486
  %v1550 = vmul.f32 %v764, %v1053
  %v1551 = vmul.f32 %v845, %v1391
  %v1552 = vmul.f32 %v878, %v1487
  %v1553 = vmul.f32 %v766, %v1055
  %v1554 = vmul.f32 %v846, %v1392
  %v1555 = vmul.f32 %v879, %v1488
  %v1556 = vmul.f32 %v768, %v1057
  %v1557 = vmul.f32 %v847, %v1393
  %v1558 = vmul.f32 %v880, %v1489
  %v1559 = vmul.f32 %v770, %v1059
  %v1560 = vmul.f32 %v848, %v1394
  %v1561 = vmul.f32 %v881, %v1490
  %v1562 = vmul.f32 %v772, %v1061
  %v1563 = vmul.f32 %v849, %v1395
  %v1564 = vmul.f32 %v882, %v1491
  %v1565 = vmul.f32 %v774, %v1063
  %v1566 = vmul.f32 %v850, %v1396
  %v1567 = vmul.f32 %v883, %v1492
  %v1568 = vmul.f32 %v776, %v1065
  %v1569 = vmul.f32 %v851, %v1397
  %v1570 = vmul.f32 %v884, %v1493
  %v1571 = vmul.f32 %v778, %v1067
  %v1572 = vmul.f32 %v852, %v1398
  %v1573 = vmul.f32 %v885, %v1494
  %v1574 = vmul.f32 %v780, %v1069
  %v1575 = vmul.f32 %v853, %v1399
  %v1576 = vmul.f32 %v886, %v1495
  %v1577 = vmul.f32 %v782, %v1071
  %v1578 = vmul.f32 %v854, %v1400
  %v1579 = vmul.f32 %v887, %v1496
  %v1580 = vmul.f32 %v784, %v1073
  %v1581 = vmul.f32 %v855, %v1401
  %v1582 = vmul.f32 %v888, %v1497
  %v1583 = vmul.f32 %v786, %v1075
  %v1584 = vmul.f32 %v856, %v1402
  %v1585 = vmul.f32 %v889, %v1498
  %v1586 = vmul.f32 %v788, %v1077
  %v1587 = vmul.f32 %v857, %v1403
  %v1588 = vmul.f32 %v890, %v1499
  %v1589 = vmul.f32 %v790, %v1079
  %v1590 = vmul.f32 %v858, %v1404
  %v1591 = vmul.f32 %v891, %v1500
  %v1592 = vmul.f32 %v792, %v1081
  %v1593 = vmul.f32 %v859, %v1405
  %v1594 = vmul.f32 %v892, %v1501
  %v1595 = vmul.f32 %v794, %v1083
  %v1596 = vmul.f32 %v860, %v1406
  %v1597 = vmul.f32 %v893, %v1502
  %v1598 = vmul.f32 %v796, %v1085
  %v1599 = vpack.c.bf16 %v1506, %v1503
  %v1600 = vpack.c.bf16 %v1507, %v1504
  %v1601 = vpack.c.bf16 %v1508, %v1505
  %v1602 = vpack.c.bf16 %v1512, %v1509
  %v1603 = vpack.c.bf16 %v1513, %v1510
  %v1604 = vpack.c.bf16 %v1514, %v1511
  %v1605 = vpack.c.bf16 %v1518, %v1515
  %v1606 = vpack.c.bf16 %v1519, %v1516
  %v1607 = vpack.c.bf16 %v1520, %v1517
  %v1608 = vpack.c.bf16 %v1524, %v1521
  %v1609 = vpack.c.bf16 %v1525, %v1522
  %v1610 = vpack.c.bf16 %v1526, %v1523
  %v1611 = vpack.c.bf16 %v1530, %v1527
  %v1612 = vpack.c.bf16 %v1531, %v1528
  %v1613 = vpack.c.bf16 %v1532, %v1529
  %v1614 = vpack.c.bf16 %v1536, %v1533
  %v1615 = vpack.c.bf16 %v1537, %v1534
  %v1616 = vpack.c.bf16 %v1538, %v1535
  %v1617 = vpack.c.bf16 %v1542, %v1539
  %v1618 = vpack.c.bf16 %v1543, %v1540
  %v1619 = vpack.c.bf16 %v1544, %v1541
  %v1620 = vpack.c.bf16 %v1548, %v1545
  %v1621 = vpack.c.bf16 %v1549, %v1546
  %v1622 = vpack.c.bf16 %v1550, %v1547
  %v1623 = vpack.c.bf16 %v1554, %v1551
  %v1624 = vpack.c.bf16 %v1555, %v1552
  %v1625 = vpack.c.bf16 %v1556, %v1553
  %v1626 = vpack.c.bf16 %v1560, %v1557
  %v1627 = vpack.c.bf16 %v1561, %v1558
  %v1628 = vpack.c.bf16 %v1562, %v1559
  %v1629 = vpack.c.bf16 %v1566, %v1563
  %v1630 = vpack.c.bf16 %v1567, %v1564
  %v1631 = vpack.c.bf16 %v1568, %v1565
  %v1632 = vpack.c.bf16 %v1572, %v1569
  %v1633 = vpack.c.bf16 %v1573, %v1570
  %v1634 = vpack.c.bf16 %v1574, %v1571
  %v1635 = vpack.c.bf16 %v1578, %v1575
  %v1636 = vpack.c.bf16 %v1579, %v1576
  %v1637 = vpack.c.bf16 %v1580, %v1577
  %v1638 = vpack.c.bf16 %v1584, %v1581
  %v1639 = vpack.c.bf16 %v1585, %v1582
  %v1640 = vpack.c.bf16 %v1586, %v1583
  %v1641 = vpack.c.bf16 %v1590, %v1587
  %v1642 = vpack.c.bf16 %v1591, %v1588
  %v1643 = vpack.c.bf16 %v1592, %v1589
  %v1644 = vpack.c.bf16 %v1596, %v1593
  %v1645 = vpack.c.bf16 %v1597, %v1594
  %v1646 = vpack.c.bf16 %v1598, %v1595
  %v1647 = vld [vmem:[%s1 + $0x408] sm:$0xf]
  %v1648 = vld [vmem:[%s1 + $0x414] sm:$0xf]
  %v1649 = vld [vmem:[%s1 + $0x420] sm:$0xf]
  %v1650 = vld [vmem:[%s1 + $0x42c] sm:$0xf]
  %v1651 = vld [vmem:[%s1 + $0x438] sm:$0xf]
  %v1652 = vld [vmem:[%s1 + $0x444] sm:$0xf]
  %v1653 = vld [vmem:[%s1 + $0x450] sm:$0xf]
  %v1654 = vld [vmem:[%s1 + $0x45c] sm:$0xf]
  %v1655 = vld [vmem:[%s1 + $0x468] sm:$0xf]
  %v1656 = vld [vmem:[%s1 + $0x474] sm:$0xf]
  %v1657 = vld [vmem:[%s1 + $0x480] sm:$0xf]
  %v1658 = vld [vmem:[%s1 + $0x48c] sm:$0xf]
  %v1659 = vld [vmem:[%s1 + $0x498] sm:$0xf]
  %v1660 = vld [vmem:[%s1 + $0x4a4] sm:$0xf]
  %v1661 = vld [vmem:[%s1 + $0x4b0] sm:$0xf]
  %v1662 = vld [vmem:[%s1 + $0x4bc] sm:$0xf]
  %v1663 = vld [vmem:[%s1 + $0x4c8] sm:$0xf]
  %v1664 = vld [vmem:[%s1 + $0x4d4] sm:$0xf]
  %v1665 = vld [vmem:[%s1 + $0x4e0] sm:$0xf]
  %v1666 = vld [vmem:[%s1 + $0x4ec] sm:$0xf]
  %v1667 = vld [vmem:[%s1 + $0x4f8] sm:$0xf]
  %v1668 = vld [vmem:[%s1 + $0x504] sm:$0xf]
  %v1669 = vld [vmem:[%s1 + $0x510] sm:$0xf]
  %v1670 = vld [vmem:[%s1 + $0x51c] sm:$0xf]
  %v1671 = vld [vmem:[%s1 + $0x528] sm:$0xf]
  %v1672 = vld [vmem:[%s1 + $0x534] sm:$0xf]
  %v1673 = vld [vmem:[%s1 + $0x540] sm:$0xf]
  %v1674 = vld [vmem:[%s1 + $0x54c] sm:$0xf]
  %v1675 = vld [vmem:[%s1 + $0x558] sm:$0xf]
  %v1676 = vld [vmem:[%s1 + $0x564] sm:$0xf]
  %v1677 = vld [vmem:[%s1 + $0x570] sm:$0xf]
  %v1678 = vld [vmem:[%s1 + $0x57c] sm:$0xf]
  %v1679 = vld [vmem:[%s1 + $0x588] sm:$0xf]
  %v1680 = vld [vmem:[%s1 + $0x594] sm:$0xf]
  %v1681 = vld [vmem:[%s1 + $0x5a0] sm:$0xf]
  %v1682 = vld [vmem:[%s1 + $0x5ac] sm:$0xf]
  %v1719 = vunpack.c.l.b16 %v1647
  %v1720 = vunpack.c.l.b16 %v1648
  %v1721 = vunpack.c.l.b16 %v1649
  %v1722 = vunpack.c.l.b16 %v1650
  %v1723 = vunpack.c.l.b16 %v1651
  %v1724 = vunpack.c.l.b16 %v1652
  %v1725 = vunpack.c.l.b16 %v1653
  %v1726 = vunpack.c.l.b16 %v1654
  %v1727 = vunpack.c.l.b16 %v1655
  %v1728 = vunpack.c.l.b16 %v1656
  %v1729 = vunpack.c.l.b16 %v1657
  %v1730 = vunpack.c.l.b16 %v1658
  %v1731 = vunpack.c.l.b16 %v1659
  %v1732 = vunpack.c.l.b16 %v1660
  %v1733 = vunpack.c.l.b16 %v1661
  %v1734 = vunpack.c.l.b16 %v1662
  %v1735 = vunpack.c.l.b16 %v1663
  %v1736 = vunpack.c.l.b16 %v1664
  %v1737 = vunpack.c.l.b16 %v1665
  %v1738 = vunpack.c.l.b16 %v1666
  %v1739 = vunpack.c.l.b16 %v1667
  %v1740 = vunpack.c.l.b16 %v1668
  %v1741 = vunpack.c.l.b16 %v1669
  %v1742 = vunpack.c.l.b16 %v1670
  %v1743 = vunpack.c.l.b16 %v1671
  %v1744 = vunpack.c.l.b16 %v1672
  %v1745 = vunpack.c.l.b16 %v1673
  %v1746 = vunpack.c.l.b16 %v1674
  %v1747 = vunpack.c.l.b16 %v1675
  %v1748 = vunpack.c.l.b16 %v1676
  %v1749 = vunpack.c.l.b16 %v1677
  %v1750 = vunpack.c.l.b16 %v1678
  %v1751 = vunpack.c.l.b16 %v1679
  %v1752 = vunpack.c.l.b16 %v1680
  %v1753 = vunpack.c.l.b16 %v1681
  %v1754 = vunpack.c.l.b16 %v1682
  %v1755 = vpack.c.b16 %v1720, %v1719
  %v1756 = vpack.c.b16 %v1722, %v1721
  %v1757 = vpack.c.b16 %v1724, %v1723
  %v1758 = vpack.c.b16 %v1726, %v1725
  %v1759 = vpack.c.b16 %v1728, %v1727
  %v1760 = vpack.c.b16 %v1730, %v1729
  %v1761 = vpack.c.b16 %v1732, %v1731
  %v1762 = vpack.c.b16 %v1734, %v1733
  %v1763 = vpack.c.b16 %v1736, %v1735
  %v1764 = vpack.c.b16 %v1738, %v1737
  %v1765 = vpack.c.b16 %v1740, %v1739
  %v1766 = vpack.c.b16 %v1742, %v1741
  %v1767 = vpack.c.b16 %v1744, %v1743
  %v1768 = vpack.c.b16 %v1746, %v1745
  %v1769 = vpack.c.b16 %v1748, %v1747
  %v1770 = vpack.c.b16 %v1750, %v1749
  %v1771 = vpack.c.b16 %v1752, %v1751
  %v1772 = vpack.c.b16 %v1754, %v1753
  %v1792 = vsel %vm1310, %v1601, 0
  %v1795 = vsel %vm1310, %v1604, 0
  %v1798 = vsel %vm1310, %v1607, 0
  %v1801 = vsel %vm1310, %v1610, 0
  %v1804 = vsel %vm1310, %v1613, 0
  %v1807 = vsel %vm1310, %v1616, 0
  %v1810 = vsel %vm1310, %v1619, 0
  %v1813 = vsel %vm1310, %v1622, 0
  %v1816 = vsel %vm1310, %v1625, 0
  %v1819 = vsel %vm1310, %v1628, 0
  %v1822 = vsel %vm1310, %v1631, 0
  %v1825 = vsel %vm1310, %v1634, 0
  %v1828 = vsel %vm1310, %v1637, 0
  %v1831 = vsel %vm1310, %v1640, 0
  %v1834 = vsel %vm1310, %v1643, 0
  %v1837 = vsel %vm1310, %v1646, 0
  %1839 = vmatprep.subr.bf16.mxu0 0
  %1840 = vmatpush1.bf16.msra.mxu0 %v1755
  %1841 = vmatprep.subr.bf16.mxu0 0
  %1842 = vmatpush1.bf16.msra.mxu0 %v1756
  %1843 = vmatprep.subr.bf16.mxu0 0
  %1844 = vmatpush1.bf16.msra.mxu0 %v1757
  %1845 = vmatprep.subr.bf16.mxu0 0
  %1846 = vmatpush1.bf16.msra.mxu0 %v1758
  %1847 = vmatprep.subr.bf16.mxu0 0
  %1848 = vmatpush1.bf16.msra.mxu0 %v1759
  %1849 = vmatprep.subr.bf16.mxu0 0
  %1850 = vmatpush1.bf16.msra.mxu0 %v1760
  %1851 = vmatprep.subr.bf16.mxu0 0
  %1852 = vmatpush1.bf16.msra.mxu0 %v1761
  %1853 = vmatprep.subr.bf16.mxu0 0
  %1854 = vmatpush1.bf16.msra.mxu0 %v1762
  %1855 = vmatprep.subr.bf16.mxu0 0
  %1856 = vmatpush1.bf16.msra.mxu0 %v1763
  %1857 = vmatprep.subr.bf16.mxu0 0
  %1858 = vmatpush1.bf16.msra.mxu0 %v1764
  %1859 = vmatprep.subr.bf16.mxu0 0
  %1860 = vmatpush1.bf16.msra.mxu0 %v1765
  %1861 = vmatprep.subr.bf16.mxu0 0
  %1862 = vmatpush1.bf16.msra.mxu0 %v1766
  %1863 = vmatprep.subr.bf16.mxu0 0
  %1864 = vmatpush1.bf16.msra.mxu0 %v1767
  %1865 = vmatprep.subr.bf16.mxu0 0
  %1866 = vmatpush1.bf16.msra.mxu0 %v1768
  %1867 = vmatprep.subr.bf16.mxu0 0
  %1868 = vmatpush1.bf16.msra.mxu0 %v1769
  %1869 = vmatprep.subr.bf16.mxu0 0
  %1870 = vmatpush1.bf16.msra.mxu0 %v1770
  %1871 = vmatprep.mubr.bf16.mxu0 %v1600
  %1872 = vmatmul.mubr.bf16.gmra.mrb[0].mxu0 %v1599
  %v1873 = vpop.f32.mrb[0].mxu0
  %v1874 = vadd.f32 0.0, %v1873
  %v1875 = vpop.f32.mrb[0].mxu0
  %v1876 = vpop.f32.mrb[0].mxu0
  %v1877 = vadd.f32 0.0, %v1876
  %v1878 = vpop.f32.mrb[0].mxu0
  %1879 = vmatprep.mubr.bf16.mxu0 %v1603
  %1880 = vmatmul.mubr.bf16.gmra.mrb[0].mxu0 %v1602
  %v1881 = vpop.f32.mrb[0].mxu0
  %v1882 = vadd.f32 0.0, %v1881
  %v1883 = vpop.f32.mrb[0].mxu0
  %v1884 = vpop.f32.mrb[0].mxu0
  %v1885 = vadd.f32 0.0, %v1884
  %v1886 = vpop.f32.mrb[0].mxu0
  %1887 = vmatprep.mubr.bf16.mxu0 %v1606
  %1888 = vmatmul.mubr.bf16.gmra.mrb[0].mxu0 %v1605
  %v1889 = vpop.f32.mrb[0].mxu0
  %v1890 = vadd.f32 0.0, %v1889
  %v1891 = vpop.f32.mrb[0].mxu0
  %v1892 = vpop.f32.mrb[0].mxu0
  %v1893 = vadd.f32 0.0, %v1892
  %v1894 = vpop.f32.mrb[0].mxu0
  %1895 = vmatprep.mubr.bf16.mxu0 %v1609
  %1896 = vmatmul.mubr.bf16.gmra.mrb[0].mxu0 %v1608
  %v1897 = vpop.f32.mrb[0].mxu0
  %v1898 = vadd.f32 0.0, %v1897
  %v1899 = vpop.f32.mrb[0].mxu0
  %v1900 = vpop.f32.mrb[0].mxu0
  %v1901 = vadd.f32 0.0, %v1900
  %v1902 = vpop.f32.mrb[0].mxu0
  %1903 = vmatprep.mubr.bf16.mxu0 %v1612
  %1904 = vmatmul.mubr.bf16.gmra.mrb[0].mxu0 %v1611
  %v1905 = vpop.f32.mrb[0].mxu0
  %v1906 = vadd.f32 0.0, %v1905
  %v1907 = vpop.f32.mrb[0].mxu0
  %v1908 = vpop.f32.mrb[0].mxu0
  %v1909 = vadd.f32 0.0, %v1908
  %v1910 = vpop.f32.mrb[0].mxu0
  %1911 = vmatprep.mubr.bf16.mxu0 %v1615
  %1912 = vmatmul.mubr.bf16.gmra.mrb[0].mxu0 %v1614
  %v1913 = vpop.f32.mrb[0].mxu0
  %v1914 = vadd.f32 0.0, %v1913
  %v1915 = vpop.f32.mrb[0].mxu0
  %v1916 = vpop.f32.mrb[0].mxu0
  %v1917 = vadd.f32 0.0, %v1916
  %v1918 = vpop.f32.mrb[0].mxu0
  %1919 = vmatprep.mubr.bf16.mxu0 %v1618
  %1920 = vmatmul.mubr.bf16.gmra.mrb[0].mxu0 %v1617
  %v1921 = vpop.f32.mrb[0].mxu0
  %v1922 = vadd.f32 0.0, %v1921
  %v1923 = vpop.f32.mrb[0].mxu0
  %v1924 = vpop.f32.mrb[0].mxu0
  %v1925 = vadd.f32 0.0, %v1924
  %v1926 = vpop.f32.mrb[0].mxu0
  %1927 = vmatprep.mubr.bf16.mxu0 %v1621
  %1928 = vmatmul.mubr.bf16.gmra.mrb[0].mxu0 %v1620
  %v1929 = vpop.f32.mrb[0].mxu0
  %v1930 = vadd.f32 0.0, %v1929
  %v1931 = vpop.f32.mrb[0].mxu0
  %v1932 = vpop.f32.mrb[0].mxu0
  %v1933 = vadd.f32 0.0, %v1932
  %v1934 = vpop.f32.mrb[0].mxu0
  %1935 = vmatprep.mubr.bf16.mxu0 %v1624
  %1936 = vmatmul.mubr.bf16.gmra.mrb[0].mxu0 %v1623
  %v1937 = vpop.f32.mrb[0].mxu0
  %v1938 = vadd.f32 0.0, %v1937
  %v1939 = vpop.f32.mrb[0].mxu0
  %v1940 = vpop.f32.mrb[0].mxu0
  %v1941 = vadd.f32 0.0, %v1940
  %v1942 = vpop.f32.mrb[0].mxu0
  %1943 = vmatprep.mubr.bf16.mxu0 %v1627
  %1944 = vmatmul.mubr.bf16.gmra.mrb[0].mxu0 %v1626
  %v1945 = vpop.f32.mrb[0].mxu0
  %v1946 = vadd.f32 0.0, %v1945
  %v1947 = vpop.f32.mrb[0].mxu0
  %v1948 = vpop.f32.mrb[0].mxu0
  %v1949 = vadd.f32 0.0, %v1948
  %v1950 = vpop.f32.mrb[0].mxu0
  %1951 = vmatprep.mubr.bf16.mxu0 %v1630
  %1952 = vmatmul.mubr.bf16.gmra.mrb[0].mxu0 %v1629
  %v1953 = vpop.f32.mrb[0].mxu0
  %v1954 = vadd.f32 0.0, %v1953
  %v1955 = vpop.f32.mrb[0].mxu0
  %v1956 = vpop.f32.mrb[0].mxu0
  %v1957 = vadd.f32 0.0, %v1956
  %v1958 = vpop.f32.mrb[0].mxu0
  %1959 = vmatprep.mubr.bf16.mxu0 %v1633
  %1960 = vmatmul.mubr.bf16.gmra.mrb[0].mxu0 %v1632
  %v1961 = vpop.f32.mrb[0].mxu0
  %v1962 = vadd.f32 0.0, %v1961
  %v1963 = vpop.f32.mrb[0].mxu0
  %v1964 = vpop.f32.mrb[0].mxu0
  %v1965 = vadd.f32 0.0, %v1964
  %v1966 = vpop.f32.mrb[0].mxu0
  %1967 = vmatprep.mubr.bf16.mxu0 %v1636
  %1968 = vmatmul.mubr.bf16.gmra.mrb[0].mxu0 %v1635
  %v1969 = vpop.f32.mrb[0].mxu0
  %v1970 = vadd.f32 0.0, %v1969
  %v1971 = vpop.f32.mrb[0].mxu0
  %v1972 = vpop.f32.mrb[0].mxu0
  %v1973 = vadd.f32 0.0, %v1972
  %v1974 = vpop.f32.mrb[0].mxu0
  %1975 = vmatprep.mubr.bf16.mxu0 %v1639
  %1976 = vmatmul.mubr.bf16.gmra.mrb[0].mxu0 %v1638
  %v1977 = vpop.f32.mrb[0].mxu0
  %v1978 = vadd.f32 0.0, %v1977
  %v1979 = vpop.f32.mrb[0].mxu0
  %v1980 = vpop.f32.mrb[0].mxu0
  %v1981 = vadd.f32 0.0, %v1980
  %v1982 = vpop.f32.mrb[0].mxu0
  %1983 = vmatprep.mubr.bf16.mxu0 %v1642
  %1984 = vmatmul.mubr.bf16.gmra.mrb[0].mxu0 %v1641
  %v1985 = vpop.f32.mrb[0].mxu0
  %v1986 = vadd.f32 0.0, %v1985
  %v1987 = vpop.f32.mrb[0].mxu0
  %v1988 = vpop.f32.mrb[0].mxu0
  %v1989 = vadd.f32 0.0, %v1988
  %v1990 = vpop.f32.mrb[0].mxu0
  %1991 = vmatprep.mubr.bf16.mxu0 %v1645
  %1992 = vmatmul.mubr.bf16.gmra.mrb[0].mxu0 %v1644
  %v1993 = vpop.f32.mrb[0].mxu0
  %v1994 = vadd.f32 0.0, %v1993
  %v1995 = vpop.f32.mrb[0].mxu0
  %v1996 = vpop.f32.mrb[0].mxu0
  %v1997 = vadd.f32 0.0, %v1996
  %v1998 = vpop.f32.mrb[0].mxu0
  %1999 = vdwg.mxu0
  %2000 = vmatprep.subr.bf16.mxu0 0
  %2001 = vmatpush1.bf16.msra.mxu0 %v1771
  %2002 = vmatprep.subr.bf16.mxu0 0
  %2003 = vmatpush1.bf16.msra.mxu0 %v1772
  %2004 = vmatprep.subr.bf16.mxu0 0
  %2005 = vmatpush1.bf16.msra.mxu0 0
  %2006 = vmatprep.subr.bf16.mxu0 0
  %2007 = vmatpush1.bf16.msra.mxu0 0
  %2008 = vmatprep.subr.bf16.mxu0 0
  %2009 = vmatpush1.bf16.msra.mxu0 0
  %2010 = vmatprep.subr.bf16.mxu0 0
  %2011 = vmatpush1.bf16.msra.mxu0 0
  %2012 = vmatprep.subr.bf16.mxu0 0
  %2013 = vmatpush1.bf16.msra.mxu0 0
  %2014 = vmatprep.subr.bf16.mxu0 0
  %2015 = vmatpush1.bf16.msra.mxu0 0
  %2016 = vmatprep.subr.bf16.mxu0 0
  %2017 = vmatpush1.bf16.msra.mxu0 0
  %2018 = vmatprep.subr.bf16.mxu0 0
  %2019 = vmatpush1.bf16.msra.mxu0 0
  %2020 = vmatprep.subr.bf16.mxu0 0
  %2021 = vmatpush1.bf16.msra.mxu0 0
  %2022 = vmatprep.subr.bf16.mxu0 0
  %2023 = vmatpush1.bf16.msra.mxu0 0
  %2024 = vmatprep.subr.bf16.mxu0 0
  %2025 = vmatpush1.bf16.msra.mxu0 0
  %2026 = vmatprep.subr.bf16.mxu0 0
  %2027 = vmatpush1.bf16.msra.mxu0 0
  %2028 = vmatprep.subr.bf16.mxu0 0
  %2029 = vmatpush1.bf16.msra.mxu0 0
  %2030 = vmatprep.subr.bf16.mxu0 0
  %2031 = vmatpush1.bf16.msra.mxu0 0
  %2032 = vmatprep.mubr.bf16.mxu0 0
  %2033 = vmatmul.mubr.bf16.gmra.mrb[0].mxu0 %v1792
  %v2034 = vpop.f32.mrb[0].mxu0
  %v2035 = vadd.f32 %v1874, %v2034
  %v2036 = vpop.f32.mrb[0].mxu0
  %v2037 = vpop.f32.mrb[0].mxu0
  %v2038 = vadd.f32 %v1877, %v2037
  %v2039 = vpop.f32.mrb[0].mxu0
  %2040 = vmatprep.mubr.bf16.mxu0 0
  %2041 = vmatmul.mubr.bf16.gmra.mrb[0].mxu0 %v1795
  %v2042 = vpop.f32.mrb[0].mxu0
  %v2043 = vadd.f32 %v1882, %v2042
  %v2044 = vpop.f32.mrb[0].mxu0
  %v2045 = vpop.f32.mrb[0].mxu0
  %v2046 = vadd.f32 %v1885, %v2045
  %v2047 = vpop.f32.mrb[0].mxu0
  %2048 = vmatprep.mubr.bf16.mxu0 0
  %2049 = vmatmul.mubr.bf16.gmra.mrb[0].mxu0 %v1798
  %v2050 = vpop.f32.mrb[0].mxu0
  %v2051 = vadd.f32 %v1890, %v2050
  %v2052 = vpop.f32.mrb[0].mxu0
  %v2053 = vpop.f32.mrb[0].mxu0
  %v2054 = vadd.f32 %v1893, %v2053
  %v2055 = vpop.f32.mrb[0].mxu0
  %2056 = vmatprep.mubr.bf16.mxu0 0
  %2057 = vmatmul.mubr.bf16.gmra.mrb[0].mxu0 %v1801
  %v2058 = vpop.f32.mrb[0].mxu0
  %v2059 = vadd.f32 %v1898, %v2058
  %v2060 = vpop.f32.mrb[0].mxu0
  %v2061 = vpop.f32.mrb[0].mxu0
  %v2062 = vadd.f32 %v1901, %v2061
  %v2063 = vpop.f32.mrb[0].mxu0
  %2064 = vmatprep.mubr.bf16.mxu0 0
  %2065 = vmatmul.mubr.bf16.gmra.mrb[0].mxu0 %v1804
  %v2066 = vpop.f32.mrb[0].mxu0
  %v2067 = vadd.f32 %v1906, %v2066
  %v2068 = vpop.f32.mrb[0].mxu0
  %v2069 = vpop.f32.mrb[0].mxu0
  %v2070 = vadd.f32 %v1909, %v2069
  %v2071 = vpop.f32.mrb[0].mxu0
  %2072 = vmatprep.mubr.bf16.mxu0 0
  %2073 = vmatmul.mubr.bf16.gmra.mrb[0].mxu0 %v1807
  %v2074 = vpop.f32.mrb[0].mxu0
  %v2075 = vadd.f32 %v1914, %v2074
  %v2076 = vpop.f32.mrb[0].mxu0
  %v2077 = vpop.f32.mrb[0].mxu0
  %v2078 = vadd.f32 %v1917, %v2077
  %v2079 = vpop.f32.mrb[0].mxu0
  %2080 = vmatprep.mubr.bf16.mxu0 0
  %2081 = vmatmul.mubr.bf16.gmra.mrb[0].mxu0 %v1810
  %v2082 = vpop.f32.mrb[0].mxu0
  %v2083 = vadd.f32 %v1922, %v2082
  %v2084 = vpop.f32.mrb[0].mxu0
  %v2085 = vpop.f32.mrb[0].mxu0
  %v2086 = vadd.f32 %v1925, %v2085
  %v2087 = vpop.f32.mrb[0].mxu0
  %2088 = vmatprep.mubr.bf16.mxu0 0
  %2089 = vmatmul.mubr.bf16.gmra.mrb[0].mxu0 %v1813
  %v2090 = vpop.f32.mrb[0].mxu0
  %v2091 = vadd.f32 %v1930, %v2090
  %v2092 = vpop.f32.mrb[0].mxu0
  %v2093 = vpop.f32.mrb[0].mxu0
  %v2094 = vadd.f32 %v1933, %v2093
  %v2095 = vpop.f32.mrb[0].mxu0
  %2096 = vmatprep.mubr.bf16.mxu0 0
  %2097 = vmatmul.mubr.bf16.gmra.mrb[0].mxu0 %v1816
  %v2098 = vpop.f32.mrb[0].mxu0
  %v2099 = vadd.f32 %v1938, %v2098
  %v2100 = vpop.f32.mrb[0].mxu0
  %v2101 = vpop.f32.mrb[0].mxu0
  %v2102 = vadd.f32 %v1941, %v2101
  %v2103 = vpop.f32.mrb[0].mxu0
  %2104 = vmatprep.mubr.bf16.mxu0 0
  %2105 = vmatmul.mubr.bf16.gmra.mrb[0].mxu0 %v1819
  %v2106 = vpop.f32.mrb[0].mxu0
  %v2107 = vadd.f32 %v1946, %v2106
  %v2108 = vpop.f32.mrb[0].mxu0
  %v2109 = vpop.f32.mrb[0].mxu0
  %v2110 = vadd.f32 %v1949, %v2109
  %v2111 = vpop.f32.mrb[0].mxu0
  %2112 = vmatprep.mubr.bf16.mxu0 0
  %2113 = vmatmul.mubr.bf16.gmra.mrb[0].mxu0 %v1822
  %v2114 = vpop.f32.mrb[0].mxu0
  %v2115 = vadd.f32 %v1954, %v2114
  %v2116 = vpop.f32.mrb[0].mxu0
  %v2117 = vpop.f32.mrb[0].mxu0
  %v2118 = vadd.f32 %v1957, %v2117
  %v2119 = vpop.f32.mrb[0].mxu0
  %2120 = vmatprep.mubr.bf16.mxu0 0
  %2121 = vmatmul.mubr.bf16.gmra.mrb[0].mxu0 %v1825
  %v2122 = vpop.f32.mrb[0].mxu0
  %v2123 = vadd.f32 %v1962, %v2122
  %v2124 = vpop.f32.mrb[0].mxu0
  %v2125 = vpop.f32.mrb[0].mxu0
  %v2126 = vadd.f32 %v1965, %v2125
  %v2127 = vpop.f32.mrb[0].mxu0
  %2128 = vmatprep.mubr.bf16.mxu0 0
  %2129 = vmatmul.mubr.bf16.gmra.mrb[0].mxu0 %v1828
  %v2130 = vpop.f32.mrb[0].mxu0
  %v2131 = vadd.f32 %v1970, %v2130
  %v2132 = vpop.f32.mrb[0].mxu0
  %v2133 = vpop.f32.mrb[0].mxu0
  %v2134 = vadd.f32 %v1973, %v2133
  %v2135 = vpop.f32.mrb[0].mxu0
  %2136 = vmatprep.mubr.bf16.mxu0 0
  %2137 = vmatmul.mubr.bf16.gmra.mrb[0].mxu0 %v1831
  %v2138 = vpop.f32.mrb[0].mxu0
  %v2139 = vadd.f32 %v1978, %v2138
  %v2140 = vpop.f32.mrb[0].mxu0
  %v2141 = vpop.f32.mrb[0].mxu0
  %v2142 = vadd.f32 %v1981, %v2141
  %v2143 = vpop.f32.mrb[0].mxu0
  %2144 = vmatprep.mubr.bf16.mxu0 0
  %2145 = vmatmul.mubr.bf16.gmra.mrb[0].mxu0 %v1834
  %v2146 = vpop.f32.mrb[0].mxu0
  %v2147 = vadd.f32 %v1986, %v2146
  %v2148 = vpop.f32.mrb[0].mxu0
  %v2149 = vpop.f32.mrb[0].mxu0
  %v2150 = vadd.f32 %v1989, %v2149
  %v2151 = vpop.f32.mrb[0].mxu0
  %2152 = vmatprep.mubr.bf16.mxu0 0
  %2153 = vmatmul.mubr.bf16.gmra.mrb[0].mxu0 %v1837
  %v2154 = vpop.f32.mrb[0].mxu0
  %v2155 = vadd.f32 %v1994, %v2154
  %v2156 = vpop.f32.mrb[0].mxu0
  %v2157 = vpop.f32.mrb[0].mxu0
  %v2158 = vadd.f32 %v1997, %v2157
  %v2159 = vpop.f32.mrb[0].mxu0
  %2160 = vdwg.mxu0
  %2193 = vrot.lane.b32.xlu0 %v2035, 116
  %v2194 = vpop.permute.xlu0 %2193
  %2195 = vrot.lane.b32.xlu0 %v2038, 116
  %v2196 = vpop.permute.xlu0 %2195
  %2197 = vrot.lane.b32.xlu0 %v2043, 116
  %v2198 = vpop.permute.xlu0 %2197
  %2199 = vrot.lane.b32.xlu0 %v2046, 116
  %v2200 = vpop.permute.xlu0 %2199
  %2201 = vrot.lane.b32.xlu0 %v2051, 116
  %v2202 = vpop.permute.xlu0 %2201
  %2203 = vrot.lane.b32.xlu0 %v2054, 116
  %v2204 = vpop.permute.xlu0 %2203
  %2205 = vrot.lane.b32.xlu0 %v2059, 116
  %v2206 = vpop.permute.xlu0 %2205
  %2207 = vrot.lane.b32.xlu0 %v2062, 116
  %v2208 = vpop.permute.xlu0 %2207
  %2209 = vrot.lane.b32.xlu0 %v2067, 116
  %v2210 = vpop.permute.xlu0 %2209
  %2211 = vrot.lane.b32.xlu0 %v2070, 116
  %v2212 = vpop.permute.xlu0 %2211
  %2213 = vrot.lane.b32.xlu0 %v2075, 116
  %v2214 = vpop.permute.xlu0 %2213
  %2215 = vrot.lane.b32.xlu0 %v2078, 116
  %v2216 = vpop.permute.xlu0 %2215
  %2217 = vrot.lane.b32.xlu0 %v2083, 116
  %v2218 = vpop.permute.xlu0 %2217
  %2219 = vrot.lane.b32.xlu0 %v2086, 116
  %v2220 = vpop.permute.xlu0 %2219
  %2221 = vrot.lane.b32.xlu0 %v2091, 116
  %v2222 = vpop.permute.xlu0 %2221
  %2223 = vrot.lane.b32.xlu0 %v2094, 116
  %v2224 = vpop.permute.xlu0 %2223
  %2225 = vrot.lane.b32.xlu0 %v2099, 116
  %v2226 = vpop.permute.xlu0 %2225
  %2227 = vrot.lane.b32.xlu0 %v2102, 116
  %v2228 = vpop.permute.xlu0 %2227
  %2229 = vrot.lane.b32.xlu0 %v2107, 116
  %v2230 = vpop.permute.xlu0 %2229
  %2231 = vrot.lane.b32.xlu0 %v2110, 116
  %v2232 = vpop.permute.xlu0 %2231
  %2233 = vrot.lane.b32.xlu0 %v2115, 116
  %v2234 = vpop.permute.xlu0 %2233
  %2235 = vrot.lane.b32.xlu0 %v2118, 116
  %v2236 = vpop.permute.xlu0 %2235
  %2237 = vrot.lane.b32.xlu0 %v2123, 116
  %v2238 = vpop.permute.xlu0 %2237
  %2239 = vrot.lane.b32.xlu0 %v2126, 116
  %v2240 = vpop.permute.xlu0 %2239
  %2241 = vrot.lane.b32.xlu0 %v2131, 116
  %v2242 = vpop.permute.xlu0 %2241
  %2243 = vrot.lane.b32.xlu0 %v2134, 116
  %v2244 = vpop.permute.xlu0 %2243
  %2245 = vrot.lane.b32.xlu0 %v2139, 116
  %v2246 = vpop.permute.xlu0 %2245
  %2247 = vrot.lane.b32.xlu0 %v2142, 116
  %v2248 = vpop.permute.xlu0 %2247
  %2249 = vrot.lane.b32.xlu0 %v2147, 116
  %v2250 = vpop.permute.xlu0 %2249
  %2251 = vrot.lane.b32.xlu0 %v2150, 116
  %v2252 = vpop.permute.xlu0 %2251
  %2253 = vrot.lane.b32.xlu0 %v2155, 116
  %v2254 = vpop.permute.xlu0 %2253
  %2255 = vrot.lane.b32.xlu0 %v2158, 116
  %v2256 = vpop.permute.xlu0 %2255
  %v2289 = vmax.f32 %v2035, %v2194
  %v2290 = vmax.f32 %v2038, %v2196
  %v2291 = vmax.f32 %v2043, %v2198
  %v2292 = vmax.f32 %v2046, %v2200
  %v2293 = vmax.f32 %v2051, %v2202
  %v2294 = vmax.f32 %v2054, %v2204
  %v2295 = vmax.f32 %v2059, %v2206
  %v2296 = vmax.f32 %v2062, %v2208
  %v2297 = vmax.f32 %v2067, %v2210
  %v2298 = vmax.f32 %v2070, %v2212
  %v2299 = vmax.f32 %v2075, %v2214
  %v2300 = vmax.f32 %v2078, %v2216
  %v2301 = vmax.f32 %v2083, %v2218
  %v2302 = vmax.f32 %v2086, %v2220
  %v2303 = vmax.f32 %v2091, %v2222
  %v2304 = vmax.f32 %v2094, %v2224
  %v2305 = vmax.f32 %v2099, %v2226
  %v2306 = vmax.f32 %v2102, %v2228
  %v2307 = vmax.f32 %v2107, %v2230
  %v2308 = vmax.f32 %v2110, %v2232
  %v2309 = vmax.f32 %v2115, %v2234
  %v2310 = vmax.f32 %v2118, %v2236
  %v2311 = vmax.f32 %v2123, %v2238
  %v2312 = vmax.f32 %v2126, %v2240
  %v2313 = vmax.f32 %v2131, %v2242
  %v2314 = vmax.f32 %v2134, %v2244
  %v2315 = vmax.f32 %v2139, %v2246
  %v2316 = vmax.f32 %v2142, %v2248
  %v2317 = vmax.f32 %v2147, %v2250
  %v2318 = vmax.f32 %v2150, %v2252
  %v2319 = vmax.f32 %v2155, %v2254
  %v2320 = vmax.f32 %v2158, %v2256
  %2321 = vrot.lane.b32.xlu0 %v2035, 104
  %v2322 = vpop.permute.xlu0 %2321
  %2323 = vrot.lane.b32.xlu0 %v2038, 104
  %v2324 = vpop.permute.xlu0 %2323
  %2325 = vrot.lane.b32.xlu0 %v2043, 104
  %v2326 = vpop.permute.xlu0 %2325
  %2327 = vrot.lane.b32.xlu0 %v2046, 104
  %v2328 = vpop.permute.xlu0 %2327
  %2329 = vrot.lane.b32.xlu0 %v2051, 104
  %v2330 = vpop.permute.xlu0 %2329
  %2331 = vrot.lane.b32.xlu0 %v2054, 104
  %v2332 = vpop.permute.xlu0 %2331
  %2333 = vrot.lane.b32.xlu0 %v2059, 104
  %v2334 = vpop.permute.xlu0 %2333
  %2335 = vrot.lane.b32.xlu0 %v2062, 104
  %v2336 = vpop.permute.xlu0 %2335
  %2337 = vrot.lane.b32.xlu0 %v2067, 104
  %v2338 = vpop.permute.xlu0 %2337
  %2339 = vrot.lane.b32.xlu0 %v2070, 104
  %v2340 = vpop.permute.xlu0 %2339
  %2341 = vrot.lane.b32.xlu0 %v2075, 104
  %v2342 = vpop.permute.xlu0 %2341
  %2343 = vrot.lane.b32.xlu0 %v2078, 104
  %v2344 = vpop.permute.xlu0 %2343
  %2345 = vrot.lane.b32.xlu0 %v2083, 104
  %v2346 = vpop.permute.xlu0 %2345
  %2347 = vrot.lane.b32.xlu0 %v2086, 104
  %v2348 = vpop.permute.xlu0 %2347
  %2349 = vrot.lane.b32.xlu0 %v2091, 104
  %v2350 = vpop.permute.xlu0 %2349
  %2351 = vrot.lane.b32.xlu0 %v2094, 104
  %v2352 = vpop.permute.xlu0 %2351
  %2353 = vrot.lane.b32.xlu0 %v2099, 104
  %v2354 = vpop.permute.xlu0 %2353
  %2355 = vrot.lane.b32.xlu0 %v2102, 104
  %v2356 = vpop.permute.xlu0 %2355
  %2357 = vrot.lane.b32.xlu0 %v2107, 104
  %v2358 = vpop.permute.xlu0 %2357
  %2359 = vrot.lane.b32.xlu0 %v2110, 104
  %v2360 = vpop.permute.xlu0 %2359
  %2361 = vrot.lane.b32.xlu0 %v2115, 104
  %v2362 = vpop.permute.xlu0 %2361
  %2363 = vrot.lane.b32.xlu0 %v2118, 104
  %v2364 = vpop.permute.xlu0 %2363
  %2365 = vrot.lane.b32.xlu0 %v2123, 104
  %v2366 = vpop.permute.xlu0 %2365
  %2367 = vrot.lane.b32.xlu0 %v2126, 104
  %v2368 = vpop.permute.xlu0 %2367
  %2369 = vrot.lane.b32.xlu0 %v2131, 104
  %v2370 = vpop.permute.xlu0 %2369
  %2371 = vrot.lane.b32.xlu0 %v2134, 104
  %v2372 = vpop.permute.xlu0 %2371
  %2373 = vrot.lane.b32.xlu0 %v2139, 104
  %v2374 = vpop.permute.xlu0 %2373
  %2375 = vrot.lane.b32.xlu0 %v2142, 104
  %v2376 = vpop.permute.xlu0 %2375
  %2377 = vrot.lane.b32.xlu0 %v2147, 104
  %v2378 = vpop.permute.xlu0 %2377
  %2379 = vrot.lane.b32.xlu0 %v2150, 104
  %v2380 = vpop.permute.xlu0 %2379
  %2381 = vrot.lane.b32.xlu0 %v2155, 104
  %v2382 = vpop.permute.xlu0 %2381
  %2383 = vrot.lane.b32.xlu0 %v2158, 104
  %v2384 = vpop.permute.xlu0 %2383
  %v2417 = vmax.f32 %v2289, %v2322
  %v2418 = vmax.f32 %v2290, %v2324
  %v2419 = vmax.f32 %v2291, %v2326
  %v2420 = vmax.f32 %v2292, %v2328
  %v2421 = vmax.f32 %v2293, %v2330
  %v2422 = vmax.f32 %v2294, %v2332
  %v2423 = vmax.f32 %v2295, %v2334
  %v2424 = vmax.f32 %v2296, %v2336
  %v2425 = vmax.f32 %v2297, %v2338
  %v2426 = vmax.f32 %v2298, %v2340
  %v2427 = vmax.f32 %v2299, %v2342
  %v2428 = vmax.f32 %v2300, %v2344
  %v2429 = vmax.f32 %v2301, %v2346
  %v2430 = vmax.f32 %v2302, %v2348
  %v2431 = vmax.f32 %v2303, %v2350
  %v2432 = vmax.f32 %v2304, %v2352
  %v2433 = vmax.f32 %v2305, %v2354
  %v2434 = vmax.f32 %v2306, %v2356
  %v2435 = vmax.f32 %v2307, %v2358
  %v2436 = vmax.f32 %v2308, %v2360
  %v2437 = vmax.f32 %v2309, %v2362
  %v2438 = vmax.f32 %v2310, %v2364
  %v2439 = vmax.f32 %v2311, %v2366
  %v2440 = vmax.f32 %v2312, %v2368
  %v2441 = vmax.f32 %v2313, %v2370
  %v2442 = vmax.f32 %v2314, %v2372
  %v2443 = vmax.f32 %v2315, %v2374
  %v2444 = vmax.f32 %v2316, %v2376
  %v2445 = vmax.f32 %v2317, %v2378
  %v2446 = vmax.f32 %v2318, %v2380
  %v2447 = vmax.f32 %v2319, %v2382
  %v2448 = vmax.f32 %v2320, %v2384
  %v2449 = vsub.f32 %v2035, %v2417
  %v2450 = vsub.f32 %v2038, %v2418
  %v2451 = vsub.f32 %v2043, %v2419
  %v2452 = vsub.f32 %v2046, %v2420
  %v2453 = vsub.f32 %v2051, %v2421
  %v2454 = vsub.f32 %v2054, %v2422
  %v2455 = vsub.f32 %v2059, %v2423
  %v2456 = vsub.f32 %v2062, %v2424
  %v2457 = vsub.f32 %v2067, %v2425
  %v2458 = vsub.f32 %v2070, %v2426
  %v2459 = vsub.f32 %v2075, %v2427
  %v2460 = vsub.f32 %v2078, %v2428
  %v2461 = vsub.f32 %v2083, %v2429
  %v2462 = vsub.f32 %v2086, %v2430
  %v2463 = vsub.f32 %v2091, %v2431
  %v2464 = vsub.f32 %v2094, %v2432
  %v2465 = vsub.f32 %v2099, %v2433
  %v2466 = vsub.f32 %v2102, %v2434
  %v2467 = vsub.f32 %v2107, %v2435
  %v2468 = vsub.f32 %v2110, %v2436
  %v2469 = vsub.f32 %v2115, %v2437
  %v2470 = vsub.f32 %v2118, %v2438
  %v2471 = vsub.f32 %v2123, %v2439
  %v2472 = vsub.f32 %v2126, %v2440
  %v2473 = vsub.f32 %v2131, %v2441
  %v2474 = vsub.f32 %v2134, %v2442
  %v2475 = vsub.f32 %v2139, %v2443
  %v2476 = vsub.f32 %v2142, %v2444
  %v2477 = vsub.f32 %v2147, %v2445
  %v2478 = vsub.f32 %v2150, %v2446
  %v2479 = vsub.f32 %v2155, %v2447
  %v2480 = vsub.f32 %v2158, %v2448
  %v2481 = vmul.f32 %v2449, 1.442695
  %v2482 = vpow.pop %v2481
  %v2483 = vmul.f32 %v2450, 1.442695
  %v2484 = vpow.pop %v2483
  %v2485 = vmul.f32 %v2451, 1.442695
  %v2486 = vpow.pop %v2485
  %v2487 = vmul.f32 %v2452, 1.442695
  %v2488 = vpow.pop %v2487
  %v2489 = vmul.f32 %v2453, 1.442695
  %v2490 = vpow.pop %v2489
  %v2491 = vmul.f32 %v2454, 1.442695
  %v2492 = vpow.pop %v2491
  %v2493 = vmul.f32 %v2455, 1.442695
  %v2494 = vpow.pop %v2493
  %v2495 = vmul.f32 %v2456, 1.442695
  %v2496 = vpow.pop %v2495
  %v2497 = vmul.f32 %v2457, 1.442695
  %v2498 = vpow.pop %v2497
  %v2499 = vmul.f32 %v2458, 1.442695
  %v2500 = vpow.pop %v2499
  %v2501 = vmul.f32 %v2459, 1.442695
  %v2502 = vpow.pop %v2501
  %v2503 = vmul.f32 %v2460, 1.442695
  %v2504 = vpow.pop %v2503
  %v2505 = vmul.f32 %v2461, 1.442695
  %v2506 = vpow.pop %v2505
  %v2507 = vmul.f32 %v2462, 1.442695
  %v2508 = vpow.pop %v2507
  %v2509 = vmul.f32 %v2463, 1.442695
  %v2510 = vpow.pop %v2509
  %v2511 = vmul.f32 %v2464, 1.442695
  %v2512 = vpow.pop %v2511
  %v2513 = vmul.f32 %v2465, 1.442695
  %v2514 = vpow.pop %v2513
  %v2515 = vmul.f32 %v2466, 1.442695
  %v2516 = vpow.pop %v2515
  %v2517 = vmul.f32 %v2467, 1.442695
  %v2518 = vpow.pop %v2517
  %v2519 = vmul.f32 %v2468, 1.442695
  %v2520 = vpow.pop %v2519
  %v2521 = vmul.f32 %v2469, 1.442695
  %v2522 = vpow.pop %v2521
  %v2523 = vmul.f32 %v2470, 1.442695
  %v2524 = vpow.pop %v2523
  %v2525 = vmul.f32 %v2471, 1.442695
  %v2526 = vpow.pop %v2525
  %v2527 = vmul.f32 %v2472, 1.442695
  %v2528 = vpow.pop %v2527
  %v2529 = vmul.f32 %v2473, 1.442695
  %v2530 = vpow.pop %v2529
  %v2531 = vmul.f32 %v2474, 1.442695
  %v2532 = vpow.pop %v2531
  %v2533 = vmul.f32 %v2475, 1.442695
  %v2534 = vpow.pop %v2533
  %v2535 = vmul.f32 %v2476, 1.442695
  %v2536 = vpow.pop %v2535
  %v2537 = vmul.f32 %v2477, 1.442695
  %v2538 = vpow.pop %v2537
  %v2539 = vmul.f32 %v2478, 1.442695
  %v2540 = vpow.pop %v2539
  %v2541 = vmul.f32 %v2479, 1.442695
  %v2542 = vpow.pop %v2541
  %v2543 = vmul.f32 %v2480, 1.442695
  %v2544 = vpow.pop %v2543
  %2577 = vrot.lane.b32.xlu0 %v2417, 12
  %v2578 = vpop.permute.xlu0 %2577
  %2579 = vrot.lane.b32.xlu0 %v2418, 12
  %v2580 = vpop.permute.xlu0 %2579
  %2581 = vrot.lane.b32.xlu0 %v2419, 12
  %v2582 = vpop.permute.xlu0 %2581
  %2583 = vrot.lane.b32.xlu0 %v2420, 12
  %v2584 = vpop.permute.xlu0 %2583
  %2585 = vrot.lane.b32.xlu0 %v2421, 12
  %v2586 = vpop.permute.xlu0 %2585
  %2587 = vrot.lane.b32.xlu0 %v2422, 12
  %v2588 = vpop.permute.xlu0 %2587
  %2589 = vrot.lane.b32.xlu0 %v2423, 12
  %v2590 = vpop.permute.xlu0 %2589
  %2591 = vrot.lane.b32.xlu0 %v2424, 12
  %v2592 = vpop.permute.xlu0 %2591
  %2593 = vrot.lane.b32.xlu0 %v2425, 12
  %v2594 = vpop.permute.xlu0 %2593
  %2595 = vrot.lane.b32.xlu0 %v2426, 12
  %v2596 = vpop.permute.xlu0 %2595
  %2597 = vrot.lane.b32.xlu0 %v2427, 12
  %v2598 = vpop.permute.xlu0 %2597
  %2599 = vrot.lane.b32.xlu0 %v2428, 12
  %v2600 = vpop.permute.xlu0 %2599
  %2601 = vrot.lane.b32.xlu0 %v2429, 12
  %v2602 = vpop.permute.xlu0 %2601
  %2603 = vrot.lane.b32.xlu0 %v2430, 12
  %v2604 = vpop.permute.xlu0 %2603
  %2605 = vrot.lane.b32.xlu0 %v2431, 12
  %v2606 = vpop.permute.xlu0 %2605
  %2607 = vrot.lane.b32.xlu0 %v2432, 12
  %v2608 = vpop.permute.xlu0 %2607
  %2609 = vrot.lane.b32.xlu0 %v2433, 12
  %v2610 = vpop.permute.xlu0 %2609
  %2611 = vrot.lane.b32.xlu0 %v2434, 12
  %v2612 = vpop.permute.xlu0 %2611
  %2613 = vrot.lane.b32.xlu0 %v2435, 12
  %v2614 = vpop.permute.xlu0 %2613
  %2615 = vrot.lane.b32.xlu0 %v2436, 12
  %v2616 = vpop.permute.xlu0 %2615
  %2617 = vrot.lane.b32.xlu0 %v2437, 12
  %v2618 = vpop.permute.xlu0 %2617
  %2619 = vrot.lane.b32.xlu0 %v2438, 12
  %v2620 = vpop.permute.xlu0 %2619
  %2621 = vrot.lane.b32.xlu0 %v2439, 12
  %v2622 = vpop.permute.xlu0 %2621
  %2623 = vrot.lane.b32.xlu0 %v2440, 12
  %v2624 = vpop.permute.xlu0 %2623
  %2625 = vrot.lane.b32.xlu0 %v2441, 12
  %v2626 = vpop.permute.xlu0 %2625
  %2627 = vrot.lane.b32.xlu0 %v2442, 12
  %v2628 = vpop.permute.xlu0 %2627
  %2629 = vrot.lane.b32.xlu0 %v2443, 12
  %v2630 = vpop.permute.xlu0 %2629
  %2631 = vrot.lane.b32.xlu0 %v2444, 12
  %v2632 = vpop.permute.xlu0 %2631
  %2633 = vrot.lane.b32.xlu0 %v2445, 12
  %v2634 = vpop.permute.xlu0 %2633
  %2635 = vrot.lane.b32.xlu0 %v2446, 12
  %v2636 = vpop.permute.xlu0 %2635
  %2637 = vrot.lane.b32.xlu0 %v2447, 12
  %v2638 = vpop.permute.xlu0 %2637
  %2639 = vrot.lane.b32.xlu0 %v2448, 12
  %v2640 = vpop.permute.xlu0 %2639
  %v2673 = vsub.f32 %v2035, %v2578
  %v2674 = vsub.f32 %v2038, %v2580
  %v2675 = vsub.f32 %v2043, %v2582
  %v2676 = vsub.f32 %v2046, %v2584
  %v2677 = vsub.f32 %v2051, %v2586
  %v2678 = vsub.f32 %v2054, %v2588
  %v2679 = vsub.f32 %v2059, %v2590
  %v2680 = vsub.f32 %v2062, %v2592
  %v2681 = vsub.f32 %v2067, %v2594
  %v2682 = vsub.f32 %v2070, %v2596
  %v2683 = vsub.f32 %v2075, %v2598
  %v2684 = vsub.f32 %v2078, %v2600
  %v2685 = vsub.f32 %v2083, %v2602
  %v2686 = vsub.f32 %v2086, %v2604
  %v2687 = vsub.f32 %v2091, %v2606
  %v2688 = vsub.f32 %v2094, %v2608
  %v2689 = vsub.f32 %v2099, %v2610
  %v2690 = vsub.f32 %v2102, %v2612
  %v2691 = vsub.f32 %v2107, %v2614
  %v2692 = vsub.f32 %v2110, %v2616
  %v2693 = vsub.f32 %v2115, %v2618
  %v2694 = vsub.f32 %v2118, %v2620
  %v2695 = vsub.f32 %v2123, %v2622
  %v2696 = vsub.f32 %v2126, %v2624
  %v2697 = vsub.f32 %v2131, %v2626
  %v2698 = vsub.f32 %v2134, %v2628
  %v2699 = vsub.f32 %v2139, %v2630
  %v2700 = vsub.f32 %v2142, %v2632
  %v2701 = vsub.f32 %v2147, %v2634
  %v2702 = vsub.f32 %v2150, %v2636
  %v2703 = vsub.f32 %v2155, %v2638
  %v2704 = vsub.f32 %v2158, %v2640
  %v2705 = vmul.f32 %v2673, 1.442695
  %v2706 = vpow.pop %v2705
  %v2707 = vmul.f32 %v2674, 1.442695
  %v2708 = vpow.pop %v2707
  %v2709 = vmul.f32 %v2675, 1.442695
  %v2710 = vpow.pop %v2709
  %v2711 = vmul.f32 %v2676, 1.442695
  %v2712 = vpow.pop %v2711
  %v2713 = vmul.f32 %v2677, 1.442695
  %v2714 = vpow.pop %v2713
  %v2715 = vmul.f32 %v2678, 1.442695
  %v2716 = vpow.pop %v2715
  %v2717 = vmul.f32 %v2679, 1.442695
  %v2718 = vpow.pop %v2717
  %v2719 = vmul.f32 %v2680, 1.442695
  %v2720 = vpow.pop %v2719
  %v2721 = vmul.f32 %v2681, 1.442695
  %v2722 = vpow.pop %v2721
  %v2723 = vmul.f32 %v2682, 1.442695
  %v2724 = vpow.pop %v2723
  %v2725 = vmul.f32 %v2683, 1.442695
  %v2726 = vpow.pop %v2725
  %v2727 = vmul.f32 %v2684, 1.442695
  %v2728 = vpow.pop %v2727
  %v2729 = vmul.f32 %v2685, 1.442695
  %v2730 = vpow.pop %v2729
  %v2731 = vmul.f32 %v2686, 1.442695
  %v2732 = vpow.pop %v2731
  %v2733 = vmul.f32 %v2687, 1.442695
  %v2734 = vpow.pop %v2733
  %v2735 = vmul.f32 %v2688, 1.442695
  %v2736 = vpow.pop %v2735
  %v2737 = vmul.f32 %v2689, 1.442695
  %v2738 = vpow.pop %v2737
  %v2739 = vmul.f32 %v2690, 1.442695
  %v2740 = vpow.pop %v2739
  %v2741 = vmul.f32 %v2691, 1.442695
  %v2742 = vpow.pop %v2741
  %v2743 = vmul.f32 %v2692, 1.442695
  %v2744 = vpow.pop %v2743
  %v2745 = vmul.f32 %v2693, 1.442695
  %v2746 = vpow.pop %v2745
  %v2747 = vmul.f32 %v2694, 1.442695
  %v2748 = vpow.pop %v2747
  %v2749 = vmul.f32 %v2695, 1.442695
  %v2750 = vpow.pop %v2749
  %v2751 = vmul.f32 %v2696, 1.442695
  %v2752 = vpow.pop %v2751
  %v2753 = vmul.f32 %v2697, 1.442695
  %v2754 = vpow.pop %v2753
  %v2755 = vmul.f32 %v2698, 1.442695
  %v2756 = vpow.pop %v2755
  %v2757 = vmul.f32 %v2699, 1.442695
  %v2758 = vpow.pop %v2757
  %v2759 = vmul.f32 %v2700, 1.442695
  %v2760 = vpow.pop %v2759
  %v2761 = vmul.f32 %v2701, 1.442695
  %v2762 = vpow.pop %v2761
  %v2763 = vmul.f32 %v2702, 1.442695
  %v2764 = vpow.pop %v2763
  %v2765 = vmul.f32 %v2703, 1.442695
  %v2766 = vpow.pop %v2765
  %v2767 = vmul.f32 %v2704, 1.442695
  %v2768 = vpow.pop %v2767
  %2769 = vrot.lane.b32.xlu0 %v2417, 24
  %v2770 = vpop.permute.xlu0 %2769
  %2771 = vrot.lane.b32.xlu0 %v2418, 24
  %v2772 = vpop.permute.xlu0 %2771
  %2773 = vrot.lane.b32.xlu0 %v2419, 24
  %v2774 = vpop.permute.xlu0 %2773
  %2775 = vrot.lane.b32.xlu0 %v2420, 24
  %v2776 = vpop.permute.xlu0 %2775
  %2777 = vrot.lane.b32.xlu0 %v2421, 24
  %v2778 = vpop.permute.xlu0 %2777
  %2779 = vrot.lane.b32.xlu0 %v2422, 24
  %v2780 = vpop.permute.xlu0 %2779
  %2781 = vrot.lane.b32.xlu0 %v2423, 24
  %v2782 = vpop.permute.xlu0 %2781
  %2783 = vrot.lane.b32.xlu0 %v2424, 24
  %v2784 = vpop.permute.xlu0 %2783
  %2785 = vrot.lane.b32.xlu0 %v2425, 24
  %v2786 = vpop.permute.xlu0 %2785
  %2787 = vrot.lane.b32.xlu0 %v2426, 24
  %v2788 = vpop.permute.xlu0 %2787
  %2789 = vrot.lane.b32.xlu0 %v2427, 24
  %v2790 = vpop.permute.xlu0 %2789
  %2791 = vrot.lane.b32.xlu0 %v2428, 24
  %v2792 = vpop.permute.xlu0 %2791
  %2793 = vrot.lane.b32.xlu0 %v2429, 24
  %v2794 = vpop.permute.xlu0 %2793
  %2795 = vrot.lane.b32.xlu0 %v2430, 24
  %v2796 = vpop.permute.xlu0 %2795
  %2797 = vrot.lane.b32.xlu0 %v2431, 24
  %v2798 = vpop.permute.xlu0 %2797
  %2799 = vrot.lane.b32.xlu0 %v2432, 24
  %v2800 = vpop.permute.xlu0 %2799
  %2801 = vrot.lane.b32.xlu0 %v2433, 24
  %v2802 = vpop.permute.xlu0 %2801
  %2803 = vrot.lane.b32.xlu0 %v2434, 24
  %v2804 = vpop.permute.xlu0 %2803
  %2805 = vrot.lane.b32.xlu0 %v2435, 24
  %v2806 = vpop.permute.xlu0 %2805
  %2807 = vrot.lane.b32.xlu0 %v2436, 24
  %v2808 = vpop.permute.xlu0 %2807
  %2809 = vrot.lane.b32.xlu0 %v2437, 24
  %v2810 = vpop.permute.xlu0 %2809
  %2811 = vrot.lane.b32.xlu0 %v2438, 24
  %v2812 = vpop.permute.xlu0 %2811
  %2813 = vrot.lane.b32.xlu0 %v2439, 24
  %v2814 = vpop.permute.xlu0 %2813
  %2815 = vrot.lane.b32.xlu0 %v2440, 24
  %v2816 = vpop.permute.xlu0 %2815
  %2817 = vrot.lane.b32.xlu0 %v2441, 24
  %v2818 = vpop.permute.xlu0 %2817
  %2819 = vrot.lane.b32.xlu0 %v2442, 24
  %v2820 = vpop.permute.xlu0 %2819
  %2821 = vrot.lane.b32.xlu0 %v2443, 24
  %v2822 = vpop.permute.xlu0 %2821
  %2823 = vrot.lane.b32.xlu0 %v2444, 24
  %v2824 = vpop.permute.xlu0 %2823
  %2825 = vrot.lane.b32.xlu0 %v2445, 24
  %v2826 = vpop.permute.xlu0 %2825
  %2827 = vrot.lane.b32.xlu0 %v2446, 24
  %v2828 = vpop.permute.xlu0 %2827
  %2829 = vrot.lane.b32.xlu0 %v2447, 24
  %v2830 = vpop.permute.xlu0 %2829
  %2831 = vrot.lane.b32.xlu0 %v2448, 24
  %v2832 = vpop.permute.xlu0 %2831
  %v2865 = vsub.f32 %v2035, %v2770
  %v2866 = vsub.f32 %v2038, %v2772
  %v2867 = vsub.f32 %v2043, %v2774
  %v2868 = vsub.f32 %v2046, %v2776
  %v2869 = vsub.f32 %v2051, %v2778
  %v2870 = vsub.f32 %v2054, %v2780
  %v2871 = vsub.f32 %v2059, %v2782
  %v2872 = vsub.f32 %v2062, %v2784
  %v2873 = vsub.f32 %v2067, %v2786
  %v2874 = vsub.f32 %v2070, %v2788
  %v2875 = vsub.f32 %v2075, %v2790
  %v2876 = vsub.f32 %v2078, %v2792
  %v2877 = vsub.f32 %v2083, %v2794
  %v2878 = vsub.f32 %v2086, %v2796
  %v2879 = vsub.f32 %v2091, %v2798
  %v2880 = vsub.f32 %v2094, %v2800
  %v2881 = vsub.f32 %v2099, %v2802
  %v2882 = vsub.f32 %v2102, %v2804
  %v2883 = vsub.f32 %v2107, %v2806
  %v2884 = vsub.f32 %v2110, %v2808
  %v2885 = vsub.f32 %v2115, %v2810
  %v2886 = vsub.f32 %v2118, %v2812
  %v2887 = vsub.f32 %v2123, %v2814
  %v2888 = vsub.f32 %v2126, %v2816
  %v2889 = vsub.f32 %v2131, %v2818
  %v2890 = vsub.f32 %v2134, %v2820
  %v2891 = vsub.f32 %v2139, %v2822
  %v2892 = vsub.f32 %v2142, %v2824
  %v2893 = vsub.f32 %v2147, %v2826
  %v2894 = vsub.f32 %v2150, %v2828
  %v2895 = vsub.f32 %v2155, %v2830
  %v2896 = vsub.f32 %v2158, %v2832
  %v2897 = vmul.f32 %v2865, 1.442695
  %v2898 = vpow.pop %v2897
  %v2899 = vmul.f32 %v2866, 1.442695
  %v2900 = vpow.pop %v2899
  %v2901 = vmul.f32 %v2867, 1.442695
  %v2902 = vpow.pop %v2901
  %v2903 = vmul.f32 %v2868, 1.442695
  %v2904 = vpow.pop %v2903
  %v2905 = vmul.f32 %v2869, 1.442695
  %v2906 = vpow.pop %v2905
  %v2907 = vmul.f32 %v2870, 1.442695
  %v2908 = vpow.pop %v2907
  %v2909 = vmul.f32 %v2871, 1.442695
  %v2910 = vpow.pop %v2909
  %v2911 = vmul.f32 %v2872, 1.442695
  %v2912 = vpow.pop %v2911
  %v2913 = vmul.f32 %v2873, 1.442695
  %v2914 = vpow.pop %v2913
  %v2915 = vmul.f32 %v2874, 1.442695
  %v2916 = vpow.pop %v2915
  %v2917 = vmul.f32 %v2875, 1.442695
  %v2918 = vpow.pop %v2917
  %v2919 = vmul.f32 %v2876, 1.442695
  %v2920 = vpow.pop %v2919
  %v2921 = vmul.f32 %v2877, 1.442695
  %v2922 = vpow.pop %v2921
  %v2923 = vmul.f32 %v2878, 1.442695
  %v2924 = vpow.pop %v2923
  %v2925 = vmul.f32 %v2879, 1.442695
  %v2926 = vpow.pop %v2925
  %v2927 = vmul.f32 %v2880, 1.442695
  %v2928 = vpow.pop %v2927
  %v2929 = vmul.f32 %v2881, 1.442695
  %v2930 = vpow.pop %v2929
  %v2931 = vmul.f32 %v2882, 1.442695
  %v2932 = vpow.pop %v2931
  %v2933 = vmul.f32 %v2883, 1.442695
  %v2934 = vpow.pop %v2933
  %v2935 = vmul.f32 %v2884, 1.442695
  %v2936 = vpow.pop %v2935
  %v2937 = vmul.f32 %v2885, 1.442695
  %v2938 = vpow.pop %v2937
  %v2939 = vmul.f32 %v2886, 1.442695
  %v2940 = vpow.pop %v2939
  %v2941 = vmul.f32 %v2887, 1.442695
  %v2942 = vpow.pop %v2941
  %v2943 = vmul.f32 %v2888, 1.442695
  %v2944 = vpow.pop %v2943
  %v2945 = vmul.f32 %v2889, 1.442695
  %v2946 = vpow.pop %v2945
  %v2947 = vmul.f32 %v2890, 1.442695
  %v2948 = vpow.pop %v2947
  %v2949 = vmul.f32 %v2891, 1.442695
  %v2950 = vpow.pop %v2949
  %v2951 = vmul.f32 %v2892, 1.442695
  %v2952 = vpow.pop %v2951
  %v2953 = vmul.f32 %v2893, 1.442695
  %v2954 = vpow.pop %v2953
  %v2955 = vmul.f32 %v2894, 1.442695
  %v2956 = vpow.pop %v2955
  %v2957 = vmul.f32 %v2895, 1.442695
  %v2958 = vpow.pop %v2957
  %v2959 = vmul.f32 %v2896, 1.442695
  %v2960 = vpow.pop %v2959
  %2993 = vrot.lane.b32.xlu0 %v2706, 116
  %v2994 = vpop.permute.xlu0 %2993
  %2995 = vrot.lane.b32.xlu0 %v2708, 116
  %v2996 = vpop.permute.xlu0 %2995
  %2997 = vrot.lane.b32.xlu0 %v2710, 116
  %v2998 = vpop.permute.xlu0 %2997
  %2999 = vrot.lane.b32.xlu0 %v2712, 116
  %v3000 = vpop.permute.xlu0 %2999
  %3001 = vrot.lane.b32.xlu0 %v2714, 116
  %v3002 = vpop.permute.xlu0 %3001
  %3003 = vrot.lane.b32.xlu0 %v2716, 116
  %v3004 = vpop.permute.xlu0 %3003
  %3005 = vrot.lane.b32.xlu0 %v2718, 116
  %v3006 = vpop.permute.xlu0 %3005
  %3007 = vrot.lane.b32.xlu0 %v2720, 116
  %v3008 = vpop.permute.xlu0 %3007
  %3009 = vrot.lane.b32.xlu0 %v2722, 116
  %v3010 = vpop.permute.xlu0 %3009
  %3011 = vrot.lane.b32.xlu0 %v2724, 116
  %v3012 = vpop.permute.xlu0 %3011
  %3013 = vrot.lane.b32.xlu0 %v2726, 116
  %v3014 = vpop.permute.xlu0 %3013
  %3015 = vrot.lane.b32.xlu0 %v2728, 116
  %v3016 = vpop.permute.xlu0 %3015
  %3017 = vrot.lane.b32.xlu0 %v2730, 116
  %v3018 = vpop.permute.xlu0 %3017
  %3019 = vrot.lane.b32.xlu0 %v2732, 116
  %v3020 = vpop.permute.xlu0 %3019
  %3021 = vrot.lane.b32.xlu0 %v2734, 116
  %v3022 = vpop.permute.xlu0 %3021
  %3023 = vrot.lane.b32.xlu0 %v2736, 116
  %v3024 = vpop.permute.xlu0 %3023
  %3025 = vrot.lane.b32.xlu0 %v2738, 116
  %v3026 = vpop.permute.xlu0 %3025
  %3027 = vrot.lane.b32.xlu0 %v2740, 116
  %v3028 = vpop.permute.xlu0 %3027
  %3029 = vrot.lane.b32.xlu0 %v2742, 116
  %v3030 = vpop.permute.xlu0 %3029
  %3031 = vrot.lane.b32.xlu0 %v2744, 116
  %v3032 = vpop.permute.xlu0 %3031
  %3033 = vrot.lane.b32.xlu0 %v2746, 116
  %v3034 = vpop.permute.xlu0 %3033
  %3035 = vrot.lane.b32.xlu0 %v2748, 116
  %v3036 = vpop.permute.xlu0 %3035
  %3037 = vrot.lane.b32.xlu0 %v2750, 116
  %v3038 = vpop.permute.xlu0 %3037
  %3039 = vrot.lane.b32.xlu0 %v2752, 116
  %v3040 = vpop.permute.xlu0 %3039
  %3041 = vrot.lane.b32.xlu0 %v2754, 116
  %v3042 = vpop.permute.xlu0 %3041
  %3043 = vrot.lane.b32.xlu0 %v2756, 116
  %v3044 = vpop.permute.xlu0 %3043
  %3045 = vrot.lane.b32.xlu0 %v2758, 116
  %v3046 = vpop.permute.xlu0 %3045
  %3047 = vrot.lane.b32.xlu0 %v2760, 116
  %v3048 = vpop.permute.xlu0 %3047
  %3049 = vrot.lane.b32.xlu0 %v2762, 116
  %v3050 = vpop.permute.xlu0 %3049
  %3051 = vrot.lane.b32.xlu0 %v2764, 116
  %v3052 = vpop.permute.xlu0 %3051
  %3053 = vrot.lane.b32.xlu0 %v2766, 116
  %v3054 = vpop.permute.xlu0 %3053
  %3055 = vrot.lane.b32.xlu0 %v2768, 116
  %v3056 = vpop.permute.xlu0 %3055
  %v3089 = vadd.f32 %v2482, %v2994
  %v3090 = vadd.f32 %v2484, %v2996
  %v3091 = vadd.f32 %v2486, %v2998
  %v3092 = vadd.f32 %v2488, %v3000
  %v3093 = vadd.f32 %v2490, %v3002
  %v3094 = vadd.f32 %v2492, %v3004
  %v3095 = vadd.f32 %v2494, %v3006
  %v3096 = vadd.f32 %v2496, %v3008
  %v3097 = vadd.f32 %v2498, %v3010
  %v3098 = vadd.f32 %v2500, %v3012
  %v3099 = vadd.f32 %v2502, %v3014
  %v3100 = vadd.f32 %v2504, %v3016
  %v3101 = vadd.f32 %v2506, %v3018
  %v3102 = vadd.f32 %v2508, %v3020
  %v3103 = vadd.f32 %v2510, %v3022
  %v3104 = vadd.f32 %v2512, %v3024
  %v3105 = vadd.f32 %v2514, %v3026
  %v3106 = vadd.f32 %v2516, %v3028
  %v3107 = vadd.f32 %v2518, %v3030
  %v3108 = vadd.f32 %v2520, %v3032
  %v3109 = vadd.f32 %v2522, %v3034
  %v3110 = vadd.f32 %v2524, %v3036
  %v3111 = vadd.f32 %v2526, %v3038
  %v3112 = vadd.f32 %v2528, %v3040
  %v3113 = vadd.f32 %v2530, %v3042
  %v3114 = vadd.f32 %v2532, %v3044
  %v3115 = vadd.f32 %v2534, %v3046
  %v3116 = vadd.f32 %v2536, %v3048
  %v3117 = vadd.f32 %v2538, %v3050
  %v3118 = vadd.f32 %v2540, %v3052
  %v3119 = vadd.f32 %v2542, %v3054
  %v3120 = vadd.f32 %v2544, %v3056
  %3153 = vrot.lane.b32.xlu0 %v2898, 104
  %v3154 = vpop.permute.xlu0 %3153
  %3155 = vrot.lane.b32.xlu0 %v2900, 104
  %v3156 = vpop.permute.xlu0 %3155
  %3157 = vrot.lane.b32.xlu0 %v2902, 104
  %v3158 = vpop.permute.xlu0 %3157
  %3159 = vrot.lane.b32.xlu0 %v2904, 104
  %v3160 = vpop.permute.xlu0 %3159
  %3161 = vrot.lane.b32.xlu0 %v2906, 104
  %v3162 = vpop.permute.xlu0 %3161
  %3163 = vrot.lane.b32.xlu0 %v2908, 104
  %v3164 = vpop.permute.xlu0 %3163
  %3165 = vrot.lane.b32.xlu0 %v2910, 104
  %v3166 = vpop.permute.xlu0 %3165
  %3167 = vrot.lane.b32.xlu0 %v2912, 104
  %v3168 = vpop.permute.xlu0 %3167
  %3169 = vrot.lane.b32.xlu0 %v2914, 104
  %v3170 = vpop.permute.xlu0 %3169
  %3171 = vrot.lane.b32.xlu0 %v2916, 104
  %v3172 = vpop.permute.xlu0 %3171
  %3173 = vrot.lane.b32.xlu0 %v2918, 104
  %v3174 = vpop.permute.xlu0 %3173
  %3175 = vrot.lane.b32.xlu0 %v2920, 104
  %v3176 = vpop.permute.xlu0 %3175
  %3177 = vrot.lane.b32.xlu0 %v2922, 104
  %v3178 = vpop.permute.xlu0 %3177
  %3179 = vrot.lane.b32.xlu0 %v2924, 104
  %v3180 = vpop.permute.xlu0 %3179
  %3181 = vrot.lane.b32.xlu0 %v2926, 104
  %v3182 = vpop.permute.xlu0 %3181
  %3183 = vrot.lane.b32.xlu0 %v2928, 104
  %v3184 = vpop.permute.xlu0 %3183
  %3185 = vrot.lane.b32.xlu0 %v2930, 104
  %v3186 = vpop.permute.xlu0 %3185
  %3187 = vrot.lane.b32.xlu0 %v2932, 104
  %v3188 = vpop.permute.xlu0 %3187
  %3189 = vrot.lane.b32.xlu0 %v2934, 104
  %v3190 = vpop.permute.xlu0 %3189
  %3191 = vrot.lane.b32.xlu0 %v2936, 104
  %v3192 = vpop.permute.xlu0 %3191
  %3193 = vrot.lane.b32.xlu0 %v2938, 104
  %v3194 = vpop.permute.xlu0 %3193
  %3195 = vrot.lane.b32.xlu0 %v2940, 104
  %v3196 = vpop.permute.xlu0 %3195
  %3197 = vrot.lane.b32.xlu0 %v2942, 104
  %v3198 = vpop.permute.xlu0 %3197
  %3199 = vrot.lane.b32.xlu0 %v2944, 104
  %v3200 = vpop.permute.xlu0 %3199
  %3201 = vrot.lane.b32.xlu0 %v2946, 104
  %v3202 = vpop.permute.xlu0 %3201
  %3203 = vrot.lane.b32.xlu0 %v2948, 104
  %v3204 = vpop.permute.xlu0 %3203
  %3205 = vrot.lane.b32.xlu0 %v2950, 104
  %v3206 = vpop.permute.xlu0 %3205
  %3207 = vrot.lane.b32.xlu0 %v2952, 104
  %v3208 = vpop.permute.xlu0 %3207
  %3209 = vrot.lane.b32.xlu0 %v2954, 104
  %v3210 = vpop.permute.xlu0 %3209
  %3211 = vrot.lane.b32.xlu0 %v2956, 104
  %v3212 = vpop.permute.xlu0 %3211
  %3213 = vrot.lane.b32.xlu0 %v2958, 104
  %v3214 = vpop.permute.xlu0 %3213
  %3215 = vrot.lane.b32.xlu0 %v2960, 104
  %v3216 = vpop.permute.xlu0 %3215
  %v3249 = vadd.f32 %v3089, %v3154
  %v3250 = vadd.f32 %v3090, %v3156
  %v3251 = vadd.f32 %v3091, %v3158
  %v3252 = vadd.f32 %v3092, %v3160
  %v3253 = vadd.f32 %v3093, %v3162
  %v3254 = vadd.f32 %v3094, %v3164
  %v3255 = vadd.f32 %v3095, %v3166
  %v3256 = vadd.f32 %v3096, %v3168
  %v3257 = vadd.f32 %v3097, %v3170
  %v3258 = vadd.f32 %v3098, %v3172
  %v3259 = vadd.f32 %v3099, %v3174
  %v3260 = vadd.f32 %v3100, %v3176
  %v3261 = vadd.f32 %v3101, %v3178
  %v3262 = vadd.f32 %v3102, %v3180
  %v3263 = vadd.f32 %v3103, %v3182
  %v3264 = vadd.f32 %v3104, %v3184
  %v3265 = vadd.f32 %v3105, %v3186
  %v3266 = vadd.f32 %v3106, %v3188
  %v3267 = vadd.f32 %v3107, %v3190
  %v3268 = vadd.f32 %v3108, %v3192
  %v3269 = vadd.f32 %v3109, %v3194
  %v3270 = vadd.f32 %v3110, %v3196
  %v3271 = vadd.f32 %v3111, %v3198
  %v3272 = vadd.f32 %v3112, %v3200
  %v3273 = vadd.f32 %v3113, %v3202
  %v3274 = vadd.f32 %v3114, %v3204
  %v3275 = vadd.f32 %v3115, %v3206
  %v3276 = vadd.f32 %v3116, %v3208
  %v3277 = vadd.f32 %v3117, %v3210
  %v3278 = vadd.f32 %v3118, %v3212
  %v3279 = vadd.f32 %v3119, %v3214
  %v3280 = vadd.f32 %v3120, %v3216
  %v3281 = vrcp.pop %v3249
  %v3282 = vrcp.pop %v3250
  %v3283 = vrcp.pop %v3251
  %v3284 = vrcp.pop %v3252
  %v3285 = vrcp.pop %v3253
  %v3286 = vrcp.pop %v3254
  %v3287 = vrcp.pop %v3255
  %v3288 = vrcp.pop %v3256
  %v3289 = vrcp.pop %v3257
  %v3290 = vrcp.pop %v3258
  %v3291 = vrcp.pop %v3259
  %v3292 = vrcp.pop %v3260
  %v3293 = vrcp.pop %v3261
  %v3294 = vrcp.pop %v3262
  %v3295 = vrcp.pop %v3263
  %v3296 = vrcp.pop %v3264
  %v3297 = vrcp.pop %v3265
  %v3298 = vrcp.pop %v3266
  %v3299 = vrcp.pop %v3267
  %v3300 = vrcp.pop %v3268
  %v3301 = vrcp.pop %v3269
  %v3302 = vrcp.pop %v3270
  %v3303 = vrcp.pop %v3271
  %v3304 = vrcp.pop %v3272
  %v3305 = vrcp.pop %v3273
  %v3306 = vrcp.pop %v3274
  %v3307 = vrcp.pop %v3275
  %v3308 = vrcp.pop %v3276
  %v3309 = vrcp.pop %v3277
  %v3310 = vrcp.pop %v3278
  %v3311 = vrcp.pop %v3279
  %v3312 = vrcp.pop %v3280
  %v3313 = vmul.f32 %v2482, %v3281
  %v3314 = vmul.f32 %v2484, %v3282
  %v3315 = vmul.f32 %v2486, %v3283
  %v3316 = vmul.f32 %v2488, %v3284
  %v3317 = vmul.f32 %v2490, %v3285
  %v3318 = vmul.f32 %v2492, %v3286
  %v3319 = vmul.f32 %v2494, %v3287
  %v3320 = vmul.f32 %v2496, %v3288
  %v3321 = vmul.f32 %v2498, %v3289
  %v3322 = vmul.f32 %v2500, %v3290
  %v3323 = vmul.f32 %v2502, %v3291
  %v3324 = vmul.f32 %v2504, %v3292
  %v3325 = vmul.f32 %v2506, %v3293
  %v3326 = vmul.f32 %v2508, %v3294
  %v3327 = vmul.f32 %v2510, %v3295
  %v3328 = vmul.f32 %v2512, %v3296
  %v3329 = vmul.f32 %v2514, %v3297
  %v3330 = vmul.f32 %v2516, %v3298
  %v3331 = vmul.f32 %v2518, %v3299
  %v3332 = vmul.f32 %v2520, %v3300
  %v3333 = vmul.f32 %v2522, %v3301
  %v3334 = vmul.f32 %v2524, %v3302
  %v3335 = vmul.f32 %v2526, %v3303
  %v3336 = vmul.f32 %v2528, %v3304
  %v3337 = vmul.f32 %v2530, %v3305
  %v3338 = vmul.f32 %v2532, %v3306
  %v3339 = vmul.f32 %v2534, %v3307
  %v3340 = vmul.f32 %v2536, %v3308
  %v3341 = vmul.f32 %v2538, %v3309
  %v3342 = vmul.f32 %v2540, %v3310
  %v3343 = vmul.f32 %v2542, %v3311
  %v3344 = vmul.f32 %v2544, %v3312
  %3377 = vrot.lane.b32.xlu0 %v3281, 12
  %v3378 = vpop.permute.xlu0 %3377
  %3379 = vrot.lane.b32.xlu0 %v3282, 12
  %v3380 = vpop.permute.xlu0 %3379
  %3381 = vrot.lane.b32.xlu0 %v3283, 12
  %v3382 = vpop.permute.xlu0 %3381
  %3383 = vrot.lane.b32.xlu0 %v3284, 12
  %v3384 = vpop.permute.xlu0 %3383
  %3385 = vrot.lane.b32.xlu0 %v3285, 12
  %v3386 = vpop.permute.xlu0 %3385
  %3387 = vrot.lane.b32.xlu0 %v3286, 12
  %v3388 = vpop.permute.xlu0 %3387
  %3389 = vrot.lane.b32.xlu0 %v3287, 12
  %v3390 = vpop.permute.xlu0 %3389
  %3391 = vrot.lane.b32.xlu0 %v3288, 12
  %v3392 = vpop.permute.xlu0 %3391
  %3393 = vrot.lane.b32.xlu0 %v3289, 12
  %v3394 = vpop.permute.xlu0 %3393
  %3395 = vrot.lane.b32.xlu0 %v3290, 12
  %v3396 = vpop.permute.xlu0 %3395
  %3397 = vrot.lane.b32.xlu0 %v3291, 12
  %v3398 = vpop.permute.xlu0 %3397
  %3399 = vrot.lane.b32.xlu0 %v3292, 12
  %v3400 = vpop.permute.xlu0 %3399
  %3401 = vrot.lane.b32.xlu0 %v3293, 12
  %v3402 = vpop.permute.xlu0 %3401
  %3403 = vrot.lane.b32.xlu0 %v3294, 12
  %v3404 = vpop.permute.xlu0 %3403
  %3405 = vrot.lane.b32.xlu0 %v3295, 12
  %v3406 = vpop.permute.xlu0 %3405
  %3407 = vrot.lane.b32.xlu0 %v3296, 12
  %v3408 = vpop.permute.xlu0 %3407
  %3409 = vrot.lane.b32.xlu0 %v3297, 12
  %v3410 = vpop.permute.xlu0 %3409
  %3411 = vrot.lane.b32.xlu0 %v3298, 12
  %v3412 = vpop.permute.xlu0 %3411
  %3413 = vrot.lane.b32.xlu0 %v3299, 12
  %v3414 = vpop.permute.xlu0 %3413
  %3415 = vrot.lane.b32.xlu0 %v3300, 12
  %v3416 = vpop.permute.xlu0 %3415
  %3417 = vrot.lane.b32.xlu0 %v3301, 12
  %v3418 = vpop.permute.xlu0 %3417
  %3419 = vrot.lane.b32.xlu0 %v3302, 12
  %v3420 = vpop.permute.xlu0 %3419
  %3421 = vrot.lane.b32.xlu0 %v3303, 12
  %v3422 = vpop.permute.xlu0 %3421
  %3423 = vrot.lane.b32.xlu0 %v3304, 12
  %v3424 = vpop.permute.xlu0 %3423
  %3425 = vrot.lane.b32.xlu0 %v3305, 12
  %v3426 = vpop.permute.xlu0 %3425
  %3427 = vrot.lane.b32.xlu0 %v3306, 12
  %v3428 = vpop.permute.xlu0 %3427
  %3429 = vrot.lane.b32.xlu0 %v3307, 12
  %v3430 = vpop.permute.xlu0 %3429
  %3431 = vrot.lane.b32.xlu0 %v3308, 12
  %v3432 = vpop.permute.xlu0 %3431
  %3433 = vrot.lane.b32.xlu0 %v3309, 12
  %v3434 = vpop.permute.xlu0 %3433
  %3435 = vrot.lane.b32.xlu0 %v3310, 12
  %v3436 = vpop.permute.xlu0 %3435
  %3437 = vrot.lane.b32.xlu0 %v3311, 12
  %v3438 = vpop.permute.xlu0 %3437
  %3439 = vrot.lane.b32.xlu0 %v3312, 12
  %v3440 = vpop.permute.xlu0 %3439
  %v3473 = vmul.f32 %v2706, %v3378
  %v3474 = vmul.f32 %v2708, %v3380
  %v3475 = vmul.f32 %v2710, %v3382
  %v3476 = vmul.f32 %v2712, %v3384
  %v3477 = vmul.f32 %v2714, %v3386
  %v3478 = vmul.f32 %v2716, %v3388
  %v3479 = vmul.f32 %v2718, %v3390
  %v3480 = vmul.f32 %v2720, %v3392
  %v3481 = vmul.f32 %v2722, %v3394
  %v3482 = vmul.f32 %v2724, %v3396
  %v3483 = vmul.f32 %v2726, %v3398
  %v3484 = vmul.f32 %v2728, %v3400
  %v3485 = vmul.f32 %v2730, %v3402
  %v3486 = vmul.f32 %v2732, %v3404
  %v3487 = vmul.f32 %v2734, %v3406
  %v3488 = vmul.f32 %v2736, %v3408
  %v3489 = vmul.f32 %v2738, %v3410
  %v3490 = vmul.f32 %v2740, %v3412
  %v3491 = vmul.f32 %v2742, %v3414
  %v3492 = vmul.f32 %v2744, %v3416
  %v3493 = vmul.f32 %v2746, %v3418
  %v3494 = vmul.f32 %v2748, %v3420
  %v3495 = vmul.f32 %v2750, %v3422
  %v3496 = vmul.f32 %v2752, %v3424
  %v3497 = vmul.f32 %v2754, %v3426
  %v3498 = vmul.f32 %v2756, %v3428
  %v3499 = vmul.f32 %v2758, %v3430
  %v3500 = vmul.f32 %v2760, %v3432
  %v3501 = vmul.f32 %v2762, %v3434
  %v3502 = vmul.f32 %v2764, %v3436
  %v3503 = vmul.f32 %v2766, %v3438
  %v3504 = vmul.f32 %v2768, %v3440
  %3505 = vrot.lane.b32.xlu0 %v3281, 24
  %v3506 = vpop.permute.xlu0 %3505
  %3507 = vrot.lane.b32.xlu0 %v3282, 24
  %v3508 = vpop.permute.xlu0 %3507
  %3509 = vrot.lane.b32.xlu0 %v3283, 24
  %v3510 = vpop.permute.xlu0 %3509
  %3511 = vrot.lane.b32.xlu0 %v3284, 24
  %v3512 = vpop.permute.xlu0 %3511
  %3513 = vrot.lane.b32.xlu0 %v3285, 24
  %v3514 = vpop.permute.xlu0 %3513
  %3515 = vrot.lane.b32.xlu0 %v3286, 24
  %v3516 = vpop.permute.xlu0 %3515
  %3517 = vrot.lane.b32.xlu0 %v3287, 24
  %v3518 = vpop.permute.xlu0 %3517
  %3519 = vrot.lane.b32.xlu0 %v3288, 24
  %v3520 = vpop.permute.xlu0 %3519
  %3521 = vrot.lane.b32.xlu0 %v3289, 24
  %v3522 = vpop.permute.xlu0 %3521
  %3523 = vrot.lane.b32.xlu0 %v3290, 24
  %v3524 = vpop.permute.xlu0 %3523
  %3525 = vrot.lane.b32.xlu0 %v3291, 24
  %v3526 = vpop.permute.xlu0 %3525
  %3527 = vrot.lane.b32.xlu0 %v3292, 24
  %v3528 = vpop.permute.xlu0 %3527
  %3529 = vrot.lane.b32.xlu0 %v3293, 24
  %v3530 = vpop.permute.xlu0 %3529
  %3531 = vrot.lane.b32.xlu0 %v3294, 24
  %v3532 = vpop.permute.xlu0 %3531
  %3533 = vrot.lane.b32.xlu0 %v3295, 24
  %v3534 = vpop.permute.xlu0 %3533
  %3535 = vrot.lane.b32.xlu0 %v3296, 24
  %v3536 = vpop.permute.xlu0 %3535
  %3537 = vrot.lane.b32.xlu0 %v3297, 24
  %v3538 = vpop.permute.xlu0 %3537
  %3539 = vrot.lane.b32.xlu0 %v3298, 24
  %v3540 = vpop.permute.xlu0 %3539
  %3541 = vrot.lane.b32.xlu0 %v3299, 24
  %v3542 = vpop.permute.xlu0 %3541
  %3543 = vrot.lane.b32.xlu0 %v3300, 24
  %v3544 = vpop.permute.xlu0 %3543
  %3545 = vrot.lane.b32.xlu0 %v3301, 24
  %v3546 = vpop.permute.xlu0 %3545
  %3547 = vrot.lane.b32.xlu0 %v3302, 24
  %v3548 = vpop.permute.xlu0 %3547
  %3549 = vrot.lane.b32.xlu0 %v3303, 24
  %v3550 = vpop.permute.xlu0 %3549
  %3551 = vrot.lane.b32.xlu0 %v3304, 24
  %v3552 = vpop.permute.xlu0 %3551
  %3553 = vrot.lane.b32.xlu0 %v3305, 24
  %v3554 = vpop.permute.xlu0 %3553
  %3555 = vrot.lane.b32.xlu0 %v3306, 24
  %v3556 = vpop.permute.xlu0 %3555
  %3557 = vrot.lane.b32.xlu0 %v3307, 24
  %v3558 = vpop.permute.xlu0 %3557
  %3559 = vrot.lane.b32.xlu0 %v3308, 24
  %v3560 = vpop.permute.xlu0 %3559
  %3561 = vrot.lane.b32.xlu0 %v3309, 24
  %v3562 = vpop.permute.xlu0 %3561
  %3563 = vrot.lane.b32.xlu0 %v3310, 24
  %v3564 = vpop.permute.xlu0 %3563
  %3565 = vrot.lane.b32.xlu0 %v3311, 24
  %v3566 = vpop.permute.xlu0 %3565
  %3567 = vrot.lane.b32.xlu0 %v3312, 24
  %v3568 = vpop.permute.xlu0 %3567
  %v3601 = vmul.f32 %v2898, %v3506
  %v3602 = vmul.f32 %v2900, %v3508
  %v3603 = vmul.f32 %v2902, %v3510
  %v3604 = vmul.f32 %v2904, %v3512
  %v3605 = vmul.f32 %v2906, %v3514
  %v3606 = vmul.f32 %v2908, %v3516
  %v3607 = vmul.f32 %v2910, %v3518
  %v3608 = vmul.f32 %v2912, %v3520
  %v3609 = vmul.f32 %v2914, %v3522
  %v3610 = vmul.f32 %v2916, %v3524
  %v3611 = vmul.f32 %v2918, %v3526
  %v3612 = vmul.f32 %v2920, %v3528
  %v3613 = vmul.f32 %v2922, %v3530
  %v3614 = vmul.f32 %v2924, %v3532
  %v3615 = vmul.f32 %v2926, %v3534
  %v3616 = vmul.f32 %v2928, %v3536
  %v3617 = vmul.f32 %v2930, %v3538
  %v3618 = vmul.f32 %v2932, %v3540
  %v3619 = vmul.f32 %v2934, %v3542
  %v3620 = vmul.f32 %v2936, %v3544
  %v3621 = vmul.f32 %v2938, %v3546
  %v3622 = vmul.f32 %v2940, %v3548
  %v3623 = vmul.f32 %v2942, %v3550
  %v3624 = vmul.f32 %v2944, %v3552
  %v3625 = vmul.f32 %v2946, %v3554
  %v3626 = vmul.f32 %v2948, %v3556
  %v3627 = vmul.f32 %v2950, %v3558
  %v3628 = vmul.f32 %v2952, %v3560
  %v3629 = vmul.f32 %v2954, %v3562
  %v3630 = vmul.f32 %v2956, %v3564
  %v3631 = vmul.f32 %v2958, %v3566
  %v3632 = vmul.f32 %v2960, %v3568
  %vm3633 = vcmask 97280
  %v3634 = vsel %vm3633, %v3313, %v3473
  %v3635 = vsel %vm3633, %v3314, %v3474
  %v3636 = vsel %vm3633, %v3315, %v3475
  %v3637 = vsel %vm3633, %v3316, %v3476
  %v3638 = vsel %vm3633, %v3317, %v3477
  %v3639 = vsel %vm3633, %v3318, %v3478
  %v3640 = vsel %vm3633, %v3319, %v3479
  %v3641 = vsel %vm3633, %v3320, %v3480
  %v3642 = vsel %vm3633, %v3321, %v3481
  %v3643 = vsel %vm3633, %v3322, %v3482
  %v3644 = vsel %vm3633, %v3323, %v3483
  %v3645 = vsel %vm3633, %v3324, %v3484
  %v3646 = vsel %vm3633, %v3325, %v3485
  %v3647 = vsel %vm3633, %v3326, %v3486
  %v3648 = vsel %vm3633, %v3327, %v3487
  %v3649 = vsel %vm3633, %v3328, %v3488
  %v3650 = vsel %vm3633, %v3329, %v3489
  %v3651 = vsel %vm3633, %v3330, %v3490
  %v3652 = vsel %vm3633, %v3331, %v3491
  %v3653 = vsel %vm3633, %v3332, %v3492
  %v3654 = vsel %vm3633, %v3333, %v3493
  %v3655 = vsel %vm3633, %v3334, %v3494
  %v3656 = vsel %vm3633, %v3335, %v3495
  %v3657 = vsel %vm3633, %v3336, %v3496
  %v3658 = vsel %vm3633, %v3337, %v3497
  %v3659 = vsel %vm3633, %v3338, %v3498
  %v3660 = vsel %vm3633, %v3339, %v3499
  %v3661 = vsel %vm3633, %v3340, %v3500
  %v3662 = vsel %vm3633, %v3341, %v3501
  %v3663 = vsel %vm3633, %v3342, %v3502
  %v3664 = vsel %vm3633, %v3343, %v3503
  %v3665 = vsel %vm3633, %v3344, %v3504
  %vm3666 = vcmask 195584
  %v3667 = vsel %vm3666, %v3634, %v3601
  %v3668 = vsel %vm3666, %v3635, %v3602
  %v3669 = vsel %vm3666, %v3636, %v3603
  %v3670 = vsel %vm3666, %v3637, %v3604
  %v3671 = vsel %vm3666, %v3638, %v3605
  %v3672 = vsel %vm3666, %v3639, %v3606
  %v3673 = vsel %vm3666, %v3640, %v3607
  %v3674 = vsel %vm3666, %v3641, %v3608
  %v3675 = vsel %vm3666, %v3642, %v3609
  %v3676 = vsel %vm3666, %v3643, %v3610
  %v3677 = vsel %vm3666, %v3644, %v3611
  %v3678 = vsel %vm3666, %v3645, %v3612
  %v3679 = vsel %vm3666, %v3646, %v3613
  %v3680 = vsel %vm3666, %v3647, %v3614
  %v3681 = vsel %vm3666, %v3648, %v3615
  %v3682 = vsel %vm3666, %v3649, %v3616
  %v3683 = vsel %vm3666, %v3650, %v3617
  %v3684 = vsel %vm3666, %v3651, %v3618
  %v3685 = vsel %vm3666, %v3652, %v3619
  %v3686 = vsel %vm3666, %v3653, %v3620
  %v3687 = vsel %vm3666, %v3654, %v3621
  %v3688 = vsel %vm3666, %v3655, %v3622
  %v3689 = vsel %vm3666, %v3656, %v3623
  %v3690 = vsel %vm3666, %v3657, %v3624
  %v3691 = vsel %vm3666, %v3658, %v3625
  %v3692 = vsel %vm3666, %v3659, %v3626
  %v3693 = vsel %vm3666, %v3660, %v3627
  %v3694 = vsel %vm3666, %v3661, %v3628
  %v3695 = vsel %vm3666, %v3662, %v3629
  %v3696 = vsel %vm3666, %v3663, %v3630
  %v3697 = vsel %vm3666, %v3664, %v3631
  %v3698 = vsel %vm3666, %v3665, %v3632
  %v3699 = vpack.c.bf16 %v3668, %v3667
  %v3700 = vpack.c.bf16 %v3670, %v3669
  %v3701 = vpack.c.bf16 %v3672, %v3671
  %v3702 = vpack.c.bf16 %v3674, %v3673
  %v3703 = vpack.c.bf16 %v3676, %v3675
  %v3704 = vpack.c.bf16 %v3678, %v3677
  %v3705 = vpack.c.bf16 %v3680, %v3679
  %v3706 = vpack.c.bf16 %v3682, %v3681
  %v3707 = vpack.c.bf16 %v3684, %v3683
  %v3708 = vpack.c.bf16 %v3686, %v3685
  %v3709 = vpack.c.bf16 %v3688, %v3687
  %v3710 = vpack.c.bf16 %v3690, %v3689
  %v3711 = vpack.c.bf16 %v3692, %v3691
  %v3712 = vpack.c.bf16 %v3694, %v3693
  %v3713 = vpack.c.bf16 %v3696, %v3695
  %v3714 = vpack.c.bf16 %v3698, %v3697
  %v3715 = vld [vmem:[%s1 + $0x5b8] sm:$0xff]
  %v3716 = vld [vmem:[%s1 + $0x5c0] sm:$0xf]
  %v3717 = vld [vmem:[%s1 + $0x5c4] sm:$0xff]
  %v3718 = vld [vmem:[%s1 + $0x5cc] sm:$0xf]
  %v3719 = vld [vmem:[%s1 + $0x5d0] sm:$0xff]
  %v3720 = vld [vmem:[%s1 + $0x5d8] sm:$0xf]
  %v3721 = vld [vmem:[%s1 + $0x5dc] sm:$0xff]
  %v3722 = vld [vmem:[%s1 + $0x5e4] sm:$0xf]
  %v3723 = vld [vmem:[%s1 + $0x5e8] sm:$0x33]
  %v3724 = vld [vmem:[%s1 + $0x5f0] sm:$0x3]
  %v3735 = vunpack.c.l.b16 %v3715
  %v3736 = vunpack.c.h.b16 %v3715
  %v3737 = vunpack.c.l.b16 %v3716
  %v3738 = vunpack.c.l.b16 %v3717
  %v3739 = vunpack.c.h.b16 %v3717
  %v3740 = vunpack.c.l.b16 %v3718
  %v3741 = vunpack.c.l.b16 %v3719
  %v3742 = vunpack.c.h.b16 %v3719
  %v3743 = vunpack.c.l.b16 %v3720
  %v3744 = vunpack.c.l.b16 %v3721
  %v3745 = vunpack.c.h.b16 %v3721
  %v3746 = vunpack.c.l.b16 %v3722
  %v3747 = vunpack.c.l.b16 %v3723
  %v3748 = vunpack.c.h.b16 %v3723
  %v3749 = vunpack.c.l.b16 %v3724
  %v3750 = vpack.c.b16 %v3738, %v3735
  %v3751 = vpack.c.b16 %v3739, %v3736
  %v3752 = vpack.c.b16 %v3740, %v3737
  %v3753 = vpack.c.b16 %v3744, %v3741
  %v3754 = vpack.c.b16 %v3745, %v3742
  %v3755 = vpack.c.b16 %v3746, %v3743
  %v3756 = vpack.c.b16 %v3747, %v3747
  %v3757 = vpack.c.b16 %v3748, %v3748
  %v3758 = vpack.c.b16 %v3749, %v3749
  %vm3765 = vcmask 293888
  %v3767 = vsel %vm3765, %v3699, 0
  %v3770 = vsel %vm3765, %v3700, 0
  %v3773 = vsel %vm3765, %v3701, 0
  %v3776 = vsel %vm3765, %v3702, 0
  %v3779 = vsel %vm3765, %v3703, 0
  %v3782 = vsel %vm3765, %v3704, 0
  %v3785 = vsel %vm3765, %v3705, 0
  %v3788 = vsel %vm3765, %v3706, 0
  %v3791 = vsel %vm3765, %v3707, 0
  %v3794 = vsel %vm3765, %v3708, 0
  %v3797 = vsel %vm3765, %v3709, 0
  %v3800 = vsel %vm3765, %v3710, 0
  %v3803 = vsel %vm3765, %v3711, 0
  %v3806 = vsel %vm3765, %v3712, 0
  %v3809 = vsel %vm3765, %v3713, 0
  %v3812 = vsel %vm3765, %v3714, 0
  %vm3814 = vcmask 1041408
  %v3816 = vsel %vm3814, %v3756, 0
  %v3819 = vsel %vm3814, %v3757, 0
  %v3822 = vsel %vm3814, %v3758, 0
  %3824 = vmatprep.subr.bf16.mxu0 %v3751
  %3825 = vmatpush1.bf16.msra.mxu0 %v3750
  %3826 = vmatprep.subr.bf16.mxu0 %v3754
  %3827 = vmatpush1.bf16.msra.mxu0 %v3753
  %3828 = vmatprep.subr.bf16.mxu0 %v3819
  %3829 = vmatpush1.bf16.msra.mxu0 %v3816
  %3830 = vmatprep.subr.bf16.mxu0 0
  %3831 = vmatpush1.bf16.msra.mxu0 0
  %3832 = vmatprep.subr.bf16.mxu0 0
  %3833 = vmatpush1.bf16.msra.mxu0 0
  %3834 = vmatprep.subr.bf16.mxu0 0
  %3835 = vmatpush1.bf16.msra.mxu0 0
  %3836 = vmatprep.subr.bf16.mxu0 0
  %3837 = vmatpush1.bf16.msra.mxu0 0
  %3838 = vmatprep.subr.bf16.mxu0 0
  %3839 = vmatpush1.bf16.msra.mxu0 0
  %3840 = vmatprep.subr.bf16.mxu0 0
  %3841 = vmatpush1.bf16.msra.mxu0 0
  %3842 = vmatprep.subr.bf16.mxu0 0
  %3843 = vmatpush1.bf16.msra.mxu0 0
  %3844 = vmatprep.subr.bf16.mxu0 0
  %3845 = vmatpush1.bf16.msra.mxu0 0
  %3846 = vmatprep.subr.bf16.mxu0 0
  %3847 = vmatpush1.bf16.msra.mxu0 0
  %3848 = vmatprep.subr.bf16.mxu0 0
  %3849 = vmatpush1.bf16.msra.mxu0 0
  %3850 = vmatprep.subr.bf16.mxu0 0
  %3851 = vmatpush1.bf16.msra.mxu0 0
  %3852 = vmatprep.subr.bf16.mxu0 0
  %3853 = vmatpush1.bf16.msra.mxu0 0
  %3854 = vmatprep.subr.bf16.mxu0 0
  %3855 = vmatpush1.bf16.msra.mxu0 0
  %3856 = vmatprep.mubr.bf16.mxu0 0
  %3857 = vmatmul.mubr.bf16.gmra.mrb[0].mxu0 %v3767
  %v3858 = vpop.f32.mrb[0].mxu0
  %v3859 = vadd.f32 0.0, %v3858
  %v3860 = vpop.f32.mrb[0].mxu0
  %v3861 = vadd.f32 0.0, %v3860
  %v3862 = vpop.f32.mrb[0].mxu0
  %v3863 = vadd.f32 0.0, %v3862
  %v3864 = vpop.f32.mrb[0].mxu0
  %v3865 = vadd.f32 0.0, %v3864
  %3866 = vmatprep.mubr.bf16.mxu0 0
  %3867 = vmatmul.mubr.bf16.gmra.mrb[0].mxu0 %v3770
  %v3868 = vpop.f32.mrb[0].mxu0
  %v3869 = vadd.f32 0.0, %v3868
  %v3870 = vpop.f32.mrb[0].mxu0
  %v3871 = vadd.f32 0.0, %v3870
  %v3872 = vpop.f32.mrb[0].mxu0
  %v3873 = vadd.f32 0.0, %v3872
  %v3874 = vpop.f32.mrb[0].mxu0
  %v3875 = vadd.f32 0.0, %v3874
  %3876 = vmatprep.mubr.bf16.mxu0 0
  %3877 = vmatmul.mubr.bf16.gmra.mrb[0].mxu0 %v3773
  %v3878 = vpop.f32.mrb[0].mxu0
  %v3879 = vadd.f32 0.0, %v3878
  %v3880 = vpop.f32.mrb[0].mxu0
  %v3881 = vadd.f32 0.0, %v3880
  %v3882 = vpop.f32.mrb[0].mxu0
  %v3883 = vadd.f32 0.0, %v3882
  %v3884 = vpop.f32.mrb[0].mxu0
  %v3885 = vadd.f32 0.0, %v3884
  %3886 = vmatprep.mubr.bf16.mxu0 0
  %3887 = vmatmul.mubr.bf16.gmra.mrb[0].mxu0 %v3776
  %v3888 = vpop.f32.mrb[0].mxu0
  %v3889 = vadd.f32 0.0, %v3888
  %v3890 = vpop.f32.mrb[0].mxu0
  %v3891 = vadd.f32 0.0, %v3890
  %v3892 = vpop.f32.mrb[0].mxu0
  %v3893 = vadd.f32 0.0, %v3892
  %v3894 = vpop.f32.mrb[0].mxu0
  %v3895 = vadd.f32 0.0, %v3894
  %3896 = vmatprep.mubr.bf16.mxu0 0
  %3897 = vmatmul.mubr.bf16.gmra.mrb[0].mxu0 %v3779
  %v3898 = vpop.f32.mrb[0].mxu0
  %v3899 = vadd.f32 0.0, %v3898
  %v3900 = vpop.f32.mrb[0].mxu0
  %v3901 = vadd.f32 0.0, %v3900
  %v3902 = vpop.f32.mrb[0].mxu0
  %v3903 = vadd.f32 0.0, %v3902
  %v3904 = vpop.f32.mrb[0].mxu0
  %v3905 = vadd.f32 0.0, %v3904
  %3906 = vmatprep.mubr.bf16.mxu0 0
  %3907 = vmatmul.mubr.bf16.gmra.mrb[0].mxu0 %v3782
  %v3908 = vpop.f32.mrb[0].mxu0
  %v3909 = vadd.f32 0.0, %v3908
  %v3910 = vpop.f32.mrb[0].mxu0
  %v3911 = vadd.f32 0.0, %v3910
  %v3912 = vpop.f32.mrb[0].mxu0
  %v3913 = vadd.f32 0.0, %v3912
  %v3914 = vpop.f32.mrb[0].mxu0
  %v3915 = vadd.f32 0.0, %v3914
  %3916 = vmatprep.mubr.bf16.mxu0 0
  %3917 = vmatmul.mubr.bf16.gmra.mrb[0].mxu0 %v3785
  %v3918 = vpop.f32.mrb[0].mxu0
  %v3919 = vadd.f32 0.0, %v3918
  %v3920 = vpop.f32.mrb[0].mxu0
  %v3921 = vadd.f32 0.0, %v3920
  %v3922 = vpop.f32.mrb[0].mxu0
  %v3923 = vadd.f32 0.0, %v3922
  %v3924 = vpop.f32.mrb[0].mxu0
  %v3925 = vadd.f32 0.0, %v3924
  %3926 = vmatprep.mubr.bf16.mxu0 0
  %3927 = vmatmul.mubr.bf16.gmra.mrb[0].mxu0 %v3788
  %v3928 = vpop.f32.mrb[0].mxu0
  %v3929 = vadd.f32 0.0, %v3928
  %v3930 = vpop.f32.mrb[0].mxu0
  %v3931 = vadd.f32 0.0, %v3930
  %v3932 = vpop.f32.mrb[0].mxu0
  %v3933 = vadd.f32 0.0, %v3932
  %v3934 = vpop.f32.mrb[0].mxu0
  %v3935 = vadd.f32 0.0, %v3934
  %3936 = vmatprep.mubr.bf16.mxu0 0
  %3937 = vmatmul.mubr.bf16.gmra.mrb[0].mxu0 %v3791
  %v3938 = vpop.f32.mrb[0].mxu0
  %v3939 = vadd.f32 0.0, %v3938
  %v3940 = vpop.f32.mrb[0].mxu0
  %v3941 = vadd.f32 0.0, %v3940
  %v3942 = vpop.f32.mrb[0].mxu0
  %v3943 = vadd.f32 0.0, %v3942
  %v3944 = vpop.f32.mrb[0].mxu0
  %v3945 = vadd.f32 0.0, %v3944
  %3946 = vmatprep.mubr.bf16.mxu0 0
  %3947 = vmatmul.mubr.bf16.gmra.mrb[0].mxu0 %v3794
  %v3948 = vpop.f32.mrb[0].mxu0
  %v3949 = vadd.f32 0.0, %v3948
  %v3950 = vpop.f32.mrb[0].mxu0
  %v3951 = vadd.f32 0.0, %v3950
  %v3952 = vpop.f32.mrb[0].mxu0
  %v3953 = vadd.f32 0.0, %v3952
  %v3954 = vpop.f32.mrb[0].mxu0
  %v3955 = vadd.f32 0.0, %v3954
  %3956 = vmatprep.mubr.bf16.mxu0 0
  %3957 = vmatmul.mubr.bf16.gmra.mrb[0].mxu0 %v3797
  %v3958 = vpop.f32.mrb[0].mxu0
  %v3959 = vadd.f32 0.0, %v3958
  %v3960 = vpop.f32.mrb[0].mxu0
  %v3961 = vadd.f32 0.0, %v3960
  %v3962 = vpop.f32.mrb[0].mxu0
  %v3963 = vadd.f32 0.0, %v3962
  %v3964 = vpop.f32.mrb[0].mxu0
  %v3965 = vadd.f32 0.0, %v3964
  %3966 = vmatprep.mubr.bf16.mxu0 0
  %3967 = vmatmul.mubr.bf16.gmra.mrb[0].mxu0 %v3800
  %v3968 = vpop.f32.mrb[0].mxu0
  %v3969 = vadd.f32 0.0, %v3968
  %v3970 = vpop.f32.mrb[0].mxu0
  %v3971 = vadd.f32 0.0, %v3970
  %v3972 = vpop.f32.mrb[0].mxu0
  %v3973 = vadd.f32 0.0, %v3972
  %v3974 = vpop.f32.mrb[0].mxu0
  %v3975 = vadd.f32 0.0, %v3974
  %3976 = vmatprep.mubr.bf16.mxu0 0
  %3977 = vmatmul.mubr.bf16.gmra.mrb[0].mxu0 %v3803
  %v3978 = vpop.f32.mrb[0].mxu0
  %v3979 = vadd.f32 0.0, %v3978
  %v3980 = vpop.f32.mrb[0].mxu0
  %v3981 = vadd.f32 0.0, %v3980
  %v3982 = vpop.f32.mrb[0].mxu0
  %v3983 = vadd.f32 0.0, %v3982
  %v3984 = vpop.f32.mrb[0].mxu0
  %v3985 = vadd.f32 0.0, %v3984
  %3986 = vmatprep.mubr.bf16.mxu0 0
  %3987 = vmatmul.mubr.bf16.gmra.mrb[0].mxu0 %v3806
  %v3988 = vpop.f32.mrb[0].mxu0
  %v3989 = vadd.f32 0.0, %v3988
  %v3990 = vpop.f32.mrb[0].mxu0
  %v3991 = vadd.f32 0.0, %v3990
  %v3992 = vpop.f32.mrb[0].mxu0
  %v3993 = vadd.f32 0.0, %v3992
  %v3994 = vpop.f32.mrb[0].mxu0
  %v3995 = vadd.f32 0.0, %v3994
  %3996 = vmatprep.mubr.bf16.mxu0 0
  %3997 = vmatmul.mubr.bf16.gmra.mrb[0].mxu0 %v3809
  %v3998 = vpop.f32.mrb[0].mxu0
  %v3999 = vadd.f32 0.0, %v3998
  %v4000 = vpop.f32.mrb[0].mxu0
  %v4001 = vadd.f32 0.0, %v4000
  %v4002 = vpop.f32.mrb[0].mxu0
  %v4003 = vadd.f32 0.0, %v4002
  %v4004 = vpop.f32.mrb[0].mxu0
  %v4005 = vadd.f32 0.0, %v4004
  %4006 = vmatprep.mubr.bf16.mxu0 0
  %4007 = vmatmul.mubr.bf16.gmra.mrb[0].mxu0 %v3812
  %v4008 = vpop.f32.mrb[0].mxu0
  %v4009 = vadd.f32 0.0, %v4008
  %v4010 = vpop.f32.mrb[0].mxu0
  %v4011 = vadd.f32 0.0, %v4010
  %v4012 = vpop.f32.mrb[0].mxu0
  %v4013 = vadd.f32 0.0, %v4012
  %v4014 = vpop.f32.mrb[0].mxu0
  %v4015 = vadd.f32 0.0, %v4014
  %4016 = vdwg.mxu0
  %4017 = vmatprep.subr.bf16.mxu0 0
  %4018 = vmatpush1.bf16.msra.mxu0 %v3752
  %4019 = vmatprep.subr.bf16.mxu0 0
  %4020 = vmatpush1.bf16.msra.mxu0 %v3755
  %4021 = vmatprep.subr.bf16.mxu0 0
  %4022 = vmatpush1.bf16.msra.mxu0 %v3822
  %4023 = vmatprep.subr.bf16.mxu0 0
  %4024 = vmatpush1.bf16.msra.mxu0 0
  %4025 = vmatprep.subr.bf16.mxu0 0
  %4026 = vmatpush1.bf16.msra.mxu0 0
  %4027 = vmatprep.subr.bf16.mxu0 0
  %4028 = vmatpush1.bf16.msra.mxu0 0
  %4029 = vmatprep.subr.bf16.mxu0 0
  %4030 = vmatpush1.bf16.msra.mxu0 0
  %4031 = vmatprep.subr.bf16.mxu0 0
  %4032 = vmatpush1.bf16.msra.mxu0 0
  %4033 = vmatprep.subr.bf16.mxu0 0
  %4034 = vmatpush1.bf16.msra.mxu0 0
  %4035 = vmatprep.subr.bf16.mxu0 0
  %4036 = vmatpush1.bf16.msra.mxu0 0
  %4037 = vmatprep.subr.bf16.mxu0 0
  %4038 = vmatpush1.bf16.msra.mxu0 0
  %4039 = vmatprep.subr.bf16.mxu0 0
  %4040 = vmatpush1.bf16.msra.mxu0 0
  %4041 = vmatprep.subr.bf16.mxu0 0
  %4042 = vmatpush1.bf16.msra.mxu0 0
  %4043 = vmatprep.subr.bf16.mxu0 0
  %4044 = vmatpush1.bf16.msra.mxu0 0
  %4045 = vmatprep.subr.bf16.mxu0 0
  %4046 = vmatpush1.bf16.msra.mxu0 0
  %4047 = vmatprep.subr.bf16.mxu0 0
  %4048 = vmatpush1.bf16.msra.mxu0 0
  %4049 = vmatprep.mubr.bf16.mxu0 0
  %4050 = vmatmul.mubr.bf16.gmra.mrb[0].mxu0 %v3767
  %v4051 = vpop.f32.mrb[0].mxu0
  %v4052 = vadd.f32 0.0, %v4051
  %v4053 = vpop.f32.mrb[0].mxu0
  %v4054 = vpop.f32.mrb[0].mxu0
  %v4055 = vadd.f32 0.0, %v4054
  %v4056 = vpop.f32.mrb[0].mxu0
  %4057 = vmatprep.mubr.bf16.mxu0 0
  %4058 = vmatmul.mubr.bf16.gmra.mrb[0].mxu0 %v3770
  %v4059 = vpop.f32.mrb[0].mxu0
  %v4060 = vadd.f32 0.0, %v4059
  %v4061 = vpop.f32.mrb[0].mxu0
  %v4062 = vpop.f32.mrb[0].mxu0
  %v4063 = vadd.f32 0.0, %v4062
  %v4064 = vpop.f32.mrb[0].mxu0
  %4065 = vmatprep.mubr.bf16.mxu0 0
  %4066 = vmatmul.mubr.bf16.gmra.mrb[0].mxu0 %v3773
  %v4067 = vpop.f32.mrb[0].mxu0
  %v4068 = vadd.f32 0.0, %v4067
  %v4069 = vpop.f32.mrb[0].mxu0
  %v4070 = vpop.f32.mrb[0].mxu0
  %v4071 = vadd.f32 0.0, %v4070
  %v4072 = vpop.f32.mrb[0].mxu0
  %4073 = vmatprep.mubr.bf16.mxu0 0
  %4074 = vmatmul.mubr.bf16.gmra.mrb[0].mxu0 %v3776
  %v4075 = vpop.f32.mrb[0].mxu0
  %v4076 = vadd.f32 0.0, %v4075
  %v4077 = vpop.f32.mrb[0].mxu0
  %v4078 = vpop.f32.mrb[0].mxu0
  %v4079 = vadd.f32 0.0, %v4078
  %v4080 = vpop.f32.mrb[0].mxu0
  %4081 = vmatprep.mubr.bf16.mxu0 0
  %4082 = vmatmul.mubr.bf16.gmra.mrb[0].mxu0 %v3779
  %v4083 = vpop.f32.mrb[0].mxu0
  %v4084 = vadd.f32 0.0, %v4083
  %v4085 = vpop.f32.mrb[0].mxu0
  %v4086 = vpop.f32.mrb[0].mxu0
  %v4087 = vadd.f32 0.0, %v4086
  %v4088 = vpop.f32.mrb[0].mxu0
  %4089 = vmatprep.mubr.bf16.mxu0 0
  %4090 = vmatmul.mubr.bf16.gmra.mrb[0].mxu0 %v3782
  %v4091 = vpop.f32.mrb[0].mxu0
  %v4092 = vadd.f32 0.0, %v4091
  %v4093 = vpop.f32.mrb[0].mxu0
  %v4094 = vpop.f32.mrb[0].mxu0
  %v4095 = vadd.f32 0.0, %v4094
  %v4096 = vpop.f32.mrb[0].mxu0
  %4097 = vmatprep.mubr.bf16.mxu0 0
  %4098 = vmatmul.mubr.bf16.gmra.mrb[0].mxu0 %v3785
  %v4099 = vpop.f32.mrb[0].mxu0
  %v4100 = vadd.f32 0.0, %v4099
  %v4101 = vpop.f32.mrb[0].mxu0
  %v4102 = vpop.f32.mrb[0].mxu0
  %v4103 = vadd.f32 0.0, %v4102
  %v4104 = vpop.f32.mrb[0].mxu0
  %4105 = vmatprep.mubr.bf16.mxu0 0
  %4106 = vmatmul.mubr.bf16.gmra.mrb[0].mxu0 %v3788
  %v4107 = vpop.f32.mrb[0].mxu0
  %v4108 = vadd.f32 0.0, %v4107
  %v4109 = vpop.f32.mrb[0].mxu0
  %v4110 = vpop.f32.mrb[0].mxu0
  %v4111 = vadd.f32 0.0, %v4110
  %v4112 = vpop.f32.mrb[0].mxu0
  %4113 = vmatprep.mubr.bf16.mxu0 0
  %4114 = vmatmul.mubr.bf16.gmra.mrb[0].mxu0 %v3791
  %v4115 = vpop.f32.mrb[0].mxu0
  %v4116 = vadd.f32 0.0, %v4115
  %v4117 = vpop.f32.mrb[0].mxu0
  %v4118 = vpop.f32.mrb[0].mxu0
  %v4119 = vadd.f32 0.0, %v4118
  %v4120 = vpop.f32.mrb[0].mxu0
  %4121 = vmatprep.mubr.bf16.mxu0 0
  %4122 = vmatmul.mubr.bf16.gmra.mrb[0].mxu0 %v3794
  %v4123 = vpop.f32.mrb[0].mxu0
  %v4124 = vadd.f32 0.0, %v4123
  %v4125 = vpop.f32.mrb[0].mxu0
  %v4126 = vpop.f32.mrb[0].mxu0
  %v4127 = vadd.f32 0.0, %v4126
  %v4128 = vpop.f32.mrb[0].mxu0
  %4129 = vmatprep.mubr.bf16.mxu0 0
  %4130 = vmatmul.mubr.bf16.gmra.mrb[0].mxu0 %v3797
  %v4131 = vpop.f32.mrb[0].mxu0
  %v4132 = vadd.f32 0.0, %v4131
  %v4133 = vpop.f32.mrb[0].mxu0
  %v4134 = vpop.f32.mrb[0].mxu0
  %v4135 = vadd.f32 0.0, %v4134
  %v4136 = vpop.f32.mrb[0].mxu0
  %4137 = vmatprep.mubr.bf16.mxu0 0
  %4138 = vmatmul.mubr.bf16.gmra.mrb[0].mxu0 %v3800
  %v4139 = vpop.f32.mrb[0].mxu0
  %v4140 = vadd.f32 0.0, %v4139
  %v4141 = vpop.f32.mrb[0].mxu0
  %v4142 = vpop.f32.mrb[0].mxu0
  %v4143 = vadd.f32 0.0, %v4142
  %v4144 = vpop.f32.mrb[0].mxu0
  %4145 = vmatprep.mubr.bf16.mxu0 0
  %4146 = vmatmul.mubr.bf16.gmra.mrb[0].mxu0 %v3803
  %v4147 = vpop.f32.mrb[0].mxu0
  %v4148 = vadd.f32 0.0, %v4147
  %v4149 = vpop.f32.mrb[0].mxu0
  %v4150 = vpop.f32.mrb[0].mxu0
  %v4151 = vadd.f32 0.0, %v4150
  %v4152 = vpop.f32.mrb[0].mxu0
  %4153 = vmatprep.mubr.bf16.mxu0 0
  %4154 = vmatmul.mubr.bf16.gmra.mrb[0].mxu0 %v3806
  %v4155 = vpop.f32.mrb[0].mxu0
  %v4156 = vadd.f32 0.0, %v4155
  %v4157 = vpop.f32.mrb[0].mxu0
  %v4158 = vpop.f32.mrb[0].mxu0
  %v4159 = vadd.f32 0.0, %v4158
  %v4160 = vpop.f32.mrb[0].mxu0
  %4161 = vmatprep.mubr.bf16.mxu0 0
  %4162 = vmatmul.mubr.bf16.gmra.mrb[0].mxu0 %v3809
  %v4163 = vpop.f32.mrb[0].mxu0
  %v4164 = vadd.f32 0.0, %v4163
  %v4165 = vpop.f32.mrb[0].mxu0
  %v4166 = vpop.f32.mrb[0].mxu0
  %v4167 = vadd.f32 0.0, %v4166
  %v4168 = vpop.f32.mrb[0].mxu0
  %4169 = vmatprep.mubr.bf16.mxu0 0
  %4170 = vmatmul.mubr.bf16.gmra.mrb[0].mxu0 %v3812
  %v4171 = vpop.f32.mrb[0].mxu0
  %v4172 = vadd.f32 0.0, %v4171
  %v4173 = vpop.f32.mrb[0].mxu0
  %v4174 = vpop.f32.mrb[0].mxu0
  %v4175 = vadd.f32 0.0, %v4174
  %v4176 = vpop.f32.mrb[0].mxu0
  %4177 = vdwg.mxu0
  %4210 = vrot.lane.b32.xlu0 %v479, 64
  %v4211 = vpop.permute.xlu0 %4210
  %4212 = vrot.lane.b32.xlu0 %v482, 64
  %v4213 = vpop.permute.xlu0 %4212
  %4214 = vrot.lane.b32.xlu0 %v487, 64
  %v4215 = vpop.permute.xlu0 %4214
  %4216 = vrot.lane.b32.xlu0 %v490, 64
  %v4217 = vpop.permute.xlu0 %4216
  %4218 = vrot.lane.b32.xlu0 %v495, 64
  %v4219 = vpop.permute.xlu0 %4218
  %4220 = vrot.lane.b32.xlu0 %v498, 64
  %v4221 = vpop.permute.xlu0 %4220
  %4222 = vrot.lane.b32.xlu0 %v503, 64
  %v4223 = vpop.permute.xlu0 %4222
  %4224 = vrot.lane.b32.xlu0 %v506, 64
  %v4225 = vpop.permute.xlu0 %4224
  %4226 = vrot.lane.b32.xlu0 %v511, 64
  %v4227 = vpop.permute.xlu0 %4226
  %4228 = vrot.lane.b32.xlu0 %v514, 64
  %v4229 = vpop.permute.xlu0 %4228
  %4230 = vrot.lane.b32.xlu0 %v519, 64
  %v4231 = vpop.permute.xlu0 %4230
  %4232 = vrot.lane.b32.xlu0 %v522, 64
  %v4233 = vpop.permute.xlu0 %4232
  %4234 = vrot.lane.b32.xlu0 %v527, 64
  %v4235 = vpop.permute.xlu0 %4234
  %4236 = vrot.lane.b32.xlu0 %v530, 64
  %v4237 = vpop.permute.xlu0 %4236
  %4238 = vrot.lane.b32.xlu0 %v535, 64
  %v4239 = vpop.permute.xlu0 %4238
  %4240 = vrot.lane.b32.xlu0 %v538, 64
  %v4241 = vpop.permute.xlu0 %4240
  %4242 = vrot.lane.b32.xlu0 %v543, 64
  %v4243 = vpop.permute.xlu0 %4242
  %4244 = vrot.lane.b32.xlu0 %v546, 64
  %v4245 = vpop.permute.xlu0 %4244
  %4246 = vrot.lane.b32.xlu0 %v551, 64
  %v4247 = vpop.permute.xlu0 %4246
  %4248 = vrot.lane.b32.xlu0 %v554, 64
  %v4249 = vpop.permute.xlu0 %4248
  %4250 = vrot.lane.b32.xlu0 %v559, 64
  %v4251 = vpop.permute.xlu0 %4250
  %4252 = vrot.lane.b32.xlu0 %v562, 64
  %v4253 = vpop.permute.xlu0 %4252
  %4254 = vrot.lane.b32.xlu0 %v567, 64
  %v4255 = vpop.permute.xlu0 %4254
  %4256 = vrot.lane.b32.xlu0 %v570, 64
  %v4257 = vpop.permute.xlu0 %4256
  %4258 = vrot.lane.b32.xlu0 %v575, 64
  %v4259 = vpop.permute.xlu0 %4258
  %4260 = vrot.lane.b32.xlu0 %v578, 64
  %v4261 = vpop.permute.xlu0 %4260
  %4262 = vrot.lane.b32.xlu0 %v583, 64
  %v4263 = vpop.permute.xlu0 %4262
  %4264 = vrot.lane.b32.xlu0 %v586, 64
  %v4265 = vpop.permute.xlu0 %4264
  %4266 = vrot.lane.b32.xlu0 %v591, 64
  %v4267 = vpop.permute.xlu0 %4266
  %4268 = vrot.lane.b32.xlu0 %v594, 64
  %v4269 = vpop.permute.xlu0 %4268
  %4270 = vrot.lane.b32.xlu0 %v599, 64
  %v4271 = vpop.permute.xlu0 %4270
  %4272 = vrot.lane.b32.xlu0 %v602, 64
  %v4273 = vpop.permute.xlu0 %4272
  %4306 = vrot.lane.b32.xlu0 %v479, 96
  %v4307 = vpop.permute.xlu0 %4306
  %4308 = vrot.lane.b32.xlu0 %v482, 96
  %v4309 = vpop.permute.xlu0 %4308
  %4310 = vrot.lane.b32.xlu0 %v487, 96
  %v4311 = vpop.permute.xlu0 %4310
  %4312 = vrot.lane.b32.xlu0 %v490, 96
  %v4313 = vpop.permute.xlu0 %4312
  %4314 = vrot.lane.b32.xlu0 %v495, 96
  %v4315 = vpop.permute.xlu0 %4314
  %4316 = vrot.lane.b32.xlu0 %v498, 96
  %v4317 = vpop.permute.xlu0 %4316
  %4318 = vrot.lane.b32.xlu0 %v503, 96
  %v4319 = vpop.permute.xlu0 %4318
  %4320 = vrot.lane.b32.xlu0 %v506, 96
  %v4321 = vpop.permute.xlu0 %4320
  %4322 = vrot.lane.b32.xlu0 %v511, 96
  %v4323 = vpop.permute.xlu0 %4322
  %4324 = vrot.lane.b32.xlu0 %v514, 96
  %v4325 = vpop.permute.xlu0 %4324
  %4326 = vrot.lane.b32.xlu0 %v519, 96
  %v4327 = vpop.permute.xlu0 %4326
  %4328 = vrot.lane.b32.xlu0 %v522, 96
  %v4329 = vpop.permute.xlu0 %4328
  %4330 = vrot.lane.b32.xlu0 %v527, 96
  %v4331 = vpop.permute.xlu0 %4330
  %4332 = vrot.lane.b32.xlu0 %v530, 96
  %v4333 = vpop.permute.xlu0 %4332
  %4334 = vrot.lane.b32.xlu0 %v535, 96
  %v4335 = vpop.permute.xlu0 %4334
  %4336 = vrot.lane.b32.xlu0 %v538, 96
  %v4337 = vpop.permute.xlu0 %4336
  %4338 = vrot.lane.b32.xlu0 %v543, 96
  %v4339 = vpop.permute.xlu0 %4338
  %4340 = vrot.lane.b32.xlu0 %v546, 96
  %v4341 = vpop.permute.xlu0 %4340
  %4342 = vrot.lane.b32.xlu0 %v551, 96
  %v4343 = vpop.permute.xlu0 %4342
  %4344 = vrot.lane.b32.xlu0 %v554, 96
  %v4345 = vpop.permute.xlu0 %4344
  %4346 = vrot.lane.b32.xlu0 %v559, 96
  %v4347 = vpop.permute.xlu0 %4346
  %4348 = vrot.lane.b32.xlu0 %v562, 96
  %v4349 = vpop.permute.xlu0 %4348
  %4350 = vrot.lane.b32.xlu0 %v567, 96
  %v4351 = vpop.permute.xlu0 %4350
  %4352 = vrot.lane.b32.xlu0 %v570, 96
  %v4353 = vpop.permute.xlu0 %4352
  %4354 = vrot.lane.b32.xlu0 %v575, 96
  %v4355 = vpop.permute.xlu0 %4354
  %4356 = vrot.lane.b32.xlu0 %v578, 96
  %v4357 = vpop.permute.xlu0 %4356
  %4358 = vrot.lane.b32.xlu0 %v583, 96
  %v4359 = vpop.permute.xlu0 %4358
  %4360 = vrot.lane.b32.xlu0 %v586, 96
  %v4361 = vpop.permute.xlu0 %4360
  %4362 = vrot.lane.b32.xlu0 %v591, 96
  %v4363 = vpop.permute.xlu0 %4362
  %4364 = vrot.lane.b32.xlu0 %v594, 96
  %v4365 = vpop.permute.xlu0 %4364
  %4366 = vrot.lane.b32.xlu0 %v599, 96
  %v4367 = vpop.permute.xlu0 %4366
  %4368 = vrot.lane.b32.xlu0 %v602, 96
  %v4369 = vpop.permute.xlu0 %4368
  %v4402 = vsel %vm1310, %v1215, %v1023
  %v4403 = vsel %vm1310, %v1217, %v1025
  %v4404 = vsel %vm1310, %v1219, %v1027
  %v4405 = vsel %vm1310, %v1221, %v1029
  %v4406 = vsel %vm1310, %v1223, %v1031
  %v4407 = vsel %vm1310, %v1225, %v1033
  %v4408 = vsel %vm1310, %v1227, %v1035
  %v4409 = vsel %vm1310, %v1229, %v1037
  %v4410 = vsel %vm1310, %v1231, %v1039
  %v4411 = vsel %vm1310, %v1233, %v1041
  %v4412 = vsel %vm1310, %v1235, %v1043
  %v4413 = vsel %vm1310, %v1237, %v1045
  %v4414 = vsel %vm1310, %v1239, %v1047
  %v4415 = vsel %vm1310, %v1241, %v1049
  %v4416 = vsel %vm1310, %v1243, %v1051
  %v4417 = vsel %vm1310, %v1245, %v1053
  %v4418 = vsel %vm1310, %v1247, %v1055
  %v4419 = vsel %vm1310, %v1249, %v1057
  %v4420 = vsel %vm1310, %v1251, %v1059
  %v4421 = vsel %vm1310, %v1253, %v1061
  %v4422 = vsel %vm1310, %v1255, %v1063
  %v4423 = vsel %vm1310, %v1257, %v1065
  %v4424 = vsel %vm1310, %v1259, %v1067
  %v4425 = vsel %vm1310, %v1261, %v1069
  %v4426 = vsel %vm1310, %v1263, %v1071
  %v4427 = vsel %vm1310, %v1265, %v1073
  %v4428 = vsel %vm1310, %v1267, %v1075
  %v4429 = vsel %vm1310, %v1269, %v1077
  %v4430 = vsel %vm1310, %v1271, %v1079
  %v4431 = vsel %vm1310, %v1273, %v1081
  %v4432 = vsel %vm1310, %v1275, %v1083
  %v4433 = vsel %vm1310, %v1277, %v1085
  %v4434 = vsel %vm861, %v4402, %v288
  %v4435 = vsel %vm861, %v4403, %v292
  %v4436 = vsel %vm861, %v4404, %v298
  %v4437 = vsel %vm861, %v4405, %v302
  %v4438 = vsel %vm861, %v4406, %v308
  %v4439 = vsel %vm861, %v4407, %v312
  %v4440 = vsel %vm861, %v4408, %v318
  %v4441 = vsel %vm861, %v4409, %v322
  %v4442 = vsel %vm861, %v4410, %v328
  %v4443 = vsel %vm861, %v4411, %v332
  %v4444 = vsel %vm861, %v4412, %v338
  %v4445 = vsel %vm861, %v4413, %v342
  %v4446 = vsel %vm861, %v4414, %v348
  %v4447 = vsel %vm861, %v4415, %v352
  %v4448 = vsel %vm861, %v4416, %v358
  %v4449 = vsel %vm861, %v4417, %v362
  %v4450 = vsel %vm861, %v4418, %v368
  %v4451 = vsel %vm861, %v4419, %v372
  %v4452 = vsel %vm861, %v4420, %v378
  %v4453 = vsel %vm861, %v4421, %v382
  %v4454 = vsel %vm861, %v4422, %v388
  %v4455 = vsel %vm861, %v4423, %v392
  %v4456 = vsel %vm861, %v4424, %v398
  %v4457 = vsel %vm861, %v4425, %v402
  %v4458 = vsel %vm861, %v4426, %v408
  %v4459 = vsel %vm861, %v4427, %v412
  %v4460 = vsel %vm861, %v4428, %v418
  %v4461 = vsel %vm861, %v4429, %v422
  %v4462 = vsel %vm861, %v4430, %v428
  %v4463 = vsel %vm861, %v4431, %v432
  %v4464 = vsel %vm861, %v4432, %v438
  %v4465 = vsel %vm861, %v4433, %v442
  %v4466 = vsel %vm202, %v4434, %v288
  %v4467 = vsel %vm202, %v4435, %v292
  %v4468 = vsel %vm202, %v4436, %v298
  %v4469 = vsel %vm202, %v4437, %v302
  %v4470 = vsel %vm202, %v4438, %v308
  %v4471 = vsel %vm202, %v4439, %v312
  %v4472 = vsel %vm202, %v4440, %v318
  %v4473 = vsel %vm202, %v4441, %v322
  %v4474 = vsel %vm202, %v4442, %v328
  %v4475 = vsel %vm202, %v4443, %v332
  %v4476 = vsel %vm202, %v4444, %v338
  %v4477 = vsel %vm202, %v4445, %v342
  %v4478 = vsel %vm202, %v4446, %v348
  %v4479 = vsel %vm202, %v4447, %v352
  %v4480 = vsel %vm202, %v4448, %v358
  %v4481 = vsel %vm202, %v4449, %v362
  %v4482 = vsel %vm202, %v4450, %v368
  %v4483 = vsel %vm202, %v4451, %v372
  %v4484 = vsel %vm202, %v4452, %v378
  %v4485 = vsel %vm202, %v4453, %v382
  %v4486 = vsel %vm202, %v4454, %v388
  %v4487 = vsel %vm202, %v4455, %v392
  %v4488 = vsel %vm202, %v4456, %v398
  %v4489 = vsel %vm202, %v4457, %v402
  %v4490 = vsel %vm202, %v4458, %v408
  %v4491 = vsel %vm202, %v4459, %v412
  %v4492 = vsel %vm202, %v4460, %v418
  %v4493 = vsel %vm202, %v4461, %v422
  %v4494 = vsel %vm202, %v4462, %v428
  %v4495 = vsel %vm202, %v4463, %v432
  %v4496 = vsel %vm202, %v4464, %v438
  %v4497 = vsel %vm202, %v4465, %v442
  %v4498 = vsel %vm1310, %v1119, %v1215
  %v4499 = vsel %vm1310, %v1121, %v1217
  %v4500 = vsel %vm1310, %v1123, %v1219
  %v4501 = vsel %vm1310, %v1125, %v1221
  %v4502 = vsel %vm1310, %v1127, %v1223
  %v4503 = vsel %vm1310, %v1129, %v1225
  %v4504 = vsel %vm1310, %v1131, %v1227
  %v4505 = vsel %vm1310, %v1133, %v1229
  %v4506 = vsel %vm1310, %v1135, %v1231
  %v4507 = vsel %vm1310, %v1137, %v1233
  %v4508 = vsel %vm1310, %v1139, %v1235
  %v4509 = vsel %vm1310, %v1141, %v1237
  %v4510 = vsel %vm1310, %v1143, %v1239
  %v4511 = vsel %vm1310, %v1145, %v1241
  %v4512 = vsel %vm1310, %v1147, %v1243
  %v4513 = vsel %vm1310, %v1149, %v1245
  %v4514 = vsel %vm1310, %v1151, %v1247
  %v4515 = vsel %vm1310, %v1153, %v1249
  %v4516 = vsel %vm1310, %v1155, %v1251
  %v4517 = vsel %vm1310, %v1157, %v1253
  %v4518 = vsel %vm1310, %v1159, %v1255
  %v4519 = vsel %vm1310, %v1161, %v1257
  %v4520 = vsel %vm1310, %v1163, %v1259
  %v4521 = vsel %vm1310, %v1165, %v1261
  %v4522 = vsel %vm1310, %v1167, %v1263
  %v4523 = vsel %vm1310, %v1169, %v1265
  %v4524 = vsel %vm1310, %v1171, %v1267
  %v4525 = vsel %vm1310, %v1173, %v1269
  %v4526 = vsel %vm1310, %v1175, %v1271
  %v4527 = vsel %vm1310, %v1177, %v1273
  %v4528 = vsel %vm1310, %v1179, %v1275
  %v4529 = vsel %vm1310, %v1181, %v1277
  %v4530 = vsel %vm861, %v4498, %v4211
  %v4531 = vsel %vm861, %v4499, %v4213
  %v4532 = vsel %vm861, %v4500, %v4215
  %v4533 = vsel %vm861, %v4501, %v4217
  %v4534 = vsel %vm861, %v4502, %v4219
  %v4535 = vsel %vm861, %v4503, %v4221
  %v4536 = vsel %vm861, %v4504, %v4223
  %v4537 = vsel %vm861, %v4505, %v4225
  %v4538 = vsel %vm861, %v4506, %v4227
  %v4539 = vsel %vm861, %v4507, %v4229
  %v4540 = vsel %vm861, %v4508, %v4231
  %v4541 = vsel %vm861, %v4509, %v4233
  %v4542 = vsel %vm861, %v4510, %v4235
  %v4543 = vsel %vm861, %v4511, %v4237
  %v4544 = vsel %vm861, %v4512, %v4239
  %v4545 = vsel %vm861, %v4513, %v4241
  %v4546 = vsel %vm861, %v4514, %v4243
  %v4547 = vsel %vm861, %v4515, %v4245
  %v4548 = vsel %vm861, %v4516, %v4247
  %v4549 = vsel %vm861, %v4517, %v4249
  %v4550 = vsel %vm861, %v4518, %v4251
  %v4551 = vsel %vm861, %v4519, %v4253
  %v4552 = vsel %vm861, %v4520, %v4255
  %v4553 = vsel %vm861, %v4521, %v4257
  %v4554 = vsel %vm861, %v4522, %v4259
  %v4555 = vsel %vm861, %v4523, %v4261
  %v4556 = vsel %vm861, %v4524, %v4263
  %v4557 = vsel %vm861, %v4525, %v4265
  %v4558 = vsel %vm861, %v4526, %v4267
  %v4559 = vsel %vm861, %v4527, %v4269
  %v4560 = vsel %vm861, %v4528, %v4271
  %v4561 = vsel %vm861, %v4529, %v4273
  %v4562 = vsel %vm202, %v4530, %v4307
  %v4563 = vsel %vm202, %v4531, %v4309
  %v4564 = vsel %vm202, %v4532, %v4311
  %v4565 = vsel %vm202, %v4533, %v4313
  %v4566 = vsel %vm202, %v4534, %v4315
  %v4567 = vsel %vm202, %v4535, %v4317
  %v4568 = vsel %vm202, %v4536, %v4319
  %v4569 = vsel %vm202, %v4537, %v4321
  %v4570 = vsel %vm202, %v4538, %v4323
  %v4571 = vsel %vm202, %v4539, %v4325
  %v4572 = vsel %vm202, %v4540, %v4327
  %v4573 = vsel %vm202, %v4541, %v4329
  %v4574 = vsel %vm202, %v4542, %v4331
  %v4575 = vsel %vm202, %v4543, %v4333
  %v4576 = vsel %vm202, %v4544, %v4335
  %v4577 = vsel %vm202, %v4545, %v4337
  %v4578 = vsel %vm202, %v4546, %v4339
  %v4579 = vsel %vm202, %v4547, %v4341
  %v4580 = vsel %vm202, %v4548, %v4343
  %v4581 = vsel %vm202, %v4549, %v4345
  %v4582 = vsel %vm202, %v4550, %v4347
  %v4583 = vsel %vm202, %v4551, %v4349
  %v4584 = vsel %vm202, %v4552, %v4351
  %v4585 = vsel %vm202, %v4553, %v4353
  %v4586 = vsel %vm202, %v4554, %v4355
  %v4587 = vsel %vm202, %v4555, %v4357
  %v4588 = vsel %vm202, %v4556, %v4359
  %v4589 = vsel %vm202, %v4557, %v4361
  %v4590 = vsel %vm202, %v4558, %v4363
  %v4591 = vsel %vm202, %v4559, %v4365
  %v4592 = vsel %vm202, %v4560, %v4367
  %v4593 = vsel %vm202, %v4561, %v4369
  %v4594 = vmul.f32 %v3859, %v4466
  %v4595 = vmul.f32 %v3861, %v4562
  %v4596 = vmul.f32 %v4052, %v479
  %v4597 = vmul.f32 %v3863, %v4467
  %v4598 = vmul.f32 %v3865, %v4563
  %v4599 = vmul.f32 %v4055, %v482
  %v4600 = vmul.f32 %v3869, %v4468
  %v4601 = vmul.f32 %v3871, %v4564
  %v4602 = vmul.f32 %v4060, %v487
  %v4603 = vmul.f32 %v3873, %v4469
  %v4604 = vmul.f32 %v3875, %v4565
  %v4605 = vmul.f32 %v4063, %v490
  %v4606 = vmul.f32 %v3879, %v4470
  %v4607 = vmul.f32 %v3881, %v4566
  %v4608 = vmul.f32 %v4068, %v495
  %v4609 = vmul.f32 %v3883, %v4471
  %v4610 = vmul.f32 %v3885, %v4567
  %v4611 = vmul.f32 %v4071, %v498
  %v4612 = vmul.f32 %v3889, %v4472
  %v4613 = vmul.f32 %v3891, %v4568
  %v4614 = vmul.f32 %v4076, %v503
  %v4615 = vmul.f32 %v3893, %v4473
  %v4616 = vmul.f32 %v3895, %v4569
  %v4617 = vmul.f32 %v4079, %v506
  %v4618 = vmul.f32 %v3899, %v4474
  %v4619 = vmul.f32 %v3901, %v4570
  %v4620 = vmul.f32 %v4084, %v511
  %v4621 = vmul.f32 %v3903, %v4475
  %v4622 = vmul.f32 %v3905, %v4571
  %v4623 = vmul.f32 %v4087, %v514
  %v4624 = vmul.f32 %v3909, %v4476
  %v4625 = vmul.f32 %v3911, %v4572
  %v4626 = vmul.f32 %v4092, %v519
  %v4627 = vmul.f32 %v3913, %v4477
  %v4628 = vmul.f32 %v3915, %v4573
  %v4629 = vmul.f32 %v4095, %v522
  %v4630 = vmul.f32 %v3919, %v4478
  %v4631 = vmul.f32 %v3921, %v4574
  %v4632 = vmul.f32 %v4100, %v527
  %v4633 = vmul.f32 %v3923, %v4479
  %v4634 = vmul.f32 %v3925, %v4575
  %v4635 = vmul.f32 %v4103, %v530
  %v4636 = vmul.f32 %v3929, %v4480
  %v4637 = vmul.f32 %v3931, %v4576
  %v4638 = vmul.f32 %v4108, %v535
  %v4639 = vmul.f32 %v3933, %v4481
  %v4640 = vmul.f32 %v3935, %v4577
  %v4641 = vmul.f32 %v4111, %v538
  %v4642 = vmul.f32 %v3939, %v4482
  %v4643 = vmul.f32 %v3941, %v4578
  %v4644 = vmul.f32 %v4116, %v543
  %v4645 = vmul.f32 %v3943, %v4483
  %v4646 = vmul.f32 %v3945, %v4579
  %v4647 = vmul.f32 %v4119, %v546
  %v4648 = vmul.f32 %v3949, %v4484
  %v4649 = vmul.f32 %v3951, %v4580
  %v4650 = vmul.f32 %v4124, %v551
  %v4651 = vmul.f32 %v3953, %v4485
  %v4652 = vmul.f32 %v3955, %v4581
  %v4653 = vmul.f32 %v4127, %v554
  %v4654 = vmul.f32 %v3959, %v4486
  %v4655 = vmul.f32 %v3961, %v4582
  %v4656 = vmul.f32 %v4132, %v559
  %v4657 = vmul.f32 %v3963, %v4487
  %v4658 = vmul.f32 %v3965, %v4583
  %v4659 = vmul.f32 %v4135, %v562
  %v4660 = vmul.f32 %v3969, %v4488
  %v4661 = vmul.f32 %v3971, %v4584
  %v4662 = vmul.f32 %v4140, %v567
  %v4663 = vmul.f32 %v3973, %v4489
  %v4664 = vmul.f32 %v3975, %v4585
  %v4665 = vmul.f32 %v4143, %v570
  %v4666 = vmul.f32 %v3979, %v4490
  %v4667 = vmul.f32 %v3981, %v4586
  %v4668 = vmul.f32 %v4148, %v575
  %v4669 = vmul.f32 %v3983, %v4491
  %v4670 = vmul.f32 %v3985, %v4587
  %v4671 = vmul.f32 %v4151, %v578
  %v4672 = vmul.f32 %v3989, %v4492
  %v4673 = vmul.f32 %v3991, %v4588
  %v4674 = vmul.f32 %v4156, %v583
  %v4675 = vmul.f32 %v3993, %v4493
  %v4676 = vmul.f32 %v3995, %v4589
  %v4677 = vmul.f32 %v4159, %v586
  %v4678 = vmul.f32 %v3999, %v4494
  %v4679 = vmul.f32 %v4001, %v4590
  %v4680 = vmul.f32 %v4164, %v591
  %v4681 = vmul.f32 %v4003, %v4495
  %v4682 = vmul.f32 %v4005, %v4591
  %v4683 = vmul.f32 %v4167, %v594
  %v4684 = vmul.f32 %v4009, %v4496
  %v4685 = vmul.f32 %v4011, %v4592
  %v4686 = vmul.f32 %v4172, %v599
  %v4687 = vmul.f32 %v4013, %v4497
  %v4688 = vmul.f32 %v4015, %v4593
  %v4689 = vmul.f32 %v4175, %v602
  %4754 = vrot.lane.b32.xlu0 %v4594, 32
  %v4755 = vpop.permute.xlu0 %4754
  %4756 = vrot.lane.b32.xlu0 %v4595, 32
  %v4757 = vpop.permute.xlu0 %4756
  %4758 = vrot.lane.b32.xlu0 %v4597, 32
  %v4759 = vpop.permute.xlu0 %4758
  %4760 = vrot.lane.b32.xlu0 %v4598, 32
  %v4761 = vpop.permute.xlu0 %4760
  %4762 = vrot.lane.b32.xlu0 %v4600, 32
  %v4763 = vpop.permute.xlu0 %4762
  %4764 = vrot.lane.b32.xlu0 %v4601, 32
  %v4765 = vpop.permute.xlu0 %4764
  %4766 = vrot.lane.b32.xlu0 %v4603, 32
  %v4767 = vpop.permute.xlu0 %4766
  %4768 = vrot.lane.b32.xlu0 %v4604, 32
  %v4769 = vpop.permute.xlu0 %4768
  %4770 = vrot.lane.b32.xlu0 %v4606, 32
  %v4771 = vpop.permute.xlu0 %4770
  %4772 = vrot.lane.b32.xlu0 %v4607, 32
  %v4773 = vpop.permute.xlu0 %4772
  %4774 = vrot.lane.b32.xlu0 %v4609, 32
  %v4775 = vpop.permute.xlu0 %4774
  %4776 = vrot.lane.b32.xlu0 %v4610, 32
  %v4777 = vpop.permute.xlu0 %4776
  %4778 = vrot.lane.b32.xlu0 %v4612, 32
  %v4779 = vpop.permute.xlu0 %4778
  %4780 = vrot.lane.b32.xlu0 %v4613, 32
  %v4781 = vpop.permute.xlu0 %4780
  %4782 = vrot.lane.b32.xlu0 %v4615, 32
  %v4783 = vpop.permute.xlu0 %4782
  %4784 = vrot.lane.b32.xlu0 %v4616, 32
  %v4785 = vpop.permute.xlu0 %4784
  %4786 = vrot.lane.b32.xlu0 %v4618, 32
  %v4787 = vpop.permute.xlu0 %4786
  %4788 = vrot.lane.b32.xlu0 %v4619, 32
  %v4789 = vpop.permute.xlu0 %4788
  %4790 = vrot.lane.b32.xlu0 %v4621, 32
  %v4791 = vpop.permute.xlu0 %4790
  %4792 = vrot.lane.b32.xlu0 %v4622, 32
  %v4793 = vpop.permute.xlu0 %4792
  %4794 = vrot.lane.b32.xlu0 %v4624, 32
  %v4795 = vpop.permute.xlu0 %4794
  %4796 = vrot.lane.b32.xlu0 %v4625, 32
  %v4797 = vpop.permute.xlu0 %4796
  %4798 = vrot.lane.b32.xlu0 %v4627, 32
  %v4799 = vpop.permute.xlu0 %4798
  %4800 = vrot.lane.b32.xlu0 %v4628, 32
  %v4801 = vpop.permute.xlu0 %4800
  %4802 = vrot.lane.b32.xlu0 %v4630, 32
  %v4803 = vpop.permute.xlu0 %4802
  %4804 = vrot.lane.b32.xlu0 %v4631, 32
  %v4805 = vpop.permute.xlu0 %4804
  %4806 = vrot.lane.b32.xlu0 %v4633, 32
  %v4807 = vpop.permute.xlu0 %4806
  %4808 = vrot.lane.b32.xlu0 %v4634, 32
  %v4809 = vpop.permute.xlu0 %4808
  %4810 = vrot.lane.b32.xlu0 %v4636, 32
  %v4811 = vpop.permute.xlu0 %4810
  %4812 = vrot.lane.b32.xlu0 %v4637, 32
  %v4813 = vpop.permute.xlu0 %4812
  %4814 = vrot.lane.b32.xlu0 %v4639, 32
  %v4815 = vpop.permute.xlu0 %4814
  %4816 = vrot.lane.b32.xlu0 %v4640, 32
  %v4817 = vpop.permute.xlu0 %4816
  %4818 = vrot.lane.b32.xlu0 %v4642, 32
  %v4819 = vpop.permute.xlu0 %4818
  %4820 = vrot.lane.b32.xlu0 %v4643, 32
  %v4821 = vpop.permute.xlu0 %4820
  %4822 = vrot.lane.b32.xlu0 %v4645, 32
  %v4823 = vpop.permute.xlu0 %4822
  %4824 = vrot.lane.b32.xlu0 %v4646, 32
  %v4825 = vpop.permute.xlu0 %4824
  %4826 = vrot.lane.b32.xlu0 %v4648, 32
  %v4827 = vpop.permute.xlu0 %4826
  %4828 = vrot.lane.b32.xlu0 %v4649, 32
  %v4829 = vpop.permute.xlu0 %4828
  %4830 = vrot.lane.b32.xlu0 %v4651, 32
  %v4831 = vpop.permute.xlu0 %4830
  %4832 = vrot.lane.b32.xlu0 %v4652, 32
  %v4833 = vpop.permute.xlu0 %4832
  %4834 = vrot.lane.b32.xlu0 %v4654, 32
  %v4835 = vpop.permute.xlu0 %4834
  %4836 = vrot.lane.b32.xlu0 %v4655, 32
  %v4837 = vpop.permute.xlu0 %4836
  %4838 = vrot.lane.b32.xlu0 %v4657, 32
  %v4839 = vpop.permute.xlu0 %4838
  %4840 = vrot.lane.b32.xlu0 %v4658, 32
  %v4841 = vpop.permute.xlu0 %4840
  %4842 = vrot.lane.b32.xlu0 %v4660, 32
  %v4843 = vpop.permute.xlu0 %4842
  %4844 = vrot.lane.b32.xlu0 %v4661, 32
  %v4845 = vpop.permute.xlu0 %4844
  %4846 = vrot.lane.b32.xlu0 %v4663, 32
  %v4847 = vpop.permute.xlu0 %4846
  %4848 = vrot.lane.b32.xlu0 %v4664, 32
  %v4849 = vpop.permute.xlu0 %4848
  %4850 = vrot.lane.b32.xlu0 %v4666, 32
  %v4851 = vpop.permute.xlu0 %4850
  %4852 = vrot.lane.b32.xlu0 %v4667, 32
  %v4853 = vpop.permute.xlu0 %4852
  %4854 = vrot.lane.b32.xlu0 %v4669, 32
  %v4855 = vpop.permute.xlu0 %4854
  %4856 = vrot.lane.b32.xlu0 %v4670, 32
  %v4857 = vpop.permute.xlu0 %4856
  %4858 = vrot.lane.b32.xlu0 %v4672, 32
  %v4859 = vpop.permute.xlu0 %4858
  %4860 = vrot.lane.b32.xlu0 %v4673, 32
  %v4861 = vpop.permute.xlu0 %4860
  %4862 = vrot.lane.b32.xlu0 %v4675, 32
  %v4863 = vpop.permute.xlu0 %4862
  %4864 = vrot.lane.b32.xlu0 %v4676, 32
  %v4865 = vpop.permute.xlu0 %4864
  %4866 = vrot.lane.b32.xlu0 %v4678, 32
  %v4867 = vpop.permute.xlu0 %4866
  %4868 = vrot.lane.b32.xlu0 %v4679, 32
  %v4869 = vpop.permute.xlu0 %4868
  %4870 = vrot.lane.b32.xlu0 %v4681, 32
  %v4871 = vpop.permute.xlu0 %4870
  %4872 = vrot.lane.b32.xlu0 %v4682, 32
  %v4873 = vpop.permute.xlu0 %4872
  %4874 = vrot.lane.b32.xlu0 %v4684, 32
  %v4875 = vpop.permute.xlu0 %4874
  %4876 = vrot.lane.b32.xlu0 %v4685, 32
  %v4877 = vpop.permute.xlu0 %4876
  %4878 = vrot.lane.b32.xlu0 %v4687, 32
  %v4879 = vpop.permute.xlu0 %4878
  %4880 = vrot.lane.b32.xlu0 %v4688, 32
  %v4881 = vpop.permute.xlu0 %4880
  %v4882 = vsel %vm1310, %v4755, %v4757
  %v4883 = vsel %vm1310, %v4759, %v4761
  %v4884 = vsel %vm1310, %v4763, %v4765
  %v4885 = vsel %vm1310, %v4767, %v4769
  %v4886 = vsel %vm1310, %v4771, %v4773
  %v4887 = vsel %vm1310, %v4775, %v4777
  %v4888 = vsel %vm1310, %v4779, %v4781
  %v4889 = vsel %vm1310, %v4783, %v4785
  %v4890 = vsel %vm1310, %v4787, %v4789
  %v4891 = vsel %vm1310, %v4791, %v4793
  %v4892 = vsel %vm1310, %v4795, %v4797
  %v4893 = vsel %vm1310, %v4799, %v4801
  %v4894 = vsel %vm1310, %v4803, %v4805
  %v4895 = vsel %vm1310, %v4807, %v4809
  %v4896 = vsel %vm1310, %v4811, %v4813
  %v4897 = vsel %vm1310, %v4815, %v4817
  %v4898 = vsel %vm1310, %v4819, %v4821
  %v4899 = vsel %vm1310, %v4823, %v4825
  %v4900 = vsel %vm1310, %v4827, %v4829
  %v4901 = vsel %vm1310, %v4831, %v4833
  %v4902 = vsel %vm1310, %v4835, %v4837
  %v4903 = vsel %vm1310, %v4839, %v4841
  %v4904 = vsel %vm1310, %v4843, %v4845
  %v4905 = vsel %vm1310, %v4847, %v4849
  %v4906 = vsel %vm1310, %v4851, %v4853
  %v4907 = vsel %vm1310, %v4855, %v4857
  %v4908 = vsel %vm1310, %v4859, %v4861
  %v4909 = vsel %vm1310, %v4863, %v4865
  %v4910 = vsel %vm1310, %v4867, %v4869
  %v4911 = vsel %vm1310, %v4871, %v4873
  %v4912 = vsel %vm1310, %v4875, %v4877
  %v4913 = vsel %vm1310, %v4879, %v4881
  %v4946 = vadd.f32 %v4594, %v4882
  %v4947 = vadd.f32 %v4597, %v4883
  %v4948 = vadd.f32 %v4600, %v4884
  %v4949 = vadd.f32 %v4603, %v4885
  %v4950 = vadd.f32 %v4606, %v4886
  %v4951 = vadd.f32 %v4609, %v4887
  %v4952 = vadd.f32 %v4612, %v4888
  %v4953 = vadd.f32 %v4615, %v4889
  %v4954 = vadd.f32 %v4618, %v4890
  %v4955 = vadd.f32 %v4621, %v4891
  %v4956 = vadd.f32 %v4624, %v4892
  %v4957 = vadd.f32 %v4627, %v4893
  %v4958 = vadd.f32 %v4630, %v4894
  %v4959 = vadd.f32 %v4633, %v4895
  %v4960 = vadd.f32 %v4636, %v4896
  %v4961 = vadd.f32 %v4639, %v4897
  %v4962 = vadd.f32 %v4642, %v4898
  %v4963 = vadd.f32 %v4645, %v4899
  %v4964 = vadd.f32 %v4648, %v4900
  %v4965 = vadd.f32 %v4651, %v4901
  %v4966 = vadd.f32 %v4654, %v4902
  %v4967 = vadd.f32 %v4657, %v4903
  %v4968 = vadd.f32 %v4660, %v4904
  %v4969 = vadd.f32 %v4663, %v4905
  %v4970 = vadd.f32 %v4666, %v4906
  %v4971 = vadd.f32 %v4669, %v4907
  %v4972 = vadd.f32 %v4672, %v4908
  %v4973 = vadd.f32 %v4675, %v4909
  %v4974 = vadd.f32 %v4678, %v4910
  %v4975 = vadd.f32 %v4681, %v4911
  %v4976 = vadd.f32 %v4684, %v4912
  %v4977 = vadd.f32 %v4687, %v4913
  %5010 = vrot.lane.b32.xlu0 %v4595, 64
  %v5011 = vpop.permute.xlu0 %5010
  %5012 = vrot.lane.b32.xlu0 %v4596, 64
  %v5013 = vpop.permute.xlu0 %5012
  %5014 = vrot.lane.b32.xlu0 %v4598, 64
  %v5015 = vpop.permute.xlu0 %5014
  %5016 = vrot.lane.b32.xlu0 %v4599, 64
  %v5017 = vpop.permute.xlu0 %5016
  %5018 = vrot.lane.b32.xlu0 %v4601, 64
  %v5019 = vpop.permute.xlu0 %5018
  %5020 = vrot.lane.b32.xlu0 %v4602, 64
  %v5021 = vpop.permute.xlu0 %5020
  %5022 = vrot.lane.b32.xlu0 %v4604, 64
  %v5023 = vpop.permute.xlu0 %5022
  %5024 = vrot.lane.b32.xlu0 %v4605, 64
  %v5025 = vpop.permute.xlu0 %5024
  %5026 = vrot.lane.b32.xlu0 %v4607, 64
  %v5027 = vpop.permute.xlu0 %5026
  %5028 = vrot.lane.b32.xlu0 %v4608, 64
  %v5029 = vpop.permute.xlu0 %5028
  %5030 = vrot.lane.b32.xlu0 %v4610, 64
  %v5031 = vpop.permute.xlu0 %5030
  %5032 = vrot.lane.b32.xlu0 %v4611, 64
  %v5033 = vpop.permute.xlu0 %5032
  %5034 = vrot.lane.b32.xlu0 %v4613, 64
  %v5035 = vpop.permute.xlu0 %5034
  %5036 = vrot.lane.b32.xlu0 %v4614, 64
  %v5037 = vpop.permute.xlu0 %5036
  %5038 = vrot.lane.b32.xlu0 %v4616, 64
  %v5039 = vpop.permute.xlu0 %5038
  %5040 = vrot.lane.b32.xlu0 %v4617, 64
  %v5041 = vpop.permute.xlu0 %5040
  %5042 = vrot.lane.b32.xlu0 %v4619, 64
  %v5043 = vpop.permute.xlu0 %5042
  %5044 = vrot.lane.b32.xlu0 %v4620, 64
  %v5045 = vpop.permute.xlu0 %5044
  %5046 = vrot.lane.b32.xlu0 %v4622, 64
  %v5047 = vpop.permute.xlu0 %5046
  %5048 = vrot.lane.b32.xlu0 %v4623, 64
  %v5049 = vpop.permute.xlu0 %5048
  %5050 = vrot.lane.b32.xlu0 %v4625, 64
  %v5051 = vpop.permute.xlu0 %5050
  %5052 = vrot.lane.b32.xlu0 %v4626, 64
  %v5053 = vpop.permute.xlu0 %5052
  %5054 = vrot.lane.b32.xlu0 %v4628, 64
  %v5055 = vpop.permute.xlu0 %5054
  %5056 = vrot.lane.b32.xlu0 %v4629, 64
  %v5057 = vpop.permute.xlu0 %5056
  %5058 = vrot.lane.b32.xlu0 %v4631, 64
  %v5059 = vpop.permute.xlu0 %5058
  %5060 = vrot.lane.b32.xlu0 %v4632, 64
  %v5061 = vpop.permute.xlu0 %5060
  %5062 = vrot.lane.b32.xlu0 %v4634, 64
  %v5063 = vpop.permute.xlu0 %5062
  %5064 = vrot.lane.b32.xlu0 %v4635, 64
  %v5065 = vpop.permute.xlu0 %5064
  %5066 = vrot.lane.b32.xlu0 %v4637, 64
  %v5067 = vpop.permute.xlu0 %5066
  %5068 = vrot.lane.b32.xlu0 %v4638, 64
  %v5069 = vpop.permute.xlu0 %5068
  %5070 = vrot.lane.b32.xlu0 %v4640, 64
  %v5071 = vpop.permute.xlu0 %5070
  %5072 = vrot.lane.b32.xlu0 %v4641, 64
  %v5073 = vpop.permute.xlu0 %5072
  %5074 = vrot.lane.b32.xlu0 %v4643, 64
  %v5075 = vpop.permute.xlu0 %5074
  %5076 = vrot.lane.b32.xlu0 %v4644, 64
  %v5077 = vpop.permute.xlu0 %5076
  %5078 = vrot.lane.b32.xlu0 %v4646, 64
  %v5079 = vpop.permute.xlu0 %5078
  %5080 = vrot.lane.b32.xlu0 %v4647, 64
  %v5081 = vpop.permute.xlu0 %5080
  %5082 = vrot.lane.b32.xlu0 %v4649, 64
  %v5083 = vpop.permute.xlu0 %5082
  %5084 = vrot.lane.b32.xlu0 %v4650, 64
  %v5085 = vpop.permute.xlu0 %5084
  %5086 = vrot.lane.b32.xlu0 %v4652, 64
  %v5087 = vpop.permute.xlu0 %5086
  %5088 = vrot.lane.b32.xlu0 %v4653, 64
  %v5089 = vpop.permute.xlu0 %5088
  %5090 = vrot.lane.b32.xlu0 %v4655, 64
  %v5091 = vpop.permute.xlu0 %5090
  %5092 = vrot.lane.b32.xlu0 %v4656, 64
  %v5093 = vpop.permute.xlu0 %5092
  %5094 = vrot.lane.b32.xlu0 %v4658, 64
  %v5095 = vpop.permute.xlu0 %5094
  %5096 = vrot.lane.b32.xlu0 %v4659, 64
  %v5097 = vpop.permute.xlu0 %5096
  %5098 = vrot.lane.b32.xlu0 %v4661, 64
  %v5099 = vpop.permute.xlu0 %5098
  %5100 = vrot.lane.b32.xlu0 %v4662, 64
  %v5101 = vpop.permute.xlu0 %5100
  %5102 = vrot.lane.b32.xlu0 %v4664, 64
  %v5103 = vpop.permute.xlu0 %5102
  %5104 = vrot.lane.b32.xlu0 %v4665, 64
  %v5105 = vpop.permute.xlu0 %5104
  %5106 = vrot.lane.b32.xlu0 %v4667, 64
  %v5107 = vpop.permute.xlu0 %5106
  %5108 = vrot.lane.b32.xlu0 %v4668, 64
  %v5109 = vpop.permute.xlu0 %5108
  %5110 = vrot.lane.b32.xlu0 %v4670, 64
  %v5111 = vpop.permute.xlu0 %5110
  %5112 = vrot.lane.b32.xlu0 %v4671, 64
  %v5113 = vpop.permute.xlu0 %5112
  %5114 = vrot.lane.b32.xlu0 %v4673, 64
  %v5115 = vpop.permute.xlu0 %5114
  %5116 = vrot.lane.b32.xlu0 %v4674, 64
  %v5117 = vpop.permute.xlu0 %5116
  %5118 = vrot.lane.b32.xlu0 %v4676, 64
  %v5119 = vpop.permute.xlu0 %5118
  %5120 = vrot.lane.b32.xlu0 %v4677, 64
  %v5121 = vpop.permute.xlu0 %5120
  %5122 = vrot.lane.b32.xlu0 %v4679, 64
  %v5123 = vpop.permute.xlu0 %5122
  %5124 = vrot.lane.b32.xlu0 %v4680, 64
  %v5125 = vpop.permute.xlu0 %5124
  %5126 = vrot.lane.b32.xlu0 %v4682, 64
  %v5127 = vpop.permute.xlu0 %5126
  %5128 = vrot.lane.b32.xlu0 %v4683, 64
  %v5129 = vpop.permute.xlu0 %5128
  %5130 = vrot.lane.b32.xlu0 %v4685, 64
  %v5131 = vpop.permute.xlu0 %5130
  %5132 = vrot.lane.b32.xlu0 %v4686, 64
  %v5133 = vpop.permute.xlu0 %5132
  %5134 = vrot.lane.b32.xlu0 %v4688, 64
  %v5135 = vpop.permute.xlu0 %5134
  %5136 = vrot.lane.b32.xlu0 %v4689, 64
  %v5137 = vpop.permute.xlu0 %5136
  %v5138 = vsel %vm861, %v5011, %v5013
  %v5139 = vsel %vm861, %v5015, %v5017
  %v5140 = vsel %vm861, %v5019, %v5021
  %v5141 = vsel %vm861, %v5023, %v5025
  %v5142 = vsel %vm861, %v5027, %v5029
  %v5143 = vsel %vm861, %v5031, %v5033
  %v5144 = vsel %vm861, %v5035, %v5037
  %v5145 = vsel %vm861, %v5039, %v5041
  %v5146 = vsel %vm861, %v5043, %v5045
  %v5147 = vsel %vm861, %v5047, %v5049
  %v5148 = vsel %vm861, %v5051, %v5053
  %v5149 = vsel %vm861, %v5055, %v5057
  %v5150 = vsel %vm861, %v5059, %v5061
  %v5151 = vsel %vm861, %v5063, %v5065
  %v5152 = vsel %vm861, %v5067, %v5069
  %v5153 = vsel %vm861, %v5071, %v5073
  %v5154 = vsel %vm861, %v5075, %v5077
  %v5155 = vsel %vm861, %v5079, %v5081
  %v5156 = vsel %vm861, %v5083, %v5085
  %v5157 = vsel %vm861, %v5087, %v5089
  %v5158 = vsel %vm861, %v5091, %v5093
  %v5159 = vsel %vm861, %v5095, %v5097
  %v5160 = vsel %vm861, %v5099, %v5101
  %v5161 = vsel %vm861, %v5103, %v5105
  %v5162 = vsel %vm861, %v5107, %v5109
  %v5163 = vsel %vm861, %v5111, %v5113
  %v5164 = vsel %vm861, %v5115, %v5117
  %v5165 = vsel %vm861, %v5119, %v5121
  %v5166 = vsel %vm861, %v5123, %v5125
  %v5167 = vsel %vm861, %v5127, %v5129
  %v5168 = vsel %vm861, %v5131, %v5133
  %v5169 = vsel %vm861, %v5135, %v5137
  %v5202 = vadd.f32 %v4946, %v5138
  %v5203 = vadd.f32 %v4947, %v5139
  %v5204 = vadd.f32 %v4948, %v5140
  %v5205 = vadd.f32 %v4949, %v5141
  %v5206 = vadd.f32 %v4950, %v5142
  %v5207 = vadd.f32 %v4951, %v5143
  %v5208 = vadd.f32 %v4952, %v5144
  %v5209 = vadd.f32 %v4953, %v5145
  %v5210 = vadd.f32 %v4954, %v5146
  %v5211 = vadd.f32 %v4955, %v5147
  %v5212 = vadd.f32 %v4956, %v5148
  %v5213 = vadd.f32 %v4957, %v5149
  %v5214 = vadd.f32 %v4958, %v5150
  %v5215 = vadd.f32 %v4959, %v5151
  %v5216 = vadd.f32 %v4960, %v5152
  %v5217 = vadd.f32 %v4961, %v5153
  %v5218 = vadd.f32 %v4962, %v5154
  %v5219 = vadd.f32 %v4963, %v5155
  %v5220 = vadd.f32 %v4964, %v5156
  %v5221 = vadd.f32 %v4965, %v5157
  %v5222 = vadd.f32 %v4966, %v5158
  %v5223 = vadd.f32 %v4967, %v5159
  %v5224 = vadd.f32 %v4968, %v5160
  %v5225 = vadd.f32 %v4969, %v5161
  %v5226 = vadd.f32 %v4970, %v5162
  %v5227 = vadd.f32 %v4971, %v5163
  %v5228 = vadd.f32 %v4972, %v5164
  %v5229 = vadd.f32 %v4973, %v5165
  %v5230 = vadd.f32 %v4974, %v5166
  %v5231 = vadd.f32 %v4975, %v5167
  %v5232 = vadd.f32 %v4976, %v5168
  %v5233 = vadd.f32 %v4977, %v5169
  %v5234 = vpack.c.bf16 %v5203, %v5202
  %v5235 = vpack.c.bf16 %v5205, %v5204
  %v5236 = vpack.c.bf16 %v5207, %v5206
  %v5237 = vpack.c.bf16 %v5209, %v5208
  %v5238 = vpack.c.bf16 %v5211, %v5210
  %v5239 = vpack.c.bf16 %v5213, %v5212
  %v5240 = vpack.c.bf16 %v5215, %v5214
  %v5241 = vpack.c.bf16 %v5217, %v5216
  %v5242 = vpack.c.bf16 %v5219, %v5218
  %v5243 = vpack.c.bf16 %v5221, %v5220
  %v5244 = vpack.c.bf16 %v5223, %v5222
  %v5245 = vpack.c.bf16 %v5225, %v5224
  %v5246 = vpack.c.bf16 %v5227, %v5226
  %v5247 = vpack.c.bf16 %v5229, %v5228
  %v5248 = vpack.c.bf16 %v5231, %v5230
  %v5249 = vpack.c.bf16 %v5233, %v5232
  %v5250 = vld [vmem:[%s1 + $0x90] sm:$0xf]
  %v5251 = vld [vmem:[%s1 + $0x9c] sm:$0xf]
  %v5252 = vld [vmem:[%s1 + $0xa8] sm:$0xf]
  %v5253 = vld [vmem:[%s1 + $0xb4] sm:$0xf]
  %v5254 = vld [vmem:[%s1 + $0xc0] sm:$0xf]
  %v5255 = vld [vmem:[%s1 + $0xcc] sm:$0xf]
  %v5256 = vld [vmem:[%s1 + $0xd8] sm:$0xf]
  %v5257 = vld [vmem:[%s1 + $0xe4] sm:$0xf]
  %v5258 = vld [vmem:[%s1 + $0xf0] sm:$0xf]
  %v5259 = vld [vmem:[%s1 + $0xfc] sm:$0xf]
  %v5260 = vld [vmem:[%s1 + $0x108] sm:$0xf]
  %v5261 = vld [vmem:[%s1 + $0x114] sm:$0xf]
  %v5262 = vld [vmem:[%s2 + $0x1] ss:$0 sm:$0xff]
  %v5275 = vunpack.c.l.b16 %v5250
  %v5276 = vunpack.c.l.b16 %v5251
  %v5277 = vunpack.c.l.b16 %v5252
  %v5278 = vunpack.c.l.b16 %v5253
  %v5279 = vunpack.c.l.b16 %v5254
  %v5280 = vunpack.c.l.b16 %v5255
  %v5281 = vunpack.c.l.b16 %v5256
  %v5282 = vunpack.c.l.b16 %v5257
  %v5283 = vunpack.c.l.b16 %v5258
  %v5284 = vunpack.c.l.b16 %v5259
  %v5285 = vunpack.c.l.b16 %v5260
  %v5286 = vunpack.c.l.b16 %v5261
  %v5287 = vpack.c.b16 %v5276, %v5275
  %v5288 = vpack.c.b16 %v5278, %v5277
  %v5289 = vpack.c.b16 %v5280, %v5279
  %v5290 = vpack.c.b16 %v5282, %v5281
  %v5291 = vpack.c.b16 %v5284, %v5283
  %v5292 = vpack.c.b16 %v5286, %v5285
  %v5300 = vsel %vm202, %v5234, 0
  %v5303 = vsel %vm202, %v5235, 0
  %v5306 = vsel %vm202, %v5236, 0
  %v5309 = vsel %vm202, %v5237, 0
  %v5312 = vsel %vm202, %v5238, 0
  %v5315 = vsel %vm202, %v5239, 0
  %v5318 = vsel %vm202, %v5240, 0
  %v5321 = vsel %vm202, %v5241, 0
  %v5324 = vsel %vm202, %v5242, 0
  %v5327 = vsel %vm202, %v5243, 0
  %v5330 = vsel %vm202, %v5244, 0
  %v5333 = vsel %vm202, %v5245, 0
  %v5336 = vsel %vm202, %v5246, 0
  %v5339 = vsel %vm202, %v5247, 0
  %v5342 = vsel %vm202, %v5248, 0
  %v5345 = vsel %vm202, %v5249, 0
  %5347 = vmatprep.subr.bf16.mxu0 0
  %5348 = vmatpush1.bf16.msra.mxu0 %v5287
  %5349 = vmatprep.subr.bf16.mxu0 0
  %5350 = vmatpush1.bf16.msra.mxu0 %v5288
  %5351 = vmatprep.subr.bf16.mxu0 0
  %5352 = vmatpush1.bf16.msra.mxu0 %v5289
  %5353 = vmatprep.subr.bf16.mxu0 0
  %5354 = vmatpush1.bf16.msra.mxu0 %v5290
  %5355 = vmatprep.subr.bf16.mxu0 0
  %5356 = vmatpush1.bf16.msra.mxu0 %v5291
  %5357 = vmatprep.subr.bf16.mxu0 0
  %5358 = vmatpush1.bf16.msra.mxu0 %v5292
  %5359 = vmatprep.subr.bf16.mxu0 0
  %5360 = vmatpush1.bf16.msra.mxu0 0
  %5361 = vmatprep.subr.bf16.mxu0 0
  %5362 = vmatpush1.bf16.msra.mxu0 0
  %5363 = vmatprep.subr.bf16.mxu0 0
  %5364 = vmatpush1.bf16.msra.mxu0 0
  %5365 = vmatprep.subr.bf16.mxu0 0
  %5366 = vmatpush1.bf16.msra.mxu0 0
  %5367 = vmatprep.subr.bf16.mxu0 0
  %5368 = vmatpush1.bf16.msra.mxu0 0
  %5369 = vmatprep.subr.bf16.mxu0 0
  %5370 = vmatpush1.bf16.msra.mxu0 0
  %5371 = vmatprep.subr.bf16.mxu0 0
  %5372 = vmatpush1.bf16.msra.mxu0 0
  %5373 = vmatprep.subr.bf16.mxu0 0
  %5374 = vmatpush1.bf16.msra.mxu0 0
  %5375 = vmatprep.subr.bf16.mxu0 0
  %5376 = vmatpush1.bf16.msra.mxu0 0
  %5377 = vmatprep.subr.bf16.mxu0 0
  %5378 = vmatpush1.bf16.msra.mxu0 0
  %5379 = vmatprep.mubr.bf16.mxu0 0
  %5380 = vmatmul.mubr.bf16.gmra.mrb[0].mxu0 %v5300
  %v5381 = vpop.f32.mrb[0].mxu0
  %v5382 = vadd.f32 %v5262, %v5381
  %v5383 = vpop.f32.mrb[0].mxu0
  %v5384 = vpop.f32.mrb[0].mxu0
  %v5385 = vadd.f32 %v5262, %v5384
  %v5386 = vpop.f32.mrb[0].mxu0
  %5387 = vmatprep.mubr.bf16.mxu0 0
  %5388 = vmatmul.mubr.bf16.gmra.mrb[0].mxu0 %v5303
  %v5389 = vpop.f32.mrb[0].mxu0
  %v5390 = vadd.f32 %v5262, %v5389
  %v5391 = vpop.f32.mrb[0].mxu0
  %v5392 = vpop.f32.mrb[0].mxu0
  %v5393 = vadd.f32 %v5262, %v5392
  %v5394 = vpop.f32.mrb[0].mxu0
  %5395 = vmatprep.mubr.bf16.mxu0 0
  %5396 = vmatmul.mubr.bf16.gmra.mrb[0].mxu0 %v5306
  %v5397 = vpop.f32.mrb[0].mxu0
  %v5398 = vadd.f32 %v5262, %v5397
  %v5399 = vpop.f32.mrb[0].mxu0
  %v5400 = vpop.f32.mrb[0].mxu0
  %v5401 = vadd.f32 %v5262, %v5400
  %v5402 = vpop.f32.mrb[0].mxu0
  %5403 = vmatprep.mubr.bf16.mxu0 0
  %5404 = vmatmul.mubr.bf16.gmra.mrb[0].mxu0 %v5309
  %v5405 = vpop.f32.mrb[0].mxu0
  %v5406 = vadd.f32 %v5262, %v5405
  %v5407 = vpop.f32.mrb[0].mxu0
  %v5408 = vpop.f32.mrb[0].mxu0
  %v5409 = vadd.f32 %v5262, %v5408
  %v5410 = vpop.f32.mrb[0].mxu0
  %5411 = vmatprep.mubr.bf16.mxu0 0
  %5412 = vmatmul.mubr.bf16.gmra.mrb[0].mxu0 %v5312
  %v5413 = vpop.f32.mrb[0].mxu0
  %v5414 = vadd.f32 %v5262, %v5413
  %v5415 = vpop.f32.mrb[0].mxu0
  %v5416 = vpop.f32.mrb[0].mxu0
  %v5417 = vadd.f32 %v5262, %v5416
  %v5418 = vpop.f32.mrb[0].mxu0
  %5419 = vmatprep.mubr.bf16.mxu0 0
  %5420 = vmatmul.mubr.bf16.gmra.mrb[0].mxu0 %v5315
  %v5421 = vpop.f32.mrb[0].mxu0
  %v5422 = vadd.f32 %v5262, %v5421
  %v5423 = vpop.f32.mrb[0].mxu0
  %v5424 = vpop.f32.mrb[0].mxu0
  %v5425 = vadd.f32 %v5262, %v5424
  %v5426 = vpop.f32.mrb[0].mxu0
  %5427 = vmatprep.mubr.bf16.mxu0 0
  %5428 = vmatmul.mubr.bf16.gmra.mrb[0].mxu0 %v5318
  %v5429 = vpop.f32.mrb[0].mxu0
  %v5430 = vadd.f32 %v5262, %v5429
  %v5431 = vpop.f32.mrb[0].mxu0
  %v5432 = vpop.f32.mrb[0].mxu0
  %v5433 = vadd.f32 %v5262, %v5432
  %v5434 = vpop.f32.mrb[0].mxu0
  %5435 = vmatprep.mubr.bf16.mxu0 0
  %5436 = vmatmul.mubr.bf16.gmra.mrb[0].mxu0 %v5321
  %v5437 = vpop.f32.mrb[0].mxu0
  %v5438 = vadd.f32 %v5262, %v5437
  %v5439 = vpop.f32.mrb[0].mxu0
  %v5440 = vpop.f32.mrb[0].mxu0
  %v5441 = vadd.f32 %v5262, %v5440
  %v5442 = vpop.f32.mrb[0].mxu0
  %5443 = vmatprep.mubr.bf16.mxu0 0
  %5444 = vmatmul.mubr.bf16.gmra.mrb[0].mxu0 %v5324
  %v5445 = vpop.f32.mrb[0].mxu0
  %v5446 = vadd.f32 %v5262, %v5445
  %v5447 = vpop.f32.mrb[0].mxu0
  %v5448 = vpop.f32.mrb[0].mxu0
  %v5449 = vadd.f32 %v5262, %v5448
  %v5450 = vpop.f32.mrb[0].mxu0
  %5451 = vmatprep.mubr.bf16.mxu0 0
  %5452 = vmatmul.mubr.bf16.gmra.mrb[0].mxu0 %v5327
  %v5453 = vpop.f32.mrb[0].mxu0
  %v5454 = vadd.f32 %v5262, %v5453
  %v5455 = vpop.f32.mrb[0].mxu0
  %v5456 = vpop.f32.mrb[0].mxu0
  %v5457 = vadd.f32 %v5262, %v5456
  %v5458 = vpop.f32.mrb[0].mxu0
  %5459 = vmatprep.mubr.bf16.mxu0 0
  %5460 = vmatmul.mubr.bf16.gmra.mrb[0].mxu0 %v5330
  %v5461 = vpop.f32.mrb[0].mxu0
  %v5462 = vadd.f32 %v5262, %v5461
  %v5463 = vpop.f32.mrb[0].mxu0
  %v5464 = vpop.f32.mrb[0].mxu0
  %v5465 = vadd.f32 %v5262, %v5464
  %v5466 = vpop.f32.mrb[0].mxu0
  %5467 = vmatprep.mubr.bf16.mxu0 0
  %5468 = vmatmul.mubr.bf16.gmra.mrb[0].mxu0 %v5333
  %v5469 = vpop.f32.mrb[0].mxu0
  %v5470 = vadd.f32 %v5262, %v5469
  %v5471 = vpop.f32.mrb[0].mxu0
  %v5472 = vpop.f32.mrb[0].mxu0
  %v5473 = vadd.f32 %v5262, %v5472
  %v5474 = vpop.f32.mrb[0].mxu0
  %5475 = vmatprep.mubr.bf16.mxu0 0
  %5476 = vmatmul.mubr.bf16.gmra.mrb[0].mxu0 %v5336
  %v5477 = vpop.f32.mrb[0].mxu0
  %v5478 = vadd.f32 %v5262, %v5477
  %v5479 = vpop.f32.mrb[0].mxu0
  %v5480 = vpop.f32.mrb[0].mxu0
  %v5481 = vadd.f32 %v5262, %v5480
  %v5482 = vpop.f32.mrb[0].mxu0
  %5483 = vmatprep.mubr.bf16.mxu0 0
  %5484 = vmatmul.mubr.bf16.gmra.mrb[0].mxu0 %v5339
  %v5485 = vpop.f32.mrb[0].mxu0
  %v5486 = vadd.f32 %v5262, %v5485
  %v5487 = vpop.f32.mrb[0].mxu0
  %v5488 = vpop.f32.mrb[0].mxu0
  %v5489 = vadd.f32 %v5262, %v5488
  %v5490 = vpop.f32.mrb[0].mxu0
  %5491 = vmatprep.mubr.bf16.mxu0 0
  %5492 = vmatmul.mubr.bf16.gmra.mrb[0].mxu0 %v5342
  %v5493 = vpop.f32.mrb[0].mxu0
  %v5494 = vadd.f32 %v5262, %v5493
  %v5495 = vpop.f32.mrb[0].mxu0
  %v5496 = vpop.f32.mrb[0].mxu0
  %v5497 = vadd.f32 %v5262, %v5496
  %v5498 = vpop.f32.mrb[0].mxu0
  %5499 = vmatprep.mubr.bf16.mxu0 0
  %5500 = vmatmul.mubr.bf16.gmra.mrb[0].mxu0 %v5345
  %v5501 = vpop.f32.mrb[0].mxu0
  %v5502 = vadd.f32 %v5262, %v5501
  %v5503 = vpop.f32.mrb[0].mxu0
  %v5504 = vpop.f32.mrb[0].mxu0
  %v5505 = vadd.f32 %v5262, %v5504
  %v5506 = vpop.f32.mrb[0].mxu0
  %5507 = vdwg.mxu0
  %v5508 = vadd.f32 %v17, %v5382
  %v5509 = vadd.f32 %v18, %v5385
  %v5510 = vadd.f32 %v19, %v5390
  %v5511 = vadd.f32 %v20, %v5393
  %v5512 = vadd.f32 %v21, %v5398
  %v5513 = vadd.f32 %v22, %v5401
  %v5514 = vadd.f32 %v23, %v5406
  %v5515 = vadd.f32 %v24, %v5409
  %v5516 = vadd.f32 %v25, %v5414
  %v5517 = vadd.f32 %v26, %v5417
  %v5518 = vadd.f32 %v27, %v5422
  %v5519 = vadd.f32 %v28, %v5425
  %v5520 = vadd.f32 %v29, %v5430
  %v5521 = vadd.f32 %v30, %v5433
  %v5522 = vadd.f32 %v31, %v5438
  %v5523 = vadd.f32 %v32, %v5441
  %v5524 = vadd.f32 %v33, %v5446
  %v5525 = vadd.f32 %v34, %v5449
  %v5526 = vadd.f32 %v35, %v5454
  %v5527 = vadd.f32 %v36, %v5457
  %v5528 = vadd.f32 %v37, %v5462
  %v5529 = vadd.f32 %v38, %v5465
  %v5530 = vadd.f32 %v39, %v5470
  %v5531 = vadd.f32 %v40, %v5473
  %v5532 = vadd.f32 %v41, %v5478
  %v5533 = vadd.f32 %v42, %v5481
  %v5534 = vadd.f32 %v43, %v5486
  %v5535 = vadd.f32 %v44, %v5489
  %v5536 = vadd.f32 %v45, %v5494
  %v5537 = vadd.f32 %v46, %v5497
  %v5538 = vadd.f32 %v47, %v5502
  %v5539 = vadd.f32 %v48, %v5505
  %v5540 = vpack.c.bf16 %v5509, %v5508
  %v5541 = vpack.c.bf16 %v5511, %v5510
  %v5542 = vpack.c.bf16 %v5513, %v5512
  %v5543 = vpack.c.bf16 %v5515, %v5514
  %v5544 = vpack.c.bf16 %v5517, %v5516
  %v5545 = vpack.c.bf16 %v5519, %v5518
  %v5546 = vpack.c.bf16 %v5521, %v5520
  %v5547 = vpack.c.bf16 %v5523, %v5522
  %v5548 = vpack.c.bf16 %v5525, %v5524
  %v5549 = vpack.c.bf16 %v5527, %v5526
  %v5550 = vpack.c.bf16 %v5529, %v5528
  %v5551 = vpack.c.bf16 %v5531, %v5530
  %v5552 = vpack.c.bf16 %v5533, %v5532
  %v5553 = vpack.c.bf16 %v5535, %v5534
  %v5554 = vpack.c.bf16 %v5537, %v5536
  %v5555 = vpack.c.bf16 %v5539, %v5538
  %v5556 = vld [vmem:[%s1 + $0x240] sm:$0xf]
  %v5557 = vld [vmem:[%s1 + $0x24c] sm:$0xf]
  %v5558 = vld [vmem:[%s1 + $0x258] sm:$0xf]
  %v5559 = vld [vmem:[%s1 + $0x264] sm:$0xf]
  %v5560 = vld [vmem:[%s1 + $0x270] sm:$0xf]
  %v5561 = vld [vmem:[%s1 + $0x27c] sm:$0xf]
  %v5562 = vld [vmem:[%s1 + $0x288] sm:$0xf]
  %v5563 = vld [vmem:[%s1 + $0x294] sm:$0xf]
  %v5564 = vld [vmem:[%s1 + $0x2a0] sm:$0xf]
  %v5565 = vld [vmem:[%s1 + $0x2ac] sm:$0xf]
  %v5566 = vld [vmem:[%s1 + $0x2b8] sm:$0xf]
  %v5567 = vld [vmem:[%s1 + $0x2c4] sm:$0xf]
  %v5580 = vunpack.c.l.b16 %v5556
  %v5581 = vunpack.c.l.b16 %v5557
  %v5582 = vunpack.c.l.b16 %v5558
  %v5583 = vunpack.c.l.b16 %v5559
  %v5584 = vunpack.c.l.b16 %v5560
  %v5585 = vunpack.c.l.b16 %v5561
  %v5586 = vunpack.c.l.b16 %v5562
  %v5587 = vunpack.c.l.b16 %v5563
  %v5588 = vunpack.c.l.b16 %v5564
  %v5589 = vunpack.c.l.b16 %v5565
  %v5590 = vunpack.c.l.b16 %v5566
  %v5591 = vunpack.c.l.b16 %v5567
  %v5592 = vpack.c.b16 %v5581, %v5580
  %v5593 = vpack.c.b16 %v5583, %v5582
  %v5594 = vpack.c.b16 %v5585, %v5584
  %v5595 = vpack.c.b16 %v5587, %v5586
  %v5596 = vpack.c.b16 %v5589, %v5588
  %v5597 = vpack.c.b16 %v5591, %v5590
  %v5605 = vsel %vm202, %v5540, 0
  %v5608 = vsel %vm202, %v5541, 0
  %v5611 = vsel %vm202, %v5542, 0
  %v5614 = vsel %vm202, %v5543, 0
  %v5617 = vsel %vm202, %v5544, 0
  %v5620 = vsel %vm202, %v5545, 0
  %v5623 = vsel %vm202, %v5546, 0
  %v5626 = vsel %vm202, %v5547, 0
  %v5629 = vsel %vm202, %v5548, 0
  %v5632 = vsel %vm202, %v5549, 0
  %v5635 = vsel %vm202, %v5550, 0
  %v5638 = vsel %vm202, %v5551, 0
  %v5641 = vsel %vm202, %v5552, 0
  %v5644 = vsel %vm202, %v5553, 0
  %v5647 = vsel %vm202, %v5554, 0
  %v5650 = vsel %vm202, %v5555, 0
  %5652 = vmatprep.subr.bf16.mxu0 0
  %5653 = vmatpush1.bf16.msra.mxu0 %v5592
  %5654 = vmatprep.subr.bf16.mxu0 0
  %5655 = vmatpush1.bf16.msra.mxu0 %v5593
  %5656 = vmatprep.subr.bf16.mxu0 0
  %5657 = vmatpush1.bf16.msra.mxu0 %v5594
  %5658 = vmatprep.subr.bf16.mxu0 0
  %5659 = vmatpush1.bf16.msra.mxu0 %v5595
  %5660 = vmatprep.subr.bf16.mxu0 0
  %5661 = vmatpush1.bf16.msra.mxu0 %v5596
  %5662 = vmatprep.subr.bf16.mxu0 0
  %5663 = vmatpush1.bf16.msra.mxu0 %v5597
  %5664 = vmatprep.subr.bf16.mxu0 0
  %5665 = vmatpush1.bf16.msra.mxu0 0
  %5666 = vmatprep.subr.bf16.mxu0 0
  %5667 = vmatpush1.bf16.msra.mxu0 0
  %5668 = vmatprep.subr.bf16.mxu0 0
  %5669 = vmatpush1.bf16.msra.mxu0 0
  %5670 = vmatprep.subr.bf16.mxu0 0
  %5671 = vmatpush1.bf16.msra.mxu0 0
  %5672 = vmatprep.subr.bf16.mxu0 0
  %5673 = vmatpush1.bf16.msra.mxu0 0
  %5674 = vmatprep.subr.bf16.mxu0 0
  %5675 = vmatpush1.bf16.msra.mxu0 0
  %5676 = vmatprep.subr.bf16.mxu0 0
  %5677 = vmatpush1.bf16.msra.mxu0 0
  %5678 = vmatprep.subr.bf16.mxu0 0
  %5679 = vmatpush1.bf16.msra.mxu0 0
  %5680 = vmatprep.subr.bf16.mxu0 0
  %5681 = vmatpush1.bf16.msra.mxu0 0
  %5682 = vmatprep.subr.bf16.mxu0 0
  %5683 = vmatpush1.bf16.msra.mxu0 0
  %5684 = vmatprep.mubr.bf16.mxu0 0
  %5685 = vmatmul.mubr.bf16.gmra.mrb[0].mxu0 %v5605
  %v5686 = vpop.f32.mrb[0].mxu0
  %v5687 = vadd.f32 0.0, %v5686
  %v5688 = vpop.f32.mrb[0].mxu0
  %v5689 = vpop.f32.mrb[0].mxu0
  %v5690 = vadd.f32 0.0, %v5689
  %v5691 = vpop.f32.mrb[0].mxu0
  %5692 = vmatprep.mubr.bf16.mxu0 0
  %5693 = vmatmul.mubr.bf16.gmra.mrb[0].mxu0 %v5608
  %v5694 = vpop.f32.mrb[0].mxu0
  %v5695 = vadd.f32 0.0, %v5694
  %v5696 = vpop.f32.mrb[0].mxu0
  %v5697 = vpop.f32.mrb[0].mxu0
  %v5698 = vadd.f32 0.0, %v5697
  %v5699 = vpop.f32.mrb[0].mxu0
  %5700 = vmatprep.mubr.bf16.mxu0 0
  %5701 = vmatmul.mubr.bf16.gmra.mrb[0].mxu0 %v5611
  %v5702 = vpop.f32.mrb[0].mxu0
  %v5703 = vadd.f32 0.0, %v5702
  %v5704 = vpop.f32.mrb[0].mxu0
  %v5705 = vpop.f32.mrb[0].mxu0
  %v5706 = vadd.f32 0.0, %v5705
  %v5707 = vpop.f32.mrb[0].mxu0
  %5708 = vmatprep.mubr.bf16.mxu0 0
  %5709 = vmatmul.mubr.bf16.gmra.mrb[0].mxu0 %v5614
  %v5710 = vpop.f32.mrb[0].mxu0
  %v5711 = vadd.f32 0.0, %v5710
  %v5712 = vpop.f32.mrb[0].mxu0
  %v5713 = vpop.f32.mrb[0].mxu0
  %v5714 = vadd.f32 0.0, %v5713
  %v5715 = vpop.f32.mrb[0].mxu0
  %5716 = vmatprep.mubr.bf16.mxu0 0
  %5717 = vmatmul.mubr.bf16.gmra.mrb[0].mxu0 %v5617
  %v5718 = vpop.f32.mrb[0].mxu0
  %v5719 = vadd.f32 0.0, %v5718
  %v5720 = vpop.f32.mrb[0].mxu0
  %v5721 = vpop.f32.mrb[0].mxu0
  %v5722 = vadd.f32 0.0, %v5721
  %v5723 = vpop.f32.mrb[0].mxu0
  %5724 = vmatprep.mubr.bf16.mxu0 0
  %5725 = vmatmul.mubr.bf16.gmra.mrb[0].mxu0 %v5620
  %v5726 = vpop.f32.mrb[0].mxu0
  %v5727 = vadd.f32 0.0, %v5726
  %v5728 = vpop.f32.mrb[0].mxu0
  %v5729 = vpop.f32.mrb[0].mxu0
  %v5730 = vadd.f32 0.0, %v5729
  %v5731 = vpop.f32.mrb[0].mxu0
  %5732 = vmatprep.mubr.bf16.mxu0 0
  %5733 = vmatmul.mubr.bf16.gmra.mrb[0].mxu0 %v5623
  %v5734 = vpop.f32.mrb[0].mxu0
  %v5735 = vadd.f32 0.0, %v5734
  %v5736 = vpop.f32.mrb[0].mxu0
  %v5737 = vpop.f32.mrb[0].mxu0
  %v5738 = vadd.f32 0.0, %v5737
  %v5739 = vpop.f32.mrb[0].mxu0
  %5740 = vmatprep.mubr.bf16.mxu0 0
  %5741 = vmatmul.mubr.bf16.gmra.mrb[0].mxu0 %v5626
  %v5742 = vpop.f32.mrb[0].mxu0
  %v5743 = vadd.f32 0.0, %v5742
  %v5744 = vpop.f32.mrb[0].mxu0
  %v5745 = vpop.f32.mrb[0].mxu0
  %v5746 = vadd.f32 0.0, %v5745
  %v5747 = vpop.f32.mrb[0].mxu0
  %5748 = vmatprep.mubr.bf16.mxu0 0
  %5749 = vmatmul.mubr.bf16.gmra.mrb[0].mxu0 %v5629
  %v5750 = vpop.f32.mrb[0].mxu0
  %v5751 = vadd.f32 0.0, %v5750
  %v5752 = vpop.f32.mrb[0].mxu0
  %v5753 = vpop.f32.mrb[0].mxu0
  %v5754 = vadd.f32 0.0, %v5753
  %v5755 = vpop.f32.mrb[0].mxu0
  %5756 = vmatprep.mubr.bf16.mxu0 0
  %5757 = vmatmul.mubr.bf16.gmra.mrb[0].mxu0 %v5632
  %v5758 = vpop.f32.mrb[0].mxu0
  %v5759 = vadd.f32 0.0, %v5758
  %v5760 = vpop.f32.mrb[0].mxu0
  %v5761 = vpop.f32.mrb[0].mxu0
  %v5762 = vadd.f32 0.0, %v5761
  %v5763 = vpop.f32.mrb[0].mxu0
  %5764 = vmatprep.mubr.bf16.mxu0 0
  %5765 = vmatmul.mubr.bf16.gmra.mrb[0].mxu0 %v5635
  %v5766 = vpop.f32.mrb[0].mxu0
  %v5767 = vadd.f32 0.0, %v5766
  %v5768 = vpop.f32.mrb[0].mxu0
  %v5769 = vpop.f32.mrb[0].mxu0
  %v5770 = vadd.f32 0.0, %v5769
  %v5771 = vpop.f32.mrb[0].mxu0
  %5772 = vmatprep.mubr.bf16.mxu0 0
  %5773 = vmatmul.mubr.bf16.gmra.mrb[0].mxu0 %v5638
  %v5774 = vpop.f32.mrb[0].mxu0
  %v5775 = vadd.f32 0.0, %v5774
  %v5776 = vpop.f32.mrb[0].mxu0
  %v5777 = vpop.f32.mrb[0].mxu0
  %v5778 = vadd.f32 0.0, %v5777
  %v5779 = vpop.f32.mrb[0].mxu0
  %5780 = vmatprep.mubr.bf16.mxu0 0
  %5781 = vmatmul.mubr.bf16.gmra.mrb[0].mxu0 %v5641
  %v5782 = vpop.f32.mrb[0].mxu0
  %v5783 = vadd.f32 0.0, %v5782
  %v5784 = vpop.f32.mrb[0].mxu0
  %v5785 = vpop.f32.mrb[0].mxu0
  %v5786 = vadd.f32 0.0, %v5785
  %v5787 = vpop.f32.mrb[0].mxu0
  %5788 = vmatprep.mubr.bf16.mxu0 0
  %5789 = vmatmul.mubr.bf16.gmra.mrb[0].mxu0 %v5644
  %v5790 = vpop.f32.mrb[0].mxu0
  %v5791 = vadd.f32 0.0, %v5790
  %v5792 = vpop.f32.mrb[0].mxu0
  %v5793 = vpop.f32.mrb[0].mxu0
  %v5794 = vadd.f32 0.0, %v5793
  %v5795 = vpop.f32.mrb[0].mxu0
  %5796 = vmatprep.mubr.bf16.mxu0 0
  %5797 = vmatmul.mubr.bf16.gmra.mrb[0].mxu0 %v5647
  %v5798 = vpop.f32.mrb[0].mxu0
  %v5799 = vadd.f32 0.0, %v5798
  %v5800 = vpop.f32.mrb[0].mxu0
  %v5801 = vpop.f32.mrb[0].mxu0
  %v5802 = vadd.f32 0.0, %v5801
  %v5803 = vpop.f32.mrb[0].mxu0
  %5804 = vmatprep.mubr.bf16.mxu0 0
  %5805 = vmatmul.mubr.bf16.gmra.mrb[0].mxu0 %v5650
  %v5806 = vpop.f32.mrb[0].mxu0
  %v5807 = vadd.f32 0.0, %v5806
  %v5808 = vpop.f32.mrb[0].mxu0
  %v5809 = vpop.f32.mrb[0].mxu0
  %v5810 = vadd.f32 0.0, %v5809
  %v5811 = vpop.f32.mrb[0].mxu0
  %5812 = vdwg.mxu0
  %v5813 = vsub.f32 %v5508, %v5687
  %v5814 = vsub.f32 %v5509, %v5690
  %v5815 = vsub.f32 %v5510, %v5695
  %v5816 = vsub.f32 %v5511, %v5698
  %v5817 = vsub.f32 %v5512, %v5703
  %v5818 = vsub.f32 %v5513, %v5706
  %v5819 = vsub.f32 %v5514, %v5711
  %v5820 = vsub.f32 %v5515, %v5714
  %v5821 = vsub.f32 %v5516, %v5719
  %v5822 = vsub.f32 %v5517, %v5722
  %v5823 = vsub.f32 %v5518, %v5727
  %v5824 = vsub.f32 %v5519, %v5730
  %v5825 = vsub.f32 %v5520, %v5735
  %v5826 = vsub.f32 %v5521, %v5738
  %v5827 = vsub.f32 %v5522, %v5743
  %v5828 = vsub.f32 %v5523, %v5746
  %v5829 = vsub.f32 %v5524, %v5751
  %v5830 = vsub.f32 %v5525, %v5754
  %v5831 = vsub.f32 %v5526, %v5759
  %v5832 = vsub.f32 %v5527, %v5762
  %v5833 = vsub.f32 %v5528, %v5767
  %v5834 = vsub.f32 %v5529, %v5770
  %v5835 = vsub.f32 %v5530, %v5775
  %v5836 = vsub.f32 %v5531, %v5778
  %v5837 = vsub.f32 %v5532, %v5783
  %v5838 = vsub.f32 %v5533, %v5786
  %v5839 = vsub.f32 %v5534, %v5791
  %v5840 = vsub.f32 %v5535, %v5794
  %v5841 = vsub.f32 %v5536, %v5799
  %v5842 = vsub.f32 %v5537, %v5802
  %v5843 = vsub.f32 %v5538, %v5807
  %v5844 = vsub.f32 %v5539, %v5810
  %v5845 = vmul.f32 %v5813, %v5813
  %v5846 = vmul.f32 %v5814, %v5814
  %v5847 = vmul.f32 %v5815, %v5815
  %v5848 = vmul.f32 %v5816, %v5816
  %v5849 = vmul.f32 %v5817, %v5817
  %v5850 = vmul.f32 %v5818, %v5818
  %v5851 = vmul.f32 %v5819, %v5819
  %v5852 = vmul.f32 %v5820, %v5820
  %v5853 = vmul.f32 %v5821, %v5821
  %v5854 = vmul.f32 %v5822, %v5822
  %v5855 = vmul.f32 %v5823, %v5823
  %v5856 = vmul.f32 %v5824, %v5824
  %v5857 = vmul.f32 %v5825, %v5825
  %v5858 = vmul.f32 %v5826, %v5826
  %v5859 = vmul.f32 %v5827, %v5827
  %v5860 = vmul.f32 %v5828, %v5828
  %v5861 = vmul.f32 %v5829, %v5829
  %v5862 = vmul.f32 %v5830, %v5830
  %v5863 = vmul.f32 %v5831, %v5831
  %v5864 = vmul.f32 %v5832, %v5832
  %v5865 = vmul.f32 %v5833, %v5833
  %v5866 = vmul.f32 %v5834, %v5834
  %v5867 = vmul.f32 %v5835, %v5835
  %v5868 = vmul.f32 %v5836, %v5836
  %v5869 = vmul.f32 %v5837, %v5837
  %v5870 = vmul.f32 %v5838, %v5838
  %v5871 = vmul.f32 %v5839, %v5839
  %v5872 = vmul.f32 %v5840, %v5840
  %v5873 = vmul.f32 %v5841, %v5841
  %v5874 = vmul.f32 %v5842, %v5842
  %v5875 = vmul.f32 %v5843, %v5843
  %v5876 = vmul.f32 %v5844, %v5844
  %v5877 = vpack.c.bf16 %v5846, %v5845
  %v5878 = vpack.c.bf16 %v5848, %v5847
  %v5879 = vpack.c.bf16 %v5850, %v5849
  %v5880 = vpack.c.bf16 %v5852, %v5851
  %v5881 = vpack.c.bf16 %v5854, %v5853
  %v5882 = vpack.c.bf16 %v5856, %v5855
  %v5883 = vpack.c.bf16 %v5858, %v5857
  %v5884 = vpack.c.bf16 %v5860, %v5859
  %v5885 = vpack.c.bf16 %v5862, %v5861
  %v5886 = vpack.c.bf16 %v5864, %v5863
  %v5887 = vpack.c.bf16 %v5866, %v5865
  %v5888 = vpack.c.bf16 %v5868, %v5867
  %v5889 = vpack.c.bf16 %v5870, %v5869
  %v5890 = vpack.c.bf16 %v5872, %v5871
  %v5891 = vpack.c.bf16 %v5874, %v5873
  %v5892 = vpack.c.bf16 %v5876, %v5875
  %v5894 = vsel %vm202, %v5877, 0
  %v5897 = vsel %vm202, %v5878, 0
  %v5900 = vsel %vm202, %v5879, 0
  %v5903 = vsel %vm202, %v5880, 0
  %v5906 = vsel %vm202, %v5881, 0
  %v5909 = vsel %vm202, %v5882, 0
  %v5912 = vsel %vm202, %v5883, 0
  %v5915 = vsel %vm202, %v5884, 0
  %v5918 = vsel %vm202, %v5885, 0
  %v5921 = vsel %vm202, %v5886, 0
  %v5924 = vsel %vm202, %v5887, 0
  %v5927 = vsel %vm202, %v5888, 0
  %v5930 = vsel %vm202, %v5889, 0
  %v5933 = vsel %vm202, %v5890, 0
  %v5936 = vsel %vm202, %v5891, 0
  %v5939 = vsel %vm202, %v5892, 0
  %5941 = vmatprep.subr.bf16.mxu0 0
  %5942 = vmatpush1.bf16.msra.mxu0 %v5592
  %5943 = vmatprep.subr.bf16.mxu0 0
  %5944 = vmatpush1.bf16.msra.mxu0 %v5593
  %5945 = vmatprep.subr.bf16.mxu0 0
  %5946 = vmatpush1.bf16.msra.mxu0 %v5594
  %5947 = vmatprep.subr.bf16.mxu0 0
  %5948 = vmatpush1.bf16.msra.mxu0 %v5595
  %5949 = vmatprep.subr.bf16.mxu0 0
  %5950 = vmatpush1.bf16.msra.mxu0 %v5596
  %5951 = vmatprep.subr.bf16.mxu0 0
  %5952 = vmatpush1.bf16.msra.mxu0 %v5597
  %5953 = vmatprep.subr.bf16.mxu0 0
  %5954 = vmatpush1.bf16.msra.mxu0 0
  %5955 = vmatprep.subr.bf16.mxu0 0
  %5956 = vmatpush1.bf16.msra.mxu0 0
  %5957 = vmatprep.subr.bf16.mxu0 0
  %5958 = vmatpush1.bf16.msra.mxu0 0
  %5959 = vmatprep.subr.bf16.mxu0 0
  %5960 = vmatpush1.bf16.msra.mxu0 0
  %5961 = vmatprep.subr.bf16.mxu0 0
  %5962 = vmatpush1.bf16.msra.mxu0 0
  %5963 = vmatprep.subr.bf16.mxu0 0
  %5964 = vmatpush1.bf16.msra.mxu0 0
  %5965 = vmatprep.subr.bf16.mxu0 0
  %5966 = vmatpush1.bf16.msra.mxu0 0
  %5967 = vmatprep.subr.bf16.mxu0 0
  %5968 = vmatpush1.bf16.msra.mxu0 0
  %5969 = vmatprep.subr.bf16.mxu0 0
  %5970 = vmatpush1.bf16.msra.mxu0 0
  %5971 = vmatprep.subr.bf16.mxu0 0
  %5972 = vmatpush1.bf16.msra.mxu0 0
  %5973 = vmatprep.mubr.bf16.mxu0 0
  %5974 = vmatmul.mubr.bf16.gmra.mrb[0].mxu0 %v5894
  %v5975 = vpop.f32.mrb[0].mxu0
  %v5976 = vadd.f32 1e-05, %v5975
  %v5977 = vpop.f32.mrb[0].mxu0
  %v5978 = vpop.f32.mrb[0].mxu0
  %v5979 = vadd.f32 1e-05, %v5978
  %v5980 = vpop.f32.mrb[0].mxu0
  %5981 = vmatprep.mubr.bf16.mxu0 0
  %5982 = vmatmul.mubr.bf16.gmra.mrb[0].mxu0 %v5897
  %v5983 = vpop.f32.mrb[0].mxu0
  %v5984 = vadd.f32 1e-05, %v5983
  %v5985 = vpop.f32.mrb[0].mxu0
  %v5986 = vpop.f32.mrb[0].mxu0
  %v5987 = vadd.f32 1e-05, %v5986
  %v5988 = vpop.f32.mrb[0].mxu0
  %5989 = vmatprep.mubr.bf16.mxu0 0
  %5990 = vmatmul.mubr.bf16.gmra.mrb[0].mxu0 %v5900
  %v5991 = vpop.f32.mrb[0].mxu0
  %v5992 = vadd.f32 1e-05, %v5991
  %v5993 = vpop.f32.mrb[0].mxu0
  %v5994 = vpop.f32.mrb[0].mxu0
  %v5995 = vadd.f32 1e-05, %v5994
  %v5996 = vpop.f32.mrb[0].mxu0
  %5997 = vmatprep.mubr.bf16.mxu0 0
  %5998 = vmatmul.mubr.bf16.gmra.mrb[0].mxu0 %v5903
  %v5999 = vpop.f32.mrb[0].mxu0
  %v6000 = vadd.f32 1e-05, %v5999
  %v6001 = vpop.f32.mrb[0].mxu0
  %v6002 = vpop.f32.mrb[0].mxu0
  %v6003 = vadd.f32 1e-05, %v6002
  %v6004 = vpop.f32.mrb[0].mxu0
  %6005 = vmatprep.mubr.bf16.mxu0 0
  %6006 = vmatmul.mubr.bf16.gmra.mrb[0].mxu0 %v5906
  %v6007 = vpop.f32.mrb[0].mxu0
  %v6008 = vadd.f32 1e-05, %v6007
  %v6009 = vpop.f32.mrb[0].mxu0
  %v6010 = vpop.f32.mrb[0].mxu0
  %v6011 = vadd.f32 1e-05, %v6010
  %v6012 = vpop.f32.mrb[0].mxu0
  %6013 = vmatprep.mubr.bf16.mxu0 0
  %6014 = vmatmul.mubr.bf16.gmra.mrb[0].mxu0 %v5909
  %v6015 = vpop.f32.mrb[0].mxu0
  %v6016 = vadd.f32 1e-05, %v6015
  %v6017 = vpop.f32.mrb[0].mxu0
  %v6018 = vpop.f32.mrb[0].mxu0
  %v6019 = vadd.f32 1e-05, %v6018
  %v6020 = vpop.f32.mrb[0].mxu0
  %6021 = vmatprep.mubr.bf16.mxu0 0
  %6022 = vmatmul.mubr.bf16.gmra.mrb[0].mxu0 %v5912
  %v6023 = vpop.f32.mrb[0].mxu0
  %v6024 = vadd.f32 1e-05, %v6023
  %v6025 = vpop.f32.mrb[0].mxu0
  %v6026 = vpop.f32.mrb[0].mxu0
  %v6027 = vadd.f32 1e-05, %v6026
  %v6028 = vpop.f32.mrb[0].mxu0
  %6029 = vmatprep.mubr.bf16.mxu0 0
  %6030 = vmatmul.mubr.bf16.gmra.mrb[0].mxu0 %v5915
  %v6031 = vpop.f32.mrb[0].mxu0
  %v6032 = vadd.f32 1e-05, %v6031
  %v6033 = vpop.f32.mrb[0].mxu0
  %v6034 = vpop.f32.mrb[0].mxu0
  %v6035 = vadd.f32 1e-05, %v6034
  %v6036 = vpop.f32.mrb[0].mxu0
  %6037 = vmatprep.mubr.bf16.mxu0 0
  %6038 = vmatmul.mubr.bf16.gmra.mrb[0].mxu0 %v5918
  %v6039 = vpop.f32.mrb[0].mxu0
  %v6040 = vadd.f32 1e-05, %v6039
  %v6041 = vpop.f32.mrb[0].mxu0
  %v6042 = vpop.f32.mrb[0].mxu0
  %v6043 = vadd.f32 1e-05, %v6042
  %v6044 = vpop.f32.mrb[0].mxu0
  %6045 = vmatprep.mubr.bf16.mxu0 0
  %6046 = vmatmul.mubr.bf16.gmra.mrb[0].mxu0 %v5921
  %v6047 = vpop.f32.mrb[0].mxu0
  %v6048 = vadd.f32 1e-05, %v6047
  %v6049 = vpop.f32.mrb[0].mxu0
  %v6050 = vpop.f32.mrb[0].mxu0
  %v6051 = vadd.f32 1e-05, %v6050
  %v6052 = vpop.f32.mrb[0].mxu0
  %6053 = vmatprep.mubr.bf16.mxu0 0
  %6054 = vmatmul.mubr.bf16.gmra.mrb[0].mxu0 %v5924
  %v6055 = vpop.f32.mrb[0].mxu0
  %v6056 = vadd.f32 1e-05, %v6055
  %v6057 = vpop.f32.mrb[0].mxu0
  %v6058 = vpop.f32.mrb[0].mxu0
  %v6059 = vadd.f32 1e-05, %v6058
  %v6060 = vpop.f32.mrb[0].mxu0
  %6061 = vmatprep.mubr.bf16.mxu0 0
  %6062 = vmatmul.mubr.bf16.gmra.mrb[0].mxu0 %v5927
  %v6063 = vpop.f32.mrb[0].mxu0
  %v6064 = vadd.f32 1e-05, %v6063
  %v6065 = vpop.f32.mrb[0].mxu0
  %v6066 = vpop.f32.mrb[0].mxu0
  %v6067 = vadd.f32 1e-05, %v6066
  %v6068 = vpop.f32.mrb[0].mxu0
  %6069 = vmatprep.mubr.bf16.mxu0 0
  %6070 = vmatmul.mubr.bf16.gmra.mrb[0].mxu0 %v5930
  %v6071 = vpop.f32.mrb[0].mxu0
  %v6072 = vadd.f32 1e-05, %v6071
  %v6073 = vpop.f32.mrb[0].mxu0
  %v6074 = vpop.f32.mrb[0].mxu0
  %v6075 = vadd.f32 1e-05, %v6074
  %v6076 = vpop.f32.mrb[0].mxu0
  %6077 = vmatprep.mubr.bf16.mxu0 0
  %6078 = vmatmul.mubr.bf16.gmra.mrb[0].mxu0 %v5933
  %v6079 = vpop.f32.mrb[0].mxu0
  %v6080 = vadd.f32 1e-05, %v6079
  %v6081 = vpop.f32.mrb[0].mxu0
  %v6082 = vpop.f32.mrb[0].mxu0
  %v6083 = vadd.f32 1e-05, %v6082
  %v6084 = vpop.f32.mrb[0].mxu0
  %6085 = vmatprep.mubr.bf16.mxu0 0
  %6086 = vmatmul.mubr.bf16.gmra.mrb[0].mxu0 %v5936
  %v6087 = vpop.f32.mrb[0].mxu0
  %v6088 = vadd.f32 1e-05, %v6087
  %v6089 = vpop.f32.mrb[0].mxu0
  %v6090 = vpop.f32.mrb[0].mxu0
  %v6091 = vadd.f32 1e-05, %v6090
  %v6092 = vpop.f32.mrb[0].mxu0
  %6093 = vmatprep.mubr.bf16.mxu0 0
  %6094 = vmatmul.mubr.bf16.gmra.mrb[0].mxu0 %v5939
  %v6095 = vpop.f32.mrb[0].mxu0
  %v6096 = vadd.f32 1e-05, %v6095
  %v6097 = vpop.f32.mrb[0].mxu0
  %v6098 = vpop.f32.mrb[0].mxu0
  %v6099 = vadd.f32 1e-05, %v6098
  %v6100 = vpop.f32.mrb[0].mxu0
  %6101 = vdwg.mxu0
  %v6102 = vrsqrt.pop %v5976
  %v6103 = vrsqrt.pop %v5979
  %v6104 = vrsqrt.pop %v5984
  %v6105 = vrsqrt.pop %v5987
  %v6106 = vrsqrt.pop %v5992
  %v6107 = vrsqrt.pop %v5995
  %v6108 = vrsqrt.pop %v6000
  %v6109 = vrsqrt.pop %v6003
  %v6110 = vrsqrt.pop %v6008
  %v6111 = vrsqrt.pop %v6011
  %v6112 = vrsqrt.pop %v6016
  %v6113 = vrsqrt.pop %v6019
  %v6114 = vrsqrt.pop %v6024
  %v6115 = vrsqrt.pop %v6027
  %v6116 = vrsqrt.pop %v6032
  %v6117 = vrsqrt.pop %v6035
  %v6118 = vrsqrt.pop %v6040
  %v6119 = vrsqrt.pop %v6043
  %v6120 = vrsqrt.pop %v6048
  %v6121 = vrsqrt.pop %v6051
  %v6122 = vrsqrt.pop %v6056
  %v6123 = vrsqrt.pop %v6059
  %v6124 = vrsqrt.pop %v6064
  %v6125 = vrsqrt.pop %v6067
  %v6126 = vrsqrt.pop %v6072
  %v6127 = vrsqrt.pop %v6075
  %v6128 = vrsqrt.pop %v6080
  %v6129 = vrsqrt.pop %v6083
  %v6130 = vrsqrt.pop %v6088
  %v6131 = vrsqrt.pop %v6091
  %v6132 = vrsqrt.pop %v6096
  %v6133 = vrsqrt.pop %v6099
  %v6134 = vmul.f32 %v5813, %v6102
  %v6135 = vmul.f32 %v5814, %v6103
  %v6136 = vmul.f32 %v5815, %v6104
  %v6137 = vmul.f32 %v5816, %v6105
  %v6138 = vmul.f32 %v5817, %v6106
  %v6139 = vmul.f32 %v5818, %v6107
  %v6140 = vmul.f32 %v5819, %v6108
  %v6141 = vmul.f32 %v5820, %v6109
  %v6142 = vmul.f32 %v5821, %v6110
  %v6143 = vmul.f32 %v5822, %v6111
  %v6144 = vmul.f32 %v5823, %v6112
  %v6145 = vmul.f32 %v5824, %v6113
  %v6146 = vmul.f32 %v5825, %v6114
  %v6147 = vmul.f32 %v5826, %v6115
  %v6148 = vmul.f32 %v5827, %v6116
  %v6149 = vmul.f32 %v5828, %v6117
  %v6150 = vmul.f32 %v5829, %v6118
  %v6151 = vmul.f32 %v5830, %v6119
  %v6152 = vmul.f32 %v5831, %v6120
  %v6153 = vmul.f32 %v5832, %v6121
  %v6154 = vmul.f32 %v5833, %v6122
  %v6155 = vmul.f32 %v5834, %v6123
  %v6156 = vmul.f32 %v5835, %v6124
  %v6157 = vmul.f32 %v5836, %v6125
  %v6158 = vmul.f32 %v5837, %v6126
  %v6159 = vmul.f32 %v5838, %v6127
  %v6160 = vmul.f32 %v5839, %v6128
  %v6161 = vmul.f32 %v5840, %v6129
  %v6162 = vmul.f32 %v5841, %v6130
  %v6163 = vmul.f32 %v5842, %v6131
  %v6164 = vmul.f32 %v5843, %v6132
  %v6165 = vmul.f32 %v5844, %v6133
  %v6166 = vld [vmem:[%s2 + $0x2] ss:$0 sm:$0xff]
  %v6167 = vmul.f32 %v6134, %v6166
  %v6168 = vmul.f32 %v6135, %v6166
  %v6169 = vmul.f32 %v6136, %v6166
  %v6170 = vmul.f32 %v6137, %v6166
  %v6171 = vmul.f32 %v6138, %v6166
  %v6172 = vmul.f32 %v6139, %v6166
  %v6173 = vmul.f32 %v6140, %v6166
  %v6174 = vmul.f32 %v6141, %v6166
  %v6175 = vmul.f32 %v6142, %v6166
  %v6176 = vmul.f32 %v6143, %v6166
  %v6177 = vmul.f32 %v6144, %v6166
  %v6178 = vmul.f32 %v6145, %v6166
  %v6179 = vmul.f32 %v6146, %v6166
  %v6180 = vmul.f32 %v6147, %v6166
  %v6181 = vmul.f32 %v6148, %v6166
  %v6182 = vmul.f32 %v6149, %v6166
  %v6183 = vmul.f32 %v6150, %v6166
  %v6184 = vmul.f32 %v6151, %v6166
  %v6185 = vmul.f32 %v6152, %v6166
  %v6186 = vmul.f32 %v6153, %v6166
  %v6187 = vmul.f32 %v6154, %v6166
  %v6188 = vmul.f32 %v6155, %v6166
  %v6189 = vmul.f32 %v6156, %v6166
  %v6190 = vmul.f32 %v6157, %v6166
  %v6191 = vmul.f32 %v6158, %v6166
  %v6192 = vmul.f32 %v6159, %v6166
  %v6193 = vmul.f32 %v6160, %v6166
  %v6194 = vmul.f32 %v6161, %v6166
  %v6195 = vmul.f32 %v6162, %v6166
  %v6196 = vmul.f32 %v6163, %v6166
  %v6197 = vmul.f32 %v6164, %v6166
  %v6198 = vmul.f32 %v6165, %v6166
  %v6199 = vld [vmem:[%s2 + $0x3] ss:$0 sm:$0xff]
  %v6200 = vadd.f32 %v6167, %v6199
  %v6201 = vadd.f32 %v6168, %v6199
  %v6202 = vadd.f32 %v6169, %v6199
  %v6203 = vadd.f32 %v6170, %v6199
  %v6204 = vadd.f32 %v6171, %v6199
  %v6205 = vadd.f32 %v6172, %v6199
  %v6206 = vadd.f32 %v6173, %v6199
  %v6207 = vadd.f32 %v6174, %v6199
  %v6208 = vadd.f32 %v6175, %v6199
  %v6209 = vadd.f32 %v6176, %v6199
  %v6210 = vadd.f32 %v6177, %v6199
  %v6211 = vadd.f32 %v6178, %v6199
  %v6212 = vadd.f32 %v6179, %v6199
  %v6213 = vadd.f32 %v6180, %v6199
  %v6214 = vadd.f32 %v6181, %v6199
  %v6215 = vadd.f32 %v6182, %v6199
  %v6216 = vadd.f32 %v6183, %v6199
  %v6217 = vadd.f32 %v6184, %v6199
  %v6218 = vadd.f32 %v6185, %v6199
  %v6219 = vadd.f32 %v6186, %v6199
  %v6220 = vadd.f32 %v6187, %v6199
  %v6221 = vadd.f32 %v6188, %v6199
  %v6222 = vadd.f32 %v6189, %v6199
  %v6223 = vadd.f32 %v6190, %v6199
  %v6224 = vadd.f32 %v6191, %v6199
  %v6225 = vadd.f32 %v6192, %v6199
  %v6226 = vadd.f32 %v6193, %v6199
  %v6227 = vadd.f32 %v6194, %v6199
  %v6228 = vadd.f32 %v6195, %v6199
  %v6229 = vadd.f32 %v6196, %v6199
  %v6230 = vadd.f32 %v6197, %v6199
  %v6231 = vadd.f32 %v6198, %v6199
  %v6232 = vpack.c.bf16 %v6201, %v6200
  %v6233 = vpack.c.bf16 %v6203, %v6202
  %v6234 = vpack.c.bf16 %v6205, %v6204
  %v6235 = vpack.c.bf16 %v6207, %v6206
  %v6236 = vpack.c.bf16 %v6209, %v6208
  %v6237 = vpack.c.bf16 %v6211, %v6210
  %v6238 = vpack.c.bf16 %v6213, %v6212
  %v6239 = vpack.c.bf16 %v6215, %v6214
  %v6240 = vpack.c.bf16 %v6217, %v6216
  %v6241 = vpack.c.bf16 %v6219, %v6218
  %v6242 = vpack.c.bf16 %v6221, %v6220
  %v6243 = vpack.c.bf16 %v6223, %v6222
  %v6244 = vpack.c.bf16 %v6225, %v6224
  %v6245 = vpack.c.bf16 %v6227, %v6226
  %v6246 = vpack.c.bf16 %v6229, %v6228
  %v6247 = vpack.c.bf16 %v6231, %v6230
  %v6248 = vld [vmem:[%s1 + $0x120] sm:$0xf]
  %v6249 = vld [vmem:[%s1 + $0x12c] sm:$0xf]
  %v6250 = vld [vmem:[%s1 + $0x138] sm:$0xf]
  %v6251 = vld [vmem:[%s1 + $0x144] sm:$0xf]
  %v6252 = vld [vmem:[%s1 + $0x150] sm:$0xf]
  %v6253 = vld [vmem:[%s1 + $0x15c] sm:$0xf]
  %v6254 = vld [vmem:[%s1 + $0x168] sm:$0xf]
  %v6255 = vld [vmem:[%s1 + $0x174] sm:$0xf]
  %v6256 = vld [vmem:[%s1 + $0x180] sm:$0xf]
  %v6257 = vld [vmem:[%s1 + $0x18c] sm:$0xf]
  %v6258 = vld [vmem:[%s1 + $0x198] sm:$0xf]
  %v6259 = vld [vmem:[%s1 + $0x1a4] sm:$0xf]
  %v6272 = vunpack.c.l.b16 %v6248
  %v6273 = vunpack.c.l.b16 %v6249
  %v6274 = vunpack.c.l.b16 %v6250
  %v6275 = vunpack.c.l.b16 %v6251
  %v6276 = vunpack.c.l.b16 %v6252
  %v6277 = vunpack.c.l.b16 %v6253
  %v6278 = vunpack.c.l.b16 %v6254
  %v6279 = vunpack.c.l.b16 %v6255
  %v6280 = vunpack.c.l.b16 %v6256
  %v6281 = vunpack.c.l.b16 %v6257
  %v6282 = vunpack.c.l.b16 %v6258
  %v6283 = vunpack.c.l.b16 %v6259
  %v6284 = vpack.c.b16 %v6273, %v6272
  %v6285 = vpack.c.b16 %v6275, %v6274
  %v6286 = vpack.c.b16 %v6277, %v6276
  %v6287 = vpack.c.b16 %v6279, %v6278
  %v6288 = vpack.c.b16 %v6281, %v6280
  %v6289 = vpack.c.b16 %v6283, %v6282
  %v6297 = vsel %vm202, %v6232, 0
  %v6300 = vsel %vm202, %v6233, 0
  %v6303 = vsel %vm202, %v6234, 0
  %v6306 = vsel %vm202, %v6235, 0
  %v6309 = vsel %vm202, %v6236, 0
  %v6312 = vsel %vm202, %v6237, 0
  %v6315 = vsel %vm202, %v6238, 0
  %v6318 = vsel %vm202, %v6239, 0
  %v6321 = vsel %vm202, %v6240, 0
  %v6324 = vsel %vm202, %v6241, 0
  %v6327 = vsel %vm202, %v6242, 0
  %v6330 = vsel %vm202, %v6243, 0
  %v6333 = vsel %vm202, %v6244, 0
  %v6336 = vsel %vm202, %v6245, 0
  %v6339 = vsel %vm202, %v6246, 0
  %v6342 = vsel %vm202, %v6247, 0
  %6344 = vmatprep.subr.bf16.mxu0 0
  %6345 = vmatpush1.bf16.msra.mxu0 %v6284
  %6346 = vmatprep.subr.bf16.mxu0 0
  %6347 = vmatpush1.bf16.msra.mxu0 %v6285
  %6348 = vmatprep.subr.bf16.mxu0 0
  %6349 = vmatpush1.bf16.msra.mxu0 %v6286
  %6350 = vmatprep.subr.bf16.mxu0 0
  %6351 = vmatpush1.bf16.msra.mxu0 %v6287
  %6352 = vmatprep.subr.bf16.mxu0 0
  %6353 = vmatpush1.bf16.msra.mxu0 %v6288
  %6354 = vmatprep.subr.bf16.mxu0 0
  %6355 = vmatpush1.bf16.msra.mxu0 %v6289
  %6356 = vmatprep.subr.bf16.mxu0 0
  %6357 = vmatpush1.bf16.msra.mxu0 0
  %6358 = vmatprep.subr.bf16.mxu0 0
  %6359 = vmatpush1.bf16.msra.mxu0 0
  %6360 = vmatprep.subr.bf16.mxu0 0
  %6361 = vmatpush1.bf16.msra.mxu0 0
  %6362 = vmatprep.subr.bf16.mxu0 0
  %6363 = vmatpush1.bf16.msra.mxu0 0
  %6364 = vmatprep.subr.bf16.mxu0 0
  %6365 = vmatpush1.bf16.msra.mxu0 0
  %6366 = vmatprep.subr.bf16.mxu0 0
  %6367 = vmatpush1.bf16.msra.mxu0 0
  %6368 = vmatprep.subr.bf16.mxu0 0
  %6369 = vmatpush1.bf16.msra.mxu0 0
  %6370 = vmatprep.subr.bf16.mxu0 0
  %6371 = vmatpush1.bf16.msra.mxu0 0
  %6372 = vmatprep.subr.bf16.mxu0 0
  %6373 = vmatpush1.bf16.msra.mxu0 0
  %6374 = vmatprep.subr.bf16.mxu0 0
  %6375 = vmatpush1.bf16.msra.mxu0 0
  %6376 = vmatprep.mubr.bf16.mxu0 0
  %6377 = vmatmul.mubr.bf16.gmra.mrb[0].mxu0 %v6297
  %v6378 = vpop.f32.mrb[0].mxu0
  %v6379 = vadd.f32 0.0, %v6378
  %v6380 = vpop.f32.mrb[0].mxu0
  %v6381 = vpop.f32.mrb[0].mxu0
  %v6382 = vadd.f32 0.0, %v6381
  %v6383 = vpop.f32.mrb[0].mxu0
  %6384 = vmatprep.mubr.bf16.mxu0 0
  %6385 = vmatmul.mubr.bf16.gmra.mrb[0].mxu0 %v6300
  %v6386 = vpop.f32.mrb[0].mxu0
  %v6387 = vadd.f32 0.0, %v6386
  %v6388 = vpop.f32.mrb[0].mxu0
  %v6389 = vpop.f32.mrb[0].mxu0
  %v6390 = vadd.f32 0.0, %v6389
  %v6391 = vpop.f32.mrb[0].mxu0
  %6392 = vmatprep.mubr.bf16.mxu0 0
  %6393 = vmatmul.mubr.bf16.gmra.mrb[0].mxu0 %v6303
  %v6394 = vpop.f32.mrb[0].mxu0
  %v6395 = vadd.f32 0.0, %v6394
  %v6396 = vpop.f32.mrb[0].mxu0
  %v6397 = vpop.f32.mrb[0].mxu0
  %v6398 = vadd.f32 0.0, %v6397
  %v6399 = vpop.f32.mrb[0].mxu0
  %6400 = vmatprep.mubr.bf16.mxu0 0
  %6401 = vmatmul.mubr.bf16.gmra.mrb[0].mxu0 %v6306
  %v6402 = vpop.f32.mrb[0].mxu0
  %v6403 = vadd.f32 0.0, %v6402
  %v6404 = vpop.f32.mrb[0].mxu0
  %v6405 = vpop.f32.mrb[0].mxu0
  %v6406 = vadd.f32 0.0, %v6405
  %v6407 = vpop.f32.mrb[0].mxu0
  %6408 = vmatprep.mubr.bf16.mxu0 0
  %6409 = vmatmul.mubr.bf16.gmra.mrb[0].mxu0 %v6309
  %v6410 = vpop.f32.mrb[0].mxu0
  %v6411 = vadd.f32 0.0, %v6410
  %v6412 = vpop.f32.mrb[0].mxu0
  %v6413 = vpop.f32.mrb[0].mxu0
  %v6414 = vadd.f32 0.0, %v6413
  %v6415 = vpop.f32.mrb[0].mxu0
  %6416 = vmatprep.mubr.bf16.mxu0 0
  %6417 = vmatmul.mubr.bf16.gmra.mrb[0].mxu0 %v6312
  %v6418 = vpop.f32.mrb[0].mxu0
  %v6419 = vadd.f32 0.0, %v6418
  %v6420 = vpop.f32.mrb[0].mxu0
  %v6421 = vpop.f32.mrb[0].mxu0
  %v6422 = vadd.f32 0.0, %v6421
  %v6423 = vpop.f32.mrb[0].mxu0
  %6424 = vmatprep.mubr.bf16.mxu0 0
  %6425 = vmatmul.mubr.bf16.gmra.mrb[0].mxu0 %v6315
  %v6426 = vpop.f32.mrb[0].mxu0
  %v6427 = vadd.f32 0.0, %v6426
  %v6428 = vpop.f32.mrb[0].mxu0
  %v6429 = vpop.f32.mrb[0].mxu0
  %v6430 = vadd.f32 0.0, %v6429
  %v6431 = vpop.f32.mrb[0].mxu0
  %6432 = vmatprep.mubr.bf16.mxu0 0
  %6433 = vmatmul.mubr.bf16.gmra.mrb[0].mxu0 %v6318
  %v6434 = vpop.f32.mrb[0].mxu0
  %v6435 = vadd.f32 0.0, %v6434
  %v6436 = vpop.f32.mrb[0].mxu0
  %v6437 = vpop.f32.mrb[0].mxu0
  %v6438 = vadd.f32 0.0, %v6437
  %v6439 = vpop.f32.mrb[0].mxu0
  %6440 = vmatprep.mubr.bf16.mxu0 0
  %6441 = vmatmul.mubr.bf16.gmra.mrb[0].mxu0 %v6321
  %v6442 = vpop.f32.mrb[0].mxu0
  %v6443 = vadd.f32 0.0, %v6442
  %v6444 = vpop.f32.mrb[0].mxu0
  %v6445 = vpop.f32.mrb[0].mxu0
  %v6446 = vadd.f32 0.0, %v6445
  %v6447 = vpop.f32.mrb[0].mxu0
  %6448 = vmatprep.mubr.bf16.mxu0 0
  %6449 = vmatmul.mubr.bf16.gmra.mrb[0].mxu0 %v6324
  %v6450 = vpop.f32.mrb[0].mxu0
  %v6451 = vadd.f32 0.0, %v6450
  %v6452 = vpop.f32.mrb[0].mxu0
  %v6453 = vpop.f32.mrb[0].mxu0
  %v6454 = vadd.f32 0.0, %v6453
  %v6455 = vpop.f32.mrb[0].mxu0
  %6456 = vmatprep.mubr.bf16.mxu0 0
  %6457 = vmatmul.mubr.bf16.gmra.mrb[0].mxu0 %v6327
  %v6458 = vpop.f32.mrb[0].mxu0
  %v6459 = vadd.f32 0.0, %v6458
  %v6460 = vpop.f32.mrb[0].mxu0
  %v6461 = vpop.f32.mrb[0].mxu0
  %v6462 = vadd.f32 0.0, %v6461
  %v6463 = vpop.f32.mrb[0].mxu0
  %6464 = vmatprep.mubr.bf16.mxu0 0
  %6465 = vmatmul.mubr.bf16.gmra.mrb[0].mxu0 %v6330
  %v6466 = vpop.f32.mrb[0].mxu0
  %v6467 = vadd.f32 0.0, %v6466
  %v6468 = vpop.f32.mrb[0].mxu0
  %v6469 = vpop.f32.mrb[0].mxu0
  %v6470 = vadd.f32 0.0, %v6469
  %v6471 = vpop.f32.mrb[0].mxu0
  %6472 = vmatprep.mubr.bf16.mxu0 0
  %6473 = vmatmul.mubr.bf16.gmra.mrb[0].mxu0 %v6333
  %v6474 = vpop.f32.mrb[0].mxu0
  %v6475 = vadd.f32 0.0, %v6474
  %v6476 = vpop.f32.mrb[0].mxu0
  %v6477 = vpop.f32.mrb[0].mxu0
  %v6478 = vadd.f32 0.0, %v6477
  %v6479 = vpop.f32.mrb[0].mxu0
  %6480 = vmatprep.mubr.bf16.mxu0 0
  %6481 = vmatmul.mubr.bf16.gmra.mrb[0].mxu0 %v6336
  %v6482 = vpop.f32.mrb[0].mxu0
  %v6483 = vadd.f32 0.0, %v6482
  %v6484 = vpop.f32.mrb[0].mxu0
  %v6485 = vpop.f32.mrb[0].mxu0
  %v6486 = vadd.f32 0.0, %v6485
  %v6487 = vpop.f32.mrb[0].mxu0
  %6488 = vmatprep.mubr.bf16.mxu0 0
  %6489 = vmatmul.mubr.bf16.gmra.mrb[0].mxu0 %v6339
  %v6490 = vpop.f32.mrb[0].mxu0
  %v6491 = vadd.f32 0.0, %v6490
  %v6492 = vpop.f32.mrb[0].mxu0
  %v6493 = vpop.f32.mrb[0].mxu0
  %v6494 = vadd.f32 0.0, %v6493
  %v6495 = vpop.f32.mrb[0].mxu0
  %6496 = vmatprep.mubr.bf16.mxu0 0
  %6497 = vmatmul.mubr.bf16.gmra.mrb[0].mxu0 %v6342
  %v6498 = vpop.f32.mrb[0].mxu0
  %v6499 = vadd.f32 0.0, %v6498
  %v6500 = vpop.f32.mrb[0].mxu0
  %v6501 = vpop.f32.mrb[0].mxu0
  %v6502 = vadd.f32 0.0, %v6501
  %v6503 = vpop.f32.mrb[0].mxu0
  %6504 = vdwg.mxu0
  %v6505 = vadd.f32 %v6200, %v6379
  %v6506 = vadd.f32 %v6201, %v6382
  %v6507 = vadd.f32 %v6202, %v6387
  %v6508 = vadd.f32 %v6203, %v6390
  %v6509 = vadd.f32 %v6204, %v6395
  %v6510 = vadd.f32 %v6205, %v6398
  %v6511 = vadd.f32 %v6206, %v6403
  %v6512 = vadd.f32 %v6207, %v6406
  %v6513 = vadd.f32 %v6208, %v6411
  %v6514 = vadd.f32 %v6209, %v6414
  %v6515 = vadd.f32 %v6210, %v6419
  %v6516 = vadd.f32 %v6211, %v6422
  %v6517 = vadd.f32 %v6212, %v6427
  %v6518 = vadd.f32 %v6213, %v6430
  %v6519 = vadd.f32 %v6214, %v6435
  %v6520 = vadd.f32 %v6215, %v6438
  %v6521 = vadd.f32 %v6216, %v6443
  %v6522 = vadd.f32 %v6217, %v6446
  %v6523 = vadd.f32 %v6218, %v6451
  %v6524 = vadd.f32 %v6219, %v6454
  %v6525 = vadd.f32 %v6220, %v6459
  %v6526 = vadd.f32 %v6221, %v6462
  %v6527 = vadd.f32 %v6222, %v6467
  %v6528 = vadd.f32 %v6223, %v6470
  %v6529 = vadd.f32 %v6224, %v6475
  %v6530 = vadd.f32 %v6225, %v6478
  %v6531 = vadd.f32 %v6226, %v6483
  %v6532 = vadd.f32 %v6227, %v6486
  %v6533 = vadd.f32 %v6228, %v6491
  %v6534 = vadd.f32 %v6229, %v6494
  %v6535 = vadd.f32 %v6230, %v6499
  %v6536 = vadd.f32 %v6231, %v6502
  %v6537 = vld [vmem:[%s2 + $0x4] ss:$0 sm:$0xff]
  %v6538 = vadd.f32 %v6505, %v6537
  %v6539 = vadd.f32 %v6506, %v6537
  %v6540 = vadd.f32 %v6507, %v6537
  %v6541 = vadd.f32 %v6508, %v6537
  %v6542 = vadd.f32 %v6509, %v6537
  %v6543 = vadd.f32 %v6510, %v6537
  %v6544 = vadd.f32 %v6511, %v6537
  %v6545 = vadd.f32 %v6512, %v6537
  %v6546 = vadd.f32 %v6513, %v6537
  %v6547 = vadd.f32 %v6514, %v6537
  %v6548 = vadd.f32 %v6515, %v6537
  %v6549 = vadd.f32 %v6516, %v6537
  %v6550 = vadd.f32 %v6517, %v6537
  %v6551 = vadd.f32 %v6518, %v6537
  %v6552 = vadd.f32 %v6519, %v6537
  %v6553 = vadd.f32 %v6520, %v6537
  %v6554 = vadd.f32 %v6521, %v6537
  %v6555 = vadd.f32 %v6522, %v6537
  %v6556 = vadd.f32 %v6523, %v6537
  %v6557 = vadd.f32 %v6524, %v6537
  %v6558 = vadd.f32 %v6525, %v6537
  %v6559 = vadd.f32 %v6526, %v6537
  %v6560 = vadd.f32 %v6527, %v6537
  %v6561 = vadd.f32 %v6528, %v6537
  %v6562 = vadd.f32 %v6529, %v6537
  %v6563 = vadd.f32 %v6530, %v6537
  %v6564 = vadd.f32 %v6531, %v6537
  %v6565 = vadd.f32 %v6532, %v6537
  %v6566 = vadd.f32 %v6533, %v6537
  %v6567 = vadd.f32 %v6534, %v6537
  %v6568 = vadd.f32 %v6535, %v6537
  %v6569 = vadd.f32 %v6536, %v6537
  %v6570 = vpack.c.bf16 %v6539, %v6538
  %v6571 = vpack.c.bf16 %v6541, %v6540
  %v6572 = vpack.c.bf16 %v6543, %v6542
  %v6573 = vpack.c.bf16 %v6545, %v6544
  %v6574 = vpack.c.bf16 %v6547, %v6546
  %v6575 = vpack.c.bf16 %v6549, %v6548
  %v6576 = vpack.c.bf16 %v6551, %v6550
  %v6577 = vpack.c.bf16 %v6553, %v6552
  %v6578 = vpack.c.bf16 %v6555, %v6554
  %v6579 = vpack.c.bf16 %v6557, %v6556
  %v6580 = vpack.c.bf16 %v6559, %v6558
  %v6581 = vpack.c.bf16 %v6561, %v6560
  %v6582 = vpack.c.bf16 %v6563, %v6562
  %v6583 = vpack.c.bf16 %v6565, %v6564
  %v6584 = vpack.c.bf16 %v6567, %v6566
  %v6585 = vpack.c.bf16 %v6569, %v6568
  %v6587 = vsel %vm202, %v6570, 0
  %v6590 = vsel %vm202, %v6571, 0
  %v6593 = vsel %vm202, %v6572, 0
  %v6596 = vsel %vm202, %v6573, 0
  %v6599 = vsel %vm202, %v6574, 0
  %v6602 = vsel %vm202, %v6575, 0
  %v6605 = vsel %vm202, %v6576, 0
  %v6608 = vsel %vm202, %v6577, 0
  %v6611 = vsel %vm202, %v6578, 0
  %v6614 = vsel %vm202, %v6579, 0
  %v6617 = vsel %vm202, %v6580, 0
  %v6620 = vsel %vm202, %v6581, 0
  %v6623 = vsel %vm202, %v6582, 0
  %v6626 = vsel %vm202, %v6583, 0
  %v6629 = vsel %vm202, %v6584, 0
  %v6632 = vsel %vm202, %v6585, 0
  %6634 = vmatprep.subr.bf16.mxu0 0
  %6635 = vmatpush1.bf16.msra.mxu0 %v5592
  %6636 = vmatprep.subr.bf16.mxu0 0
  %6637 = vmatpush1.bf16.msra.mxu0 %v5593
  %6638 = vmatprep.subr.bf16.mxu0 0
  %6639 = vmatpush1.bf16.msra.mxu0 %v5594
  %6640 = vmatprep.subr.bf16.mxu0 0
  %6641 = vmatpush1.bf16.msra.mxu0 %v5595
  %6642 = vmatprep.subr.bf16.mxu0 0
  %6643 = vmatpush1.bf16.msra.mxu0 %v5596
  %6644 = vmatprep.subr.bf16.mxu0 0
  %6645 = vmatpush1.bf16.msra.mxu0 %v5597
  %6646 = vmatprep.subr.bf16.mxu0 0
  %6647 = vmatpush1.bf16.msra.mxu0 0
  %6648 = vmatprep.subr.bf16.mxu0 0
  %6649 = vmatpush1.bf16.msra.mxu0 0
  %6650 = vmatprep.subr.bf16.mxu0 0
  %6651 = vmatpush1.bf16.msra.mxu0 0
  %6652 = vmatprep.subr.bf16.mxu0 0
  %6653 = vmatpush1.bf16.msra.mxu0 0
  %6654 = vmatprep.subr.bf16.mxu0 0
  %6655 = vmatpush1.bf16.msra.mxu0 0
  %6656 = vmatprep.subr.bf16.mxu0 0
  %6657 = vmatpush1.bf16.msra.mxu0 0
  %6658 = vmatprep.subr.bf16.mxu0 0
  %6659 = vmatpush1.bf16.msra.mxu0 0
  %6660 = vmatprep.subr.bf16.mxu0 0
  %6661 = vmatpush1.bf16.msra.mxu0 0
  %6662 = vmatprep.subr.bf16.mxu0 0
  %6663 = vmatpush1.bf16.msra.mxu0 0
  %6664 = vmatprep.subr.bf16.mxu0 0
  %6665 = vmatpush1.bf16.msra.mxu0 0
  %6666 = vmatprep.mubr.bf16.mxu0 0
  %6667 = vmatmul.mubr.bf16.gmra.mrb[0].mxu0 %v6587
  %v6668 = vpop.f32.mrb[0].mxu0
  %v6669 = vadd.f32 0.0, %v6668
  %v6670 = vpop.f32.mrb[0].mxu0
  %v6671 = vpop.f32.mrb[0].mxu0
  %v6672 = vadd.f32 0.0, %v6671
  %v6673 = vpop.f32.mrb[0].mxu0
  %6674 = vmatprep.mubr.bf16.mxu0 0
  %6675 = vmatmul.mubr.bf16.gmra.mrb[0].mxu0 %v6590
  %v6676 = vpop.f32.mrb[0].mxu0
  %v6677 = vadd.f32 0.0, %v6676
  %v6678 = vpop.f32.mrb[0].mxu0
  %v6679 = vpop.f32.mrb[0].mxu0
  %v6680 = vadd.f32 0.0, %v6679
  %v6681 = vpop.f32.mrb[0].mxu0
  %6682 = vmatprep.mubr.bf16.mxu0 0
  %6683 = vmatmul.mubr.bf16.gmra.mrb[0].mxu0 %v6593
  %v6684 = vpop.f32.mrb[0].mxu0
  %v6685 = vadd.f32 0.0, %v6684
  %v6686 = vpop.f32.mrb[0].mxu0
  %v6687 = vpop.f32.mrb[0].mxu0
  %v6688 = vadd.f32 0.0, %v6687
  %v6689 = vpop.f32.mrb[0].mxu0
  %6690 = vmatprep.mubr.bf16.mxu0 0
  %6691 = vmatmul.mubr.bf16.gmra.mrb[0].mxu0 %v6596
  %v6692 = vpop.f32.mrb[0].mxu0
  %v6693 = vadd.f32 0.0, %v6692
  %v6694 = vpop.f32.mrb[0].mxu0
  %v6695 = vpop.f32.mrb[0].mxu0
  %v6696 = vadd.f32 0.0, %v6695
  %v6697 = vpop.f32.mrb[0].mxu0
  %6698 = vmatprep.mubr.bf16.mxu0 0
  %6699 = vmatmul.mubr.bf16.gmra.mrb[0].mxu0 %v6599
  %v6700 = vpop.f32.mrb[0].mxu0
  %v6701 = vadd.f32 0.0, %v6700
  %v6702 = vpop.f32.mrb[0].mxu0
  %v6703 = vpop.f32.mrb[0].mxu0
  %v6704 = vadd.f32 0.0, %v6703
  %v6705 = vpop.f32.mrb[0].mxu0
  %6706 = vmatprep.mubr.bf16.mxu0 0
  %6707 = vmatmul.mubr.bf16.gmra.mrb[0].mxu0 %v6602
  %v6708 = vpop.f32.mrb[0].mxu0
  %v6709 = vadd.f32 0.0, %v6708
  %v6710 = vpop.f32.mrb[0].mxu0
  %v6711 = vpop.f32.mrb[0].mxu0
  %v6712 = vadd.f32 0.0, %v6711
  %v6713 = vpop.f32.mrb[0].mxu0
  %6714 = vmatprep.mubr.bf16.mxu0 0
  %6715 = vmatmul.mubr.bf16.gmra.mrb[0].mxu0 %v6605
  %v6716 = vpop.f32.mrb[0].mxu0
  %v6717 = vadd.f32 0.0, %v6716
  %v6718 = vpop.f32.mrb[0].mxu0
  %v6719 = vpop.f32.mrb[0].mxu0
  %v6720 = vadd.f32 0.0, %v6719
  %v6721 = vpop.f32.mrb[0].mxu0
  %6722 = vmatprep.mubr.bf16.mxu0 0
  %6723 = vmatmul.mubr.bf16.gmra.mrb[0].mxu0 %v6608
  %v6724 = vpop.f32.mrb[0].mxu0
  %v6725 = vadd.f32 0.0, %v6724
  %v6726 = vpop.f32.mrb[0].mxu0
  %v6727 = vpop.f32.mrb[0].mxu0
  %v6728 = vadd.f32 0.0, %v6727
  %v6729 = vpop.f32.mrb[0].mxu0
  %6730 = vmatprep.mubr.bf16.mxu0 0
  %6731 = vmatmul.mubr.bf16.gmra.mrb[0].mxu0 %v6611
  %v6732 = vpop.f32.mrb[0].mxu0
  %v6733 = vadd.f32 0.0, %v6732
  %v6734 = vpop.f32.mrb[0].mxu0
  %v6735 = vpop.f32.mrb[0].mxu0
  %v6736 = vadd.f32 0.0, %v6735
  %v6737 = vpop.f32.mrb[0].mxu0
  %6738 = vmatprep.mubr.bf16.mxu0 0
  %6739 = vmatmul.mubr.bf16.gmra.mrb[0].mxu0 %v6614
  %v6740 = vpop.f32.mrb[0].mxu0
  %v6741 = vadd.f32 0.0, %v6740
  %v6742 = vpop.f32.mrb[0].mxu0
  %v6743 = vpop.f32.mrb[0].mxu0
  %v6744 = vadd.f32 0.0, %v6743
  %v6745 = vpop.f32.mrb[0].mxu0
  %6746 = vmatprep.mubr.bf16.mxu0 0
  %6747 = vmatmul.mubr.bf16.gmra.mrb[0].mxu0 %v6617
  %v6748 = vpop.f32.mrb[0].mxu0
  %v6749 = vadd.f32 0.0, %v6748
  %v6750 = vpop.f32.mrb[0].mxu0
  %v6751 = vpop.f32.mrb[0].mxu0
  %v6752 = vadd.f32 0.0, %v6751
  %v6753 = vpop.f32.mrb[0].mxu0
  %6754 = vmatprep.mubr.bf16.mxu0 0
  %6755 = vmatmul.mubr.bf16.gmra.mrb[0].mxu0 %v6620
  %v6756 = vpop.f32.mrb[0].mxu0
  %v6757 = vadd.f32 0.0, %v6756
  %v6758 = vpop.f32.mrb[0].mxu0
  %v6759 = vpop.f32.mrb[0].mxu0
  %v6760 = vadd.f32 0.0, %v6759
  %v6761 = vpop.f32.mrb[0].mxu0
  %6762 = vmatprep.mubr.bf16.mxu0 0
  %6763 = vmatmul.mubr.bf16.gmra.mrb[0].mxu0 %v6623
  %v6764 = vpop.f32.mrb[0].mxu0
  %v6765 = vadd.f32 0.0, %v6764
  %v6766 = vpop.f32.mrb[0].mxu0
  %v6767 = vpop.f32.mrb[0].mxu0
  %v6768 = vadd.f32 0.0, %v6767
  %v6769 = vpop.f32.mrb[0].mxu0
  %6770 = vmatprep.mubr.bf16.mxu0 0
  %6771 = vmatmul.mubr.bf16.gmra.mrb[0].mxu0 %v6626
  %v6772 = vpop.f32.mrb[0].mxu0
  %v6773 = vadd.f32 0.0, %v6772
  %v6774 = vpop.f32.mrb[0].mxu0
  %v6775 = vpop.f32.mrb[0].mxu0
  %v6776 = vadd.f32 0.0, %v6775
  %v6777 = vpop.f32.mrb[0].mxu0
  %6778 = vmatprep.mubr.bf16.mxu0 0
  %6779 = vmatmul.mubr.bf16.gmra.mrb[0].mxu0 %v6629
  %v6780 = vpop.f32.mrb[0].mxu0
  %v6781 = vadd.f32 0.0, %v6780
  %v6782 = vpop.f32.mrb[0].mxu0
  %v6783 = vpop.f32.mrb[0].mxu0
  %v6784 = vadd.f32 0.0, %v6783
  %v6785 = vpop.f32.mrb[0].mxu0
  %6786 = vmatprep.mubr.bf16.mxu0 0
  %6787 = vmatmul.mubr.bf16.gmra.mrb[0].mxu0 %v6632
  %v6788 = vpop.f32.mrb[0].mxu0
  %v6789 = vadd.f32 0.0, %v6788
  %v6790 = vpop.f32.mrb[0].mxu0
  %v6791 = vpop.f32.mrb[0].mxu0
  %v6792 = vadd.f32 0.0, %v6791
  %v6793 = vpop.f32.mrb[0].mxu0
  %6794 = vdwg.mxu0
  %v6795 = vsub.f32 %v6538, %v6669
  %v6796 = vsub.f32 %v6539, %v6672
  %v6797 = vsub.f32 %v6540, %v6677
  %v6798 = vsub.f32 %v6541, %v6680
  %v6799 = vsub.f32 %v6542, %v6685
  %v6800 = vsub.f32 %v6543, %v6688
  %v6801 = vsub.f32 %v6544, %v6693
  %v6802 = vsub.f32 %v6545, %v6696
  %v6803 = vsub.f32 %v6546, %v6701
  %v6804 = vsub.f32 %v6547, %v6704
  %v6805 = vsub.f32 %v6548, %v6709
  %v6806 = vsub.f32 %v6549, %v6712
  %v6807 = vsub.f32 %v6550, %v6717
  %v6808 = vsub.f32 %v6551, %v6720
  %v6809 = vsub.f32 %v6552, %v6725
  %v6810 = vsub.f32 %v6553, %v6728
  %v6811 = vsub.f32 %v6554, %v6733
  %v6812 = vsub.f32 %v6555, %v6736
  %v6813 = vsub.f32 %v6556, %v6741
  %v6814 = vsub.f32 %v6557, %v6744
  %v6815 = vsub.f32 %v6558, %v6749
  %v6816 = vsub.f32 %v6559, %v6752
  %v6817 = vsub.f32 %v6560, %v6757
  %v6818 = vsub.f32 %v6561, %v6760
  %v6819 = vsub.f32 %v6562, %v6765
  %v6820 = vsub.f32 %v6563, %v6768
  %v6821 = vsub.f32 %v6564, %v6773
  %v6822 = vsub.f32 %v6565, %v6776
  %v6823 = vsub.f32 %v6566, %v6781
  %v6824 = vsub.f32 %v6567, %v6784
  %v6825 = vsub.f32 %v6568, %v6789
  %v6826 = vsub.f32 %v6569, %v6792
  %v6827 = vmul.f32 %v6795, %v6795
  %v6828 = vmul.f32 %v6796, %v6796
  %v6829 = vmul.f32 %v6797, %v6797
  %v6830 = vmul.f32 %v6798, %v6798
  %v6831 = vmul.f32 %v6799, %v6799
  %v6832 = vmul.f32 %v6800, %v6800
  %v6833 = vmul.f32 %v6801, %v6801
  %v6834 = vmul.f32 %v6802, %v6802
  %v6835 = vmul.f32 %v6803, %v6803
  %v6836 = vmul.f32 %v6804, %v6804
  %v6837 = vmul.f32 %v6805, %v6805
  %v6838 = vmul.f32 %v6806, %v6806
  %v6839 = vmul.f32 %v6807, %v6807
  %v6840 = vmul.f32 %v6808, %v6808
  %v6841 = vmul.f32 %v6809, %v6809
  %v6842 = vmul.f32 %v6810, %v6810
  %v6843 = vmul.f32 %v6811, %v6811
  %v6844 = vmul.f32 %v6812, %v6812
  %v6845 = vmul.f32 %v6813, %v6813
  %v6846 = vmul.f32 %v6814, %v6814
  %v6847 = vmul.f32 %v6815, %v6815
  %v6848 = vmul.f32 %v6816, %v6816
  %v6849 = vmul.f32 %v6817, %v6817
  %v6850 = vmul.f32 %v6818, %v6818
  %v6851 = vmul.f32 %v6819, %v6819
  %v6852 = vmul.f32 %v6820, %v6820
  %v6853 = vmul.f32 %v6821, %v6821
  %v6854 = vmul.f32 %v6822, %v6822
  %v6855 = vmul.f32 %v6823, %v6823
  %v6856 = vmul.f32 %v6824, %v6824
  %v6857 = vmul.f32 %v6825, %v6825
  %v6858 = vmul.f32 %v6826, %v6826
  %v6859 = vpack.c.bf16 %v6828, %v6827
  %v6860 = vpack.c.bf16 %v6830, %v6829
  %v6861 = vpack.c.bf16 %v6832, %v6831
  %v6862 = vpack.c.bf16 %v6834, %v6833
  %v6863 = vpack.c.bf16 %v6836, %v6835
  %v6864 = vpack.c.bf16 %v6838, %v6837
  %v6865 = vpack.c.bf16 %v6840, %v6839
  %v6866 = vpack.c.bf16 %v6842, %v6841
  %v6867 = vpack.c.bf16 %v6844, %v6843
  %v6868 = vpack.c.bf16 %v6846, %v6845
  %v6869 = vpack.c.bf16 %v6848, %v6847
  %v6870 = vpack.c.bf16 %v6850, %v6849
  %v6871 = vpack.c.bf16 %v6852, %v6851
  %v6872 = vpack.c.bf16 %v6854, %v6853
  %v6873 = vpack.c.bf16 %v6856, %v6855
  %v6874 = vpack.c.bf16 %v6858, %v6857
  %v6876 = vsel %vm202, %v6859, 0
  %v6879 = vsel %vm202, %v6860, 0
  %v6882 = vsel %vm202, %v6861, 0
  %v6885 = vsel %vm202, %v6862, 0
  %v6888 = vsel %vm202, %v6863, 0
  %v6891 = vsel %vm202, %v6864, 0
  %v6894 = vsel %vm202, %v6865, 0
  %v6897 = vsel %vm202, %v6866, 0
  %v6900 = vsel %vm202, %v6867, 0
  %v6903 = vsel %vm202, %v6868, 0
  %v6906 = vsel %vm202, %v6869, 0
  %v6909 = vsel %vm202, %v6870, 0
  %v6912 = vsel %vm202, %v6871, 0
  %v6915 = vsel %vm202, %v6872, 0
  %v6918 = vsel %vm202, %v6873, 0
  %v6921 = vsel %vm202, %v6874, 0
  %6923 = vmatprep.subr.bf16.mxu0 0
  %6924 = vmatpush1.bf16.msra.mxu0 %v5592
  %6925 = vmatprep.subr.bf16.mxu0 0
  %6926 = vmatpush1.bf16.msra.mxu0 %v5593
  %6927 = vmatprep.subr.bf16.mxu0 0
  %6928 = vmatpush1.bf16.msra.mxu0 %v5594
  %6929 = vmatprep.subr.bf16.mxu0 0
  %6930 = vmatpush1.bf16.msra.mxu0 %v5595
  %6931 = vmatprep.subr.bf16.mxu0 0
  %6932 = vmatpush1.bf16.msra.mxu0 %v5596
  %6933 = vmatprep.subr.bf16.mxu0 0
  %6934 = vmatpush1.bf16.msra.mxu0 %v5597
  %6935 = vmatprep.subr.bf16.mxu0 0
  %6936 = vmatpush1.bf16.msra.mxu0 0
  %6937 = vmatprep.subr.bf16.mxu0 0
  %6938 = vmatpush1.bf16.msra.mxu0 0
  %6939 = vmatprep.subr.bf16.mxu0 0
  %6940 = vmatpush1.bf16.msra.mxu0 0
  %6941 = vmatprep.subr.bf16.mxu0 0
  %6942 = vmatpush1.bf16.msra.mxu0 0
  %6943 = vmatprep.subr.bf16.mxu0 0
  %6944 = vmatpush1.bf16.msra.mxu0 0
  %6945 = vmatprep.subr.bf16.mxu0 0
  %6946 = vmatpush1.bf16.msra.mxu0 0
  %6947 = vmatprep.subr.bf16.mxu0 0
  %6948 = vmatpush1.bf16.msra.mxu0 0
  %6949 = vmatprep.subr.bf16.mxu0 0
  %6950 = vmatpush1.bf16.msra.mxu0 0
  %6951 = vmatprep.subr.bf16.mxu0 0
  %6952 = vmatpush1.bf16.msra.mxu0 0
  %6953 = vmatprep.subr.bf16.mxu0 0
  %6954 = vmatpush1.bf16.msra.mxu0 0
  %6955 = vmatprep.mubr.bf16.mxu0 0
  %6956 = vmatmul.mubr.bf16.gmra.mrb[0].mxu0 %v6876
  %v6957 = vpop.f32.mrb[0].mxu0
  %v6958 = vadd.f32 1e-05, %v6957
  %v6959 = vpop.f32.mrb[0].mxu0
  %v6960 = vpop.f32.mrb[0].mxu0
  %v6961 = vadd.f32 1e-05, %v6960
  %v6962 = vpop.f32.mrb[0].mxu0
  %6963 = vmatprep.mubr.bf16.mxu0 0
  %6964 = vmatmul.mubr.bf16.gmra.mrb[0].mxu0 %v6879
  %v6965 = vpop.f32.mrb[0].mxu0
  %v6966 = vadd.f32 1e-05, %v6965
  %v6967 = vpop.f32.mrb[0].mxu0
  %v6968 = vpop.f32.mrb[0].mxu0
  %v6969 = vadd.f32 1e-05, %v6968
  %v6970 = vpop.f32.mrb[0].mxu0
  %6971 = vmatprep.mubr.bf16.mxu0 0
  %6972 = vmatmul.mubr.bf16.gmra.mrb[0].mxu0 %v6882
  %v6973 = vpop.f32.mrb[0].mxu0
  %v6974 = vadd.f32 1e-05, %v6973
  %v6975 = vpop.f32.mrb[0].mxu0
  %v6976 = vpop.f32.mrb[0].mxu0
  %v6977 = vadd.f32 1e-05, %v6976
  %v6978 = vpop.f32.mrb[0].mxu0
  %6979 = vmatprep.mubr.bf16.mxu0 0
  %6980 = vmatmul.mubr.bf16.gmra.mrb[0].mxu0 %v6885
  %v6981 = vpop.f32.mrb[0].mxu0
  %v6982 = vadd.f32 1e-05, %v6981
  %v6983 = vpop.f32.mrb[0].mxu0
  %v6984 = vpop.f32.mrb[0].mxu0
  %v6985 = vadd.f32 1e-05, %v6984
  %v6986 = vpop.f32.mrb[0].mxu0
  %6987 = vmatprep.mubr.bf16.mxu0 0
  %6988 = vmatmul.mubr.bf16.gmra.mrb[0].mxu0 %v6888
  %v6989 = vpop.f32.mrb[0].mxu0
  %v6990 = vadd.f32 1e-05, %v6989
  %v6991 = vpop.f32.mrb[0].mxu0
  %v6992 = vpop.f32.mrb[0].mxu0
  %v6993 = vadd.f32 1e-05, %v6992
  %v6994 = vpop.f32.mrb[0].mxu0
  %6995 = vmatprep.mubr.bf16.mxu0 0
  %6996 = vmatmul.mubr.bf16.gmra.mrb[0].mxu0 %v6891
  %v6997 = vpop.f32.mrb[0].mxu0
  %v6998 = vadd.f32 1e-05, %v6997
  %v6999 = vpop.f32.mrb[0].mxu0
  %v7000 = vpop.f32.mrb[0].mxu0
  %v7001 = vadd.f32 1e-05, %v7000
  %v7002 = vpop.f32.mrb[0].mxu0
  %7003 = vmatprep.mubr.bf16.mxu0 0
  %7004 = vmatmul.mubr.bf16.gmra.mrb[0].mxu0 %v6894
  %v7005 = vpop.f32.mrb[0].mxu0
  %v7006 = vadd.f32 1e-05, %v7005
  %v7007 = vpop.f32.mrb[0].mxu0
  %v7008 = vpop.f32.mrb[0].mxu0
  %v7009 = vadd.f32 1e-05, %v7008
  %v7010 = vpop.f32.mrb[0].mxu0
  %7011 = vmatprep.mubr.bf16.mxu0 0
  %7012 = vmatmul.mubr.bf16.gmra.mrb[0].mxu0 %v6897
  %v7013 = vpop.f32.mrb[0].mxu0
  %v7014 = vadd.f32 1e-05, %v7013
  %v7015 = vpop.f32.mrb[0].mxu0
  %v7016 = vpop.f32.mrb[0].mxu0
  %v7017 = vadd.f32 1e-05, %v7016
  %v7018 = vpop.f32.mrb[0].mxu0
  %7019 = vmatprep.mubr.bf16.mxu0 0
  %7020 = vmatmul.mubr.bf16.gmra.mrb[0].mxu0 %v6900
  %v7021 = vpop.f32.mrb[0].mxu0
  %v7022 = vadd.f32 1e-05, %v7021
  %v7023 = vpop.f32.mrb[0].mxu0
  %v7024 = vpop.f32.mrb[0].mxu0
  %v7025 = vadd.f32 1e-05, %v7024
  %v7026 = vpop.f32.mrb[0].mxu0
  %7027 = vmatprep.mubr.bf16.mxu0 0
  %7028 = vmatmul.mubr.bf16.gmra.mrb[0].mxu0 %v6903
  %v7029 = vpop.f32.mrb[0].mxu0
  %v7030 = vadd.f32 1e-05, %v7029
  %v7031 = vpop.f32.mrb[0].mxu0
  %v7032 = vpop.f32.mrb[0].mxu0
  %v7033 = vadd.f32 1e-05, %v7032
  %v7034 = vpop.f32.mrb[0].mxu0
  %7035 = vmatprep.mubr.bf16.mxu0 0
  %7036 = vmatmul.mubr.bf16.gmra.mrb[0].mxu0 %v6906
  %v7037 = vpop.f32.mrb[0].mxu0
  %v7038 = vadd.f32 1e-05, %v7037
  %v7039 = vpop.f32.mrb[0].mxu0
  %v7040 = vpop.f32.mrb[0].mxu0
  %v7041 = vadd.f32 1e-05, %v7040
  %v7042 = vpop.f32.mrb[0].mxu0
  %7043 = vmatprep.mubr.bf16.mxu0 0
  %7044 = vmatmul.mubr.bf16.gmra.mrb[0].mxu0 %v6909
  %v7045 = vpop.f32.mrb[0].mxu0
  %v7046 = vadd.f32 1e-05, %v7045
  %v7047 = vpop.f32.mrb[0].mxu0
  %v7048 = vpop.f32.mrb[0].mxu0
  %v7049 = vadd.f32 1e-05, %v7048
  %v7050 = vpop.f32.mrb[0].mxu0
  %7051 = vmatprep.mubr.bf16.mxu0 0
  %7052 = vmatmul.mubr.bf16.gmra.mrb[0].mxu0 %v6912
  %v7053 = vpop.f32.mrb[0].mxu0
  %v7054 = vadd.f32 1e-05, %v7053
  %v7055 = vpop.f32.mrb[0].mxu0
  %v7056 = vpop.f32.mrb[0].mxu0
  %v7057 = vadd.f32 1e-05, %v7056
  %v7058 = vpop.f32.mrb[0].mxu0
  %7059 = vmatprep.mubr.bf16.mxu0 0
  %7060 = vmatmul.mubr.bf16.gmra.mrb[0].mxu0 %v6915
  %v7061 = vpop.f32.mrb[0].mxu0
  %v7062 = vadd.f32 1e-05, %v7061
  %v7063 = vpop.f32.mrb[0].mxu0
  %v7064 = vpop.f32.mrb[0].mxu0
  %v7065 = vadd.f32 1e-05, %v7064
  %v7066 = vpop.f32.mrb[0].mxu0
  %7067 = vmatprep.mubr.bf16.mxu0 0
  %7068 = vmatmul.mubr.bf16.gmra.mrb[0].mxu0 %v6918
  %v7069 = vpop.f32.mrb[0].mxu0
  %v7070 = vadd.f32 1e-05, %v7069
  %v7071 = vpop.f32.mrb[0].mxu0
  %v7072 = vpop.f32.mrb[0].mxu0
  %v7073 = vadd.f32 1e-05, %v7072
  %v7074 = vpop.f32.mrb[0].mxu0
  %7075 = vmatprep.mubr.bf16.mxu0 0
  %7076 = vmatmul.mubr.bf16.gmra.mrb[0].mxu0 %v6921
  %v7077 = vpop.f32.mrb[0].mxu0
  %v7078 = vadd.f32 1e-05, %v7077
  %v7079 = vpop.f32.mrb[0].mxu0
  %v7080 = vpop.f32.mrb[0].mxu0
  %v7081 = vadd.f32 1e-05, %v7080
  %v7082 = vpop.f32.mrb[0].mxu0
  %7083 = vdwg.mxu0
  %v7084 = vrsqrt.pop %v6958
  %v7085 = vrsqrt.pop %v6961
  %v7086 = vrsqrt.pop %v6966
  %v7087 = vrsqrt.pop %v6969
  %v7088 = vrsqrt.pop %v6974
  %v7089 = vrsqrt.pop %v6977
  %v7090 = vrsqrt.pop %v6982
  %v7091 = vrsqrt.pop %v6985
  %v7092 = vrsqrt.pop %v6990
  %v7093 = vrsqrt.pop %v6993
  %v7094 = vrsqrt.pop %v6998
  %v7095 = vrsqrt.pop %v7001
  %v7096 = vrsqrt.pop %v7006
  %v7097 = vrsqrt.pop %v7009
  %v7098 = vrsqrt.pop %v7014
  %v7099 = vrsqrt.pop %v7017
  %v7100 = vrsqrt.pop %v7022
  %v7101 = vrsqrt.pop %v7025
  %v7102 = vrsqrt.pop %v7030
  %v7103 = vrsqrt.pop %v7033
  %v7104 = vrsqrt.pop %v7038
  %v7105 = vrsqrt.pop %v7041
  %v7106 = vrsqrt.pop %v7046
  %v7107 = vrsqrt.pop %v7049
  %v7108 = vrsqrt.pop %v7054
  %v7109 = vrsqrt.pop %v7057
  %v7110 = vrsqrt.pop %v7062
  %v7111 = vrsqrt.pop %v7065
  %v7112 = vrsqrt.pop %v7070
  %v7113 = vrsqrt.pop %v7073
  %v7114 = vrsqrt.pop %v7078
  %v7115 = vrsqrt.pop %v7081
  %v7116 = vmul.f32 %v6795, %v7084
  %v7117 = vmul.f32 %v6796, %v7085
  %v7118 = vmul.f32 %v6797, %v7086
  %v7119 = vmul.f32 %v6798, %v7087
  %v7120 = vmul.f32 %v6799, %v7088
  %v7121 = vmul.f32 %v6800, %v7089
  %v7122 = vmul.f32 %v6801, %v7090
  %v7123 = vmul.f32 %v6802, %v7091
  %v7124 = vmul.f32 %v6803, %v7092
  %v7125 = vmul.f32 %v6804, %v7093
  %v7126 = vmul.f32 %v6805, %v7094
  %v7127 = vmul.f32 %v6806, %v7095
  %v7128 = vmul.f32 %v6807, %v7096
  %v7129 = vmul.f32 %v6808, %v7097
  %v7130 = vmul.f32 %v6809, %v7098
  %v7131 = vmul.f32 %v6810, %v7099
  %v7132 = vmul.f32 %v6811, %v7100
  %v7133 = vmul.f32 %v6812, %v7101
  %v7134 = vmul.f32 %v6813, %v7102
  %v7135 = vmul.f32 %v6814, %v7103
  %v7136 = vmul.f32 %v6815, %v7104
  %v7137 = vmul.f32 %v6816, %v7105
  %v7138 = vmul.f32 %v6817, %v7106
  %v7139 = vmul.f32 %v6818, %v7107
  %v7140 = vmul.f32 %v6819, %v7108
  %v7141 = vmul.f32 %v6820, %v7109
  %v7142 = vmul.f32 %v6821, %v7110
  %v7143 = vmul.f32 %v6822, %v7111
  %v7144 = vmul.f32 %v6823, %v7112
  %v7145 = vmul.f32 %v6824, %v7113
  %v7146 = vmul.f32 %v6825, %v7114
  %v7147 = vmul.f32 %v6826, %v7115
  %v7148 = vld [vmem:[%s2 + $0x5] ss:$0 sm:$0xff]
  %v7149 = vmul.f32 %v7116, %v7148
  %v7150 = vmul.f32 %v7117, %v7148
  %v7151 = vmul.f32 %v7118, %v7148
  %v7152 = vmul.f32 %v7119, %v7148
  %v7153 = vmul.f32 %v7120, %v7148
  %v7154 = vmul.f32 %v7121, %v7148
  %v7155 = vmul.f32 %v7122, %v7148
  %v7156 = vmul.f32 %v7123, %v7148
  %v7157 = vmul.f32 %v7124, %v7148
  %v7158 = vmul.f32 %v7125, %v7148
  %v7159 = vmul.f32 %v7126, %v7148
  %v7160 = vmul.f32 %v7127, %v7148
  %v7161 = vmul.f32 %v7128, %v7148
  %v7162 = vmul.f32 %v7129, %v7148
  %v7163 = vmul.f32 %v7130, %v7148
  %v7164 = vmul.f32 %v7131, %v7148
  %v7165 = vmul.f32 %v7132, %v7148
  %v7166 = vmul.f32 %v7133, %v7148
  %v7167 = vmul.f32 %v7134, %v7148
  %v7168 = vmul.f32 %v7135, %v7148
  %v7169 = vmul.f32 %v7136, %v7148
  %v7170 = vmul.f32 %v7137, %v7148
  %v7171 = vmul.f32 %v7138, %v7148
  %v7172 = vmul.f32 %v7139, %v7148
  %v7173 = vmul.f32 %v7140, %v7148
  %v7174 = vmul.f32 %v7141, %v7148
  %v7175 = vmul.f32 %v7142, %v7148
  %v7176 = vmul.f32 %v7143, %v7148
  %v7177 = vmul.f32 %v7144, %v7148
  %v7178 = vmul.f32 %v7145, %v7148
  %v7179 = vmul.f32 %v7146, %v7148
  %v7180 = vmul.f32 %v7147, %v7148
  %v7181 = vld [vmem:[%s2 + $0x6] ss:$0 sm:$0xff]
  %v7182 = vadd.f32 %v7149, %v7181
  %v7183 = vadd.f32 %v7150, %v7181
  %v7184 = vadd.f32 %v7151, %v7181
  %v7185 = vadd.f32 %v7152, %v7181
  %v7186 = vadd.f32 %v7153, %v7181
  %v7187 = vadd.f32 %v7154, %v7181
  %v7188 = vadd.f32 %v7155, %v7181
  %v7189 = vadd.f32 %v7156, %v7181
  %v7190 = vadd.f32 %v7157, %v7181
  %v7191 = vadd.f32 %v7158, %v7181
  %v7192 = vadd.f32 %v7159, %v7181
  %v7193 = vadd.f32 %v7160, %v7181
  %v7194 = vadd.f32 %v7161, %v7181
  %v7195 = vadd.f32 %v7162, %v7181
  %v7196 = vadd.f32 %v7163, %v7181
  %v7197 = vadd.f32 %v7164, %v7181
  %v7198 = vadd.f32 %v7165, %v7181
  %v7199 = vadd.f32 %v7166, %v7181
  %v7200 = vadd.f32 %v7167, %v7181
  %v7201 = vadd.f32 %v7168, %v7181
  %v7202 = vadd.f32 %v7169, %v7181
  %v7203 = vadd.f32 %v7170, %v7181
  %v7204 = vadd.f32 %v7171, %v7181
  %v7205 = vadd.f32 %v7172, %v7181
  %v7206 = vadd.f32 %v7173, %v7181
  %v7207 = vadd.f32 %v7174, %v7181
  %v7208 = vadd.f32 %v7175, %v7181
  %v7209 = vadd.f32 %v7176, %v7181
  %v7210 = vadd.f32 %v7177, %v7181
  %v7211 = vadd.f32 %v7178, %v7181
  %v7212 = vadd.f32 %v7179, %v7181
  %v7213 = vadd.f32 %v7180, %v7181
  %v7214 = vpack.c.bf16 %v7183, %v7182
  %v7215 = vpack.c.bf16 %v7185, %v7184
  %v7216 = vpack.c.bf16 %v7187, %v7186
  %v7217 = vpack.c.bf16 %v7189, %v7188
  %v7218 = vpack.c.bf16 %v7191, %v7190
  %v7219 = vpack.c.bf16 %v7193, %v7192
  %v7220 = vpack.c.bf16 %v7195, %v7194
  %v7221 = vpack.c.bf16 %v7197, %v7196
  %v7222 = vpack.c.bf16 %v7199, %v7198
  %v7223 = vpack.c.bf16 %v7201, %v7200
  %v7224 = vpack.c.bf16 %v7203, %v7202
  %v7225 = vpack.c.bf16 %v7205, %v7204
  %v7226 = vpack.c.bf16 %v7207, %v7206
  %v7227 = vpack.c.bf16 %v7209, %v7208
  %v7228 = vpack.c.bf16 %v7211, %v7210
  %v7229 = vpack.c.bf16 %v7213, %v7212
  %v7230 = vld [vmem:[%s1 + $0x1b0] sm:$0xf]
  %v7231 = vld [vmem:[%s1 + $0x1bc] sm:$0xf]
  %v7232 = vld [vmem:[%s1 + $0x1c8] sm:$0xf]
  %v7233 = vld [vmem:[%s1 + $0x1d4] sm:$0xf]
  %v7234 = vld [vmem:[%s1 + $0x1e0] sm:$0xf]
  %v7235 = vld [vmem:[%s1 + $0x1ec] sm:$0xf]
  %v7236 = vld [vmem:[%s1 + $0x1f8] sm:$0xf]
  %v7237 = vld [vmem:[%s1 + $0x204] sm:$0xf]
  %v7238 = vld [vmem:[%s1 + $0x210] sm:$0xf]
  %v7239 = vld [vmem:[%s1 + $0x21c] sm:$0xf]
  %v7240 = vld [vmem:[%s1 + $0x228] sm:$0xf]
  %v7241 = vld [vmem:[%s1 + $0x234] sm:$0xf]
  %v7242 = vld [vmem:[%s2 + $0x7] ss:$0 sm:$0xff]
  %v7255 = vunpack.c.l.b16 %v7230
  %v7256 = vunpack.c.l.b16 %v7231
  %v7257 = vunpack.c.l.b16 %v7232
  %v7258 = vunpack.c.l.b16 %v7233
  %v7259 = vunpack.c.l.b16 %v7234
  %v7260 = vunpack.c.l.b16 %v7235
  %v7261 = vunpack.c.l.b16 %v7236
  %v7262 = vunpack.c.l.b16 %v7237
  %v7263 = vunpack.c.l.b16 %v7238
  %v7264 = vunpack.c.l.b16 %v7239
  %v7265 = vunpack.c.l.b16 %v7240
  %v7266 = vunpack.c.l.b16 %v7241
  %v7267 = vpack.c.b16 %v7256, %v7255
  %v7268 = vpack.c.b16 %v7258, %v7257
  %v7269 = vpack.c.b16 %v7260, %v7259
  %v7270 = vpack.c.b16 %v7262, %v7261
  %v7271 = vpack.c.b16 %v7264, %v7263
  %v7272 = vpack.c.b16 %v7266, %v7265
  %v7280 = vsel %vm202, %v7214, 0
  %v7283 = vsel %vm202, %v7215, 0
  %v7286 = vsel %vm202, %v7216, 0
  %v7289 = vsel %vm202, %v7217, 0
  %v7292 = vsel %vm202, %v7218, 0
  %v7295 = vsel %vm202, %v7219, 0
  %v7298 = vsel %vm202, %v7220, 0
  %v7301 = vsel %vm202, %v7221, 0
  %v7304 = vsel %vm202, %v7222, 0
  %v7307 = vsel %vm202, %v7223, 0
  %v7310 = vsel %vm202, %v7224, 0
  %v7313 = vsel %vm202, %v7225, 0
  %v7316 = vsel %vm202, %v7226, 0
  %v7319 = vsel %vm202, %v7227, 0
  %v7322 = vsel %vm202, %v7228, 0
  %v7325 = vsel %vm202, %v7229, 0
  %7327 = vmatprep.subr.bf16.mxu0 0
  %7328 = vmatpush1.bf16.msra.mxu0 %v7267
  %7329 = vmatprep.subr.bf16.mxu0 0
  %7330 = vmatpush1.bf16.msra.mxu0 %v7268
  %7331 = vmatprep.subr.bf16.mxu0 0
  %7332 = vmatpush1.bf16.msra.mxu0 %v7269
  %7333 = vmatprep.subr.bf16.mxu0 0
  %7334 = vmatpush1.bf16.msra.mxu0 %v7270
  %7335 = vmatprep.subr.bf16.mxu0 0
  %7336 = vmatpush1.bf16.msra.mxu0 %v7271
  %7337 = vmatprep.subr.bf16.mxu0 0
  %7338 = vmatpush1.bf16.msra.mxu0 %v7272
  %7339 = vmatprep.subr.bf16.mxu0 0
  %7340 = vmatpush1.bf16.msra.mxu0 0
  %7341 = vmatprep.subr.bf16.mxu0 0
  %7342 = vmatpush1.bf16.msra.mxu0 0
  %7343 = vmatprep.subr.bf16.mxu0 0
  %7344 = vmatpush1.bf16.msra.mxu0 0
  %7345 = vmatprep.subr.bf16.mxu0 0
  %7346 = vmatpush1.bf16.msra.mxu0 0
  %7347 = vmatprep.subr.bf16.mxu0 0
  %7348 = vmatpush1.bf16.msra.mxu0 0
  %7349 = vmatprep.subr.bf16.mxu0 0
  %7350 = vmatpush1.bf16.msra.mxu0 0
  %7351 = vmatprep.subr.bf16.mxu0 0
  %7352 = vmatpush1.bf16.msra.mxu0 0
  %7353 = vmatprep.subr.bf16.mxu0 0
  %7354 = vmatpush1.bf16.msra.mxu0 0
  %7355 = vmatprep.subr.bf16.mxu0 0
  %7356 = vmatpush1.bf16.msra.mxu0 0
  %7357 = vmatprep.subr.bf16.mxu0 0
  %7358 = vmatpush1.bf16.msra.mxu0 0
  %7359 = vmatprep.mubr.bf16.mxu0 0
  %7360 = vmatmul.mubr.bf16.gmra.mrb[0].mxu0 %v7280
  %v7361 = vpop.f32.mrb[0].mxu0
  %v7362 = vadd.f32 %v7242, %v7361
  %v7363 = vpop.f32.mrb[0].mxu0
  %v7364 = vpop.f32.mrb[0].mxu0
  %v7365 = vadd.f32 %v7242, %v7364
  %v7366 = vpop.f32.mrb[0].mxu0
  %7367 = vmatprep.mubr.bf16.mxu0 0
  %7368 = vmatmul.mubr.bf16.gmra.mrb[0].mxu0 %v7283
  %v7369 = vpop.f32.mrb[0].mxu0
  %v7370 = vadd.f32 %v7242, %v7369
  %v7371 = vpop.f32.mrb[0].mxu0
  %v7372 = vpop.f32.mrb[0].mxu0
  %v7373 = vadd.f32 %v7242, %v7372
  %v7374 = vpop.f32.mrb[0].mxu0
  %7375 = vmatprep.mubr.bf16.mxu0 0
  %7376 = vmatmul.mubr.bf16.gmra.mrb[0].mxu0 %v7286
  %v7377 = vpop.f32.mrb[0].mxu0
  %v7378 = vadd.f32 %v7242, %v7377
  %v7379 = vpop.f32.mrb[0].mxu0
  %v7380 = vpop.f32.mrb[0].mxu0
  %v7381 = vadd.f32 %v7242, %v7380
  %v7382 = vpop.f32.mrb[0].mxu0
  %7383 = vmatprep.mubr.bf16.mxu0 0
  %7384 = vmatmul.mubr.bf16.gmra.mrb[0].mxu0 %v7289
  %v7385 = vpop.f32.mrb[0].mxu0
  %v7386 = vadd.f32 %v7242, %v7385
  %v7387 = vpop.f32.mrb[0].mxu0
  %v7388 = vpop.f32.mrb[0].mxu0
  %v7389 = vadd.f32 %v7242, %v7388
  %v7390 = vpop.f32.mrb[0].mxu0
  %7391 = vmatprep.mubr.bf16.mxu0 0
  %7392 = vmatmul.mubr.bf16.gmra.mrb[0].mxu0 %v7292
  %v7393 = vpop.f32.mrb[0].mxu0
  %v7394 = vadd.f32 %v7242, %v7393
  %v7395 = vpop.f32.mrb[0].mxu0
  %v7396 = vpop.f32.mrb[0].mxu0
  %v7397 = vadd.f32 %v7242, %v7396
  %v7398 = vpop.f32.mrb[0].mxu0
  %7399 = vmatprep.mubr.bf16.mxu0 0
  %7400 = vmatmul.mubr.bf16.gmra.mrb[0].mxu0 %v7295
  %v7401 = vpop.f32.mrb[0].mxu0
  %v7402 = vadd.f32 %v7242, %v7401
  %v7403 = vpop.f32.mrb[0].mxu0
  %v7404 = vpop.f32.mrb[0].mxu0
  %v7405 = vadd.f32 %v7242, %v7404
  %v7406 = vpop.f32.mrb[0].mxu0
  %7407 = vmatprep.mubr.bf16.mxu0 0
  %7408 = vmatmul.mubr.bf16.gmra.mrb[0].mxu0 %v7298
  %v7409 = vpop.f32.mrb[0].mxu0
  %v7410 = vadd.f32 %v7242, %v7409
  %v7411 = vpop.f32.mrb[0].mxu0
  %v7412 = vpop.f32.mrb[0].mxu0
  %v7413 = vadd.f32 %v7242, %v7412
  %v7414 = vpop.f32.mrb[0].mxu0
  %7415 = vmatprep.mubr.bf16.mxu0 0
  %7416 = vmatmul.mubr.bf16.gmra.mrb[0].mxu0 %v7301
  %v7417 = vpop.f32.mrb[0].mxu0
  %v7418 = vadd.f32 %v7242, %v7417
  %v7419 = vpop.f32.mrb[0].mxu0
  %v7420 = vpop.f32.mrb[0].mxu0
  %v7421 = vadd.f32 %v7242, %v7420
  %v7422 = vpop.f32.mrb[0].mxu0
  %7423 = vmatprep.mubr.bf16.mxu0 0
  %7424 = vmatmul.mubr.bf16.gmra.mrb[0].mxu0 %v7304
  %v7425 = vpop.f32.mrb[0].mxu0
  %v7426 = vadd.f32 %v7242, %v7425
  %v7427 = vpop.f32.mrb[0].mxu0
  %v7428 = vpop.f32.mrb[0].mxu0
  %v7429 = vadd.f32 %v7242, %v7428
  %v7430 = vpop.f32.mrb[0].mxu0
  %7431 = vmatprep.mubr.bf16.mxu0 0
  %7432 = vmatmul.mubr.bf16.gmra.mrb[0].mxu0 %v7307
  %v7433 = vpop.f32.mrb[0].mxu0
  %v7434 = vadd.f32 %v7242, %v7433
  %v7435 = vpop.f32.mrb[0].mxu0
  %v7436 = vpop.f32.mrb[0].mxu0
  %v7437 = vadd.f32 %v7242, %v7436
  %v7438 = vpop.f32.mrb[0].mxu0
  %7439 = vmatprep.mubr.bf16.mxu0 0
  %7440 = vmatmul.mubr.bf16.gmra.mrb[0].mxu0 %v7310
  %v7441 = vpop.f32.mrb[0].mxu0
  %v7442 = vadd.f32 %v7242, %v7441
  %v7443 = vpop.f32.mrb[0].mxu0
  %v7444 = vpop.f32.mrb[0].mxu0
  %v7445 = vadd.f32 %v7242, %v7444
  %v7446 = vpop.f32.mrb[0].mxu0
  %7447 = vmatprep.mubr.bf16.mxu0 0
  %7448 = vmatmul.mubr.bf16.gmra.mrb[0].mxu0 %v7313
  %v7449 = vpop.f32.mrb[0].mxu0
  %v7450 = vadd.f32 %v7242, %v7449
  %v7451 = vpop.f32.mrb[0].mxu0
  %v7452 = vpop.f32.mrb[0].mxu0
  %v7453 = vadd.f32 %v7242, %v7452
  %v7454 = vpop.f32.mrb[0].mxu0
  %7455 = vmatprep.mubr.bf16.mxu0 0
  %7456 = vmatmul.mubr.bf16.gmra.mrb[0].mxu0 %v7316
  %v7457 = vpop.f32.mrb[0].mxu0
  %v7458 = vadd.f32 %v7242, %v7457
  %v7459 = vpop.f32.mrb[0].mxu0
  %v7460 = vpop.f32.mrb[0].mxu0
  %v7461 = vadd.f32 %v7242, %v7460
  %v7462 = vpop.f32.mrb[0].mxu0
  %7463 = vmatprep.mubr.bf16.mxu0 0
  %7464 = vmatmul.mubr.bf16.gmra.mrb[0].mxu0 %v7319
  %v7465 = vpop.f32.mrb[0].mxu0
  %v7466 = vadd.f32 %v7242, %v7465
  %v7467 = vpop.f32.mrb[0].mxu0
  %v7468 = vpop.f32.mrb[0].mxu0
  %v7469 = vadd.f32 %v7242, %v7468
  %v7470 = vpop.f32.mrb[0].mxu0
  %7471 = vmatprep.mubr.bf16.mxu0 0
  %7472 = vmatmul.mubr.bf16.gmra.mrb[0].mxu0 %v7322
  %v7473 = vpop.f32.mrb[0].mxu0
  %v7474 = vadd.f32 %v7242, %v7473
  %v7475 = vpop.f32.mrb[0].mxu0
  %v7476 = vpop.f32.mrb[0].mxu0
  %v7477 = vadd.f32 %v7242, %v7476
  %v7478 = vpop.f32.mrb[0].mxu0
  %7479 = vmatprep.mubr.bf16.mxu0 0
  %7480 = vmatmul.mubr.bf16.gmra.mrb[0].mxu0 %v7325
  %v7481 = vpop.f32.mrb[0].mxu0
  %v7482 = vadd.f32 %v7242, %v7481
  %v7483 = vpop.f32.mrb[0].mxu0
  %v7484 = vpop.f32.mrb[0].mxu0
  %v7485 = vadd.f32 %v7242, %v7484
  %v7486 = vpop.f32.mrb[0].mxu0
  %7487 = vdwg.mxu0
  %v7488 = vmul.f32 %v7362, 0.5
  %v7489 = vmul.f32 %v7365, 0.5
  %v7490 = vmul.f32 %v7370, 0.5
  %v7491 = vmul.f32 %v7373, 0.5
  %v7492 = vmul.f32 %v7378, 0.5
  %v7493 = vmul.f32 %v7381, 0.5
  %v7494 = vmul.f32 %v7386, 0.5
  %v7495 = vmul.f32 %v7389, 0.5
  %v7496 = vmul.f32 %v7394, 0.5
  %v7497 = vmul.f32 %v7397, 0.5
  %v7498 = vmul.f32 %v7402, 0.5
  %v7499 = vmul.f32 %v7405, 0.5
  %v7500 = vmul.f32 %v7410, 0.5
  %v7501 = vmul.f32 %v7413, 0.5
  %v7502 = vmul.f32 %v7418, 0.5
  %v7503 = vmul.f32 %v7421, 0.5
  %v7504 = vmul.f32 %v7426, 0.5
  %v7505 = vmul.f32 %v7429, 0.5
  %v7506 = vmul.f32 %v7434, 0.5
  %v7507 = vmul.f32 %v7437, 0.5
  %v7508 = vmul.f32 %v7442, 0.5
  %v7509 = vmul.f32 %v7445, 0.5
  %v7510 = vmul.f32 %v7450, 0.5
  %v7511 = vmul.f32 %v7453, 0.5
  %v7512 = vmul.f32 %v7458, 0.5
  %v7513 = vmul.f32 %v7461, 0.5
  %v7514 = vmul.f32 %v7466, 0.5
  %v7515 = vmul.f32 %v7469, 0.5
  %v7516 = vmul.f32 %v7474, 0.5
  %v7517 = vmul.f32 %v7477, 0.5
  %v7518 = vmul.f32 %v7482, 0.5
  %v7519 = vmul.f32 %v7485, 0.5
  %v7520 = vmul.f32 %v7362, 0.044715
  %v7521 = vmul.f32 %v7365, 0.044715
  %v7522 = vmul.f32 %v7370, 0.044715
  %v7523 = vmul.f32 %v7373, 0.044715
  %v7524 = vmul.f32 %v7378, 0.044715
  %v7525 = vmul.f32 %v7381, 0.044715
  %v7526 = vmul.f32 %v7386, 0.044715
  %v7527 = vmul.f32 %v7389, 0.044715
  %v7528 = vmul.f32 %v7394, 0.044715
  %v7529 = vmul.f32 %v7397, 0.044715
  %v7530 = vmul.f32 %v7402, 0.044715
  %v7531 = vmul.f32 %v7405, 0.044715
  %v7532 = vmul.f32 %v7410, 0.044715
  %v7533 = vmul.f32 %v7413, 0.044715
  %v7534 = vmul.f32 %v7418, 0.044715
  %v7535 = vmul.f32 %v7421, 0.044715
  %v7536 = vmul.f32 %v7426, 0.044715
  %v7537 = vmul.f32 %v7429, 0.044715
  %v7538 = vmul.f32 %v7434, 0.044715
  %v7539 = vmul.f32 %v7437, 0.044715
  %v7540 = vmul.f32 %v7442, 0.044715
  %v7541 = vmul.f32 %v7445, 0.044715
  %v7542 = vmul.f32 %v7450, 0.044715
  %v7543 = vmul.f32 %v7453, 0.044715
  %v7544 = vmul.f32 %v7458, 0.044715
  %v7545 = vmul.f32 %v7461, 0.044715
  %v7546 = vmul.f32 %v7466, 0.044715
  %v7547 = vmul.f32 %v7469, 0.044715
  %v7548 = vmul.f32 %v7474, 0.044715
  %v7549 = vmul.f32 %v7477, 0.044715
  %v7550 = vmul.f32 %v7482, 0.044715
  %v7551 = vmul.f32 %v7485, 0.044715
  %v7552 = vmul.f32 %v7520, %v7362
  %v7553 = vmul.f32 %v7521, %v7365
  %v7554 = vmul.f32 %v7522, %v7370
  %v7555 = vmul.f32 %v7523, %v7373
  %v7556 = vmul.f32 %v7524, %v7378
  %v7557 = vmul.f32 %v7525, %v7381
  %v7558 = vmul.f32 %v7526, %v7386
  %v7559 = vmul.f32 %v7527, %v7389
  %v7560 = vmul.f32 %v7528, %v7394
  %v7561 = vmul.f32 %v7529, %v7397
  %v7562 = vmul.f32 %v7530, %v7402
  %v7563 = vmul.f32 %v7531, %v7405
  %v7564 = vmul.f32 %v7532, %v7410
  %v7565 = vmul.f32 %v7533, %v7413
  %v7566 = vmul.f32 %v7534, %v7418
  %v7567 = vmul.f32 %v7535, %v7421
  %v7568 = vmul.f32 %v7536, %v7426
  %v7569 = vmul.f32 %v7537, %v7429
  %v7570 = vmul.f32 %v7538, %v7434
  %v7571 = vmul.f32 %v7539, %v7437
  %v7572 = vmul.f32 %v7540, %v7442
  %v7573 = vmul.f32 %v7541, %v7445
  %v7574 = vmul.f32 %v7542, %v7450
  %v7575 = vmul.f32 %v7543, %v7453
  %v7576 = vmul.f32 %v7544, %v7458
  %v7577 = vmul.f32 %v7545, %v7461
  %v7578 = vmul.f32 %v7546, %v7466
  %v7579 = vmul.f32 %v7547, %v7469
  %v7580 = vmul.f32 %v7548, %v7474
  %v7581 = vmul.f32 %v7549, %v7477
  %v7582 = vmul.f32 %v7550, %v7482
  %v7583 = vmul.f32 %v7551, %v7485
  %v7584 = vmul.f32 %v7552, %v7362
  %v7585 = vmul.f32 %v7553, %v7365
  %v7586 = vmul.f32 %v7554, %v7370
  %v7587 = vmul.f32 %v7555, %v7373
  %v7588 = vmul.f32 %v7556, %v7378
  %v7589 = vmul.f32 %v7557, %v7381
  %v7590 = vmul.f32 %v7558, %v7386
  %v7591 = vmul.f32 %v7559, %v7389
  %v7592 = vmul.f32 %v7560, %v7394
  %v7593 = vmul.f32 %v7561, %v7397
  %v7594 = vmul.f32 %v7562, %v7402
  %v7595 = vmul.f32 %v7563, %v7405
  %v7596 = vmul.f32 %v7564, %v7410
  %v7597 = vmul.f32 %v7565, %v7413
  %v7598 = vmul.f32 %v7566, %v7418
  %v7599 = vmul.f32 %v7567, %v7421
  %v7600 = vmul.f32 %v7568, %v7426
  %v7601 = vmul.f32 %v7569, %v7429
  %v7602 = vmul.f32 %v7570, %v7434
  %v7603 = vmul.f32 %v7571, %v7437
  %v7604 = vmul.f32 %v7572, %v7442
  %v7605 = vmul.f32 %v7573, %v7445
  %v7606 = vmul.f32 %v7574, %v7450
  %v7607 = vmul.f32 %v7575, %v7453
  %v7608 = vmul.f32 %v7576, %v7458
  %v7609 = vmul.f32 %v7577, %v7461
  %v7610 = vmul.f32 %v7578, %v7466
  %v7611 = vmul.f32 %v7579, %v7469
  %v7612 = vmul.f32 %v7580, %v7474
  %v7613 = vmul.f32 %v7581, %v7477
  %v7614 = vmul.f32 %v7582, %v7482
  %v7615 = vmul.f32 %v7583, %v7485
  %v7616 = vadd.f32 %v7362, %v7584
  %v7617 = vadd.f32 %v7365, %v7585
  %v7618 = vadd.f32 %v7370, %v7586
  %v7619 = vadd.f32 %v7373, %v7587
  %v7620 = vadd.f32 %v7378, %v7588
  %v7621 = vadd.f32 %v7381, %v7589
  %v7622 = vadd.f32 %v7386, %v7590
  %v7623 = vadd.f32 %v7389, %v7591
  %v7624 = vadd.f32 %v7394, %v7592
  %v7625 = vadd.f32 %v7397, %v7593
  %v7626 = vadd.f32 %v7402, %v7594
  %v7627 = vadd.f32 %v7405, %v7595
  %v7628 = vadd.f32 %v7410, %v7596
  %v7629 = vadd.f32 %v7413, %v7597
  %v7630 = vadd.f32 %v7418, %v7598
  %v7631 = vadd.f32 %v7421, %v7599
  %v7632 = vadd.f32 %v7426, %v7600
  %v7633 = vadd.f32 %v7429, %v7601
  %v7634 = vadd.f32 %v7434, %v7602
  %v7635 = vadd.f32 %v7437, %v7603
  %v7636 = vadd.f32 %v7442, %v7604
  %v7637 = vadd.f32 %v7445, %v7605
  %v7638 = vadd.f32 %v7450, %v7606
  %v7639 = vadd.f32 %v7453, %v7607
  %v7640 = vadd.f32 %v7458, %v7608
  %v7641 = vadd.f32 %v7461, %v7609
  %v7642 = vadd.f32 %v7466, %v7610
  %v7643 = vadd.f32 %v7469, %v7611
  %v7644 = vadd.f32 %v7474, %v7612
  %v7645 = vadd.f32 %v7477, %v7613
  %v7646 = vadd.f32 %v7482, %v7614
  %v7647 = vadd.f32 %v7485, %v7615
  %v7648 = vmul.f32 %v7616, 0.7978846
  %v7649 = vmul.f32 %v7617, 0.7978846
  %v7650 = vmul.f32 %v7618, 0.7978846
  %v7651 = vmul.f32 %v7619, 0.7978846
  %v7652 = vmul.f32 %v7620, 0.7978846
  %v7653 = vmul.f32 %v7621, 0.7978846
  %v7654 = vmul.f32 %v7622, 0.7978846
  %v7655 = vmul.f32 %v7623, 0.7978846
  %v7656 = vmul.f32 %v7624, 0.7978846
  %v7657 = vmul.f32 %v7625, 0.7978846
  %v7658 = vmul.f32 %v7626, 0.7978846
  %v7659 = vmul.f32 %v7627, 0.7978846
  %v7660 = vmul.f32 %v7628, 0.7978846
  %v7661 = vmul.f32 %v7629, 0.7978846
  %v7662 = vmul.f32 %v7630, 0.7978846
  %v7663 = vmul.f32 %v7631, 0.7978846
  %v7664 = vmul.f32 %v7632, 0.7978846
  %v7665 = vmul.f32 %v7633, 0.7978846
  %v7666 = vmul.f32 %v7634, 0.7978846
  %v7667 = vmul.f32 %v7635, 0.7978846
  %v7668 = vmul.f32 %v7636, 0.7978846
  %v7669 = vmul.f32 %v7637, 0.7978846
  %v7670 = vmul.f32 %v7638, 0.7978846
  %v7671 = vmul.f32 %v7639, 0.7978846
  %v7672 = vmul.f32 %v7640, 0.7978846
  %v7673 = vmul.f32 %v7641, 0.7978846
  %v7674 = vmul.f32 %v7642, 0.7978846
  %v7675 = vmul.f32 %v7643, 0.7978846
  %v7676 = vmul.f32 %v7644, 0.7978846
  %v7677 = vmul.f32 %v7645, 0.7978846
  %v7678 = vmul.f32 %v7646, 0.7978846
  %v7679 = vmul.f32 %v7647, 0.7978846
  %v7680 = vtanh.pop %v7648
  %v7681 = vtanh.pop %v7649
  %v7682 = vtanh.pop %v7650
  %v7683 = vtanh.pop %v7651
  %v7684 = vtanh.pop %v7652
  %v7685 = vtanh.pop %v7653
  %v7686 = vtanh.pop %v7654
  %v7687 = vtanh.pop %v7655
  %v7688 = vtanh.pop %v7656
  %v7689 = vtanh.pop %v7657
  %v7690 = vtanh.pop %v7658
  %v7691 = vtanh.pop %v7659
  %v7692 = vtanh.pop %v7660
  %v7693 = vtanh.pop %v7661
  %v7694 = vtanh.pop %v7662
  %v7695 = vtanh.pop %v7663
  %v7696 = vtanh.pop %v7664
  %v7697 = vtanh.pop %v7665
  %v7698 = vtanh.pop %v7666
  %v7699 = vtanh.pop %v7667
  %v7700 = vtanh.pop %v7668
  %v7701 = vtanh.pop %v7669
  %v7702 = vtanh.pop %v7670
  %v7703 = vtanh.pop %v7671
  %v7704 = vtanh.pop %v7672
  %v7705 = vtanh.pop %v7673
  %v7706 = vtanh.pop %v7674
  %v7707 = vtanh.pop %v7675
  %v7708 = vtanh.pop %v7676
  %v7709 = vtanh.pop %v7677
  %v7710 = vtanh.pop %v7678
  %v7711 = vtanh.pop %v7679
  %v7712 = vadd.f32 %v7680, 1.0
  %v7713 = vadd.f32 %v7681, 1.0
  %v7714 = vadd.f32 %v7682, 1.0
  %v7715 = vadd.f32 %v7683, 1.0
  %v7716 = vadd.f32 %v7684, 1.0
  %v7717 = vadd.f32 %v7685, 1.0
  %v7718 = vadd.f32 %v7686, 1.0
  %v7719 = vadd.f32 %v7687, 1.0
  %v7720 = vadd.f32 %v7688, 1.0
  %v7721 = vadd.f32 %v7689, 1.0
  %v7722 = vadd.f32 %v7690, 1.0
  %v7723 = vadd.f32 %v7691, 1.0
  %v7724 = vadd.f32 %v7692, 1.0
  %v7725 = vadd.f32 %v7693, 1.0
  %v7726 = vadd.f32 %v7694, 1.0
  %v7727 = vadd.f32 %v7695, 1.0
  %v7728 = vadd.f32 %v7696, 1.0
  %v7729 = vadd.f32 %v7697, 1.0
  %v7730 = vadd.f32 %v7698, 1.0
  %v7731 = vadd.f32 %v7699, 1.0
  %v7732 = vadd.f32 %v7700, 1.0
  %v7733 = vadd.f32 %v7701, 1.0
  %v7734 = vadd.f32 %v7702, 1.0
  %v7735 = vadd.f32 %v7703, 1.0
  %v7736 = vadd.f32 %v7704, 1.0
  %v7737 = vadd.f32 %v7705, 1.0
  %v7738 = vadd.f32 %v7706, 1.0
  %v7739 = vadd.f32 %v7707, 1.0
  %v7740 = vadd.f32 %v7708, 1.0
  %v7741 = vadd.f32 %v7709, 1.0
  %v7742 = vadd.f32 %v7710, 1.0
  %v7743 = vadd.f32 %v7711, 1.0
  %v7744 = vmul.f32 %v7488, %v7712
  %v7745 = vmul.f32 %v7489, %v7713
  %v7746 = vmul.f32 %v7490, %v7714
  %v7747 = vmul.f32 %v7491, %v7715
  %v7748 = vmul.f32 %v7492, %v7716
  %v7749 = vmul.f32 %v7493, %v7717
  %v7750 = vmul.f32 %v7494, %v7718
  %v7751 = vmul.f32 %v7495, %v7719
  %v7752 = vmul.f32 %v7496, %v7720
  %v7753 = vmul.f32 %v7497, %v7721
  %v7754 = vmul.f32 %v7498, %v7722
  %v7755 = vmul.f32 %v7499, %v7723
  %v7756 = vmul.f32 %v7500, %v7724
  %v7757 = vmul.f32 %v7501, %v7725
  %v7758 = vmul.f32 %v7502, %v7726
  %v7759 = vmul.f32 %v7503, %v7727
  %v7760 = vmul.f32 %v7504, %v7728
  %v7761 = vmul.f32 %v7505, %v7729
  %v7762 = vmul.f32 %v7506, %v7730
  %v7763 = vmul.f32 %v7507, %v7731
  %v7764 = vmul.f32 %v7508, %v7732
  %v7765 = vmul.f32 %v7509, %v7733
  %v7766 = vmul.f32 %v7510, %v7734
  %v7767 = vmul.f32 %v7511, %v7735
  %v7768 = vmul.f32 %v7512, %v7736
  %v7769 = vmul.f32 %v7513, %v7737
  %v7770 = vmul.f32 %v7514, %v7738
  %v7771 = vmul.f32 %v7515, %v7739
  %v7772 = vmul.f32 %v7516, %v7740
  %v7773 = vmul.f32 %v7517, %v7741
  %v7774 = vmul.f32 %v7518, %v7742
  %v7775 = vmul.f32 %v7519, %v7743
  %v7776 = vld [vmem:[%s2 + $0x18] ss:$0 sm:$0xff]
  %v7777 = vmul.f32 %v7744, %v7776
  %v7778 = vmul.f32 %v7745, %v7776
  %v7779 = vmul.f32 %v7746, %v7776
  %v7780 = vmul.f32 %v7747, %v7776
  %v7781 = vmul.f32 %v7748, %v7776
  %v7782 = vmul.f32 %v7749, %v7776
  %v7783 = vmul.f32 %v7750, %v7776
  %v7784 = vmul.f32 %v7751, %v7776
  %v7785 = vmul.f32 %v7752, %v7776
  %v7786 = vmul.f32 %v7753, %v7776
  %v7787 = vmul.f32 %v7754, %v7776
  %v7788 = vmul.f32 %v7755, %v7776
  %v7789 = vmul.f32 %v7756, %v7776
  %v7790 = vmul.f32 %v7757, %v7776
  %v7791 = vmul.f32 %v7758, %v7776
  %v7792 = vmul.f32 %v7759, %v7776
  %v7793 = vmul.f32 %v7760, %v7776
  %v7794 = vmul.f32 %v7761, %v7776
  %v7795 = vmul.f32 %v7762, %v7776
  %v7796 = vmul.f32 %v7763, %v7776
  %v7797 = vmul.f32 %v7764, %v7776
  %v7798 = vmul.f32 %v7765, %v7776
  %v7799 = vmul.f32 %v7766, %v7776
  %v7800 = vmul.f32 %v7767, %v7776
  %v7801 = vmul.f32 %v7768, %v7776
  %v7802 = vmul.f32 %v7769, %v7776
  %v7803 = vmul.f32 %v7770, %v7776
  %v7804 = vmul.f32 %v7771, %v7776
  %v7805 = vmul.f32 %v7772, %v7776
  %v7806 = vmul.f32 %v7773, %v7776
  %v7807 = vmul.f32 %v7774, %v7776
  %v7808 = vmul.f32 %v7775, %v7776
  %v7809 = vld [vmem:[%s2 + $0x19] ss:$0 sm:$0xff]
  %v7810 = vadd.f32 %v7777, %v7809
  %v7811 = vadd.f32 %v7778, %v7809
  %v7812 = vadd.f32 %v7779, %v7809
  %v7813 = vadd.f32 %v7780, %v7809
  %v7814 = vadd.f32 %v7781, %v7809
  %v7815 = vadd.f32 %v7782, %v7809
  %v7816 = vadd.f32 %v7783, %v7809
  %v7817 = vadd.f32 %v7784, %v7809
  %v7818 = vadd.f32 %v7785, %v7809
  %v7819 = vadd.f32 %v7786, %v7809
  %v7820 = vadd.f32 %v7787, %v7809
  %v7821 = vadd.f32 %v7788, %v7809
  %v7822 = vadd.f32 %v7789, %v7809
  %v7823 = vadd.f32 %v7790, %v7809
  %v7824 = vadd.f32 %v7791, %v7809
  %v7825 = vadd.f32 %v7792, %v7809
  %v7826 = vadd.f32 %v7793, %v7809
  %v7827 = vadd.f32 %v7794, %v7809
  %v7828 = vadd.f32 %v7795, %v7809
  %v7829 = vadd.f32 %v7796, %v7809
  %v7830 = vadd.f32 %v7797, %v7809
  %v7831 = vadd.f32 %v7798, %v7809
  %v7832 = vadd.f32 %v7799, %v7809
  %v7833 = vadd.f32 %v7800, %v7809
  %v7834 = vadd.f32 %v7801, %v7809
  %v7835 = vadd.f32 %v7802, %v7809
  %v7836 = vadd.f32 %v7803, %v7809
  %v7837 = vadd.f32 %v7804, %v7809
  %v7838 = vadd.f32 %v7805, %v7809
  %v7839 = vadd.f32 %v7806, %v7809
  %v7840 = vadd.f32 %v7807, %v7809
  %v7841 = vadd.f32 %v7808, %v7809
  %v7842 = vpack.c.bf16 %v7811, %v7810
  %v7843 = vpack.c.bf16 %v7813, %v7812
  %v7844 = vpack.c.bf16 %v7815, %v7814
  %v7845 = vpack.c.bf16 %v7817, %v7816
  %v7846 = vpack.c.bf16 %v7819, %v7818
  %v7847 = vpack.c.bf16 %v7821, %v7820
  %v7848 = vpack.c.bf16 %v7823, %v7822
  %v7849 = vpack.c.bf16 %v7825, %v7824
  %v7850 = vpack.c.bf16 %v7827, %v7826
  %v7851 = vpack.c.bf16 %v7829, %v7828
  %v7852 = vpack.c.bf16 %v7831, %v7830
  %v7853 = vpack.c.bf16 %v7833, %v7832
  %v7854 = vpack.c.bf16 %v7835, %v7834
  %v7855 = vpack.c.bf16 %v7837, %v7836
  %v7856 = vpack.c.bf16 %v7839, %v7838
  %v7857 = vpack.c.bf16 %v7841, %v7840
  %v7858 = vld [vmem:[%s1 + $0x2d0] sm:$0xf]
  %v7859 = vld [vmem:[%s1 + $0x2dc] sm:$0xf]
  %v7860 = vld [vmem:[%s1 + $0x2e8] sm:$0xf]
  %v7861 = vld [vmem:[%s1 + $0x2f4] sm:$0xf]
  %v7862 = vld [vmem:[%s1 + $0x300] sm:$0xf]
  %v7863 = vld [vmem:[%s1 + $0x30c] sm:$0xf]
  %v7864 = vld [vmem:[%s1 + $0x318] sm:$0xf]
  %v7865 = vld [vmem:[%s1 + $0x324] sm:$0xf]
  %v7866 = vld [vmem:[%s1 + $0x330] sm:$0xf]
  %v7867 = vld [vmem:[%s2 + $0x1a] ss:$0 sm:$0xff]
  %v7877 = vunpack.c.l.b16 %v7858
  %v7878 = vunpack.c.l.b16 %v7859
  %v7879 = vunpack.c.l.b16 %v7860
  %v7880 = vunpack.c.l.b16 %v7861
  %v7881 = vunpack.c.l.b16 %v7862
  %v7882 = vunpack.c.l.b16 %v7863
  %v7883 = vunpack.c.l.b16 %v7864
  %v7884 = vunpack.c.l.b16 %v7865
  %v7885 = vunpack.c.l.b16 %v7866
  %v7886 = vpack.c.b16 %v7878, %v7877
  %v7887 = vpack.c.b16 %v7880, %v7879
  %v7888 = vpack.c.b16 %v7882, %v7881
  %v7889 = vpack.c.b16 %v7884, %v7883
  %v7890 = vpack.c.b16 %v7885, %v7885
  %vm7895 = vcmask 588800
  %v7897 = vsel %vm7895, %v7842, 0
  %v7900 = vsel %vm7895, %v7843, 0
  %v7903 = vsel %vm7895, %v7844, 0
  %v7906 = vsel %vm7895, %v7845, 0
  %v7909 = vsel %vm7895, %v7846, 0
  %v7912 = vsel %vm7895, %v7847, 0
  %v7915 = vsel %vm7895, %v7848, 0
  %v7918 = vsel %vm7895, %v7849, 0
  %v7921 = vsel %vm7895, %v7850, 0
  %v7924 = vsel %vm7895, %v7851, 0
  %v7927 = vsel %vm7895, %v7852, 0
  %v7930 = vsel %vm7895, %v7853, 0
  %v7933 = vsel %vm7895, %v7854, 0
  %v7936 = vsel %vm7895, %v7855, 0
  %v7939 = vsel %vm7895, %v7856, 0
  %v7942 = vsel %vm7895, %v7857, 0
  %vm7944 = vcmask 1043456
  %v7946 = vsel %vm7944, %v7890, 0
  %7948 = vmatprep.subr.bf16.mxu0 0
  %7949 = vmatpush1.bf16.msra.mxu0 %v7886
  %7950 = vmatprep.subr.bf16.mxu0 0
  %7951 = vmatpush1.bf16.msra.mxu0 %v7887
  %7952 = vmatprep.subr.bf16.mxu0 0
  %7953 = vmatpush1.bf16.msra.mxu0 %v7888
  %7954 = vmatprep.subr.bf16.mxu0 0
  %7955 = vmatpush1.bf16.msra.mxu0 %v7889
  %7956 = vmatprep.subr.bf16.mxu0 0
  %7957 = vmatpush1.bf16.msra.mxu0 %v7946
  %7958 = vmatprep.subr.bf16.mxu0 0
  %7959 = vmatpush1.bf16.msra.mxu0 0
  %7960 = vmatprep.subr.bf16.mxu0 0
  %7961 = vmatpush1.bf16.msra.mxu0 0
  %7962 = vmatprep.subr.bf16.mxu0 0
  %7963 = vmatpush1.bf16.msra.mxu0 0
  %7964 = vmatprep.subr.bf16.mxu0 0
  %7965 = vmatpush1.bf16.msra.mxu0 0
  %7966 = vmatprep.subr.bf16.mxu0 0
  %7967 = vmatpush1.bf16.msra.mxu0 0
  %7968 = vmatprep.subr.bf16.mxu0 0
  %7969 = vmatpush1.bf16.msra.mxu0 0
  %7970 = vmatprep.subr.bf16.mxu0 0
  %7971 = vmatpush1.bf16.msra.mxu0 0
  %7972 = vmatprep.subr.bf16.mxu0 0
  %7973 = vmatpush1.bf16.msra.mxu0 0
  %7974 = vmatprep.subr.bf16.mxu0 0
  %7975 = vmatpush1.bf16.msra.mxu0 0
  %7976 = vmatprep.subr.bf16.mxu0 0
  %7977 = vmatpush1.bf16.msra.mxu0 0
  %7978 = vmatprep.subr.bf16.mxu0 0
  %7979 = vmatpush1.bf16.msra.mxu0 0
  %7980 = vmatprep.mubr.bf16.mxu0 0
  %7981 = vmatmul.mubr.bf16.gmra.mrb[0].mxu0 %v7897
  %v7982 = vpop.f32.mrb[0].mxu0
  %v7983 = vadd.f32 %v7867, %v7982
  %v7984 = vpop.f32.mrb[0].mxu0
  %v7985 = vpop.f32.mrb[0].mxu0
  %v7986 = vadd.f32 %v7867, %v7985
  %v7987 = vpop.f32.mrb[0].mxu0
  %7988 = vmatprep.mubr.bf16.mxu0 0
  %7989 = vmatmul.mubr.bf16.gmra.mrb[0].mxu0 %v7900
  %v7990 = vpop.f32.mrb[0].mxu0
  %v7991 = vadd.f32 %v7867, %v7990
  %v7992 = vpop.f32.mrb[0].mxu0
  %v7993 = vpop.f32.mrb[0].mxu0
  %v7994 = vadd.f32 %v7867, %v7993
  %v7995 = vpop.f32.mrb[0].mxu0
  %7996 = vmatprep.mubr.bf16.mxu0 0
  %7997 = vmatmul.mubr.bf16.gmra.mrb[0].mxu0 %v7903
  %v7998 = vpop.f32.mrb[0].mxu0
  %v7999 = vadd.f32 %v7867, %v7998
  %v8000 = vpop.f32.mrb[0].mxu0
  %v8001 = vpop.f32.mrb[0].mxu0
  %v8002 = vadd.f32 %v7867, %v8001
  %v8003 = vpop.f32.mrb[0].mxu0
  %8004 = vmatprep.mubr.bf16.mxu0 0
  %8005 = vmatmul.mubr.bf16.gmra.mrb[0].mxu0 %v7906
  %v8006 = vpop.f32.mrb[0].mxu0
  %v8007 = vadd.f32 %v7867, %v8006
  %v8008 = vpop.f32.mrb[0].mxu0
  %v8009 = vpop.f32.mrb[0].mxu0
  %v8010 = vadd.f32 %v7867, %v8009
  %v8011 = vpop.f32.mrb[0].mxu0
  %8012 = vmatprep.mubr.bf16.mxu0 0
  %8013 = vmatmul.mubr.bf16.gmra.mrb[0].mxu0 %v7909
  %v8014 = vpop.f32.mrb[0].mxu0
  %v8015 = vadd.f32 %v7867, %v8014
  %v8016 = vpop.f32.mrb[0].mxu0
  %v8017 = vpop.f32.mrb[0].mxu0
  %v8018 = vadd.f32 %v7867, %v8017
  %v8019 = vpop.f32.mrb[0].mxu0
  %8020 = vmatprep.mubr.bf16.mxu0 0
  %8021 = vmatmul.mubr.bf16.gmra.mrb[0].mxu0 %v7912
  %v8022 = vpop.f32.mrb[0].mxu0
  %v8023 = vadd.f32 %v7867, %v8022
  %v8024 = vpop.f32.mrb[0].mxu0
  %v8025 = vpop.f32.mrb[0].mxu0
  %v8026 = vadd.f32 %v7867, %v8025
  %v8027 = vpop.f32.mrb[0].mxu0
  %8028 = vmatprep.mubr.bf16.mxu0 0
  %8029 = vmatmul.mubr.bf16.gmra.mrb[0].mxu0 %v7915
  %v8030 = vpop.f32.mrb[0].mxu0
  %v8031 = vadd.f32 %v7867, %v8030
  %v8032 = vpop.f32.mrb[0].mxu0
  %v8033 = vpop.f32.mrb[0].mxu0
  %v8034 = vadd.f32 %v7867, %v8033
  %v8035 = vpop.f32.mrb[0].mxu0
  %8036 = vmatprep.mubr.bf16.mxu0 0
  %8037 = vmatmul.mubr.bf16.gmra.mrb[0].mxu0 %v7918
  %v8038 = vpop.f32.mrb[0].mxu0
  %v8039 = vadd.f32 %v7867, %v8038
  %v8040 = vpop.f32.mrb[0].mxu0
  %v8041 = vpop.f32.mrb[0].mxu0
  %v8042 = vadd.f32 %v7867, %v8041
  %v8043 = vpop.f32.mrb[0].mxu0
  %8044 = vmatprep.mubr.bf16.mxu0 0
  %8045 = vmatmul.mubr.bf16.gmra.mrb[0].mxu0 %v7921
  %v8046 = vpop.f32.mrb[0].mxu0
  %v8047 = vadd.f32 %v7867, %v8046
  %v8048 = vpop.f32.mrb[0].mxu0
  %v8049 = vpop.f32.mrb[0].mxu0
  %v8050 = vadd.f32 %v7867, %v8049
  %v8051 = vpop.f32.mrb[0].mxu0
  %8052 = vmatprep.mubr.bf16.mxu0 0
  %8053 = vmatmul.mubr.bf16.gmra.mrb[0].mxu0 %v7924
  %v8054 = vpop.f32.mrb[0].mxu0
  %v8055 = vadd.f32 %v7867, %v8054
  %v8056 = vpop.f32.mrb[0].mxu0
  %v8057 = vpop.f32.mrb[0].mxu0
  %v8058 = vadd.f32 %v7867, %v8057
  %v8059 = vpop.f32.mrb[0].mxu0
  %8060 = vmatprep.mubr.bf16.mxu0 0
  %8061 = vmatmul.mubr.bf16.gmra.mrb[0].mxu0 %v7927
  %v8062 = vpop.f32.mrb[0].mxu0
  %v8063 = vadd.f32 %v7867, %v8062
  %v8064 = vpop.f32.mrb[0].mxu0
  %v8065 = vpop.f32.mrb[0].mxu0
  %v8066 = vadd.f32 %v7867, %v8065
  %v8067 = vpop.f32.mrb[0].mxu0
  %8068 = vmatprep.mubr.bf16.mxu0 0
  %8069 = vmatmul.mubr.bf16.gmra.mrb[0].mxu0 %v7930
  %v8070 = vpop.f32.mrb[0].mxu0
  %v8071 = vadd.f32 %v7867, %v8070
  %v8072 = vpop.f32.mrb[0].mxu0
  %v8073 = vpop.f32.mrb[0].mxu0
  %v8074 = vadd.f32 %v7867, %v8073
  %v8075 = vpop.f32.mrb[0].mxu0
  %8076 = vmatprep.mubr.bf16.mxu0 0
  %8077 = vmatmul.mubr.bf16.gmra.mrb[0].mxu0 %v7933
  %v8078 = vpop.f32.mrb[0].mxu0
  %v8079 = vadd.f32 %v7867, %v8078
  %v8080 = vpop.f32.mrb[0].mxu0
  %v8081 = vpop.f32.mrb[0].mxu0
  %v8082 = vadd.f32 %v7867, %v8081
  %v8083 = vpop.f32.mrb[0].mxu0
  %8084 = vmatprep.mubr.bf16.mxu0 0
  %8085 = vmatmul.mubr.bf16.gmra.mrb[0].mxu0 %v7936
  %v8086 = vpop.f32.mrb[0].mxu0
  %v8087 = vadd.f32 %v7867, %v8086
  %v8088 = vpop.f32.mrb[0].mxu0
  %v8089 = vpop.f32.mrb[0].mxu0
  %v8090 = vadd.f32 %v7867, %v8089
  %v8091 = vpop.f32.mrb[0].mxu0
  %8092 = vmatprep.mubr.bf16.mxu0 0
  %8093 = vmatmul.mubr.bf16.gmra.mrb[0].mxu0 %v7939
  %v8094 = vpop.f32.mrb[0].mxu0
  %v8095 = vadd.f32 %v7867, %v8094
  %v8096 = vpop.f32.mrb[0].mxu0
  %v8097 = vpop.f32.mrb[0].mxu0
  %v8098 = vadd.f32 %v7867, %v8097
  %v8099 = vpop.f32.mrb[0].mxu0
  %8100 = vmatprep.mubr.bf16.mxu0 0
  %8101 = vmatmul.mubr.bf16.gmra.mrb[0].mxu0 %v7942
  %v8102 = vpop.f32.mrb[0].mxu0
  %v8103 = vadd.f32 %v7867, %v8102
  %v8104 = vpop.f32.mrb[0].mxu0
  %v8105 = vpop.f32.mrb[0].mxu0
  %v8106 = vadd.f32 %v7867, %v8105
  %v8107 = vpop.f32.mrb[0].mxu0
  %8108 = vdwg.mxu0
  %v8109 = vpack.c.bf16 %v7986, %v7983
  %v8110 = vpack.c.bf16 %v7994, %v7991
  %v8111 = vpack.c.bf16 %v8002, %v7999
  %v8112 = vpack.c.bf16 %v8010, %v8007
  %v8113 = vpack.c.bf16 %v8018, %v8015
  %v8114 = vpack.c.bf16 %v8026, %v8023
  %v8115 = vpack.c.bf16 %v8034, %v8031
  %v8116 = vpack.c.bf16 %v8042, %v8039
  %v8117 = vpack.c.bf16 %v8050, %v8047
  %v8118 = vpack.c.bf16 %v8058, %v8055
  %v8119 = vpack.c.bf16 %v8066, %v8063
  %v8120 = vpack.c.bf16 %v8074, %v8071
  %v8121 = vpack.c.bf16 %v8082, %v8079
  %v8122 = vpack.c.bf16 %v8090, %v8087
  %v8123 = vpack.c.bf16 %v8098, %v8095
  %v8124 = vpack.c.bf16 %v8106, %v8103
  %v8125 = vld [vmem:[%s1 + $0x3c0] sm:$0xf]
  %v8126 = vld [vmem:[%s1 + $0x3cc] sm:$0xf]
  %v8127 = vld [vmem:[%s1 + $0x3d8] sm:$0xf]
  %v8128 = vld [vmem:[%s1 + $0x3e4] sm:$0xf]
  %v8129 = vld [vmem:[%s1 + $0x3f0] sm:$0xf]
  %v8130 = vld [vmem:[%s1 + $0x3fc] sm:$0xf]
  %v8131 = vld [vmem:[%s2 + $0x1b] ss:$0 sm:$0xff]
  %v8138 = vunpack.c.l.b16 %v8125
  %v8139 = vunpack.c.l.b16 %v8126
  %v8140 = vunpack.c.l.b16 %v8127
  %v8141 = vunpack.c.l.b16 %v8128
  %v8142 = vunpack.c.l.b16 %v8129
  %v8143 = vunpack.c.l.b16 %v8130
  %v8144 = vpack.c.b16 %v8139, %v8138
  %v8145 = vpack.c.b16 %v8141, %v8140
  %v8146 = vpack.c.b16 %v8143, %v8142
  %vm8150 = vcmask 392192
  %v8152 = vsel %vm8150, %v8109, 0
  %v8155 = vsel %vm8150, %v8110, 0
  %v8158 = vsel %vm8150, %v8111, 0
  %v8161 = vsel %vm8150, %v8112, 0
  %v8164 = vsel %vm8150, %v8113, 0
  %v8167 = vsel %vm8150, %v8114, 0
  %v8170 = vsel %vm8150, %v8115, 0
  %v8173 = vsel %vm8150, %v8116, 0
  %v8176 = vsel %vm8150, %v8117, 0
  %v8179 = vsel %vm8150, %v8118, 0
  %v8182 = vsel %vm8150, %v8119, 0
  %v8185 = vsel %vm8150, %v8120, 0
  %v8188 = vsel %vm8150, %v8121, 0
  %v8191 = vsel %vm8150, %v8122, 0
  %v8194 = vsel %vm8150, %v8123, 0
  %v8197 = vsel %vm8150, %v8124, 0
  %8199 = vmatprep.subr.bf16.mxu0 0
  %8200 = vmatpush1.bf16.msra.mxu0 %v8144
  %8201 = vmatprep.subr.bf16.mxu0 0
  %8202 = vmatpush1.bf16.msra.mxu0 %v8145
  %8203 = vmatprep.subr.bf16.mxu0 0
  %8204 = vmatpush1.bf16.msra.mxu0 %v8146
  %8205 = vmatprep.subr.bf16.mxu0 0
  %8206 = vmatpush1.bf16.msra.mxu0 0
  %8207 = vmatprep.subr.bf16.mxu0 0
  %8208 = vmatpush1.bf16.msra.mxu0 0
  %8209 = vmatprep.subr.bf16.mxu0 0
  %8210 = vmatpush1.bf16.msra.mxu0 0
  %8211 = vmatprep.subr.bf16.mxu0 0
  %8212 = vmatpush1.bf16.msra.mxu0 0
  %8213 = vmatprep.subr.bf16.mxu0 0
  %8214 = vmatpush1.bf16.msra.mxu0 0
  %8215 = vmatprep.subr.bf16.mxu0 0
  %8216 = vmatpush1.bf16.msra.mxu0 0
  %8217 = vmatprep.subr.bf16.mxu0 0
  %8218 = vmatpush1.bf16.msra.mxu0 0
  %8219 = vmatprep.subr.bf16.mxu0 0
  %8220 = vmatpush1.bf16.msra.mxu0 0
  %8221 = vmatprep.subr.bf16.mxu0 0
  %8222 = vmatpush1.bf16.msra.mxu0 0
  %8223 = vmatprep.subr.bf16.mxu0 0
  %8224 = vmatpush1.bf16.msra.mxu0 0
  %8225 = vmatprep.subr.bf16.mxu0 0
  %8226 = vmatpush1.bf16.msra.mxu0 0
  %8227 = vmatprep.subr.bf16.mxu0 0
  %8228 = vmatpush1.bf16.msra.mxu0 0
  %8229 = vmatprep.subr.bf16.mxu0 0
  %8230 = vmatpush1.bf16.msra.mxu0 0
  %8231 = vmatprep.mubr.bf16.mxu0 0
  %8232 = vmatmul.mubr.bf16.gmra.mrb[0].mxu0 %v8152
  %v8233 = vpop.f32.mrb[0].mxu0
  %v8234 = vadd.f32 %v8131, %v8233
  %v8235 = vpop.f32.mrb[0].mxu0
  %v8236 = vpop.f32.mrb[0].mxu0
  %v8237 = vadd.f32 %v8131, %v8236
  %v8238 = vpop.f32.mrb[0].mxu0
  %8239 = vmatprep.mubr.bf16.mxu0 0
  %8240 = vmatmul.mubr.bf16.gmra.mrb[0].mxu0 %v8155
  %v8241 = vpop.f32.mrb[0].mxu0
  %v8242 = vadd.f32 %v8131, %v8241
  %v8243 = vpop.f32.mrb[0].mxu0
  %v8244 = vpop.f32.mrb[0].mxu0
  %v8245 = vadd.f32 %v8131, %v8244
  %v8246 = vpop.f32.mrb[0].mxu0
  %8247 = vmatprep.mubr.bf16.mxu0 0
  %8248 = vmatmul.mubr.bf16.gmra.mrb[0].mxu0 %v8158
  %v8249 = vpop.f32.mrb[0].mxu0
  %v8250 = vadd.f32 %v8131, %v8249
  %v8251 = vpop.f32.mrb[0].mxu0
  %v8252 = vpop.f32.mrb[0].mxu0
  %v8253 = vadd.f32 %v8131, %v8252
  %v8254 = vpop.f32.mrb[0].mxu0
  %8255 = vmatprep.mubr.bf16.mxu0 0
  %8256 = vmatmul.mubr.bf16.gmra.mrb[0].mxu0 %v8161
  %v8257 = vpop.f32.mrb[0].mxu0
  %v8258 = vadd.f32 %v8131, %v8257
  %v8259 = vpop.f32.mrb[0].mxu0
  %v8260 = vpop.f32.mrb[0].mxu0
  %v8261 = vadd.f32 %v8131, %v8260
  %v8262 = vpop.f32.mrb[0].mxu0
  %8263 = vmatprep.mubr.bf16.mxu0 0
  %8264 = vmatmul.mubr.bf16.gmra.mrb[0].mxu0 %v8164
  %v8265 = vpop.f32.mrb[0].mxu0
  %v8266 = vadd.f32 %v8131, %v8265
  %v8267 = vpop.f32.mrb[0].mxu0
  %v8268 = vpop.f32.mrb[0].mxu0
  %v8269 = vadd.f32 %v8131, %v8268
  %v8270 = vpop.f32.mrb[0].mxu0
  %8271 = vmatprep.mubr.bf16.mxu0 0
  %8272 = vmatmul.mubr.bf16.gmra.mrb[0].mxu0 %v8167
  %v8273 = vpop.f32.mrb[0].mxu0
  %v8274 = vadd.f32 %v8131, %v8273
  %v8275 = vpop.f32.mrb[0].mxu0
  %v8276 = vpop.f32.mrb[0].mxu0
  %v8277 = vadd.f32 %v8131, %v8276
  %v8278 = vpop.f32.mrb[0].mxu0
  %8279 = vmatprep.mubr.bf16.mxu0 0
  %8280 = vmatmul.mubr.bf16.gmra.mrb[0].mxu0 %v8170
  %v8281 = vpop.f32.mrb[0].mxu0
  %v8282 = vadd.f32 %v8131, %v8281
  %v8283 = vpop.f32.mrb[0].mxu0
  %v8284 = vpop.f32.mrb[0].mxu0
  %v8285 = vadd.f32 %v8131, %v8284
  %v8286 = vpop.f32.mrb[0].mxu0
  %8287 = vmatprep.mubr.bf16.mxu0 0
  %8288 = vmatmul.mubr.bf16.gmra.mrb[0].mxu0 %v8173
  %v8289 = vpop.f32.mrb[0].mxu0
  %v8290 = vadd.f32 %v8131, %v8289
  %v8291 = vpop.f32.mrb[0].mxu0
  %v8292 = vpop.f32.mrb[0].mxu0
  %v8293 = vadd.f32 %v8131, %v8292
  %v8294 = vpop.f32.mrb[0].mxu0
  %8295 = vmatprep.mubr.bf16.mxu0 0
  %8296 = vmatmul.mubr.bf16.gmra.mrb[0].mxu0 %v8176
  %v8297 = vpop.f32.mrb[0].mxu0
  %v8298 = vadd.f32 %v8131, %v8297
  %v8299 = vpop.f32.mrb[0].mxu0
  %v8300 = vpop.f32.mrb[0].mxu0
  %v8301 = vadd.f32 %v8131, %v8300
  %v8302 = vpop.f32.mrb[0].mxu0
  %8303 = vmatprep.mubr.bf16.mxu0 0
  %8304 = vmatmul.mubr.bf16.gmra.mrb[0].mxu0 %v8179
  %v8305 = vpop.f32.mrb[0].mxu0
  %v8306 = vadd.f32 %v8131, %v8305
  %v8307 = vpop.f32.mrb[0].mxu0
  %v8308 = vpop.f32.mrb[0].mxu0
  %v8309 = vadd.f32 %v8131, %v8308
  %v8310 = vpop.f32.mrb[0].mxu0
  %8311 = vmatprep.mubr.bf16.mxu0 0
  %8312 = vmatmul.mubr.bf16.gmra.mrb[0].mxu0 %v8182
  %v8313 = vpop.f32.mrb[0].mxu0
  %v8314 = vadd.f32 %v8131, %v8313
  %v8315 = vpop.f32.mrb[0].mxu0
  %v8316 = vpop.f32.mrb[0].mxu0
  %v8317 = vadd.f32 %v8131, %v8316
  %v8318 = vpop.f32.mrb[0].mxu0
  %8319 = vmatprep.mubr.bf16.mxu0 0
  %8320 = vmatmul.mubr.bf16.gmra.mrb[0].mxu0 %v8185
  %v8321 = vpop.f32.mrb[0].mxu0
  %v8322 = vadd.f32 %v8131, %v8321
  %v8323 = vpop.f32.mrb[0].mxu0
  %v8324 = vpop.f32.mrb[0].mxu0
  %v8325 = vadd.f32 %v8131, %v8324
  %v8326 = vpop.f32.mrb[0].mxu0
  %8327 = vmatprep.mubr.bf16.mxu0 0
  %8328 = vmatmul.mubr.bf16.gmra.mrb[0].mxu0 %v8188
  %v8329 = vpop.f32.mrb[0].mxu0
  %v8330 = vadd.f32 %v8131, %v8329
  %v8331 = vpop.f32.mrb[0].mxu0
  %v8332 = vpop.f32.mrb[0].mxu0
  %v8333 = vadd.f32 %v8131, %v8332
  %v8334 = vpop.f32.mrb[0].mxu0
  %8335 = vmatprep.mubr.bf16.mxu0 0
  %8336 = vmatmul.mubr.bf16.gmra.mrb[0].mxu0 %v8191
  %v8337 = vpop.f32.mrb[0].mxu0
  %v8338 = vadd.f32 %v8131, %v8337
  %v8339 = vpop.f32.mrb[0].mxu0
  %v8340 = vpop.f32.mrb[0].mxu0
  %v8341 = vadd.f32 %v8131, %v8340
  %v8342 = vpop.f32.mrb[0].mxu0
  %8343 = vmatprep.mubr.bf16.mxu0 0
  %8344 = vmatmul.mubr.bf16.gmra.mrb[0].mxu0 %v8194
  %v8345 = vpop.f32.mrb[0].mxu0
  %v8346 = vadd.f32 %v8131, %v8345
  %v8347 = vpop.f32.mrb[0].mxu0
  %v8348 = vpop.f32.mrb[0].mxu0
  %v8349 = vadd.f32 %v8131, %v8348
  %v8350 = vpop.f32.mrb[0].mxu0
  %8351 = vmatprep.mubr.bf16.mxu0 0
  %8352 = vmatmul.mubr.bf16.gmra.mrb[0].mxu0 %v8197
  %v8353 = vpop.f32.mrb[0].mxu0
  %v8354 = vadd.f32 %v8131, %v8353
  %v8355 = vpop.f32.mrb[0].mxu0
  %v8356 = vpop.f32.mrb[0].mxu0
  %v8357 = vadd.f32 %v8131, %v8356
  %v8358 = vpop.f32.mrb[0].mxu0
  %8359 = vdwg.mxu0
  %v8360 = vmul.f32 %v8234, 0.5
  %v8361 = vmul.f32 %v8237, 0.5
  %v8362 = vmul.f32 %v8242, 0.5
  %v8363 = vmul.f32 %v8245, 0.5
  %v8364 = vmul.f32 %v8250, 0.5
  %v8365 = vmul.f32 %v8253, 0.5
  %v8366 = vmul.f32 %v8258, 0.5
  %v8367 = vmul.f32 %v8261, 0.5
  %v8368 = vmul.f32 %v8266, 0.5
  %v8369 = vmul.f32 %v8269, 0.5
  %v8370 = vmul.f32 %v8274, 0.5
  %v8371 = vmul.f32 %v8277, 0.5
  %v8372 = vmul.f32 %v8282, 0.5
  %v8373 = vmul.f32 %v8285, 0.5
  %v8374 = vmul.f32 %v8290, 0.5
  %v8375 = vmul.f32 %v8293, 0.5
  %v8376 = vmul.f32 %v8298, 0.5
  %v8377 = vmul.f32 %v8301, 0.5
  %v8378 = vmul.f32 %v8306, 0.5
  %v8379 = vmul.f32 %v8309, 0.5
  %v8380 = vmul.f32 %v8314, 0.5
  %v8381 = vmul.f32 %v8317, 0.5
  %v8382 = vmul.f32 %v8322, 0.5
  %v8383 = vmul.f32 %v8325, 0.5
  %v8384 = vmul.f32 %v8330, 0.5
  %v8385 = vmul.f32 %v8333, 0.5
  %v8386 = vmul.f32 %v8338, 0.5
  %v8387 = vmul.f32 %v8341, 0.5
  %v8388 = vmul.f32 %v8346, 0.5
  %v8389 = vmul.f32 %v8349, 0.5
  %v8390 = vmul.f32 %v8354, 0.5
  %v8391 = vmul.f32 %v8357, 0.5
  %v8392 = vmul.f32 %v8234, 0.044715
  %v8393 = vmul.f32 %v8237, 0.044715
  %v8394 = vmul.f32 %v8242, 0.044715
  %v8395 = vmul.f32 %v8245, 0.044715
  %v8396 = vmul.f32 %v8250, 0.044715
  %v8397 = vmul.f32 %v8253, 0.044715
  %v8398 = vmul.f32 %v8258, 0.044715
  %v8399 = vmul.f32 %v8261, 0.044715
  %v8400 = vmul.f32 %v8266, 0.044715
  %v8401 = vmul.f32 %v8269, 0.044715
  %v8402 = vmul.f32 %v8274, 0.044715
  %v8403 = vmul.f32 %v8277, 0.044715
  %v8404 = vmul.f32 %v8282, 0.044715
  %v8405 = vmul.f32 %v8285, 0.044715
  %v8406 = vmul.f32 %v8290, 0.044715
  %v8407 = vmul.f32 %v8293, 0.044715
  %v8408 = vmul.f32 %v8298, 0.044715
  %v8409 = vmul.f32 %v8301, 0.044715
  %v8410 = vmul.f32 %v8306, 0.044715
  %v8411 = vmul.f32 %v8309, 0.044715
  %v8412 = vmul.f32 %v8314, 0.044715
  %v8413 = vmul.f32 %v8317, 0.044715
  %v8414 = vmul.f32 %v8322, 0.044715
  %v8415 = vmul.f32 %v8325, 0.044715
  %v8416 = vmul.f32 %v8330, 0.044715
  %v8417 = vmul.f32 %v8333, 0.044715
  %v8418 = vmul.f32 %v8338, 0.044715
  %v8419 = vmul.f32 %v8341, 0.044715
  %v8420 = vmul.f32 %v8346, 0.044715
  %v8421 = vmul.f32 %v8349, 0.044715
  %v8422 = vmul.f32 %v8354, 0.044715
  %v8423 = vmul.f32 %v8357, 0.044715
  %v8424 = vmul.f32 %v8392, %v8234
  %v8425 = vmul.f32 %v8393, %v8237
  %v8426 = vmul.f32 %v8394, %v8242
  %v8427 = vmul.f32 %v8395, %v8245
  %v8428 = vmul.f32 %v8396, %v8250
  %v8429 = vmul.f32 %v8397, %v8253
  %v8430 = vmul.f32 %v8398, %v8258
  %v8431 = vmul.f32 %v8399, %v8261
  %v8432 = vmul.f32 %v8400, %v8266
  %v8433 = vmul.f32 %v8401, %v8269
  %v8434 = vmul.f32 %v8402, %v8274
  %v8435 = vmul.f32 %v8403, %v8277
  %v8436 = vmul.f32 %v8404, %v8282
  %v8437 = vmul.f32 %v8405, %v8285
  %v8438 = vmul.f32 %v8406, %v8290
  %v8439 = vmul.f32 %v8407, %v8293
  %v8440 = vmul.f32 %v8408, %v8298
  %v8441 = vmul.f32 %v8409, %v8301
  %v8442 = vmul.f32 %v8410, %v8306
  %v8443 = vmul.f32 %v8411, %v8309
  %v8444 = vmul.f32 %v8412, %v8314
  %v8445 = vmul.f32 %v8413, %v8317
  %v8446 = vmul.f32 %v8414, %v8322
  %v8447 = vmul.f32 %v8415, %v8325
  %v8448 = vmul.f32 %v8416, %v8330
  %v8449 = vmul.f32 %v8417, %v8333
  %v8450 = vmul.f32 %v8418, %v8338
  %v8451 = vmul.f32 %v8419, %v8341
  %v8452 = vmul.f32 %v8420, %v8346
  %v8453 = vmul.f32 %v8421, %v8349
  %v8454 = vmul.f32 %v8422, %v8354
  %v8455 = vmul.f32 %v8423, %v8357
  %v8456 = vmul.f32 %v8424, %v8234
  %v8457 = vmul.f32 %v8425, %v8237
  %v8458 = vmul.f32 %v8426, %v8242
  %v8459 = vmul.f32 %v8427, %v8245
  %v8460 = vmul.f32 %v8428, %v8250
  %v8461 = vmul.f32 %v8429, %v8253
  %v8462 = vmul.f32 %v8430, %v8258
  %v8463 = vmul.f32 %v8431, %v8261
  %v8464 = vmul.f32 %v8432, %v8266
  %v8465 = vmul.f32 %v8433, %v8269
  %v8466 = vmul.f32 %v8434, %v8274
  %v8467 = vmul.f32 %v8435, %v8277
  %v8468 = vmul.f32 %v8436, %v8282
  %v8469 = vmul.f32 %v8437, %v8285
  %v8470 = vmul.f32 %v8438, %v8290
  %v8471 = vmul.f32 %v8439, %v8293
  %v8472 = vmul.f32 %v8440, %v8298
  %v8473 = vmul.f32 %v8441, %v8301
  %v8474 = vmul.f32 %v8442, %v8306
  %v8475 = vmul.f32 %v8443, %v8309
  %v8476 = vmul.f32 %v8444, %v8314
  %v8477 = vmul.f32 %v8445, %v8317
  %v8478 = vmul.f32 %v8446, %v8322
  %v8479 = vmul.f32 %v8447, %v8325
  %v8480 = vmul.f32 %v8448, %v8330
  %v8481 = vmul.f32 %v8449, %v8333
  %v8482 = vmul.f32 %v8450, %v8338
  %v8483 = vmul.f32 %v8451, %v8341
  %v8484 = vmul.f32 %v8452, %v8346
  %v8485 = vmul.f32 %v8453, %v8349
  %v8486 = vmul.f32 %v8454, %v8354
  %v8487 = vmul.f32 %v8455, %v8357
  %v8488 = vadd.f32 %v8234, %v8456
  %v8489 = vadd.f32 %v8237, %v8457
  %v8490 = vadd.f32 %v8242, %v8458
  %v8491 = vadd.f32 %v8245, %v8459
  %v8492 = vadd.f32 %v8250, %v8460
  %v8493 = vadd.f32 %v8253, %v8461
  %v8494 = vadd.f32 %v8258, %v8462
  %v8495 = vadd.f32 %v8261, %v8463
  %v8496 = vadd.f32 %v8266, %v8464
  %v8497 = vadd.f32 %v8269, %v8465
  %v8498 = vadd.f32 %v8274, %v8466
  %v8499 = vadd.f32 %v8277, %v8467
  %v8500 = vadd.f32 %v8282, %v8468
  %v8501 = vadd.f32 %v8285, %v8469
  %v8502 = vadd.f32 %v8290, %v8470
  %v8503 = vadd.f32 %v8293, %v8471
  %v8504 = vadd.f32 %v8298, %v8472
  %v8505 = vadd.f32 %v8301, %v8473
  %v8506 = vadd.f32 %v8306, %v8474
  %v8507 = vadd.f32 %v8309, %v8475
  %v8508 = vadd.f32 %v8314, %v8476
  %v8509 = vadd.f32 %v8317, %v8477
  %v8510 = vadd.f32 %v8322, %v8478
  %v8511 = vadd.f32 %v8325, %v8479
  %v8512 = vadd.f32 %v8330, %v8480
  %v8513 = vadd.f32 %v8333, %v8481
  %v8514 = vadd.f32 %v8338, %v8482
  %v8515 = vadd.f32 %v8341, %v8483
  %v8516 = vadd.f32 %v8346, %v8484
  %v8517 = vadd.f32 %v8349, %v8485
  %v8518 = vadd.f32 %v8354, %v8486
  %v8519 = vadd.f32 %v8357, %v8487
  %v8520 = vmul.f32 %v8488, 0.7978846
  %v8521 = vmul.f32 %v8489, 0.7978846
  %v8522 = vmul.f32 %v8490, 0.7978846
  %v8523 = vmul.f32 %v8491, 0.7978846
  %v8524 = vmul.f32 %v8492, 0.7978846
  %v8525 = vmul.f32 %v8493, 0.7978846
  %v8526 = vmul.f32 %v8494, 0.7978846
  %v8527 = vmul.f32 %v8495, 0.7978846
  %v8528 = vmul.f32 %v8496, 0.7978846
  %v8529 = vmul.f32 %v8497, 0.7978846
  %v8530 = vmul.f32 %v8498, 0.7978846
  %v8531 = vmul.f32 %v8499, 0.7978846
  %v8532 = vmul.f32 %v8500, 0.7978846
  %v8533 = vmul.f32 %v8501, 0.7978846
  %v8534 = vmul.f32 %v8502, 0.7978846
  %v8535 = vmul.f32 %v8503, 0.7978846
  %v8536 = vmul.f32 %v8504, 0.7978846
  %v8537 = vmul.f32 %v8505, 0.7978846
  %v8538 = vmul.f32 %v8506, 0.7978846
  %v8539 = vmul.f32 %v8507, 0.7978846
  %v8540 = vmul.f32 %v8508, 0.7978846
  %v8541 = vmul.f32 %v8509, 0.7978846
  %v8542 = vmul.f32 %v8510, 0.7978846
  %v8543 = vmul.f32 %v8511, 0.7978846
  %v8544 = vmul.f32 %v8512, 0.7978846
  %v8545 = vmul.f32 %v8513, 0.7978846
  %v8546 = vmul.f32 %v8514, 0.7978846
  %v8547 = vmul.f32 %v8515, 0.7978846
  %v8548 = vmul.f32 %v8516, 0.7978846
  %v8549 = vmul.f32 %v8517, 0.7978846
  %v8550 = vmul.f32 %v8518, 0.7978846
  %v8551 = vmul.f32 %v8519, 0.7978846
  %v8552 = vtanh.pop %v8520
  %v8553 = vtanh.pop %v8521
  %v8554 = vtanh.pop %v8522
  %v8555 = vtanh.pop %v8523
  %v8556 = vtanh.pop %v8524
  %v8557 = vtanh.pop %v8525
  %v8558 = vtanh.pop %v8526
  %v8559 = vtanh.pop %v8527
  %v8560 = vtanh.pop %v8528
  %v8561 = vtanh.pop %v8529
  %v8562 = vtanh.pop %v8530
  %v8563 = vtanh.pop %v8531
  %v8564 = vtanh.pop %v8532
  %v8565 = vtanh.pop %v8533
  %v8566 = vtanh.pop %v8534
  %v8567 = vtanh.pop %v8535
  %v8568 = vtanh.pop %v8536
  %v8569 = vtanh.pop %v8537
  %v8570 = vtanh.pop %v8538
  %v8571 = vtanh.pop %v8539
  %v8572 = vtanh.pop %v8540
  %v8573 = vtanh.pop %v8541
  %v8574 = vtanh.pop %v8542
  %v8575 = vtanh.pop %v8543
  %v8576 = vtanh.pop %v8544
  %v8577 = vtanh.pop %v8545
  %v8578 = vtanh.pop %v8546
  %v8579 = vtanh.pop %v8547
  %v8580 = vtanh.pop %v8548
  %v8581 = vtanh.pop %v8549
  %v8582 = vtanh.pop %v8550
  %v8583 = vtanh.pop %v8551
  %v8584 = vadd.f32 %v8552, 1.0
  %v8585 = vadd.f32 %v8553, 1.0
  %v8586 = vadd.f32 %v8554, 1.0
  %v8587 = vadd.f32 %v8555, 1.0
  %v8588 = vadd.f32 %v8556, 1.0
  %v8589 = vadd.f32 %v8557, 1.0
  %v8590 = vadd.f32 %v8558, 1.0
  %v8591 = vadd.f32 %v8559, 1.0
  %v8592 = vadd.f32 %v8560, 1.0
  %v8593 = vadd.f32 %v8561, 1.0
  %v8594 = vadd.f32 %v8562, 1.0
  %v8595 = vadd.f32 %v8563, 1.0
  %v8596 = vadd.f32 %v8564, 1.0
  %v8597 = vadd.f32 %v8565, 1.0
  %v8598 = vadd.f32 %v8566, 1.0
  %v8599 = vadd.f32 %v8567, 1.0
  %v8600 = vadd.f32 %v8568, 1.0
  %v8601 = vadd.f32 %v8569, 1.0
  %v8602 = vadd.f32 %v8570, 1.0
  %v8603 = vadd.f32 %v8571, 1.0
  %v8604 = vadd.f32 %v8572, 1.0
  %v8605 = vadd.f32 %v8573, 1.0
  %v8606 = vadd.f32 %v8574, 1.0
  %v8607 = vadd.f32 %v8575, 1.0
  %v8608 = vadd.f32 %v8576, 1.0
  %v8609 = vadd.f32 %v8577, 1.0
  %v8610 = vadd.f32 %v8578, 1.0
  %v8611 = vadd.f32 %v8579, 1.0
  %v8612 = vadd.f32 %v8580, 1.0
  %v8613 = vadd.f32 %v8581, 1.0
  %v8614 = vadd.f32 %v8582, 1.0
  %v8615 = vadd.f32 %v8583, 1.0
  %v8616 = vmul.f32 %v8360, %v8584
  %v8617 = vmul.f32 %v8361, %v8585
  %v8618 = vmul.f32 %v8362, %v8586
  %v8619 = vmul.f32 %v8363, %v8587
  %v8620 = vmul.f32 %v8364, %v8588
  %v8621 = vmul.f32 %v8365, %v8589
  %v8622 = vmul.f32 %v8366, %v8590
  %v8623 = vmul.f32 %v8367, %v8591
  %v8624 = vmul.f32 %v8368, %v8592
  %v8625 = vmul.f32 %v8369, %v8593
  %v8626 = vmul.f32 %v8370, %v8594
  %v8627 = vmul.f32 %v8371, %v8595
  %v8628 = vmul.f32 %v8372, %v8596
  %v8629 = vmul.f32 %v8373, %v8597
  %v8630 = vmul.f32 %v8374, %v8598
  %v8631 = vmul.f32 %v8375, %v8599
  %v8632 = vmul.f32 %v8376, %v8600
  %v8633 = vmul.f32 %v8377, %v8601
  %v8634 = vmul.f32 %v8378, %v8602
  %v8635 = vmul.f32 %v8379, %v8603
  %v8636 = vmul.f32 %v8380, %v8604
  %v8637 = vmul.f32 %v8381, %v8605
  %v8638 = vmul.f32 %v8382, %v8606
  %v8639 = vmul.f32 %v8383, %v8607
  %v8640 = vmul.f32 %v8384, %v8608
  %v8641 = vmul.f32 %v8385, %v8609
  %v8642 = vmul.f32 %v8386, %v8610
  %v8643 = vmul.f32 %v8387, %v8611
  %v8644 = vmul.f32 %v8388, %v8612
  %v8645 = vmul.f32 %v8389, %v8613
  %v8646 = vmul.f32 %v8390, %v8614
  %v8647 = vmul.f32 %v8391, %v8615
  %v8648 = vld [vmem:[%s2 + $0x1c] ss:$0 sm:$0xff]
  %v8649 = vmul.f32 %v8616, %v8648
  %v8650 = vmul.f32 %v8617, %v8648
  %v8651 = vmul.f32 %v8618, %v8648
  %v8652 = vmul.f32 %v8619, %v8648
  %v8653 = vmul.f32 %v8620, %v8648
  %v8654 = vmul.f32 %v8621, %v8648
  %v8655 = vmul.f32 %v8622, %v8648
  %v8656 = vmul.f32 %v8623, %v8648
  %v8657 = vmul.f32 %v8624, %v8648
  %v8658 = vmul.f32 %v8625, %v8648
  %v8659 = vmul.f32 %v8626, %v8648
  %v8660 = vmul.f32 %v8627, %v8648
  %v8661 = vmul.f32 %v8628, %v8648
  %v8662 = vmul.f32 %v8629, %v8648
  %v8663 = vmul.f32 %v8630, %v8648
  %v8664 = vmul.f32 %v8631, %v8648
  %v8665 = vmul.f32 %v8632, %v8648
  %v8666 = vmul.f32 %v8633, %v8648
  %v8667 = vmul.f32 %v8634, %v8648
  %v8668 = vmul.f32 %v8635, %v8648
  %v8669 = vmul.f32 %v8636, %v8648
  %v8670 = vmul.f32 %v8637, %v8648
  %v8671 = vmul.f32 %v8638, %v8648
  %v8672 = vmul.f32 %v8639, %v8648
  %v8673 = vmul.f32 %v8640, %v8648
  %v8674 = vmul.f32 %v8641, %v8648
  %v8675 = vmul.f32 %v8642, %v8648
  %v8676 = vmul.f32 %v8643, %v8648
  %v8677 = vmul.f32 %v8644, %v8648
  %v8678 = vmul.f32 %v8645, %v8648
  %v8679 = vmul.f32 %v8646, %v8648
  %v8680 = vmul.f32 %v8647, %v8648
  %v8681 = vld [vmem:[%s2 + $0x1d] ss:$0 sm:$0xff]
  %v8682 = vadd.f32 %v8649, %v8681
  %v8683 = vadd.f32 %v8650, %v8681
  %v8684 = vadd.f32 %v8651, %v8681
  %v8685 = vadd.f32 %v8652, %v8681
  %v8686 = vadd.f32 %v8653, %v8681
  %v8687 = vadd.f32 %v8654, %v8681
  %v8688 = vadd.f32 %v8655, %v8681
  %v8689 = vadd.f32 %v8656, %v8681
  %v8690 = vadd.f32 %v8657, %v8681
  %v8691 = vadd.f32 %v8658, %v8681
  %v8692 = vadd.f32 %v8659, %v8681
  %v8693 = vadd.f32 %v8660, %v8681
  %v8694 = vadd.f32 %v8661, %v8681
  %v8695 = vadd.f32 %v8662, %v8681
  %v8696 = vadd.f32 %v8663, %v8681
  %v8697 = vadd.f32 %v8664, %v8681
  %v8698 = vadd.f32 %v8665, %v8681
  %v8699 = vadd.f32 %v8666, %v8681
  %v8700 = vadd.f32 %v8667, %v8681
  %v8701 = vadd.f32 %v8668, %v8681
  %v8702 = vadd.f32 %v8669, %v8681
  %v8703 = vadd.f32 %v8670, %v8681
  %v8704 = vadd.f32 %v8671, %v8681
  %v8705 = vadd.f32 %v8672, %v8681
  %v8706 = vadd.f32 %v8673, %v8681
  %v8707 = vadd.f32 %v8674, %v8681
  %v8708 = vadd.f32 %v8675, %v8681
  %v8709 = vadd.f32 %v8676, %v8681
  %v8710 = vadd.f32 %v8677, %v8681
  %v8711 = vadd.f32 %v8678, %v8681
  %v8712 = vadd.f32 %v8679, %v8681
  %v8713 = vadd.f32 %v8680, %v8681
  %v8714 = vpack.c.bf16 %v8683, %v8682
  %v8715 = vpack.c.bf16 %v8685, %v8684
  %v8716 = vpack.c.bf16 %v8687, %v8686
  %v8717 = vpack.c.bf16 %v8689, %v8688
  %v8718 = vpack.c.bf16 %v8691, %v8690
  %v8719 = vpack.c.bf16 %v8693, %v8692
  %v8720 = vpack.c.bf16 %v8695, %v8694
  %v8721 = vpack.c.bf16 %v8697, %v8696
  %v8722 = vpack.c.bf16 %v8699, %v8698
  %v8723 = vpack.c.bf16 %v8701, %v8700
  %v8724 = vpack.c.bf16 %v8703, %v8702
  %v8725 = vpack.c.bf16 %v8705, %v8704
  %v8726 = vpack.c.bf16 %v8707, %v8706
  %v8727 = vpack.c.bf16 %v8709, %v8708
  %v8728 = vpack.c.bf16 %v8711, %v8710
  %v8729 = vpack.c.bf16 %v8713, %v8712
  %v8730 = vld [vmem:[%s1 + $0x348] sm:$0xf]
  %v8731 = vld [vmem:[%s1 + $0x354] sm:$0xf]
  %v8732 = vld [vmem:[%s1 + $0x360] sm:$0xf]
  %v8733 = vld [vmem:[%s1 + $0x36c] sm:$0xf]
  %v8734 = vld [vmem:[%s1 + $0x378] sm:$0xf]
  %v8735 = vld [vmem:[%s1 + $0x384] sm:$0xf]
  %v8736 = vld [vmem:[%s1 + $0x390] sm:$0xf]
  %v8737 = vld [vmem:[%s1 + $0x39c] sm:$0xf]
  %v8738 = vld [vmem:[%s1 + $0x3a8] sm:$0xf]
  %v8739 = vld [vmem:[%s2 + $0x1e] ss:$0 sm:$0xff]
  %v8749 = vunpack.c.l.b16 %v8730
  %v8750 = vunpack.c.l.b16 %v8731
  %v8751 = vunpack.c.l.b16 %v8732
  %v8752 = vunpack.c.l.b16 %v8733
  %v8753 = vunpack.c.l.b16 %v8734
  %v8754 = vunpack.c.l.b16 %v8735
  %v8755 = vunpack.c.l.b16 %v8736
  %v8756 = vunpack.c.l.b16 %v8737
  %v8757 = vunpack.c.l.b16 %v8738
  %v8758 = vpack.c.b16 %v8750, %v8749
  %v8759 = vpack.c.b16 %v8752, %v8751
  %v8760 = vpack.c.b16 %v8754, %v8753
  %v8761 = vpack.c.b16 %v8756, %v8755
  %v8762 = vpack.c.b16 %v8757, %v8757
  %v8768 = vsel %vm7895, %v8714, 0
  %v8771 = vsel %vm7895, %v8715, 0
  %v8774 = vsel %vm7895, %v8716, 0
  %v8777 = vsel %vm7895, %v8717, 0
  %v8780 = vsel %vm7895, %v8718, 0
  %v8783 = vsel %vm7895, %v8719, 0
  %v8786 = vsel %vm7895, %v8720, 0
  %v8789 = vsel %vm7895, %v8721, 0
  %v8792 = vsel %vm7895, %v8722, 0
  %v8795 = vsel %vm7895, %v8723, 0
  %v8798 = vsel %vm7895, %v8724, 0
  %v8801 = vsel %vm7895, %v8725, 0
  %v8804 = vsel %vm7895, %v8726, 0
  %v8807 = vsel %vm7895, %v8727, 0
  %v8810 = vsel %vm7895, %v8728, 0
  %v8813 = vsel %vm7895, %v8729, 0
  %v8816 = vsel %vm7944, %v8762, 0
  %8818 = vmatprep.subr.bf16.mxu0 0
  %8819 = vmatpush1.bf16.msra.mxu0 %v8758
  %8820 = vmatprep.subr.bf16.mxu0 0
  %8821 = vmatpush1.bf16.msra.mxu0 %v8759
  %8822 = vmatprep.subr.bf16.mxu0 0
  %8823 = vmatpush1.bf16.msra.mxu0 %v8760
  %8824 = vmatprep.subr.bf16.mxu0 0
  %8825 = vmatpush1.bf16.msra.mxu0 %v8761
  %8826 = vmatprep.subr.bf16.mxu0 0
  %8827 = vmatpush1.bf16.msra.mxu0 %v8816
  %8828 = vmatprep.subr.bf16.mxu0 0
  %8829 = vmatpush1.bf16.msra.mxu0 0
  %8830 = vmatprep.subr.bf16.mxu0 0
  %8831 = vmatpush1.bf16.msra.mxu0 0
  %8832 = vmatprep.subr.bf16.mxu0 0
  %8833 = vmatpush1.bf16.msra.mxu0 0
  %8834 = vmatprep.subr.bf16.mxu0 0
  %8835 = vmatpush1.bf16.msra.mxu0 0
  %8836 = vmatprep.subr.bf16.mxu0 0
  %8837 = vmatpush1.bf16.msra.mxu0 0
  %8838 = vmatprep.subr.bf16.mxu0 0
  %8839 = vmatpush1.bf16.msra.mxu0 0
  %8840 = vmatprep.subr.bf16.mxu0 0
  %8841 = vmatpush1.bf16.msra.mxu0 0
  %8842 = vmatprep.subr.bf16.mxu0 0
  %8843 = vmatpush1.bf16.msra.mxu0 0
  %8844 = vmatprep.subr.bf16.mxu0 0
  %8845 = vmatpush1.bf16.msra.mxu0 0
  %8846 = vmatprep.subr.bf16.mxu0 0
  %8847 = vmatpush1.bf16.msra.mxu0 0
  %8848 = vmatprep.subr.bf16.mxu0 0
  %8849 = vmatpush1.bf16.msra.mxu0 0
  %8850 = vmatprep.mubr.bf16.mxu0 0
  %8851 = vmatmul.mubr.bf16.gmra.mrb[0].mxu0 %v8768
  %v8852 = vpop.f32.mrb[0].mxu0
  %v8853 = vadd.f32 %v8739, %v8852
  %v8854 = vpop.f32.mrb[0].mxu0
  %v8855 = vpop.f32.mrb[0].mxu0
  %v8856 = vadd.f32 %v8739, %v8855
  %v8857 = vpop.f32.mrb[0].mxu0
  %8858 = vmatprep.mubr.bf16.mxu0 0
  %8859 = vmatmul.mubr.bf16.gmra.mrb[0].mxu0 %v8771
  %v8860 = vpop.f32.mrb[0].mxu0
  %v8861 = vadd.f32 %v8739, %v8860
  %v8862 = vpop.f32.mrb[0].mxu0
  %v8863 = vpop.f32.mrb[0].mxu0
  %v8864 = vadd.f32 %v8739, %v8863
  %v8865 = vpop.f32.mrb[0].mxu0
  %8866 = vmatprep.mubr.bf16.mxu0 0
  %8867 = vmatmul.mubr.bf16.gmra.mrb[0].mxu0 %v8774
  %v8868 = vpop.f32.mrb[0].mxu0
  %v8869 = vadd.f32 %v8739, %v8868
  %v8870 = vpop.f32.mrb[0].mxu0
  %v8871 = vpop.f32.mrb[0].mxu0
  %v8872 = vadd.f32 %v8739, %v8871
  %v8873 = vpop.f32.mrb[0].mxu0
  %8874 = vmatprep.mubr.bf16.mxu0 0
  %8875 = vmatmul.mubr.bf16.gmra.mrb[0].mxu0 %v8777
  %v8876 = vpop.f32.mrb[0].mxu0
  %v8877 = vadd.f32 %v8739, %v8876
  %v8878 = vpop.f32.mrb[0].mxu0
  %v8879 = vpop.f32.mrb[0].mxu0
  %v8880 = vadd.f32 %v8739, %v8879
  %v8881 = vpop.f32.mrb[0].mxu0
  %8882 = vmatprep.mubr.bf16.mxu0 0
  %8883 = vmatmul.mubr.bf16.gmra.mrb[0].mxu0 %v8780
  %v8884 = vpop.f32.mrb[0].mxu0
  %v8885 = vadd.f32 %v8739, %v8884
  %v8886 = vpop.f32.mrb[0].mxu0
  %v8887 = vpop.f32.mrb[0].mxu0
  %v8888 = vadd.f32 %v8739, %v8887
  %v8889 = vpop.f32.mrb[0].mxu0
  %8890 = vmatprep.mubr.bf16.mxu0 0
  %8891 = vmatmul.mubr.bf16.gmra.mrb[0].mxu0 %v8783
  %v8892 = vpop.f32.mrb[0].mxu0
  %v8893 = vadd.f32 %v8739, %v8892
  %v8894 = vpop.f32.mrb[0].mxu0
  %v8895 = vpop.f32.mrb[0].mxu0
  %v8896 = vadd.f32 %v8739, %v8895
  %v8897 = vpop.f32.mrb[0].mxu0
  %8898 = vmatprep.mubr.bf16.mxu0 0
  %8899 = vmatmul.mubr.bf16.gmra.mrb[0].mxu0 %v8786
  %v8900 = vpop.f32.mrb[0].mxu0
  %v8901 = vadd.f32 %v8739, %v8900
  %v8902 = vpop.f32.mrb[0].mxu0
  %v8903 = vpop.f32.mrb[0].mxu0
  %v8904 = vadd.f32 %v8739, %v8903
  %v8905 = vpop.f32.mrb[0].mxu0
  %8906 = vmatprep.mubr.bf16.mxu0 0
  %8907 = vmatmul.mubr.bf16.gmra.mrb[0].mxu0 %v8789
  %v8908 = vpop.f32.mrb[0].mxu0
  %v8909 = vadd.f32 %v8739, %v8908
  %v8910 = vpop.f32.mrb[0].mxu0
  %v8911 = vpop.f32.mrb[0].mxu0
  %v8912 = vadd.f32 %v8739, %v8911
  %v8913 = vpop.f32.mrb[0].mxu0
  %8914 = vmatprep.mubr.bf16.mxu0 0
  %8915 = vmatmul.mubr.bf16.gmra.mrb[0].mxu0 %v8792
  %v8916 = vpop.f32.mrb[0].mxu0
  %v8917 = vadd.f32 %v8739, %v8916
  %v8918 = vpop.f32.mrb[0].mxu0
  %v8919 = vpop.f32.mrb[0].mxu0
  %v8920 = vadd.f32 %v8739, %v8919
  %v8921 = vpop.f32.mrb[0].mxu0
  %8922 = vmatprep.mubr.bf16.mxu0 0
  %8923 = vmatmul.mubr.bf16.gmra.mrb[0].mxu0 %v8795
  %v8924 = vpop.f32.mrb[0].mxu0
  %v8925 = vadd.f32 %v8739, %v8924
  %v8926 = vpop.f32.mrb[0].mxu0
  %v8927 = vpop.f32.mrb[0].mxu0
  %v8928 = vadd.f32 %v8739, %v8927
  %v8929 = vpop.f32.mrb[0].mxu0
  %8930 = vmatprep.mubr.bf16.mxu0 0
  %8931 = vmatmul.mubr.bf16.gmra.mrb[0].mxu0 %v8798
  %v8932 = vpop.f32.mrb[0].mxu0
  %v8933 = vadd.f32 %v8739, %v8932
  %v8934 = vpop.f32.mrb[0].mxu0
  %v8935 = vpop.f32.mrb[0].mxu0
  %v8936 = vadd.f32 %v8739, %v8935
  %v8937 = vpop.f32.mrb[0].mxu0
  %8938 = vmatprep.mubr.bf16.mxu0 0
  %8939 = vmatmul.mubr.bf16.gmra.mrb[0].mxu0 %v8801
  %v8940 = vpop.f32.mrb[0].mxu0
  %v8941 = vadd.f32 %v8739, %v8940
  %v8942 = vpop.f32.mrb[0].mxu0
  %v8943 = vpop.f32.mrb[0].mxu0
  %v8944 = vadd.f32 %v8739, %v8943
  %v8945 = vpop.f32.mrb[0].mxu0
  %8946 = vmatprep.mubr.bf16.mxu0 0
  %8947 = vmatmul.mubr.bf16.gmra.mrb[0].mxu0 %v8804
  %v8948 = vpop.f32.mrb[0].mxu0
  %v8949 = vadd.f32 %v8739, %v8948
  %v8950 = vpop.f32.mrb[0].mxu0
  %v8951 = vpop.f32.mrb[0].mxu0
  %v8952 = vadd.f32 %v8739, %v8951
  %v8953 = vpop.f32.mrb[0].mxu0
  %8954 = vmatprep.mubr.bf16.mxu0 0
  %8955 = vmatmul.mubr.bf16.gmra.mrb[0].mxu0 %v8807
  %v8956 = vpop.f32.mrb[0].mxu0
  %v8957 = vadd.f32 %v8739, %v8956
  %v8958 = vpop.f32.mrb[0].mxu0
  %v8959 = vpop.f32.mrb[0].mxu0
  %v8960 = vadd.f32 %v8739, %v8959
  %v8961 = vpop.f32.mrb[0].mxu0
  %8962 = vmatprep.mubr.bf16.mxu0 0
  %8963 = vmatmul.mubr.bf16.gmra.mrb[0].mxu0 %v8810
  %v8964 = vpop.f32.mrb[0].mxu0
  %v8965 = vadd.f32 %v8739, %v8964
  %v8966 = vpop.f32.mrb[0].mxu0
  %v8967 = vpop.f32.mrb[0].mxu0
  %v8968 = vadd.f32 %v8739, %v8967
  %v8969 = vpop.f32.mrb[0].mxu0
  %8970 = vmatprep.mubr.bf16.mxu0 0
  %8971 = vmatmul.mubr.bf16.gmra.mrb[0].mxu0 %v8813
  %v8972 = vpop.f32.mrb[0].mxu0
  %v8973 = vadd.f32 %v8739, %v8972
  %v8974 = vpop.f32.mrb[0].mxu0
  %v8975 = vpop.f32.mrb[0].mxu0
  %v8976 = vadd.f32 %v8739, %v8975
  %v8977 = vpop.f32.mrb[0].mxu0
  %8978 = vdwg.mxu0
  %8979 = vst.msk [vmem:[%s3] sm:$0xff] %vm8150, %v7983
  %8980 = vst.msk [vmem:[%s3 + $0x8] sm:$0xff] %vm8150, %v7986
  %8981 = vst.msk [vmem:[%s3 + $0x10] sm:$0xff] %vm8150, %v7991
  %8982 = vst.msk [vmem:[%s3 + $0x18] sm:$0xff] %vm8150, %v7994
  %8983 = vst.msk [vmem:[%s3 + $0x20] sm:$0xff] %vm8150, %v7999
  %8984 = vst.msk [vmem:[%s3 + $0x28] sm:$0xff] %vm8150, %v8002
  %8985 = vst.msk [vmem:[%s3 + $0x30] sm:$0xff] %vm8150, %v8007
  %8986 = vst.msk [vmem:[%s3 + $0x38] sm:$0xff] %vm8150, %v8010
  %8987 = vst.msk [vmem:[%s3 + $0x40] sm:$0xff] %vm8150, %v8015
  %8988 = vst.msk [vmem:[%s3 + $0x48] sm:$0xff] %vm8150, %v8018
  %8989 = vst.msk [vmem:[%s3 + $0x50] sm:$0xff] %vm8150, %v8023
  %8990 = vst.msk [vmem:[%s3 + $0x58] sm:$0xff] %vm8150, %v8026
  %8991 = vst.msk [vmem:[%s3 + $0x60] sm:$0xff] %vm8150, %v8031
  %8992 = vst.msk [vmem:[%s3 + $0x68] sm:$0xff] %vm8150, %v8034
  %8993 = vst.msk [vmem:[%s3 + $0x70] sm:$0xff] %vm8150, %v8039
  %8994 = vst.msk [vmem:[%s3 + $0x78] sm:$0xff] %vm8150, %v8042
  %8995 = vst.msk [vmem:[%s3 + $0x80] sm:$0xff] %vm8150, %v8047
  %8996 = vst.msk [vmem:[%s3 + $0x88] sm:$0xff] %vm8150, %v8050
  %8997 = vst.msk [vmem:[%s3 + $0x90] sm:$0xff] %vm8150, %v8055
  %8998 = vst.msk [vmem:[%s3 + $0x98] sm:$0xff] %vm8150, %v8058
  %8999 = vst.msk [vmem:[%s3 + $0xa0] sm:$0xff] %vm8150, %v8063
  %9000 = vst.msk [vmem:[%s3 + $0xa8] sm:$0xff] %vm8150, %v8066
  %9001 = vst.msk [vmem:[%s3 + $0xb0] sm:$0xff] %vm8150, %v8071
  %9002 = vst.msk [vmem:[%s3 + $0xb8] sm:$0xff] %vm8150, %v8074
  %9003 = vst.msk [vmem:[%s3 + $0xc0] sm:$0xff] %vm8150, %v8079
  %9004 = vst.msk [vmem:[%s3 + $0xc8] sm:$0xff] %vm8150, %v8082
  %9005 = vst.msk [vmem:[%s3 + $0xd0] sm:$0xff] %vm8150, %v8087
  %9006 = vst.msk [vmem:[%s3 + $0xd8] sm:$0xff] %vm8150, %v8090
  %9007 = vst.msk [vmem:[%s3 + $0xe0] sm:$0xff] %vm8150, %v8095
  %9008 = vst.msk [vmem:[%s3 + $0xe8] sm:$0xff] %vm8150, %v8098
  %9009 = vst.msk [vmem:[%s3 + $0xf0] sm:$0xff] %vm8150, %v8103
  %9010 = vst.msk [vmem:[%s3 + $0xf8] sm:$0xff] %vm8150, %v8106
  %9011 = vst.msk [vmem:[%s4] sm:$0xff] %vm202, %v8853
  %9012 = vst.msk [vmem:[%s4 + $0x8] sm:$0xff] %vm202, %v8856
  %9013 = vst.msk [vmem:[%s4 + $0x10] sm:$0xff] %vm202, %v8861
  %9014 = vst.msk [vmem:[%s4 + $0x18] sm:$0xff] %vm202, %v8864
  %9015 = vst.msk [vmem:[%s4 + $0x20] sm:$0xff] %vm202, %v8869
  %9016 = vst.msk [vmem:[%s4 + $0x28] sm:$0xff] %vm202, %v8872
  %9017 = vst.msk [vmem:[%s4 + $0x30] sm:$0xff] %vm202, %v8877
  %9018 = vst.msk [vmem:[%s4 + $0x38] sm:$0xff] %vm202, %v8880
  %9019 = vst.msk [vmem:[%s4 + $0x40] sm:$0xff] %vm202, %v8885
  %9020 = vst.msk [vmem:[%s4 + $0x48] sm:$0xff] %vm202, %v8888
  %9021 = vst.msk [vmem:[%s4 + $0x50] sm:$0xff] %vm202, %v8893
  %9022 = vst.msk [vmem:[%s4 + $0x58] sm:$0xff] %vm202, %v8896
  %9023 = vst.msk [vmem:[%s4 + $0x60] sm:$0xff] %vm202, %v8901
  %9024 = vst.msk [vmem:[%s4 + $0x68] sm:$0xff] %vm202, %v8904
  %9025 = vst.msk [vmem:[%s4 + $0x70] sm:$0xff] %vm202, %v8909
  %9026 = vst.msk [vmem:[%s4 + $0x78] sm:$0xff] %vm202, %v8912
  %9027 = vst.msk [vmem:[%s4 + $0x80] sm:$0xff] %vm202, %v8917
  %9028 = vst.msk [vmem:[%s4 + $0x88] sm:$0xff] %vm202, %v8920
  %9029 = vst.msk [vmem:[%s4 + $0x90] sm:$0xff] %vm202, %v8925
  %9030 = vst.msk [vmem:[%s4 + $0x98] sm:$0xff] %vm202, %v8928
  %9031 = vst.msk [vmem:[%s4 + $0xa0] sm:$0xff] %vm202, %v8933
  %9032 = vst.msk [vmem:[%s4 + $0xa8] sm:$0xff] %vm202, %v8936
  %9033 = vst.msk [vmem:[%s4 + $0xb0] sm:$0xff] %vm202, %v8941
  %9034 = vst.msk [vmem:[%s4 + $0xb8] sm:$0xff] %vm202, %v8944
  %9035 = vst.msk [vmem:[%s4 + $0xc0] sm:$0xff] %vm202, %v8949
  %9036 = vst.msk [vmem:[%s4 + $0xc8] sm:$0xff] %vm202, %v8952
  %9037 = vst.msk [vmem:[%s4 + $0xd0] sm:$0xff] %vm202, %v8957
  %9038 = vst.msk [vmem:[%s4 + $0xd8] sm:$0xff] %vm202, %v8960
  %9039 = vst.msk [vmem:[%s4 + $0xe0] sm:$0xff] %vm202, %v8965
  %9040 = vst.msk [vmem:[%s4 + $0xe8] sm:$0xff] %vm202, %v8968
  %9041 = vst.msk [vmem:[%s4 + $0xf0] sm:$0xff] %vm202, %v8973
  %9042 = vst.msk [vmem:[%s4 + $0xf8] sm:$0xff] %vm202, %v8976
  // Predicated region
  $region14: #{autoencoder_forward.1} parent=0 // pred_check
    _
  $region15: #{autoencoder_forward.1} parent=0 // pred_check_branch
    %9044 = sbr.rel (0) target = $region17
  $region16: #{autoencoder_forward.1} parent=0 // pred_region
    _
  $region17: #{autoencoder_forward.1} parent=0 // pred_fallthru
    _
  // Predicated region
  $region18: #{autoencoder_forward.1} parent=0 // pred_check
    _
  $region19: #{autoencoder_forward.1} parent=0 // pred_check_branch
    %9046 = sbr.rel (0) target = $region21
  $region20: #{autoencoder_forward.1} parent=0 // pred_region
    _
  $region21: #{autoencoder_forward.1} parent=0 // pred_fallthru
    _
  // Predicated region
  $region22: #{autoencoder_forward.1} parent=0 // pred_check
    _
  $region23: #{autoencoder_forward.1} parent=0 // pred_check_branch
    %9048 = sbr.rel (0) target = $region25
  $region24: #{autoencoder_forward.1} parent=0 // pred_region
    _
  $region25: #{autoencoder_forward.1} parent=0 // pred_fallthru
    _
  // Predicated region
  $region26: #{autoencoder_forward.1} parent=0 // pred_check
    _
  $region27: #{autoencoder_forward.1} parent=0 // pred_check_branch
    %9050 = sbr.rel (0) target = $region29
  $region28: #{autoencoder_forward.1} parent=0 // pred_region
    _
  $region29: #{autoencoder_forward.1} parent=0 // pred_fallthru
    _

</llo_original>
